<compile_context>
chip_gen: v6e
topology: v6e:2x2x1
jax: 0.10.0
libtpu: 0.0.40
codegen_flags: <defaults>
</compile_context>

<pallas_src>
import jax
import jax.numpy as jnp
from jax import lax
from jax.experimental import pallas as pl
from jax.experimental.pallas import tpu as pltpu


def _round_up(n, m):
    return ((n + m - 1) // m) * m


def _shallownet_kernel(x_ref, w_ref, b_ref, pool_ref, wc_ref, bc_ref, o_ref):
    # x_ref:    (bblk, C, T)        input block (natural PyTorch layout)
    # w_ref:    (K, F, C)           folded conv_time*conv_spat*BN weight
    # b_ref:    (1, F, 1)           folded bias (f32)
    # pool_ref: (P, Tp)             shared average-pool matrix (f32)
    # wc_ref:   (P, F, NCpad)       classifier weight, class axis lane-padded
    # bc_ref:   (1, NCpad)          classifier bias, lane-padded
    # o_ref:    (bblk, NCpad)       output logits (f32), lane-dense store
    bblk = x_ref.shape[0]
    k_len = w_ref.shape[0]
    n_pool, t_conv = pool_ref.shape

    x = x_ref[...]                                     # (bblk, C, T)
    w = w_ref[...]                                     # (K, F, C)

    # ---- conv_time + conv_spat + BatchNorm folded into K batched matmuls ---
    # z[b, f, t] = sum_{k, c} w[k, f, c] * x[b, c, t + k]
    z = None
    for k in range(k_len):
        wk = jnp.broadcast_to(w[k], (bblk,) + w[k].shape)          # (bblk, F, C)
        zk = jnp.einsum("bfc,bct->bft", wk, x[:, :, k:k + t_conv],
                        preferred_element_type=jnp.float32)
        z = zk if z is None else z + zk
    z = z + b_ref[...]                                 # (bblk, F, Tp) f32

    # square nonlinearity
    z = z * z

    # ---- AvgPool over time: one batched matmul with the shared (P, Tp) -----
    pool = jnp.broadcast_to(pool_ref[...], (bblk,) + pool_ref.shape)
    pooled = jnp.einsum("bpt,bft->bpf", pool, z,
                        preferred_element_type=jnp.float32)        # (bblk, P, F)

    # log(clamp(., min=1e-6))
    pooled = jnp.log(jnp.maximum(pooled, 1e-6))

    # TODO(synk): nn.Dropout(p=0.5) is identity here (inference semantics).

    # ---- classifier Conv2d(F, n_classes, (P, 1)): balanced-tree of P dots ---
    parts = [jnp.dot(pooled[:, p, :], wc_ref[p],
                     preferred_element_type=jnp.float32)
             for p in range(n_pool)]
    while len(parts) > 1:
        nxt = [parts[i] + parts[i + 1] for i in range(0, len(parts) - 1, 2)]
        if len(parts) % 2:
            nxt.append(parts[-1])
        parts = nxt

    o_ref[...] = parts[0] + bc_ref[...]


def prepare_shallownet_params(params, *, input_window_samples, pool_time_length,
                              pool_time_stride, eps=1e-5,
                              compute_dtype=jnp.bfloat16):
    """One-time parameter folding (call once, reuse across forward calls)."""
    w_time = jnp.asarray(params["w_time"], jnp.float32)   # (F, 1, K, 1)
    b_time = jnp.asarray(params["b_time"], jnp.float32)   # (F,)
    w_spat = jnp.asarray(params["w_spat"], jnp.float32)   # (F, F, 1, C)
    w_cls = jnp.asarray(params["w_cls"], jnp.float32)     # (nc, F, P, 1)
    b_cls = jnp.asarray(params["b_cls"], jnp.float32)     # (nc,)
    gamma = jnp.asarray(params["bn_gamma"], jnp.float32)
    beta = jnp.asarray(params["bn_beta"], jnp.float32)
    mean = jnp.asarray(params["bn_mean"], jnp.float32)
    var = jnp.asarray(params["bn_var"], jnp.float32)

    n_filters, _, k_len, _ = w_time.shape
    n_classes = w_cls.shape[0]
    t_conv = input_window_samples - k_len + 1
    n_pool = (t_conv - pool_time_length) // pool_time_stride + 1
    assert w_cls.shape == (n_classes, n_filters, n_pool, 1)

    # Fold conv_time -> conv_spat -> BatchNorm(inference).
    wt = w_time[:, 0, :, 0]                                # (F, K)
    ws = w_spat[:, :, 0, :]                                # (G=F, F, C)
    w_fold = jnp.einsum("fk,gfc->kgc", wt, ws)             # (K, F_out, C)
    b_fold = jnp.einsum("f,gfc->g", b_time, ws)            # (F_out,)
    scale = gamma * lax.rsqrt(var + eps)
    w_k = (w_fold * scale[None, :, None]).astype(compute_dtype)
    b_k = ((b_fold - mean) * scale + beta).reshape(1, n_filters, 1)
    b_k = b_k.astype(jnp.float32)

    # Shared (P, Tp) average-pool matrix (per-sample contraction -> no O(bblk^2)).
    p_i = jnp.arange(n_pool)[:, None]
    t_i = jnp.arange(t_conv)[None, :]
    in_win = ((t_i >= p_i * pool_time_stride)
              & (t_i < p_i * pool_time_stride + pool_time_length))
    pool_mat = in_win.astype(jnp.float32) / float(pool_time_length)   # (P, Tp)

    # Classifier as a (P, F, NCpad) dense weight with the class axis padded to
    # a full 128-lane register -> lane-dense (unmasked) output store.
    nc_pad = _round_up(max(n_classes, 1), 128)
    wc = jnp.transpose(w_cls[:, :, :, 0], (2, 1, 0))                  # (P, F, nc)
    wc_k = jnp.zeros((n_pool, n_filters, nc_pad), jnp.float32)
    wc_k = wc_k.at[:, :, :n_classes].set(wc)
    bc_k = jnp.zeros((1, nc_pad), jnp.float32).at[0, :n_classes].set(b_cls)

    kernel_params = dict(w=w_k, b=b_k, pool=pool_mat, wc=wc_k, bc=bc_k)
    meta = dict(n_classes=n_classes, compute_dtype=compute_dtype,
                input_window_samples=input_window_samples)
    return kernel_params, meta


def shallownet_forward(x_bct, kernel_params, meta, *, bblk=None,
                       vmem_limit_bytes=None):
    """x_bct: (B, in_channels, T) like the PyTorch module input.

    bblk=None -> one grid step covering the whole padded batch (best on the
    single-TensorCore v5e/v6e).  On v7x pass bblk = ceil(B/2) rounded up to a
    multiple of 8 so the two "parallel" grid steps land on the two TensorCores.
    """
    w_k = kernel_params["w"]
    b_k = kernel_params["b"]
    pool_mat = kernel_params["pool"]
    wc_k = kernel_params["wc"]
    bc_k = kernel_params["bc"]

    B, n_ch, T = x_bct.shape
    assert T == meta["input_window_samples"]
    k_len, n_filters, n_ch_w = w_k.shape
    assert n_ch_w == n_ch
    n_pool, t_conv = pool_mat.shape
    nc_pad = wc_k.shape[2]
    n_classes = meta["n_classes"]

    if bblk is None:
        b_pad = _round_up(B, 8)
        bblk = b_pad
    else:
        assert bblk % 8 == 0, "bblk must be a multiple of 8"
        b_pad = _round_up(B, bblk)

    x = x_bct.astype(meta["compute_dtype"])
    if b_pad != B:
        x = jnp.pad(x, ((0, b_pad - B), (0, 0), (0, 0)))

    out = pl.pallas_call(
        _shallownet_kernel,
        out_shape=jax.ShapeDtypeStruct((b_pad, nc_pad), jnp.float32),
        grid=(b_pad // bblk,),
        in_specs=[
            pl.BlockSpec((bblk, n_ch, T), lambda i: (i, 0, 0)),        # streamed
            pl.BlockSpec((k_len, n_filters, n_ch), lambda i: (0, 0, 0)),
            pl.BlockSpec((1, n_filters, 1), lambda i: (0, 0, 0)),
            pl.BlockSpec((n_pool, t_conv), lambda i: (0, 0)),
            pl.BlockSpec((n_pool, n_filters, nc_pad), lambda i: (0, 0, 0)),
            pl.BlockSpec((1, nc_pad), lambda i: (0, 0)),
        ],
        out_specs=pl.BlockSpec((bblk, nc_pad), lambda i: (i, 0)),
        compiler_params=pltpu.CompilerParams(
            dimension_semantics=("parallel",),
            vmem_limit_bytes=vmem_limit_bytes),
    )(x, w_k, b_k, pool_mat, wc_k, bc_k)
    return out[:B, :n_classes]


def shallownet_reference(x_bct, params, *, pool_time_length, pool_time_stride,
                         eps=1e-5):
    """Pure-JAX reference mirroring the PyTorch forward (eval mode)."""
    xr = jnp.transpose(x_bct, (0, 2, 1))[:, None, :, :]   # b c t -> b 1 t c
    dn = ("NCHW", "OIHW", "NCHW")
    y = lax.conv_general_dilated(xr, params["w_time"], (1, 1), "VALID",
                                 dimension_numbers=dn)
    y = y + params["b_time"][None, :, None, None]
    z = lax.conv_general_dilated(y, params["w_spat"], (1, 1), "VALID",
                                 dimension_numbers=dn)
    g, b = params["bn_gamma"], params["bn_beta"]
    mu, var = params["bn_mean"], params["bn_var"]
    z = (z - mu[None, :, None, None]) * (g / jnp.sqrt(var + eps))[None, :, None, None] \
        + b[None, :, None, None]
    z = z * z
    z = lax.reduce_window(z, 0.0, lax.add,
                          (1, 1, pool_time_length, 1),
                          (1, 1, pool_time_stride, 1), "VALID") / pool_time_length
    z = jnp.log(jnp.maximum(z, 1e-6))
    o = lax.conv_general_dilated(z, params["w_cls"], (1, 1), "VALID",
                                 dimension_numbers=dn)
    o = o + params["b_cls"][None, :, None, None]
    return o[:, :, 0, 0]


if __name__ == "__main__":
    # Small ShallowNetModule hyper-parameters (module __init__ signature).
    B = 16
    in_channels = 4
    n_classes = 3
    input_window_samples = 32
    n_filters_time = 8
    filter_time_length = 5
    pool_time_length = 8
    pool_time_stride = 4

    t_conv = input_window_samples - filter_time_length + 1
    n_pool = (t_conv - pool_time_length) // pool_time_stride + 1

    key = jax.random.PRNGKey(0)
    ks = jax.random.split(key, 10)
    F, K, C = n_filters_time, filter_time_length, in_channels

    params = {
        "w_time": 0.2 * jax.random.normal(ks[0], (F, 1, K, 1), jnp.float32),
        "b_time": 0.05 * jax.random.normal(ks[1], (F,), jnp.float32),
        "w_spat": 0.2 * jax.random.normal(ks[2], (F, F, 1, C), jnp.float32),
        "bn_gamma": 1.0 + 0.1 * jax.random.normal(ks[3], (F,), jnp.float32),
        "bn_beta": 0.1 * jax.random.normal(ks[4], (F,), jnp.float32),
        "bn_mean": 0.05 * jax.random.normal(ks[5], (F,), jnp.float32),
        "bn_var": 1.0 + 0.2 * jax.random.uniform(ks[6], (F,), jnp.float32),
        "w_cls": 0.2 * jax.random.normal(ks[7], (n_classes, F, n_pool, 1),
                                         jnp.float32),
        "b_cls": 0.05 * jax.random.normal(ks[8], (n_classes,), jnp.float32),
    }
    x = jax.random.normal(ks[9], (B, in_channels, input_window_samples),
                          jnp.float32)

    ref = jax.block_until_ready(
        shallownet_reference(x, params, pool_time_length=pool_time_length,
                             pool_time_stride=pool_time_stride))

    # Config 1: f32 compute, single grid step (v5e/v6e-style) -- tight check.
    kp32, meta32 = prepare_shallownet_params(
        params, input_window_samples=input_window_samples,
        pool_time_length=pool_time_length, pool_time_stride=pool_time_stride,
        compute_dtype=jnp.float32)
    out32 = jax.block_until_ready(shallownet_forward(x, kp32, meta32, bblk=None))
    assert out32.shape == (B, n_classes)
    assert jnp.allclose(out32, ref, rtol=1e-3, atol=1e-3), (out32, ref)

    # Config 2: bf16 streamed input/weight, two "parallel" grid steps
    # (v7x-style) -- loose check (bf16 input rounding only; f32 accumulation).
    kp16, meta16 = prepare_shallownet_params(
        params, input_window_samples=input_window_samples,
        pool_time_length=pool_time_length, pool_time_stride=pool_time_stride,
        compute_dtype=jnp.bfloat16)
    out16 = jax.block_until_ready(shallownet_forward(x, kp16, meta16, bblk=8))
    assert out16.shape == (B, n_classes)
    assert jnp.allclose(out16, ref, rtol=1e-1, atol=1e-1), (out16, ref)

    print("KERNEL_OK")
</pallas_src>

<mosaic_0001>
module attributes {stable_mosaic.version = 11 : i64} {
  func.func @_shallownet_kernel(%arg0: i32, %arg1: memref<16x4x32xf32, #tpu.memory_space<vmem>>, %arg2: memref<5x8x4xf32, #tpu.memory_space<vmem>>, %arg3: memref<1x8x1xf32, #tpu.memory_space<vmem>>, %arg4: memref<6x28xf32, #tpu.memory_space<vmem>>, %arg5: memref<6x8x128xf32, #tpu.memory_space<vmem>>, %arg6: memref<1x128xf32, #tpu.memory_space<vmem>>, %arg7: memref<16x128xf32, #tpu.memory_space<vmem>>) attributes {dimension_semantics = [#tpu.dimension_semantics<parallel>], iteration_bounds = array<i64: 1>, scalar_prefetch = 0 : i64, scratch_operands = 0 : i64, tpu.core_type = #tpu.core_type<tc>, window_params = [{transform_indices = @transform_0, window_bounds = array<i64: 16, 4, 32>}, {pipeline_mode = #tpu.pipeline_mode<synchronous>, transform_indices = @transform_1, window_bounds = array<i64: 5, 8, 4>}, {pipeline_mode = #tpu.pipeline_mode<synchronous>, transform_indices = @transform_2, window_bounds = array<i64: 1, 8, 1>}, {pipeline_mode = #tpu.pipeline_mode<synchronous>, transform_indices = @transform_3, window_bounds = array<i64: 6, 28>}, {pipeline_mode = #tpu.pipeline_mode<synchronous>, transform_indices = @transform_4, window_bounds = array<i64: 6, 8, 128>}, {pipeline_mode = #tpu.pipeline_mode<synchronous>, transform_indices = @transform_5, window_bounds = array<i64: 1, 128>}, {transform_indices = @transform_6, window_bounds = array<i64: 16, 128>}]} {
    %c0 = arith.constant 0 : index
    %c0_0 = arith.constant 0 : index
    %c0_1 = arith.constant 0 : index
    %0 = vector.load %arg1[%c0, %c0_0, %c0_1] : memref<16x4x32xf32, #tpu.memory_space<vmem>>, vector<16x4x32xf32>
    %c0_2 = arith.constant 0 : index
    %c0_3 = arith.constant 0 : index
    %c0_4 = arith.constant 0 : index
    %1 = vector.load %arg2[%c0_2, %c0_3, %c0_4] : memref<5x8x4xf32, #tpu.memory_space<vmem>>, vector<5x8x4xf32>
    %2 = vector.extract_strided_slice %1 {offsets = [0, 0, 0], sizes = [1, 8, 4], strides = [1, 1, 1]} : vector<5x8x4xf32> to vector<1x8x4xf32>
    %3 = vector.shape_cast %2 : vector<1x8x4xf32> to vector<8x4xf32>
    %4 = vector.shape_cast %3 : vector<8x4xf32> to vector<1x8x4xf32>
    %5 = vector.broadcast %4 : vector<1x8x4xf32> to vector<16x8x4xf32>
    %6 = vector.extract_strided_slice %0 {offsets = [0, 0, 0], sizes = [16, 4, 28], strides = [1, 1, 1]} : vector<16x4x32xf32> to vector<16x4x28xf32>
    "tpu.trace_start"() <{level = 10 : i32, message = "bfc,bct->bft"}> : () -> ()
    %cst = arith.constant dense<0.000000e+00> : vector<16x8x28xf32>
    %7 = tpu.matmul %5, %6, %cst {dimension_numbers = #tpu.dot_dimension_numbers<[2], [1], [1], [2], [0, 0, 0, 1, 1, 2], [0], [0]>} : vector<16x8x4xf32>, vector<16x4x28xf32>, vector<16x8x28xf32> -> vector<16x8x28xf32>
    "tpu.trace_stop"() : () -> ()
    %8 = vector.extract_strided_slice %1 {offsets = [1, 0, 0], sizes = [1, 8, 4], strides = [1, 1, 1]} : vector<5x8x4xf32> to vector<1x8x4xf32>
    %9 = vector.shape_cast %8 : vector<1x8x4xf32> to vector<8x4xf32>
    %10 = vector.shape_cast %9 : vector<8x4xf32> to vector<1x8x4xf32>
    %11 = vector.broadcast %10 : vector<1x8x4xf32> to vector<16x8x4xf32>
    %12 = vector.extract_strided_slice %0 {offsets = [0, 0, 1], sizes = [16, 4, 28], strides = [1, 1, 1]} : vector<16x4x32xf32> to vector<16x4x28xf32>
    "tpu.trace_start"() <{level = 10 : i32, message = "bfc,bct->bft"}> : () -> ()
    %cst_5 = arith.constant dense<0.000000e+00> : vector<16x8x28xf32>
    %13 = tpu.matmul %11, %12, %cst_5 {dimension_numbers = #tpu.dot_dimension_numbers<[2], [1], [1], [2], [0, 0, 0, 1, 1, 2], [0], [0]>} : vector<16x8x4xf32>, vector<16x4x28xf32>, vector<16x8x28xf32> -> vector<16x8x28xf32>
    "tpu.trace_stop"() : () -> ()
    %14 = arith.addf %7, %13 : vector<16x8x28xf32>
    %15 = vector.extract_strided_slice %1 {offsets = [2, 0, 0], sizes = [1, 8, 4], strides = [1, 1, 1]} : vector<5x8x4xf32> to vector<1x8x4xf32>
    %16 = vector.shape_cast %15 : vector<1x8x4xf32> to vector<8x4xf32>
    %17 = vector.shape_cast %16 : vector<8x4xf32> to vector<1x8x4xf32>
    %18 = vector.broadcast %17 : vector<1x8x4xf32> to vector<16x8x4xf32>
    %19 = vector.extract_strided_slice %0 {offsets = [0, 0, 2], sizes = [16, 4, 28], strides = [1, 1, 1]} : vector<16x4x32xf32> to vector<16x4x28xf32>
    "tpu.trace_start"() <{level = 10 : i32, message = "bfc,bct->bft"}> : () -> ()
    %cst_6 = arith.constant dense<0.000000e+00> : vector<16x8x28xf32>
    %20 = tpu.matmul %18, %19, %cst_6 {dimension_numbers = #tpu.dot_dimension_numbers<[2], [1], [1], [2], [0, 0, 0, 1, 1, 2], [0], [0]>} : vector<16x8x4xf32>, vector<16x4x28xf32>, vector<16x8x28xf32> -> vector<16x8x28xf32>
    "tpu.trace_stop"() : () -> ()
    %21 = arith.addf %14, %20 : vector<16x8x28xf32>
    %22 = vector.extract_strided_slice %1 {offsets = [3, 0, 0], sizes = [1, 8, 4], strides = [1, 1, 1]} : vector<5x8x4xf32> to vector<1x8x4xf32>
    %23 = vector.shape_cast %22 : vector<1x8x4xf32> to vector<8x4xf32>
    %24 = vector.shape_cast %23 : vector<8x4xf32> to vector<1x8x4xf32>
    %25 = vector.broadcast %24 : vector<1x8x4xf32> to vector<16x8x4xf32>
    %26 = vector.extract_strided_slice %0 {offsets = [0, 0, 3], sizes = [16, 4, 28], strides = [1, 1, 1]} : vector<16x4x32xf32> to vector<16x4x28xf32>
    "tpu.trace_start"() <{level = 10 : i32, message = "bfc,bct->bft"}> : () -> ()
    %cst_7 = arith.constant dense<0.000000e+00> : vector<16x8x28xf32>
    %27 = tpu.matmul %25, %26, %cst_7 {dimension_numbers = #tpu.dot_dimension_numbers<[2], [1], [1], [2], [0, 0, 0, 1, 1, 2], [0], [0]>} : vector<16x8x4xf32>, vector<16x4x28xf32>, vector<16x8x28xf32> -> vector<16x8x28xf32>
    "tpu.trace_stop"() : () -> ()
    %28 = arith.addf %21, %27 : vector<16x8x28xf32>
    %29 = vector.extract_strided_slice %1 {offsets = [4, 0, 0], sizes = [1, 8, 4], strides = [1, 1, 1]} : vector<5x8x4xf32> to vector<1x8x4xf32>
    %30 = vector.shape_cast %29 : vector<1x8x4xf32> to vector<8x4xf32>
    %31 = vector.shape_cast %30 : vector<8x4xf32> to vector<1x8x4xf32>
    %32 = vector.broadcast %31 : vector<1x8x4xf32> to vector<16x8x4xf32>
    %33 = vector.extract_strided_slice %0 {offsets = [0, 0, 4], sizes = [16, 4, 28], strides = [1, 1, 1]} : vector<16x4x32xf32> to vector<16x4x28xf32>
    "tpu.trace_start"() <{level = 10 : i32, message = "bfc,bct->bft"}> : () -> ()
    %cst_8 = arith.constant dense<0.000000e+00> : vector<16x8x28xf32>
    %34 = tpu.matmul %32, %33, %cst_8 {dimension_numbers = #tpu.dot_dimension_numbers<[2], [1], [1], [2], [0, 0, 0, 1, 1, 2], [0], [0]>} : vector<16x8x4xf32>, vector<16x4x28xf32>, vector<16x8x28xf32> -> vector<16x8x28xf32>
    "tpu.trace_stop"() : () -> ()
    %35 = arith.addf %28, %34 : vector<16x8x28xf32>
    %c0_9 = arith.constant 0 : index
    %c0_10 = arith.constant 0 : index
    %c0_11 = arith.constant 0 : index
    %36 = vector.load %arg3[%c0_9, %c0_10, %c0_11] : memref<1x8x1xf32, #tpu.memory_space<vmem>>, vector<1x8x1xf32>
    %37 = vector.broadcast %36 : vector<1x8x1xf32> to vector<16x8x28xf32>
    %38 = arith.addf %35, %37 : vector<16x8x28xf32>
    %39 = arith.mulf %38, %38 : vector<16x8x28xf32>
    %c0_12 = arith.constant 0 : index
    %c0_13 = arith.constant 0 : index
    %40 = vector.load %arg4[%c0_12, %c0_13] : memref<6x28xf32, #tpu.memory_space<vmem>>, vector<6x28xf32>
    %41 = vector.shape_cast %40 : vector<6x28xf32> to vector<1x6x28xf32>
    %42 = vector.broadcast %41 : vector<1x6x28xf32> to vector<16x6x28xf32>
    "tpu.trace_start"() <{level = 10 : i32, message = "bpt,bft->bpf"}> : () -> ()
    %cst_14 = arith.constant dense<0.000000e+00> : vector<16x6x8xf32>
    %43 = tpu.matmul %42, %39, %cst_14 {dimension_numbers = #tpu.dot_dimension_numbers<[2], [2], [1], [1], [0, 0, 0, 1, 1, 1], [0], [0]>} : vector<16x6x28xf32>, vector<16x8x28xf32>, vector<16x6x8xf32> -> vector<16x6x8xf32>
    "tpu.trace_stop"() : () -> ()
    %cst_15 = arith.constant 9.99999997E-7 : f32
    %44 = vector.broadcast %cst_15 : f32 to vector<16x6x8xf32>
    %45 = arith.maximumf %43, %44 : vector<16x6x8xf32>
    %46 = math.log %45 : vector<16x6x8xf32>
    %47 = vector.extract_strided_slice %46 {offsets = [0, 0, 0], sizes = [16, 1, 8], strides = [1, 1, 1]} : vector<16x6x8xf32> to vector<16x1x8xf32>
    %48 = vector.shape_cast %47 : vector<16x1x8xf32> to vector<16x8xf32>
    %c0_16 = arith.constant 0 : index
    %c0_17 = arith.constant 0 : index
    %c0_18 = arith.constant 0 : index
    %49 = vector.load %arg5[%c0_16, %c0_17, %c0_18] : memref<6x8x128xf32, #tpu.memory_space<vmem>>, vector<1x8x128xf32>
    %50 = vector.shape_cast %49 : vector<1x8x128xf32> to vector<8x128xf32>
    %cst_19 = arith.constant dense<0.000000e+00> : vector<16x128xf32>
    %51 = tpu.matmul %48, %50, %cst_19 {dimension_numbers = #tpu.dot_dimension_numbers<[1], [0], [0], [1], [0, 0, 1, 1], [], []>} : vector<16x8xf32>, vector<8x128xf32>, vector<16x128xf32> -> vector<16x128xf32>
    %52 = vector.extract_strided_slice %46 {offsets = [0, 1, 0], sizes = [16, 1, 8], strides = [1, 1, 1]} : vector<16x6x8xf32> to vector<16x1x8xf32>
    %53 = vector.shape_cast %52 : vector<16x1x8xf32> to vector<16x8xf32>
    %c1 = arith.constant 1 : index
    %c0_20 = arith.constant 0 : index
    %c0_21 = arith.constant 0 : index
    %54 = vector.load %arg5[%c1, %c0_20, %c0_21] : memref<6x8x128xf32, #tpu.memory_space<vmem>>, vector<1x8x128xf32>
    %55 = vector.shape_cast %54 : vector<1x8x128xf32> to vector<8x128xf32>
    %cst_22 = arith.constant dense<0.000000e+00> : vector<16x128xf32>
    %56 = tpu.matmul %53, %55, %cst_22 {dimension_numbers = #tpu.dot_dimension_numbers<[1], [0], [0], [1], [0, 0, 1, 1], [], []>} : vector<16x8xf32>, vector<8x128xf32>, vector<16x128xf32> -> vector<16x128xf32>
    %57 = vector.extract_strided_slice %46 {offsets = [0, 2, 0], sizes = [16, 1, 8], strides = [1, 1, 1]} : vector<16x6x8xf32> to vector<16x1x8xf32>
    %58 = vector.shape_cast %57 : vector<16x1x8xf32> to vector<16x8xf32>
    %c2 = arith.constant 2 : index
    %c0_23 = arith.constant 0 : index
    %c0_24 = arith.constant 0 : index
    %59 = vector.load %arg5[%c2, %c0_23, %c0_24] : memref<6x8x128xf32, #tpu.memory_space<vmem>>, vector<1x8x128xf32>
    %60 = vector.shape_cast %59 : vector<1x8x128xf32> to vector<8x128xf32>
    %cst_25 = arith.constant dense<0.000000e+00> : vector<16x128xf32>
    %61 = tpu.matmul %58, %60, %cst_25 {dimension_numbers = #tpu.dot_dimension_numbers<[1], [0], [0], [1], [0, 0, 1, 1], [], []>} : vector<16x8xf32>, vector<8x128xf32>, vector<16x128xf32> -> vector<16x128xf32>
    %62 = vector.extract_strided_slice %46 {offsets = [0, 3, 0], sizes = [16, 1, 8], strides = [1, 1, 1]} : vector<16x6x8xf32> to vector<16x1x8xf32>
    %63 = vector.shape_cast %62 : vector<16x1x8xf32> to vector<16x8xf32>
    %c3 = arith.constant 3 : index
    %c0_26 = arith.constant 0 : index
    %c0_27 = arith.constant 0 : index
    %64 = vector.load %arg5[%c3, %c0_26, %c0_27] : memref<6x8x128xf32, #tpu.memory_space<vmem>>, vector<1x8x128xf32>
    %65 = vector.shape_cast %64 : vector<1x8x128xf32> to vector<8x128xf32>
    %cst_28 = arith.constant dense<0.000000e+00> : vector<16x128xf32>
    %66 = tpu.matmul %63, %65, %cst_28 {dimension_numbers = #tpu.dot_dimension_numbers<[1], [0], [0], [1], [0, 0, 1, 1], [], []>} : vector<16x8xf32>, vector<8x128xf32>, vector<16x128xf32> -> vector<16x128xf32>
    %67 = vector.extract_strided_slice %46 {offsets = [0, 4, 0], sizes = [16, 1, 8], strides = [1, 1, 1]} : vector<16x6x8xf32> to vector<16x1x8xf32>
    %68 = vector.shape_cast %67 : vector<16x1x8xf32> to vector<16x8xf32>
    %c4 = arith.constant 4 : index
    %c0_29 = arith.constant 0 : index
    %c0_30 = arith.constant 0 : index
    %69 = vector.load %arg5[%c4, %c0_29, %c0_30] : memref<6x8x128xf32, #tpu.memory_space<vmem>>, vector<1x8x128xf32>
    %70 = vector.shape_cast %69 : vector<1x8x128xf32> to vector<8x128xf32>
    %cst_31 = arith.constant dense<0.000000e+00> : vector<16x128xf32>
    %71 = tpu.matmul %68, %70, %cst_31 {dimension_numbers = #tpu.dot_dimension_numbers<[1], [0], [0], [1], [0, 0, 1, 1], [], []>} : vector<16x8xf32>, vector<8x128xf32>, vector<16x128xf32> -> vector<16x128xf32>
    %72 = vector.extract_strided_slice %46 {offsets = [0, 5, 0], sizes = [16, 1, 8], strides = [1, 1, 1]} : vector<16x6x8xf32> to vector<16x1x8xf32>
    %73 = vector.shape_cast %72 : vector<16x1x8xf32> to vector<16x8xf32>
    %c5 = arith.constant 5 : index
    %c0_32 = arith.constant 0 : index
    %c0_33 = arith.constant 0 : index
    %74 = vector.load %arg5[%c5, %c0_32, %c0_33] : memref<6x8x128xf32, #tpu.memory_space<vmem>>, vector<1x8x128xf32>
    %75 = vector.shape_cast %74 : vector<1x8x128xf32> to vector<8x128xf32>
    %cst_34 = arith.constant dense<0.000000e+00> : vector<16x128xf32>
    %76 = tpu.matmul %73, %75, %cst_34 {dimension_numbers = #tpu.dot_dimension_numbers<[1], [0], [0], [1], [0, 0, 1, 1], [], []>} : vector<16x8xf32>, vector<8x128xf32>, vector<16x128xf32> -> vector<16x128xf32>
    %77 = arith.addf %51, %56 : vector<16x128xf32>
    %78 = arith.addf %61, %66 : vector<16x128xf32>
    %79 = arith.addf %71, %76 : vector<16x128xf32>
    %80 = arith.addf %77, %78 : vector<16x128xf32>
    %81 = arith.addf %80, %79 : vector<16x128xf32>
    %c0_35 = arith.constant 0 : index
    %c0_36 = arith.constant 0 : index
    %82 = vector.load %arg6[%c0_35, %c0_36] : memref<1x128xf32, #tpu.memory_space<vmem>>, vector<1x128xf32>
    %83 = vector.broadcast %82 : vector<1x128xf32> to vector<16x128xf32>
    %84 = arith.addf %81, %83 : vector<16x128xf32>
    %c0_37 = arith.constant 0 : index
    %c0_38 = arith.constant 0 : index
    %85 = vector.load %arg7[%c0_37, %c0_38] : memref<16x128xf32, #tpu.memory_space<vmem>>, vector<16x128xf32>
    tpu.vector_store %arg7[%c0_37, %c0_38], %84 {strides = array<i32>} : memref<16x128xf32, #tpu.memory_space<vmem>>, vector<16x128xf32>,
    return
  }
  func.func @transform_0(%arg0: i32) -> (i32, i32, i32) {
    %c0_i32 = arith.constant 0 : i32
    %c0_i32_0 = arith.constant 0 : i32
    %c0_i32_1 = arith.constant 0 : i32
    return %arg0, %c0_i32, %c0_i32_0 : i32, i32, i32
  }
  func.func @transform_1(%arg0: i32) -> (i32, i32, i32) {
    %c0_i32 = arith.constant 0 : i32
    %c0_i32_0 = arith.constant 0 : i32
    %c0_i32_1 = arith.constant 0 : i32
    %c0_i32_2 = arith.constant 0 : i32
    return %c0_i32, %c0_i32_0, %c0_i32_1 : i32, i32, i32
  }
  func.func @transform_2(%arg0: i32) -> (i32, i32, i32) {
    %c0_i32 = arith.constant 0 : i32
    %c0_i32_0 = arith.constant 0 : i32
    %c0_i32_1 = arith.constant 0 : i32
    %c0_i32_2 = arith.constant 0 : i32
    return %c0_i32, %c0_i32_0, %c0_i32_1 : i32, i32, i32
  }
  func.func @transform_3(%arg0: i32) -> (i32, i32) {
    %c0_i32 = arith.constant 0 : i32
    %c0_i32_0 = arith.constant 0 : i32
    %c0_i32_1 = arith.constant 0 : i32
    return %c0_i32, %c0_i32_0 : i32, i32
  }
  func.func @transform_4(%arg0: i32) -> (i32, i32, i32) {
    %c0_i32 = arith.constant 0 : i32
    %c0_i32_0 = arith.constant 0 : i32
    %c0_i32_1 = arith.constant 0 : i32
    %c0_i32_2 = arith.constant 0 : i32
    return %c0_i32, %c0_i32_0, %c0_i32_1 : i32, i32, i32
  }
  func.func @transform_5(%arg0: i32) -> (i32, i32) {
    %c0_i32 = arith.constant 0 : i32
    %c0_i32_0 = arith.constant 0 : i32
    %c0_i32_1 = arith.constant 0 : i32
    return %c0_i32, %c0_i32_0 : i32, i32
  }
  func.func @transform_6(%arg0: i32) -> (i32, i32) {
    %c0_i32 = arith.constant 0 : i32
    %c0_i32_0 = arith.constant 0 : i32
    return %arg0, %c0_i32 : i32, i32
  }
}

</mosaic_0001>

<llo_original>
// kernel: tpu_custom_call.1
$region0: #{tpu_custom_call.1}
  #allocation0 [shape = 'u32[]', space=smem, size = 0x4, offset = 0x4, fixed_abs, tag = 'smem constant byte address 0x4 - core index']
  #allocation1 [shape = 'u32[144,128]{1,0:T(1,128)}', space=vmem, size = 0x12000, scoped, tag = 'internal scratch']
  %s0 = inlined_call_operand.vmem [shape: f32[16,4,32], index: 0, kind: input, shape index: {}]
  %s1 = inlined_call_operand.vmem [shape: f32[5,8,4], index: 1, kind: input, shape index: {}]
  %s2 = inlined_call_operand.vmem [shape: f32[1,8,1], index: 2, kind: input, shape index: {}]
  %s3 = inlined_call_operand.vmem [shape: f32[6,28], index: 3, kind: input, shape index: {}]
  %s4 = inlined_call_operand.hbm [shape: f32[6,8,128], index: 4, kind: input, shape index: {}]
  %s5 = inlined_call_operand.vmem [shape: f32[1,128], index: 5, kind: input, shape index: {}]
  %s6 = inlined_call_operand.hbm [shape: f32[16,128], index: 6, kind: output, shape index: {}]
  %s7 = sld [smem:[#allocation0]]
  $region38: #{tpu_custom_call.1} parent=0
    _
  %s9 = ssub.s32 1, %s7
  %s10 = scalar_select 0, %s9, %s7
  $region1: #{tpu_custom_call.1} parent=0
    #allocation2 [shape = 'u8[24576]{0}', space=vmem, size = 0x6000, scoped, tag = 'input window, operand 4, single buffered']
    #allocation3 [shape = 's32[1]{0}', space=sflag, size = 0x4, scoped, tag = 'scoped memory for tpu_custom_call.1']
    #allocation4 [shape = 's32[1]{0}', space=sflag, size = 0x4, scoped, tag = 'scoped memory for tpu_custom_call.1']
    #allocation5 [shape = 'u8[8192]{0}', space=vmem, size = 0x2000, scoped, tag = 'output window, operand 0, single buffered']
    %11 = vsyncpa [#allocation3], 0
    %12 = vsyncpa [#allocation4], 0
    // Predicated region
    $region2: #{tpu_custom_call.1} parent=1 // pred_check
      _
    $region3: #{tpu_custom_call.1} parent=1 // pred_check_branch
      %14 = sbr.rel (0) target = $region5
    $region4: #{tpu_custom_call.1} parent=1 // pred_region
      _
    $region5: #{tpu_custom_call.1} parent=1 // pred_fallthru
      _
    // Predicated region
    $region6: #{tpu_custom_call.1} parent=1 // pred_check
      _
    $region7: #{tpu_custom_call.1} parent=1 // pred_check_branch
      %16 = sbr.rel (0) target = $region9
    $region8: #{tpu_custom_call.1} parent=1 // pred_region
      _
    $region9: #{tpu_custom_call.1} parent=1 // pred_fallthru
      _
    // Predicated region
    $region10: #{tpu_custom_call.1} parent=1 // pred_check
      _
    $region11: #{tpu_custom_call.1} parent=1 // pred_check_branch
      %18 = sbr.rel (0) target = $region13
    $region12: #{tpu_custom_call.1} parent=1 // pred_region
      _
    $region13: #{tpu_custom_call.1} parent=1 // pred_fallthru
      _
    // Predicated region
    $region14: #{tpu_custom_call.1} parent=1 // pred_check
      _
    $region15: #{tpu_custom_call.1} parent=1 // pred_check_branch
      %20 = sbr.rel (0) target = $region17
    $region16: #{tpu_custom_call.1} parent=1 // pred_region
      _
    $region17: #{tpu_custom_call.1} parent=1 // pred_fallthru
      _
    // Predicated region
    $region18: #{tpu_custom_call.1} parent=1 // pred_check
      _
    $region19: #{tpu_custom_call.1} parent=1 // pred_check_branch
      %22 = sbr.rel (0) target = $region21
    $region20: #{tpu_custom_call.1} parent=1 // pred_region
      %s24 = ssub.s32 768, 768
      %25 = vsyncadd [#allocation3], %s24
      %s26 = sshll.u32 [#allocation2], 4
      %s27 = int_to_ptr.vmem [resolvable:$true] %s26
      %32 = dma.hbm_to_vmem [thread:$0]  %s4, 768, %s27, [#allocation3], 128, 128, 8
    $region21: #{tpu_custom_call.1} parent=1 // pred_fallthru
      _
    // Predicated region
    $region22: #{tpu_custom_call.1} parent=1 // pred_check
      _
    $region23: #{tpu_custom_call.1} parent=1 // pred_check_branch
      %34 = sbr.rel (0) target = $region25
    $region24: #{tpu_custom_call.1} parent=1 // pred_region
      _
    $region25: #{tpu_custom_call.1} parent=1 // pred_fallthru
      _
    // Predicated region
    $region26: #{tpu_custom_call.1} parent=1 // pred_check
      _
    $region27: #{tpu_custom_call.1} parent=1 // pred_check_branch
      %36 = sbr.rel (0) target = $region29
    $region28: #{tpu_custom_call.1} parent=1 // pred_region
      %37 = dma.done [#allocation3], 768
    $region29: #{tpu_custom_call.1} parent=1 // pred_fallthru
      _
    %v38 = vld [vmem:[%s0] sm:$0xf]
    %v39 = vld [vmem:[%s0 + $0x4] sm:$0xf]
    %v40 = vld [vmem:[%s0 + $0x8] sm:$0xf]
    %v41 = vld [vmem:[%s0 + $0xc] sm:$0xf]
    %v42 = vld [vmem:[%s0 + $0x10] sm:$0xf]
    %v43 = vld [vmem:[%s0 + $0x14] sm:$0xf]
    %v44 = vld [vmem:[%s0 + $0x18] sm:$0xf]
    %v45 = vld [vmem:[%s0 + $0x1c] sm:$0xf]
    %v46 = vld [vmem:[%s0 + $0x20] sm:$0xf]
    %v47 = vld [vmem:[%s0 + $0x24] sm:$0xf]
    %v48 = vld [vmem:[%s0 + $0x28] sm:$0xf]
    %v49 = vld [vmem:[%s0 + $0x2c] sm:$0xf]
    %v50 = vld [vmem:[%s0 + $0x30] sm:$0xf]
    %v51 = vld [vmem:[%s0 + $0x34] sm:$0xf]
    %v52 = vld [vmem:[%s0 + $0x38] sm:$0xf]
    %v53 = vld [vmem:[%s0 + $0x3c] sm:$0xf]
    %v54 = vld [vmem:[%s1] sm:$0xff]
    %v55 = vld [vmem:[%s1 + $0x8] sm:$0xff]
    %v56 = vld [vmem:[%s1 + $0x10] sm:$0xff]
    %v57 = vld [vmem:[%s1 + $0x18] sm:$0xff]
    %v58 = vld [vmem:[%s1 + $0x20] sm:$0xff]
    %60 = vrot.lane.b32.xlu0 %v38, 127
    %v61 = vpop.permute.xlu0 %60
    %vm62 = vcmask 31744
    %v64 = vsel %vm62, %v55, 0
    %vm66 = vcmask 1043456
    %v67 = vsel %vm66, %v61, 0
    %69 = vmatprep.subr.mxu0 0.0
    %70 = vmatpush1.msra.mxu0 0.0
    %71 = vmatprep.subr.mxu0 0.0
    %72 = vmatpush1.msra.mxu0 0.0
    %73 = vmatprep.subr.mxu0 0.0
    %74 = vmatpush1.msra.mxu0 0.0
    %75 = vmatprep.subr.mxu0 0.0
    %76 = vmatpush1.msra.mxu0 0.0
    %77 = vmatprep.subr.mxu0 0.0
    %78 = vmatpush1.msra.mxu0 0.0
    %79 = vmatprep.subr.mxu0 0.0
    %80 = vmatpush1.msra.mxu0 0.0
    %81 = vmatprep.subr.mxu0 0.0
    %82 = vmatpush1.msra.mxu0 0.0
    %83 = vmatprep.subr.mxu0 0.0
    %84 = vmatpush1.msra.mxu0 0.0
    %85 = vmatprep.subr.mxu0 0.0
    %86 = vmatpush1.msra.mxu0 0.0
    %87 = vmatprep.subr.mxu0 0.0
    %88 = vmatpush1.msra.mxu0 0.0
    %89 = vmatprep.subr.mxu0 0.0
    %90 = vmatpush1.msra.mxu0 0.0
    %91 = vmatprep.subr.mxu0 0.0
    %92 = vmatpush1.msra.mxu0 0.0
    %93 = vmatprep.subr.mxu0 0.0
    %94 = vmatpush1.msra.mxu0 0.0
    %95 = vmatprep.subr.mxu0 0.0
    %96 = vmatpush1.msra.mxu0 0.0
    %97 = vmatprep.subr.mxu0 0.0
    %98 = vmatpush1.msra.mxu0 0.0
    %99 = vmatprep.subr.mxu0 0.0
    %100 = vmatpush1.msra.mxu0 %v67
    %101 = vmatprep.subr.mxu0 0.0
    %102 = vmatpush2.msra.mxu0 0.0
    %103 = vmatprep.subr.mxu0 0.0
    %104 = vmatpush2.msra.mxu0 0.0
    %105 = vmatprep.subr.mxu0 0.0
    %106 = vmatpush2.msra.mxu0 0.0
    %107 = vmatprep.subr.mxu0 0.0
    %108 = vmatpush2.msra.mxu0 0.0
    %109 = vmatprep.subr.mxu0 0.0
    %110 = vmatpush2.msra.mxu0 0.0
    %111 = vmatprep.subr.mxu0 0.0
    %112 = vmatpush2.msra.mxu0 0.0
    %113 = vmatprep.subr.mxu0 0.0
    %114 = vmatpush2.msra.mxu0 0.0
    %115 = vmatprep.subr.mxu0 0.0
    %116 = vmatpush2.msra.mxu0 0.0
    %117 = vmatprep.subr.mxu0 0.0
    %118 = vmatpush2.msra.mxu0 0.0
    %119 = vmatprep.subr.mxu0 0.0
    %120 = vmatpush2.msra.mxu0 0.0
    %121 = vmatprep.subr.mxu0 0.0
    %122 = vmatpush2.msra.mxu0 0.0
    %123 = vmatprep.subr.mxu0 0.0
    %124 = vmatpush2.msra.mxu0 0.0
    %125 = vmatprep.subr.mxu0 0.0
    %126 = vmatpush2.msra.mxu0 0.0
    %127 = vmatprep.subr.mxu0 0.0
    %128 = vmatpush2.msra.mxu0 0.0
    %129 = vmatprep.subr.mxu0 0.0
    %130 = vmatpush2.msra.mxu0 0.0
    %131 = vmatprep.subr.mxu0 0.0
    %132 = vmatpush2.msra.mxu0 0.0
    %133 = vmatprep.mubr.f32.mxu0 0.0
    %134 = vmatmul.mubr.f32.gmra.mxu0 %v64
    %v135 = vpop.f32.mrf.mxu0
    %v136 = vadd.f32 0.0, %v135
    %v137 = vpop.f32.mrf.mxu0
    %138 = vdwg.mxu0
    %140 = vrot.lane.b32.xlu0 %v39, 127
    %v141 = vpop.permute.xlu0 %140
    %v142 = vsel %vm66, %v141, 0
    %144 = vmatprep.subr.mxu0 0.0
    %145 = vmatpush1.msra.mxu0 0.0
    %146 = vmatprep.subr.mxu0 0.0
    %147 = vmatpush1.msra.mxu0 0.0
    %148 = vmatprep.subr.mxu0 0.0
    %149 = vmatpush1.msra.mxu0 0.0
    %150 = vmatprep.subr.mxu0 0.0
    %151 = vmatpush1.msra.mxu0 0.0
    %152 = vmatprep.subr.mxu0 0.0
    %153 = vmatpush1.msra.mxu0 0.0
    %154 = vmatprep.subr.mxu0 0.0
    %155 = vmatpush1.msra.mxu0 0.0
    %156 = vmatprep.subr.mxu0 0.0
    %157 = vmatpush1.msra.mxu0 0.0
    %158 = vmatprep.subr.mxu0 0.0
    %159 = vmatpush1.msra.mxu0 0.0
    %160 = vmatprep.subr.mxu0 0.0
    %161 = vmatpush1.msra.mxu0 0.0
    %162 = vmatprep.subr.mxu0 0.0
    %163 = vmatpush1.msra.mxu0 0.0
    %164 = vmatprep.subr.mxu0 0.0
    %165 = vmatpush1.msra.mxu0 0.0
    %166 = vmatprep.subr.mxu0 0.0
    %167 = vmatpush1.msra.mxu0 0.0
    %168 = vmatprep.subr.mxu0 0.0
    %169 = vmatpush1.msra.mxu0 0.0
    %170 = vmatprep.subr.mxu0 0.0
    %171 = vmatpush1.msra.mxu0 0.0
    %172 = vmatprep.subr.mxu0 0.0
    %173 = vmatpush1.msra.mxu0 0.0
    %174 = vmatprep.subr.mxu0 0.0
    %175 = vmatpush1.msra.mxu0 %v142
    %176 = vmatprep.subr.mxu0 0.0
    %177 = vmatpush2.msra.mxu0 0.0
    %178 = vmatprep.subr.mxu0 0.0
    %179 = vmatpush2.msra.mxu0 0.0
    %180 = vmatprep.subr.mxu0 0.0
    %181 = vmatpush2.msra.mxu0 0.0
    %182 = vmatprep.subr.mxu0 0.0
    %183 = vmatpush2.msra.mxu0 0.0
    %184 = vmatprep.subr.mxu0 0.0
    %185 = vmatpush2.msra.mxu0 0.0
    %186 = vmatprep.subr.mxu0 0.0
    %187 = vmatpush2.msra.mxu0 0.0
    %188 = vmatprep.subr.mxu0 0.0
    %189 = vmatpush2.msra.mxu0 0.0
    %190 = vmatprep.subr.mxu0 0.0
    %191 = vmatpush2.msra.mxu0 0.0
    %192 = vmatprep.subr.mxu0 0.0
    %193 = vmatpush2.msra.mxu0 0.0
    %194 = vmatprep.subr.mxu0 0.0
    %195 = vmatpush2.msra.mxu0 0.0
    %196 = vmatprep.subr.mxu0 0.0
    %197 = vmatpush2.msra.mxu0 0.0
    %198 = vmatprep.subr.mxu0 0.0
    %199 = vmatpush2.msra.mxu0 0.0
    %200 = vmatprep.subr.mxu0 0.0
    %201 = vmatpush2.msra.mxu0 0.0
    %202 = vmatprep.subr.mxu0 0.0
    %203 = vmatpush2.msra.mxu0 0.0
    %204 = vmatprep.subr.mxu0 0.0
    %205 = vmatpush2.msra.mxu0 0.0
    %206 = vmatprep.subr.mxu0 0.0
    %207 = vmatpush2.msra.mxu0 0.0
    %208 = vmatprep.mubr.f32.mxu0 0.0
    %209 = vmatmul.mubr.f32.gmra.mxu0 %v64
    %v210 = vpop.f32.mrf.mxu0
    %v211 = vadd.f32 0.0, %v210
    %v212 = vpop.f32.mrf.mxu0
    %213 = vdwg.mxu0
    %215 = vrot.lane.b32.xlu0 %v40, 127
    %v216 = vpop.permute.xlu0 %215
    %v217 = vsel %vm66, %v216, 0
    %219 = vmatprep.subr.mxu0 0.0
    %220 = vmatpush1.msra.mxu0 0.0
    %221 = vmatprep.subr.mxu0 0.0
    %222 = vmatpush1.msra.mxu0 0.0
    %223 = vmatprep.subr.mxu0 0.0
    %224 = vmatpush1.msra.mxu0 0.0
    %225 = vmatprep.subr.mxu0 0.0
    %226 = vmatpush1.msra.mxu0 0.0
    %227 = vmatprep.subr.mxu0 0.0
    %228 = vmatpush1.msra.mxu0 0.0
    %229 = vmatprep.subr.mxu0 0.0
    %230 = vmatpush1.msra.mxu0 0.0
    %231 = vmatprep.subr.mxu0 0.0
    %232 = vmatpush1.msra.mxu0 0.0
    %233 = vmatprep.subr.mxu0 0.0
    %234 = vmatpush1.msra.mxu0 0.0
    %235 = vmatprep.subr.mxu0 0.0
    %236 = vmatpush1.msra.mxu0 0.0
    %237 = vmatprep.subr.mxu0 0.0
    %238 = vmatpush1.msra.mxu0 0.0
    %239 = vmatprep.subr.mxu0 0.0
    %240 = vmatpush1.msra.mxu0 0.0
    %241 = vmatprep.subr.mxu0 0.0
    %242 = vmatpush1.msra.mxu0 0.0
    %243 = vmatprep.subr.mxu0 0.0
    %244 = vmatpush1.msra.mxu0 0.0
    %245 = vmatprep.subr.mxu0 0.0
    %246 = vmatpush1.msra.mxu0 0.0
    %247 = vmatprep.subr.mxu0 0.0
    %248 = vmatpush1.msra.mxu0 0.0
    %249 = vmatprep.subr.mxu0 0.0
    %250 = vmatpush1.msra.mxu0 %v217
    %251 = vmatprep.subr.mxu0 0.0
    %252 = vmatpush2.msra.mxu0 0.0
    %253 = vmatprep.subr.mxu0 0.0
    %254 = vmatpush2.msra.mxu0 0.0
    %255 = vmatprep.subr.mxu0 0.0
    %256 = vmatpush2.msra.mxu0 0.0
    %257 = vmatprep.subr.mxu0 0.0
    %258 = vmatpush2.msra.mxu0 0.0
    %259 = vmatprep.subr.mxu0 0.0
    %260 = vmatpush2.msra.mxu0 0.0
    %261 = vmatprep.subr.mxu0 0.0
    %262 = vmatpush2.msra.mxu0 0.0
    %263 = vmatprep.subr.mxu0 0.0
    %264 = vmatpush2.msra.mxu0 0.0
    %265 = vmatprep.subr.mxu0 0.0
    %266 = vmatpush2.msra.mxu0 0.0
    %267 = vmatprep.subr.mxu0 0.0
    %268 = vmatpush2.msra.mxu0 0.0
    %269 = vmatprep.subr.mxu0 0.0
    %270 = vmatpush2.msra.mxu0 0.0
    %271 = vmatprep.subr.mxu0 0.0
    %272 = vmatpush2.msra.mxu0 0.0
    %273 = vmatprep.subr.mxu0 0.0
    %274 = vmatpush2.msra.mxu0 0.0
    %275 = vmatprep.subr.mxu0 0.0
    %276 = vmatpush2.msra.mxu0 0.0
    %277 = vmatprep.subr.mxu0 0.0
    %278 = vmatpush2.msra.mxu0 0.0
    %279 = vmatprep.subr.mxu0 0.0
    %280 = vmatpush2.msra.mxu0 0.0
    %281 = vmatprep.subr.mxu0 0.0
    %282 = vmatpush2.msra.mxu0 0.0
    %283 = vmatprep.mubr.f32.mxu0 0.0
    %284 = vmatmul.mubr.f32.gmra.mxu0 %v64
    %v285 = vpop.f32.mrf.mxu0
    %v286 = vadd.f32 0.0, %v285
    %v287 = vpop.f32.mrf.mxu0
    %288 = vdwg.mxu0
    %290 = vrot.lane.b32.xlu0 %v41, 127
    %v291 = vpop.permute.xlu0 %290
    %v292 = vsel %vm66, %v291, 0
    %294 = vmatprep.subr.mxu0 0.0
    %295 = vmatpush1.msra.mxu0 0.0
    %296 = vmatprep.subr.mxu0 0.0
    %297 = vmatpush1.msra.mxu0 0.0
    %298 = vmatprep.subr.mxu0 0.0
    %299 = vmatpush1.msra.mxu0 0.0
    %300 = vmatprep.subr.mxu0 0.0
    %301 = vmatpush1.msra.mxu0 0.0
    %302 = vmatprep.subr.mxu0 0.0
    %303 = vmatpush1.msra.mxu0 0.0
    %304 = vmatprep.subr.mxu0 0.0
    %305 = vmatpush1.msra.mxu0 0.0
    %306 = vmatprep.subr.mxu0 0.0
    %307 = vmatpush1.msra.mxu0 0.0
    %308 = vmatprep.subr.mxu0 0.0
    %309 = vmatpush1.msra.mxu0 0.0
    %310 = vmatprep.subr.mxu0 0.0
    %311 = vmatpush1.msra.mxu0 0.0
    %312 = vmatprep.subr.mxu0 0.0
    %313 = vmatpush1.msra.mxu0 0.0
    %314 = vmatprep.subr.mxu0 0.0
    %315 = vmatpush1.msra.mxu0 0.0
    %316 = vmatprep.subr.mxu0 0.0
    %317 = vmatpush1.msra.mxu0 0.0
    %318 = vmatprep.subr.mxu0 0.0
    %319 = vmatpush1.msra.mxu0 0.0
    %320 = vmatprep.subr.mxu0 0.0
    %321 = vmatpush1.msra.mxu0 0.0
    %322 = vmatprep.subr.mxu0 0.0
    %323 = vmatpush1.msra.mxu0 0.0
    %324 = vmatprep.subr.mxu0 0.0
    %325 = vmatpush1.msra.mxu0 %v292
    %326 = vmatprep.subr.mxu0 0.0
    %327 = vmatpush2.msra.mxu0 0.0
    %328 = vmatprep.subr.mxu0 0.0
    %329 = vmatpush2.msra.mxu0 0.0
    %330 = vmatprep.subr.mxu0 0.0
    %331 = vmatpush2.msra.mxu0 0.0
    %332 = vmatprep.subr.mxu0 0.0
    %333 = vmatpush2.msra.mxu0 0.0
    %334 = vmatprep.subr.mxu0 0.0
    %335 = vmatpush2.msra.mxu0 0.0
    %336 = vmatprep.subr.mxu0 0.0
    %337 = vmatpush2.msra.mxu0 0.0
    %338 = vmatprep.subr.mxu0 0.0
    %339 = vmatpush2.msra.mxu0 0.0
    %340 = vmatprep.subr.mxu0 0.0
    %341 = vmatpush2.msra.mxu0 0.0
    %342 = vmatprep.subr.mxu0 0.0
    %343 = vmatpush2.msra.mxu0 0.0
    %344 = vmatprep.subr.mxu0 0.0
    %345 = vmatpush2.msra.mxu0 0.0
    %346 = vmatprep.subr.mxu0 0.0
    %347 = vmatpush2.msra.mxu0 0.0
    %348 = vmatprep.subr.mxu0 0.0
    %349 = vmatpush2.msra.mxu0 0.0
    %350 = vmatprep.subr.mxu0 0.0
    %351 = vmatpush2.msra.mxu0 0.0
    %352 = vmatprep.subr.mxu0 0.0
    %353 = vmatpush2.msra.mxu0 0.0
    %354 = vmatprep.subr.mxu0 0.0
    %355 = vmatpush2.msra.mxu0 0.0
    %356 = vmatprep.subr.mxu0 0.0
    %357 = vmatpush2.msra.mxu0 0.0
    %358 = vmatprep.mubr.f32.mxu0 0.0
    %359 = vmatmul.mubr.f32.gmra.mxu0 %v64
    %v360 = vpop.f32.mrf.mxu0
    %v361 = vadd.f32 0.0, %v360
    %v362 = vpop.f32.mrf.mxu0
    %363 = vdwg.mxu0
    %365 = vrot.lane.b32.xlu0 %v42, 127
    %v366 = vpop.permute.xlu0 %365
    %v367 = vsel %vm66, %v366, 0
    %369 = vmatprep.subr.mxu0 0.0
    %370 = vmatpush1.msra.mxu0 0.0
    %371 = vmatprep.subr.mxu0 0.0
    %372 = vmatpush1.msra.mxu0 0.0
    %373 = vmatprep.subr.mxu0 0.0
    %374 = vmatpush1.msra.mxu0 0.0
    %375 = vmatprep.subr.mxu0 0.0
    %376 = vmatpush1.msra.mxu0 0.0
    %377 = vmatprep.subr.mxu0 0.0
    %378 = vmatpush1.msra.mxu0 0.0
    %379 = vmatprep.subr.mxu0 0.0
    %380 = vmatpush1.msra.mxu0 0.0
    %381 = vmatprep.subr.mxu0 0.0
    %382 = vmatpush1.msra.mxu0 0.0
    %383 = vmatprep.subr.mxu0 0.0
    %384 = vmatpush1.msra.mxu0 0.0
    %385 = vmatprep.subr.mxu0 0.0
    %386 = vmatpush1.msra.mxu0 0.0
    %387 = vmatprep.subr.mxu0 0.0
    %388 = vmatpush1.msra.mxu0 0.0
    %389 = vmatprep.subr.mxu0 0.0
    %390 = vmatpush1.msra.mxu0 0.0
    %391 = vmatprep.subr.mxu0 0.0
    %392 = vmatpush1.msra.mxu0 0.0
    %393 = vmatprep.subr.mxu0 0.0
    %394 = vmatpush1.msra.mxu0 0.0
    %395 = vmatprep.subr.mxu0 0.0
    %396 = vmatpush1.msra.mxu0 0.0
    %397 = vmatprep.subr.mxu0 0.0
    %398 = vmatpush1.msra.mxu0 0.0
    %399 = vmatprep.subr.mxu0 0.0
    %400 = vmatpush1.msra.mxu0 %v367
    %401 = vmatprep.subr.mxu0 0.0
    %402 = vmatpush2.msra.mxu0 0.0
    %403 = vmatprep.subr.mxu0 0.0
    %404 = vmatpush2.msra.mxu0 0.0
    %405 = vmatprep.subr.mxu0 0.0
    %406 = vmatpush2.msra.mxu0 0.0
    %407 = vmatprep.subr.mxu0 0.0
    %408 = vmatpush2.msra.mxu0 0.0
    %409 = vmatprep.subr.mxu0 0.0
    %410 = vmatpush2.msra.mxu0 0.0
    %411 = vmatprep.subr.mxu0 0.0
    %412 = vmatpush2.msra.mxu0 0.0
    %413 = vmatprep.subr.mxu0 0.0
    %414 = vmatpush2.msra.mxu0 0.0
    %415 = vmatprep.subr.mxu0 0.0
    %416 = vmatpush2.msra.mxu0 0.0
    %417 = vmatprep.subr.mxu0 0.0
    %418 = vmatpush2.msra.mxu0 0.0
    %419 = vmatprep.subr.mxu0 0.0
    %420 = vmatpush2.msra.mxu0 0.0
    %421 = vmatprep.subr.mxu0 0.0
    %422 = vmatpush2.msra.mxu0 0.0
    %423 = vmatprep.subr.mxu0 0.0
    %424 = vmatpush2.msra.mxu0 0.0
    %425 = vmatprep.subr.mxu0 0.0
    %426 = vmatpush2.msra.mxu0 0.0
    %427 = vmatprep.subr.mxu0 0.0
    %428 = vmatpush2.msra.mxu0 0.0
    %429 = vmatprep.subr.mxu0 0.0
    %430 = vmatpush2.msra.mxu0 0.0
    %431 = vmatprep.subr.mxu0 0.0
    %432 = vmatpush2.msra.mxu0 0.0
    %433 = vmatprep.mubr.f32.mxu0 0.0
    %434 = vmatmul.mubr.f32.gmra.mxu0 %v64
    %v435 = vpop.f32.mrf.mxu0
    %v436 = vadd.f32 0.0, %v435
    %v437 = vpop.f32.mrf.mxu0
    %438 = vdwg.mxu0
    %440 = vrot.lane.b32.xlu0 %v43, 127
    %v441 = vpop.permute.xlu0 %440
    %v442 = vsel %vm66, %v441, 0
    %444 = vmatprep.subr.mxu0 0.0
    %445 = vmatpush1.msra.mxu0 0.0
    %446 = vmatprep.subr.mxu0 0.0
    %447 = vmatpush1.msra.mxu0 0.0
    %448 = vmatprep.subr.mxu0 0.0
    %449 = vmatpush1.msra.mxu0 0.0
    %450 = vmatprep.subr.mxu0 0.0
    %451 = vmatpush1.msra.mxu0 0.0
    %452 = vmatprep.subr.mxu0 0.0
    %453 = vmatpush1.msra.mxu0 0.0
    %454 = vmatprep.subr.mxu0 0.0
    %455 = vmatpush1.msra.mxu0 0.0
    %456 = vmatprep.subr.mxu0 0.0
    %457 = vmatpush1.msra.mxu0 0.0
    %458 = vmatprep.subr.mxu0 0.0
    %459 = vmatpush1.msra.mxu0 0.0
    %460 = vmatprep.subr.mxu0 0.0
    %461 = vmatpush1.msra.mxu0 0.0
    %462 = vmatprep.subr.mxu0 0.0
    %463 = vmatpush1.msra.mxu0 0.0
    %464 = vmatprep.subr.mxu0 0.0
    %465 = vmatpush1.msra.mxu0 0.0
    %466 = vmatprep.subr.mxu0 0.0
    %467 = vmatpush1.msra.mxu0 0.0
    %468 = vmatprep.subr.mxu0 0.0
    %469 = vmatpush1.msra.mxu0 0.0
    %470 = vmatprep.subr.mxu0 0.0
    %471 = vmatpush1.msra.mxu0 0.0
    %472 = vmatprep.subr.mxu0 0.0
    %473 = vmatpush1.msra.mxu0 0.0
    %474 = vmatprep.subr.mxu0 0.0
    %475 = vmatpush1.msra.mxu0 %v442
    %476 = vmatprep.subr.mxu0 0.0
    %477 = vmatpush2.msra.mxu0 0.0
    %478 = vmatprep.subr.mxu0 0.0
    %479 = vmatpush2.msra.mxu0 0.0
    %480 = vmatprep.subr.mxu0 0.0
    %481 = vmatpush2.msra.mxu0 0.0
    %482 = vmatprep.subr.mxu0 0.0
    %483 = vmatpush2.msra.mxu0 0.0
    %484 = vmatprep.subr.mxu0 0.0
    %485 = vmatpush2.msra.mxu0 0.0
    %486 = vmatprep.subr.mxu0 0.0
    %487 = vmatpush2.msra.mxu0 0.0
    %488 = vmatprep.subr.mxu0 0.0
    %489 = vmatpush2.msra.mxu0 0.0
    %490 = vmatprep.subr.mxu0 0.0
    %491 = vmatpush2.msra.mxu0 0.0
    %492 = vmatprep.subr.mxu0 0.0
    %493 = vmatpush2.msra.mxu0 0.0
    %494 = vmatprep.subr.mxu0 0.0
    %495 = vmatpush2.msra.mxu0 0.0
    %496 = vmatprep.subr.mxu0 0.0
    %497 = vmatpush2.msra.mxu0 0.0
    %498 = vmatprep.subr.mxu0 0.0
    %499 = vmatpush2.msra.mxu0 0.0
    %500 = vmatprep.subr.mxu0 0.0
    %501 = vmatpush2.msra.mxu0 0.0
    %502 = vmatprep.subr.mxu0 0.0
    %503 = vmatpush2.msra.mxu0 0.0
    %504 = vmatprep.subr.mxu0 0.0
    %505 = vmatpush2.msra.mxu0 0.0
    %506 = vmatprep.subr.mxu0 0.0
    %507 = vmatpush2.msra.mxu0 0.0
    %508 = vmatprep.mubr.f32.mxu0 0.0
    %509 = vmatmul.mubr.f32.gmra.mxu0 %v64
    %v510 = vpop.f32.mrf.mxu0
    %v511 = vadd.f32 0.0, %v510
    %v512 = vpop.f32.mrf.mxu0
    %513 = vdwg.mxu0
    %515 = vrot.lane.b32.xlu0 %v44, 127
    %v516 = vpop.permute.xlu0 %515
    %v517 = vsel %vm66, %v516, 0
    %519 = vmatprep.subr.mxu0 0.0
    %520 = vmatpush1.msra.mxu0 0.0
    %521 = vmatprep.subr.mxu0 0.0
    %522 = vmatpush1.msra.mxu0 0.0
    %523 = vmatprep.subr.mxu0 0.0
    %524 = vmatpush1.msra.mxu0 0.0
    %525 = vmatprep.subr.mxu0 0.0
    %526 = vmatpush1.msra.mxu0 0.0
    %527 = vmatprep.subr.mxu0 0.0
    %528 = vmatpush1.msra.mxu0 0.0
    %529 = vmatprep.subr.mxu0 0.0
    %530 = vmatpush1.msra.mxu0 0.0
    %531 = vmatprep.subr.mxu0 0.0
    %532 = vmatpush1.msra.mxu0 0.0
    %533 = vmatprep.subr.mxu0 0.0
    %534 = vmatpush1.msra.mxu0 0.0
    %535 = vmatprep.subr.mxu0 0.0
    %536 = vmatpush1.msra.mxu0 0.0
    %537 = vmatprep.subr.mxu0 0.0
    %538 = vmatpush1.msra.mxu0 0.0
    %539 = vmatprep.subr.mxu0 0.0
    %540 = vmatpush1.msra.mxu0 0.0
    %541 = vmatprep.subr.mxu0 0.0
    %542 = vmatpush1.msra.mxu0 0.0
    %543 = vmatprep.subr.mxu0 0.0
    %544 = vmatpush1.msra.mxu0 0.0
    %545 = vmatprep.subr.mxu0 0.0
    %546 = vmatpush1.msra.mxu0 0.0
    %547 = vmatprep.subr.mxu0 0.0
    %548 = vmatpush1.msra.mxu0 0.0
    %549 = vmatprep.subr.mxu0 0.0
    %550 = vmatpush1.msra.mxu0 %v517
    %551 = vmatprep.subr.mxu0 0.0
    %552 = vmatpush2.msra.mxu0 0.0
    %553 = vmatprep.subr.mxu0 0.0
    %554 = vmatpush2.msra.mxu0 0.0
    %555 = vmatprep.subr.mxu0 0.0
    %556 = vmatpush2.msra.mxu0 0.0
    %557 = vmatprep.subr.mxu0 0.0
    %558 = vmatpush2.msra.mxu0 0.0
    %559 = vmatprep.subr.mxu0 0.0
    %560 = vmatpush2.msra.mxu0 0.0
    %561 = vmatprep.subr.mxu0 0.0
    %562 = vmatpush2.msra.mxu0 0.0
    %563 = vmatprep.subr.mxu0 0.0
    %564 = vmatpush2.msra.mxu0 0.0
    %565 = vmatprep.subr.mxu0 0.0
    %566 = vmatpush2.msra.mxu0 0.0
    %567 = vmatprep.subr.mxu0 0.0
    %568 = vmatpush2.msra.mxu0 0.0
    %569 = vmatprep.subr.mxu0 0.0
    %570 = vmatpush2.msra.mxu0 0.0
    %571 = vmatprep.subr.mxu0 0.0
    %572 = vmatpush2.msra.mxu0 0.0
    %573 = vmatprep.subr.mxu0 0.0
    %574 = vmatpush2.msra.mxu0 0.0
    %575 = vmatprep.subr.mxu0 0.0
    %576 = vmatpush2.msra.mxu0 0.0
    %577 = vmatprep.subr.mxu0 0.0
    %578 = vmatpush2.msra.mxu0 0.0
    %579 = vmatprep.subr.mxu0 0.0
    %580 = vmatpush2.msra.mxu0 0.0
    %581 = vmatprep.subr.mxu0 0.0
    %582 = vmatpush2.msra.mxu0 0.0
    %583 = vmatprep.mubr.f32.mxu0 0.0
    %584 = vmatmul.mubr.f32.gmra.mxu0 %v64
    %v585 = vpop.f32.mrf.mxu0
    %v586 = vadd.f32 0.0, %v585
    %v587 = vpop.f32.mrf.mxu0
    %588 = vdwg.mxu0
    %590 = vrot.lane.b32.xlu0 %v45, 127
    %v591 = vpop.permute.xlu0 %590
    %v592 = vsel %vm66, %v591, 0
    %594 = vmatprep.subr.mxu0 0.0
    %595 = vmatpush1.msra.mxu0 0.0
    %596 = vmatprep.subr.mxu0 0.0
    %597 = vmatpush1.msra.mxu0 0.0
    %598 = vmatprep.subr.mxu0 0.0
    %599 = vmatpush1.msra.mxu0 0.0
    %600 = vmatprep.subr.mxu0 0.0
    %601 = vmatpush1.msra.mxu0 0.0
    %602 = vmatprep.subr.mxu0 0.0
    %603 = vmatpush1.msra.mxu0 0.0
    %604 = vmatprep.subr.mxu0 0.0
    %605 = vmatpush1.msra.mxu0 0.0
    %606 = vmatprep.subr.mxu0 0.0
    %607 = vmatpush1.msra.mxu0 0.0
    %608 = vmatprep.subr.mxu0 0.0
    %609 = vmatpush1.msra.mxu0 0.0
    %610 = vmatprep.subr.mxu0 0.0
    %611 = vmatpush1.msra.mxu0 0.0
    %612 = vmatprep.subr.mxu0 0.0
    %613 = vmatpush1.msra.mxu0 0.0
    %614 = vmatprep.subr.mxu0 0.0
    %615 = vmatpush1.msra.mxu0 0.0
    %616 = vmatprep.subr.mxu0 0.0
    %617 = vmatpush1.msra.mxu0 0.0
    %618 = vmatprep.subr.mxu0 0.0
    %619 = vmatpush1.msra.mxu0 0.0
    %620 = vmatprep.subr.mxu0 0.0
    %621 = vmatpush1.msra.mxu0 0.0
    %622 = vmatprep.subr.mxu0 0.0
    %623 = vmatpush1.msra.mxu0 0.0
    %624 = vmatprep.subr.mxu0 0.0
    %625 = vmatpush1.msra.mxu0 %v592
    %626 = vmatprep.subr.mxu0 0.0
    %627 = vmatpush2.msra.mxu0 0.0
    %628 = vmatprep.subr.mxu0 0.0
    %629 = vmatpush2.msra.mxu0 0.0
    %630 = vmatprep.subr.mxu0 0.0
    %631 = vmatpush2.msra.mxu0 0.0
    %632 = vmatprep.subr.mxu0 0.0
    %633 = vmatpush2.msra.mxu0 0.0
    %634 = vmatprep.subr.mxu0 0.0
    %635 = vmatpush2.msra.mxu0 0.0
    %636 = vmatprep.subr.mxu0 0.0
    %637 = vmatpush2.msra.mxu0 0.0
    %638 = vmatprep.subr.mxu0 0.0
    %639 = vmatpush2.msra.mxu0 0.0
    %640 = vmatprep.subr.mxu0 0.0
    %641 = vmatpush2.msra.mxu0 0.0
    %642 = vmatprep.subr.mxu0 0.0
    %643 = vmatpush2.msra.mxu0 0.0
    %644 = vmatprep.subr.mxu0 0.0
    %645 = vmatpush2.msra.mxu0 0.0
    %646 = vmatprep.subr.mxu0 0.0
    %647 = vmatpush2.msra.mxu0 0.0
    %648 = vmatprep.subr.mxu0 0.0
    %649 = vmatpush2.msra.mxu0 0.0
    %650 = vmatprep.subr.mxu0 0.0
    %651 = vmatpush2.msra.mxu0 0.0
    %652 = vmatprep.subr.mxu0 0.0
    %653 = vmatpush2.msra.mxu0 0.0
    %654 = vmatprep.subr.mxu0 0.0
    %655 = vmatpush2.msra.mxu0 0.0
    %656 = vmatprep.subr.mxu0 0.0
    %657 = vmatpush2.msra.mxu0 0.0
    %658 = vmatprep.mubr.f32.mxu0 0.0
    %659 = vmatmul.mubr.f32.gmra.mxu0 %v64
    %v660 = vpop.f32.mrf.mxu0
    %v661 = vadd.f32 0.0, %v660
    %v662 = vpop.f32.mrf.mxu0
    %663 = vdwg.mxu0
    %665 = vrot.lane.b32.xlu0 %v46, 127
    %v666 = vpop.permute.xlu0 %665
    %v667 = vsel %vm66, %v666, 0
    %669 = vmatprep.subr.mxu0 0.0
    %670 = vmatpush1.msra.mxu0 0.0
    %671 = vmatprep.subr.mxu0 0.0
    %672 = vmatpush1.msra.mxu0 0.0
    %673 = vmatprep.subr.mxu0 0.0
    %674 = vmatpush1.msra.mxu0 0.0
    %675 = vmatprep.subr.mxu0 0.0
    %676 = vmatpush1.msra.mxu0 0.0
    %677 = vmatprep.subr.mxu0 0.0
    %678 = vmatpush1.msra.mxu0 0.0
    %679 = vmatprep.subr.mxu0 0.0
    %680 = vmatpush1.msra.mxu0 0.0
    %681 = vmatprep.subr.mxu0 0.0
    %682 = vmatpush1.msra.mxu0 0.0
    %683 = vmatprep.subr.mxu0 0.0
    %684 = vmatpush1.msra.mxu0 0.0
    %685 = vmatprep.subr.mxu0 0.0
    %686 = vmatpush1.msra.mxu0 0.0
    %687 = vmatprep.subr.mxu0 0.0
    %688 = vmatpush1.msra.mxu0 0.0
    %689 = vmatprep.subr.mxu0 0.0
    %690 = vmatpush1.msra.mxu0 0.0
    %691 = vmatprep.subr.mxu0 0.0
    %692 = vmatpush1.msra.mxu0 0.0
    %693 = vmatprep.subr.mxu0 0.0
    %694 = vmatpush1.msra.mxu0 0.0
    %695 = vmatprep.subr.mxu0 0.0
    %696 = vmatpush1.msra.mxu0 0.0
    %697 = vmatprep.subr.mxu0 0.0
    %698 = vmatpush1.msra.mxu0 0.0
    %699 = vmatprep.subr.mxu0 0.0
    %700 = vmatpush1.msra.mxu0 %v667
    %701 = vmatprep.subr.mxu0 0.0
    %702 = vmatpush2.msra.mxu0 0.0
    %703 = vmatprep.subr.mxu0 0.0
    %704 = vmatpush2.msra.mxu0 0.0
    %705 = vmatprep.subr.mxu0 0.0
    %706 = vmatpush2.msra.mxu0 0.0
    %707 = vmatprep.subr.mxu0 0.0
    %708 = vmatpush2.msra.mxu0 0.0
    %709 = vmatprep.subr.mxu0 0.0
    %710 = vmatpush2.msra.mxu0 0.0
    %711 = vmatprep.subr.mxu0 0.0
    %712 = vmatpush2.msra.mxu0 0.0
    %713 = vmatprep.subr.mxu0 0.0
    %714 = vmatpush2.msra.mxu0 0.0
    %715 = vmatprep.subr.mxu0 0.0
    %716 = vmatpush2.msra.mxu0 0.0
    %717 = vmatprep.subr.mxu0 0.0
    %718 = vmatpush2.msra.mxu0 0.0
    %719 = vmatprep.subr.mxu0 0.0
    %720 = vmatpush2.msra.mxu0 0.0
    %721 = vmatprep.subr.mxu0 0.0
    %722 = vmatpush2.msra.mxu0 0.0
    %723 = vmatprep.subr.mxu0 0.0
    %724 = vmatpush2.msra.mxu0 0.0
    %725 = vmatprep.subr.mxu0 0.0
    %726 = vmatpush2.msra.mxu0 0.0
    %727 = vmatprep.subr.mxu0 0.0
    %728 = vmatpush2.msra.mxu0 0.0
    %729 = vmatprep.subr.mxu0 0.0
    %730 = vmatpush2.msra.mxu0 0.0
    %731 = vmatprep.subr.mxu0 0.0
    %732 = vmatpush2.msra.mxu0 0.0
    %733 = vmatprep.mubr.f32.mxu0 0.0
    %734 = vmatmul.mubr.f32.gmra.mxu0 %v64
    %v735 = vpop.f32.mrf.mxu0
    %v736 = vadd.f32 0.0, %v735
    %v737 = vpop.f32.mrf.mxu0
    %738 = vdwg.mxu0
    %740 = vrot.lane.b32.xlu0 %v47, 127
    %v741 = vpop.permute.xlu0 %740
    %v742 = vsel %vm66, %v741, 0
    %744 = vmatprep.subr.mxu0 0.0
    %745 = vmatpush1.msra.mxu0 0.0
    %746 = vmatprep.subr.mxu0 0.0
    %747 = vmatpush1.msra.mxu0 0.0
    %748 = vmatprep.subr.mxu0 0.0
    %749 = vmatpush1.msra.mxu0 0.0
    %750 = vmatprep.subr.mxu0 0.0
    %751 = vmatpush1.msra.mxu0 0.0
    %752 = vmatprep.subr.mxu0 0.0
    %753 = vmatpush1.msra.mxu0 0.0
    %754 = vmatprep.subr.mxu0 0.0
    %755 = vmatpush1.msra.mxu0 0.0
    %756 = vmatprep.subr.mxu0 0.0
    %757 = vmatpush1.msra.mxu0 0.0
    %758 = vmatprep.subr.mxu0 0.0
    %759 = vmatpush1.msra.mxu0 0.0
    %760 = vmatprep.subr.mxu0 0.0
    %761 = vmatpush1.msra.mxu0 0.0
    %762 = vmatprep.subr.mxu0 0.0
    %763 = vmatpush1.msra.mxu0 0.0
    %764 = vmatprep.subr.mxu0 0.0
    %765 = vmatpush1.msra.mxu0 0.0
    %766 = vmatprep.subr.mxu0 0.0
    %767 = vmatpush1.msra.mxu0 0.0
    %768 = vmatprep.subr.mxu0 0.0
    %769 = vmatpush1.msra.mxu0 0.0
    %770 = vmatprep.subr.mxu0 0.0
    %771 = vmatpush1.msra.mxu0 0.0
    %772 = vmatprep.subr.mxu0 0.0
    %773 = vmatpush1.msra.mxu0 0.0
    %774 = vmatprep.subr.mxu0 0.0
    %775 = vmatpush1.msra.mxu0 %v742
    %776 = vmatprep.subr.mxu0 0.0
    %777 = vmatpush2.msra.mxu0 0.0
    %778 = vmatprep.subr.mxu0 0.0
    %779 = vmatpush2.msra.mxu0 0.0
    %780 = vmatprep.subr.mxu0 0.0
    %781 = vmatpush2.msra.mxu0 0.0
    %782 = vmatprep.subr.mxu0 0.0
    %783 = vmatpush2.msra.mxu0 0.0
    %784 = vmatprep.subr.mxu0 0.0
    %785 = vmatpush2.msra.mxu0 0.0
    %786 = vmatprep.subr.mxu0 0.0
    %787 = vmatpush2.msra.mxu0 0.0
    %788 = vmatprep.subr.mxu0 0.0
    %789 = vmatpush2.msra.mxu0 0.0
    %790 = vmatprep.subr.mxu0 0.0
    %791 = vmatpush2.msra.mxu0 0.0
    %792 = vmatprep.subr.mxu0 0.0
    %793 = vmatpush2.msra.mxu0 0.0
    %794 = vmatprep.subr.mxu0 0.0
    %795 = vmatpush2.msra.mxu0 0.0
    %796 = vmatprep.subr.mxu0 0.0
    %797 = vmatpush2.msra.mxu0 0.0
    %798 = vmatprep.subr.mxu0 0.0
    %799 = vmatpush2.msra.mxu0 0.0
    %800 = vmatprep.subr.mxu0 0.0
    %801 = vmatpush2.msra.mxu0 0.0
    %802 = vmatprep.subr.mxu0 0.0
    %803 = vmatpush2.msra.mxu0 0.0
    %804 = vmatprep.subr.mxu0 0.0
    %805 = vmatpush2.msra.mxu0 0.0
    %806 = vmatprep.subr.mxu0 0.0
    %807 = vmatpush2.msra.mxu0 0.0
    %808 = vmatprep.mubr.f32.mxu0 0.0
    %809 = vmatmul.mubr.f32.gmra.mxu0 %v64
    %v810 = vpop.f32.mrf.mxu0
    %v811 = vadd.f32 0.0, %v810
    %v812 = vpop.f32.mrf.mxu0
    %813 = vdwg.mxu0
    %815 = vrot.lane.b32.xlu0 %v48, 127
    %v816 = vpop.permute.xlu0 %815
    %v817 = vsel %vm66, %v816, 0
    %819 = vmatprep.subr.mxu0 0.0
    %820 = vmatpush1.msra.mxu0 0.0
    %821 = vmatprep.subr.mxu0 0.0
    %822 = vmatpush1.msra.mxu0 0.0
    %823 = vmatprep.subr.mxu0 0.0
    %824 = vmatpush1.msra.mxu0 0.0
    %825 = vmatprep.subr.mxu0 0.0
    %826 = vmatpush1.msra.mxu0 0.0
    %827 = vmatprep.subr.mxu0 0.0
    %828 = vmatpush1.msra.mxu0 0.0
    %829 = vmatprep.subr.mxu0 0.0
    %830 = vmatpush1.msra.mxu0 0.0
    %831 = vmatprep.subr.mxu0 0.0
    %832 = vmatpush1.msra.mxu0 0.0
    %833 = vmatprep.subr.mxu0 0.0
    %834 = vmatpush1.msra.mxu0 0.0
    %835 = vmatprep.subr.mxu0 0.0
    %836 = vmatpush1.msra.mxu0 0.0
    %837 = vmatprep.subr.mxu0 0.0
    %838 = vmatpush1.msra.mxu0 0.0
    %839 = vmatprep.subr.mxu0 0.0
    %840 = vmatpush1.msra.mxu0 0.0
    %841 = vmatprep.subr.mxu0 0.0
    %842 = vmatpush1.msra.mxu0 0.0
    %843 = vmatprep.subr.mxu0 0.0
    %844 = vmatpush1.msra.mxu0 0.0
    %845 = vmatprep.subr.mxu0 0.0
    %846 = vmatpush1.msra.mxu0 0.0
    %847 = vmatprep.subr.mxu0 0.0
    %848 = vmatpush1.msra.mxu0 0.0
    %849 = vmatprep.subr.mxu0 0.0
    %850 = vmatpush1.msra.mxu0 %v817
    %851 = vmatprep.subr.mxu0 0.0
    %852 = vmatpush2.msra.mxu0 0.0
    %853 = vmatprep.subr.mxu0 0.0
    %854 = vmatpush2.msra.mxu0 0.0
    %855 = vmatprep.subr.mxu0 0.0
    %856 = vmatpush2.msra.mxu0 0.0
    %857 = vmatprep.subr.mxu0 0.0
    %858 = vmatpush2.msra.mxu0 0.0
    %859 = vmatprep.subr.mxu0 0.0
    %860 = vmatpush2.msra.mxu0 0.0
    %861 = vmatprep.subr.mxu0 0.0
    %862 = vmatpush2.msra.mxu0 0.0
    %863 = vmatprep.subr.mxu0 0.0
    %864 = vmatpush2.msra.mxu0 0.0
    %865 = vmatprep.subr.mxu0 0.0
    %866 = vmatpush2.msra.mxu0 0.0
    %867 = vmatprep.subr.mxu0 0.0
    %868 = vmatpush2.msra.mxu0 0.0
    %869 = vmatprep.subr.mxu0 0.0
    %870 = vmatpush2.msra.mxu0 0.0
    %871 = vmatprep.subr.mxu0 0.0
    %872 = vmatpush2.msra.mxu0 0.0
    %873 = vmatprep.subr.mxu0 0.0
    %874 = vmatpush2.msra.mxu0 0.0
    %875 = vmatprep.subr.mxu0 0.0
    %876 = vmatpush2.msra.mxu0 0.0
    %877 = vmatprep.subr.mxu0 0.0
    %878 = vmatpush2.msra.mxu0 0.0
    %879 = vmatprep.subr.mxu0 0.0
    %880 = vmatpush2.msra.mxu0 0.0
    %881 = vmatprep.subr.mxu0 0.0
    %882 = vmatpush2.msra.mxu0 0.0
    %883 = vmatprep.mubr.f32.mxu0 0.0
    %884 = vmatmul.mubr.f32.gmra.mxu0 %v64
    %v885 = vpop.f32.mrf.mxu0
    %v886 = vadd.f32 0.0, %v885
    %v887 = vpop.f32.mrf.mxu0
    %888 = vdwg.mxu0
    %890 = vrot.lane.b32.xlu0 %v49, 127
    %v891 = vpop.permute.xlu0 %890
    %v892 = vsel %vm66, %v891, 0
    %894 = vmatprep.subr.mxu0 0.0
    %895 = vmatpush1.msra.mxu0 0.0
    %896 = vmatprep.subr.mxu0 0.0
    %897 = vmatpush1.msra.mxu0 0.0
    %898 = vmatprep.subr.mxu0 0.0
    %899 = vmatpush1.msra.mxu0 0.0
    %900 = vmatprep.subr.mxu0 0.0
    %901 = vmatpush1.msra.mxu0 0.0
    %902 = vmatprep.subr.mxu0 0.0
    %903 = vmatpush1.msra.mxu0 0.0
    %904 = vmatprep.subr.mxu0 0.0
    %905 = vmatpush1.msra.mxu0 0.0
    %906 = vmatprep.subr.mxu0 0.0
    %907 = vmatpush1.msra.mxu0 0.0
    %908 = vmatprep.subr.mxu0 0.0
    %909 = vmatpush1.msra.mxu0 0.0
    %910 = vmatprep.subr.mxu0 0.0
    %911 = vmatpush1.msra.mxu0 0.0
    %912 = vmatprep.subr.mxu0 0.0
    %913 = vmatpush1.msra.mxu0 0.0
    %914 = vmatprep.subr.mxu0 0.0
    %915 = vmatpush1.msra.mxu0 0.0
    %916 = vmatprep.subr.mxu0 0.0
    %917 = vmatpush1.msra.mxu0 0.0
    %918 = vmatprep.subr.mxu0 0.0
    %919 = vmatpush1.msra.mxu0 0.0
    %920 = vmatprep.subr.mxu0 0.0
    %921 = vmatpush1.msra.mxu0 0.0
    %922 = vmatprep.subr.mxu0 0.0
    %923 = vmatpush1.msra.mxu0 0.0
    %924 = vmatprep.subr.mxu0 0.0
    %925 = vmatpush1.msra.mxu0 %v892
    %926 = vmatprep.subr.mxu0 0.0
    %927 = vmatpush2.msra.mxu0 0.0
    %928 = vmatprep.subr.mxu0 0.0
    %929 = vmatpush2.msra.mxu0 0.0
    %930 = vmatprep.subr.mxu0 0.0
    %931 = vmatpush2.msra.mxu0 0.0
    %932 = vmatprep.subr.mxu0 0.0
    %933 = vmatpush2.msra.mxu0 0.0
    %934 = vmatprep.subr.mxu0 0.0
    %935 = vmatpush2.msra.mxu0 0.0
    %936 = vmatprep.subr.mxu0 0.0
    %937 = vmatpush2.msra.mxu0 0.0
    %938 = vmatprep.subr.mxu0 0.0
    %939 = vmatpush2.msra.mxu0 0.0
    %940 = vmatprep.subr.mxu0 0.0
    %941 = vmatpush2.msra.mxu0 0.0
    %942 = vmatprep.subr.mxu0 0.0
    %943 = vmatpush2.msra.mxu0 0.0
    %944 = vmatprep.subr.mxu0 0.0
    %945 = vmatpush2.msra.mxu0 0.0
    %946 = vmatprep.subr.mxu0 0.0
    %947 = vmatpush2.msra.mxu0 0.0
    %948 = vmatprep.subr.mxu0 0.0
    %949 = vmatpush2.msra.mxu0 0.0
    %950 = vmatprep.subr.mxu0 0.0
    %951 = vmatpush2.msra.mxu0 0.0
    %952 = vmatprep.subr.mxu0 0.0
    %953 = vmatpush2.msra.mxu0 0.0
    %954 = vmatprep.subr.mxu0 0.0
    %955 = vmatpush2.msra.mxu0 0.0
    %956 = vmatprep.subr.mxu0 0.0
    %957 = vmatpush2.msra.mxu0 0.0
    %958 = vmatprep.mubr.f32.mxu0 0.0
    %959 = vmatmul.mubr.f32.gmra.mxu0 %v64
    %v960 = vpop.f32.mrf.mxu0
    %v961 = vadd.f32 0.0, %v960
    %v962 = vpop.f32.mrf.mxu0
    %963 = vdwg.mxu0
    %965 = vrot.lane.b32.xlu0 %v50, 127
    %v966 = vpop.permute.xlu0 %965
    %v967 = vsel %vm66, %v966, 0
    %969 = vmatprep.subr.mxu0 0.0
    %970 = vmatpush1.msra.mxu0 0.0
    %971 = vmatprep.subr.mxu0 0.0
    %972 = vmatpush1.msra.mxu0 0.0
    %973 = vmatprep.subr.mxu0 0.0
    %974 = vmatpush1.msra.mxu0 0.0
    %975 = vmatprep.subr.mxu0 0.0
    %976 = vmatpush1.msra.mxu0 0.0
    %977 = vmatprep.subr.mxu0 0.0
    %978 = vmatpush1.msra.mxu0 0.0
    %979 = vmatprep.subr.mxu0 0.0
    %980 = vmatpush1.msra.mxu0 0.0
    %981 = vmatprep.subr.mxu0 0.0
    %982 = vmatpush1.msra.mxu0 0.0
    %983 = vmatprep.subr.mxu0 0.0
    %984 = vmatpush1.msra.mxu0 0.0
    %985 = vmatprep.subr.mxu0 0.0
    %986 = vmatpush1.msra.mxu0 0.0
    %987 = vmatprep.subr.mxu0 0.0
    %988 = vmatpush1.msra.mxu0 0.0
    %989 = vmatprep.subr.mxu0 0.0
    %990 = vmatpush1.msra.mxu0 0.0
    %991 = vmatprep.subr.mxu0 0.0
    %992 = vmatpush1.msra.mxu0 0.0
    %993 = vmatprep.subr.mxu0 0.0
    %994 = vmatpush1.msra.mxu0 0.0
    %995 = vmatprep.subr.mxu0 0.0
    %996 = vmatpush1.msra.mxu0 0.0
    %997 = vmatprep.subr.mxu0 0.0
    %998 = vmatpush1.msra.mxu0 0.0
    %999 = vmatprep.subr.mxu0 0.0
    %1000 = vmatpush1.msra.mxu0 %v967
    %1001 = vmatprep.subr.mxu0 0.0
    %1002 = vmatpush2.msra.mxu0 0.0
    %1003 = vmatprep.subr.mxu0 0.0
    %1004 = vmatpush2.msra.mxu0 0.0
    %1005 = vmatprep.subr.mxu0 0.0
    %1006 = vmatpush2.msra.mxu0 0.0
    %1007 = vmatprep.subr.mxu0 0.0
    %1008 = vmatpush2.msra.mxu0 0.0
    %1009 = vmatprep.subr.mxu0 0.0
    %1010 = vmatpush2.msra.mxu0 0.0
    %1011 = vmatprep.subr.mxu0 0.0
    %1012 = vmatpush2.msra.mxu0 0.0
    %1013 = vmatprep.subr.mxu0 0.0
    %1014 = vmatpush2.msra.mxu0 0.0
    %1015 = vmatprep.subr.mxu0 0.0
    %1016 = vmatpush2.msra.mxu0 0.0
    %1017 = vmatprep.subr.mxu0 0.0
    %1018 = vmatpush2.msra.mxu0 0.0
    %1019 = vmatprep.subr.mxu0 0.0
    %1020 = vmatpush2.msra.mxu0 0.0
    %1021 = vmatprep.subr.mxu0 0.0
    %1022 = vmatpush2.msra.mxu0 0.0
    %1023 = vmatprep.subr.mxu0 0.0
    %1024 = vmatpush2.msra.mxu0 0.0
    %1025 = vmatprep.subr.mxu0 0.0
    %1026 = vmatpush2.msra.mxu0 0.0
    %1027 = vmatprep.subr.mxu0 0.0
    %1028 = vmatpush2.msra.mxu0 0.0
    %1029 = vmatprep.subr.mxu0 0.0
    %1030 = vmatpush2.msra.mxu0 0.0
    %1031 = vmatprep.subr.mxu0 0.0
    %1032 = vmatpush2.msra.mxu0 0.0
    %1033 = vmatprep.mubr.f32.mxu0 0.0
    %1034 = vmatmul.mubr.f32.gmra.mxu0 %v64
    %v1035 = vpop.f32.mrf.mxu0
    %v1036 = vadd.f32 0.0, %v1035
    %v1037 = vpop.f32.mrf.mxu0
    %1038 = vdwg.mxu0
    %1040 = vrot.lane.b32.xlu0 %v51, 127
    %v1041 = vpop.permute.xlu0 %1040
    %v1042 = vsel %vm66, %v1041, 0
    %1044 = vmatprep.subr.mxu0 0.0
    %1045 = vmatpush1.msra.mxu0 0.0
    %1046 = vmatprep.subr.mxu0 0.0
    %1047 = vmatpush1.msra.mxu0 0.0
    %1048 = vmatprep.subr.mxu0 0.0
    %1049 = vmatpush1.msra.mxu0 0.0
    %1050 = vmatprep.subr.mxu0 0.0
    %1051 = vmatpush1.msra.mxu0 0.0
    %1052 = vmatprep.subr.mxu0 0.0
    %1053 = vmatpush1.msra.mxu0 0.0
    %1054 = vmatprep.subr.mxu0 0.0
    %1055 = vmatpush1.msra.mxu0 0.0
    %1056 = vmatprep.subr.mxu0 0.0
    %1057 = vmatpush1.msra.mxu0 0.0
    %1058 = vmatprep.subr.mxu0 0.0
    %1059 = vmatpush1.msra.mxu0 0.0
    %1060 = vmatprep.subr.mxu0 0.0
    %1061 = vmatpush1.msra.mxu0 0.0
    %1062 = vmatprep.subr.mxu0 0.0
    %1063 = vmatpush1.msra.mxu0 0.0
    %1064 = vmatprep.subr.mxu0 0.0
    %1065 = vmatpush1.msra.mxu0 0.0
    %1066 = vmatprep.subr.mxu0 0.0
    %1067 = vmatpush1.msra.mxu0 0.0
    %1068 = vmatprep.subr.mxu0 0.0
    %1069 = vmatpush1.msra.mxu0 0.0
    %1070 = vmatprep.subr.mxu0 0.0
    %1071 = vmatpush1.msra.mxu0 0.0
    %1072 = vmatprep.subr.mxu0 0.0
    %1073 = vmatpush1.msra.mxu0 0.0
    %1074 = vmatprep.subr.mxu0 0.0
    %1075 = vmatpush1.msra.mxu0 %v1042
    %1076 = vmatprep.subr.mxu0 0.0
    %1077 = vmatpush2.msra.mxu0 0.0
    %1078 = vmatprep.subr.mxu0 0.0
    %1079 = vmatpush2.msra.mxu0 0.0
    %1080 = vmatprep.subr.mxu0 0.0
    %1081 = vmatpush2.msra.mxu0 0.0
    %1082 = vmatprep.subr.mxu0 0.0
    %1083 = vmatpush2.msra.mxu0 0.0
    %1084 = vmatprep.subr.mxu0 0.0
    %1085 = vmatpush2.msra.mxu0 0.0
    %1086 = vmatprep.subr.mxu0 0.0
    %1087 = vmatpush2.msra.mxu0 0.0
    %1088 = vmatprep.subr.mxu0 0.0
    %1089 = vmatpush2.msra.mxu0 0.0
    %1090 = vmatprep.subr.mxu0 0.0
    %1091 = vmatpush2.msra.mxu0 0.0
    %1092 = vmatprep.subr.mxu0 0.0
    %1093 = vmatpush2.msra.mxu0 0.0
    %1094 = vmatprep.subr.mxu0 0.0
    %1095 = vmatpush2.msra.mxu0 0.0
    %1096 = vmatprep.subr.mxu0 0.0
    %1097 = vmatpush2.msra.mxu0 0.0
    %1098 = vmatprep.subr.mxu0 0.0
    %1099 = vmatpush2.msra.mxu0 0.0
    %1100 = vmatprep.subr.mxu0 0.0
    %1101 = vmatpush2.msra.mxu0 0.0
    %1102 = vmatprep.subr.mxu0 0.0
    %1103 = vmatpush2.msra.mxu0 0.0
    %1104 = vmatprep.subr.mxu0 0.0
    %1105 = vmatpush2.msra.mxu0 0.0
    %1106 = vmatprep.subr.mxu0 0.0
    %1107 = vmatpush2.msra.mxu0 0.0
    %1108 = vmatprep.mubr.f32.mxu0 0.0
    %1109 = vmatmul.mubr.f32.gmra.mxu0 %v64
    %v1110 = vpop.f32.mrf.mxu0
    %v1111 = vadd.f32 0.0, %v1110
    %v1112 = vpop.f32.mrf.mxu0
    %1113 = vdwg.mxu0
    %1115 = vrot.lane.b32.xlu0 %v52, 127
    %v1116 = vpop.permute.xlu0 %1115
    %v1117 = vsel %vm66, %v1116, 0
    %1119 = vmatprep.subr.mxu0 0.0
    %1120 = vmatpush1.msra.mxu0 0.0
    %1121 = vmatprep.subr.mxu0 0.0
    %1122 = vmatpush1.msra.mxu0 0.0
    %1123 = vmatprep.subr.mxu0 0.0
    %1124 = vmatpush1.msra.mxu0 0.0
    %1125 = vmatprep.subr.mxu0 0.0
    %1126 = vmatpush1.msra.mxu0 0.0
    %1127 = vmatprep.subr.mxu0 0.0
    %1128 = vmatpush1.msra.mxu0 0.0
    %1129 = vmatprep.subr.mxu0 0.0
    %1130 = vmatpush1.msra.mxu0 0.0
    %1131 = vmatprep.subr.mxu0 0.0
    %1132 = vmatpush1.msra.mxu0 0.0
    %1133 = vmatprep.subr.mxu0 0.0
    %1134 = vmatpush1.msra.mxu0 0.0
    %1135 = vmatprep.subr.mxu0 0.0
    %1136 = vmatpush1.msra.mxu0 0.0
    %1137 = vmatprep.subr.mxu0 0.0
    %1138 = vmatpush1.msra.mxu0 0.0
    %1139 = vmatprep.subr.mxu0 0.0
    %1140 = vmatpush1.msra.mxu0 0.0
    %1141 = vmatprep.subr.mxu0 0.0
    %1142 = vmatpush1.msra.mxu0 0.0
    %1143 = vmatprep.subr.mxu0 0.0
    %1144 = vmatpush1.msra.mxu0 0.0
    %1145 = vmatprep.subr.mxu0 0.0
    %1146 = vmatpush1.msra.mxu0 0.0
    %1147 = vmatprep.subr.mxu0 0.0
    %1148 = vmatpush1.msra.mxu0 0.0
    %1149 = vmatprep.subr.mxu0 0.0
    %1150 = vmatpush1.msra.mxu0 %v1117
    %1151 = vmatprep.subr.mxu0 0.0
    %1152 = vmatpush2.msra.mxu0 0.0
    %1153 = vmatprep.subr.mxu0 0.0
    %1154 = vmatpush2.msra.mxu0 0.0
    %1155 = vmatprep.subr.mxu0 0.0
    %1156 = vmatpush2.msra.mxu0 0.0
    %1157 = vmatprep.subr.mxu0 0.0
    %1158 = vmatpush2.msra.mxu0 0.0
    %1159 = vmatprep.subr.mxu0 0.0
    %1160 = vmatpush2.msra.mxu0 0.0
    %1161 = vmatprep.subr.mxu0 0.0
    %1162 = vmatpush2.msra.mxu0 0.0
    %1163 = vmatprep.subr.mxu0 0.0
    %1164 = vmatpush2.msra.mxu0 0.0
    %1165 = vmatprep.subr.mxu0 0.0
    %1166 = vmatpush2.msra.mxu0 0.0
    %1167 = vmatprep.subr.mxu0 0.0
    %1168 = vmatpush2.msra.mxu0 0.0
    %1169 = vmatprep.subr.mxu0 0.0
    %1170 = vmatpush2.msra.mxu0 0.0
    %1171 = vmatprep.subr.mxu0 0.0
    %1172 = vmatpush2.msra.mxu0 0.0
    %1173 = vmatprep.subr.mxu0 0.0
    %1174 = vmatpush2.msra.mxu0 0.0
    %1175 = vmatprep.subr.mxu0 0.0
    %1176 = vmatpush2.msra.mxu0 0.0
    %1177 = vmatprep.subr.mxu0 0.0
    %1178 = vmatpush2.msra.mxu0 0.0
    %1179 = vmatprep.subr.mxu0 0.0
    %1180 = vmatpush2.msra.mxu0 0.0
    %1181 = vmatprep.subr.mxu0 0.0
    %1182 = vmatpush2.msra.mxu0 0.0
    %1183 = vmatprep.mubr.f32.mxu0 0.0
    %1184 = vmatmul.mubr.f32.gmra.mxu0 %v64
    %v1185 = vpop.f32.mrf.mxu0
    %v1186 = vadd.f32 0.0, %v1185
    %v1187 = vpop.f32.mrf.mxu0
    %1188 = vdwg.mxu0
    %1190 = vrot.lane.b32.xlu0 %v53, 127
    %v1191 = vpop.permute.xlu0 %1190
    %v1192 = vsel %vm66, %v1191, 0
    %1194 = vmatprep.subr.mxu0 0.0
    %1195 = vmatpush1.msra.mxu0 0.0
    %1196 = vmatprep.subr.mxu0 0.0
    %1197 = vmatpush1.msra.mxu0 0.0
    %1198 = vmatprep.subr.mxu0 0.0
    %1199 = vmatpush1.msra.mxu0 0.0
    %1200 = vmatprep.subr.mxu0 0.0
    %1201 = vmatpush1.msra.mxu0 0.0
    %1202 = vmatprep.subr.mxu0 0.0
    %1203 = vmatpush1.msra.mxu0 0.0
    %1204 = vmatprep.subr.mxu0 0.0
    %1205 = vmatpush1.msra.mxu0 0.0
    %1206 = vmatprep.subr.mxu0 0.0
    %1207 = vmatpush1.msra.mxu0 0.0
    %1208 = vmatprep.subr.mxu0 0.0
    %1209 = vmatpush1.msra.mxu0 0.0
    %1210 = vmatprep.subr.mxu0 0.0
    %1211 = vmatpush1.msra.mxu0 0.0
    %1212 = vmatprep.subr.mxu0 0.0
    %1213 = vmatpush1.msra.mxu0 0.0
    %1214 = vmatprep.subr.mxu0 0.0
    %1215 = vmatpush1.msra.mxu0 0.0
    %1216 = vmatprep.subr.mxu0 0.0
    %1217 = vmatpush1.msra.mxu0 0.0
    %1218 = vmatprep.subr.mxu0 0.0
    %1219 = vmatpush1.msra.mxu0 0.0
    %1220 = vmatprep.subr.mxu0 0.0
    %1221 = vmatpush1.msra.mxu0 0.0
    %1222 = vmatprep.subr.mxu0 0.0
    %1223 = vmatpush1.msra.mxu0 0.0
    %1224 = vmatprep.subr.mxu0 0.0
    %1225 = vmatpush1.msra.mxu0 %v1192
    %1226 = vmatprep.subr.mxu0 0.0
    %1227 = vmatpush2.msra.mxu0 0.0
    %1228 = vmatprep.subr.mxu0 0.0
    %1229 = vmatpush2.msra.mxu0 0.0
    %1230 = vmatprep.subr.mxu0 0.0
    %1231 = vmatpush2.msra.mxu0 0.0
    %1232 = vmatprep.subr.mxu0 0.0
    %1233 = vmatpush2.msra.mxu0 0.0
    %1234 = vmatprep.subr.mxu0 0.0
    %1235 = vmatpush2.msra.mxu0 0.0
    %1236 = vmatprep.subr.mxu0 0.0
    %1237 = vmatpush2.msra.mxu0 0.0
    %1238 = vmatprep.subr.mxu0 0.0
    %1239 = vmatpush2.msra.mxu0 0.0
    %1240 = vmatprep.subr.mxu0 0.0
    %1241 = vmatpush2.msra.mxu0 0.0
    %1242 = vmatprep.subr.mxu0 0.0
    %1243 = vmatpush2.msra.mxu0 0.0
    %1244 = vmatprep.subr.mxu0 0.0
    %1245 = vmatpush2.msra.mxu0 0.0
    %1246 = vmatprep.subr.mxu0 0.0
    %1247 = vmatpush2.msra.mxu0 0.0
    %1248 = vmatprep.subr.mxu0 0.0
    %1249 = vmatpush2.msra.mxu0 0.0
    %1250 = vmatprep.subr.mxu0 0.0
    %1251 = vmatpush2.msra.mxu0 0.0
    %1252 = vmatprep.subr.mxu0 0.0
    %1253 = vmatpush2.msra.mxu0 0.0
    %1254 = vmatprep.subr.mxu0 0.0
    %1255 = vmatpush2.msra.mxu0 0.0
    %1256 = vmatprep.subr.mxu0 0.0
    %1257 = vmatpush2.msra.mxu0 0.0
    %1258 = vmatprep.mubr.f32.mxu0 0.0
    %1259 = vmatmul.mubr.f32.gmra.mxu0 %v64
    %v1260 = vpop.f32.mrf.mxu0
    %v1261 = vadd.f32 0.0, %v1260
    %v1262 = vpop.f32.mrf.mxu0
    %1263 = vdwg.mxu0
    %v1265 = vsel %vm62, %v54, 0
    %v1267 = vsel %vm66, %v38, 0
    %1269 = vmatprep.subr.mxu0 0.0
    %1270 = vmatpush1.msra.mxu0 0.0
    %1271 = vmatprep.subr.mxu0 0.0
    %1272 = vmatpush1.msra.mxu0 0.0
    %1273 = vmatprep.subr.mxu0 0.0
    %1274 = vmatpush1.msra.mxu0 0.0
    %1275 = vmatprep.subr.mxu0 0.0
    %1276 = vmatpush1.msra.mxu0 0.0
    %1277 = vmatprep.subr.mxu0 0.0
    %1278 = vmatpush1.msra.mxu0 0.0
    %1279 = vmatprep.subr.mxu0 0.0
    %1280 = vmatpush1.msra.mxu0 0.0
    %1281 = vmatprep.subr.mxu0 0.0
    %1282 = vmatpush1.msra.mxu0 0.0
    %1283 = vmatprep.subr.mxu0 0.0
    %1284 = vmatpush1.msra.mxu0 0.0
    %1285 = vmatprep.subr.mxu0 0.0
    %1286 = vmatpush1.msra.mxu0 0.0
    %1287 = vmatprep.subr.mxu0 0.0
    %1288 = vmatpush1.msra.mxu0 0.0
    %1289 = vmatprep.subr.mxu0 0.0
    %1290 = vmatpush1.msra.mxu0 0.0
    %1291 = vmatprep.subr.mxu0 0.0
    %1292 = vmatpush1.msra.mxu0 0.0
    %1293 = vmatprep.subr.mxu0 0.0
    %1294 = vmatpush1.msra.mxu0 0.0
    %1295 = vmatprep.subr.mxu0 0.0
    %1296 = vmatpush1.msra.mxu0 0.0
    %1297 = vmatprep.subr.mxu0 0.0
    %1298 = vmatpush1.msra.mxu0 0.0
    %1299 = vmatprep.subr.mxu0 0.0
    %1300 = vmatpush1.msra.mxu0 %v1267
    %1301 = vmatprep.subr.mxu0 0.0
    %1302 = vmatpush2.msra.mxu0 0.0
    %1303 = vmatprep.subr.mxu0 0.0
    %1304 = vmatpush2.msra.mxu0 0.0
    %1305 = vmatprep.subr.mxu0 0.0
    %1306 = vmatpush2.msra.mxu0 0.0
    %1307 = vmatprep.subr.mxu0 0.0
    %1308 = vmatpush2.msra.mxu0 0.0
    %1309 = vmatprep.subr.mxu0 0.0
    %1310 = vmatpush2.msra.mxu0 0.0
    %1311 = vmatprep.subr.mxu0 0.0
    %1312 = vmatpush2.msra.mxu0 0.0
    %1313 = vmatprep.subr.mxu0 0.0
    %1314 = vmatpush2.msra.mxu0 0.0
    %1315 = vmatprep.subr.mxu0 0.0
    %1316 = vmatpush2.msra.mxu0 0.0
    %1317 = vmatprep.subr.mxu0 0.0
    %1318 = vmatpush2.msra.mxu0 0.0
    %1319 = vmatprep.subr.mxu0 0.0
    %1320 = vmatpush2.msra.mxu0 0.0
    %1321 = vmatprep.subr.mxu0 0.0
    %1322 = vmatpush2.msra.mxu0 0.0
    %1323 = vmatprep.subr.mxu0 0.0
    %1324 = vmatpush2.msra.mxu0 0.0
    %1325 = vmatprep.subr.mxu0 0.0
    %1326 = vmatpush2.msra.mxu0 0.0
    %1327 = vmatprep.subr.mxu0 0.0
    %1328 = vmatpush2.msra.mxu0 0.0
    %1329 = vmatprep.subr.mxu0 0.0
    %1330 = vmatpush2.msra.mxu0 0.0
    %1331 = vmatprep.subr.mxu0 0.0
    %1332 = vmatpush2.msra.mxu0 0.0
    %1333 = vmatprep.mubr.f32.mxu0 0.0
    %1334 = vmatmul.mubr.f32.gmra.mxu0 %v1265
    %v1335 = vpop.f32.mrf.mxu0
    %v1336 = vadd.f32 %v136, %v1335
    %v1337 = vpop.f32.mrf.mxu0
    %1338 = vdwg.mxu0
    %v1339 = vsel %vm66, %v39, 0
    %1341 = vmatprep.subr.mxu0 0.0
    %1342 = vmatpush1.msra.mxu0 0.0
    %1343 = vmatprep.subr.mxu0 0.0
    %1344 = vmatpush1.msra.mxu0 0.0
    %1345 = vmatprep.subr.mxu0 0.0
    %1346 = vmatpush1.msra.mxu0 0.0
    %1347 = vmatprep.subr.mxu0 0.0
    %1348 = vmatpush1.msra.mxu0 0.0
    %1349 = vmatprep.subr.mxu0 0.0
    %1350 = vmatpush1.msra.mxu0 0.0
    %1351 = vmatprep.subr.mxu0 0.0
    %1352 = vmatpush1.msra.mxu0 0.0
    %1353 = vmatprep.subr.mxu0 0.0
    %1354 = vmatpush1.msra.mxu0 0.0
    %1355 = vmatprep.subr.mxu0 0.0
    %1356 = vmatpush1.msra.mxu0 0.0
    %1357 = vmatprep.subr.mxu0 0.0
    %1358 = vmatpush1.msra.mxu0 0.0
    %1359 = vmatprep.subr.mxu0 0.0
    %1360 = vmatpush1.msra.mxu0 0.0
    %1361 = vmatprep.subr.mxu0 0.0
    %1362 = vmatpush1.msra.mxu0 0.0
    %1363 = vmatprep.subr.mxu0 0.0
    %1364 = vmatpush1.msra.mxu0 0.0
    %1365 = vmatprep.subr.mxu0 0.0
    %1366 = vmatpush1.msra.mxu0 0.0
    %1367 = vmatprep.subr.mxu0 0.0
    %1368 = vmatpush1.msra.mxu0 0.0
    %1369 = vmatprep.subr.mxu0 0.0
    %1370 = vmatpush1.msra.mxu0 0.0
    %1371 = vmatprep.subr.mxu0 0.0
    %1372 = vmatpush1.msra.mxu0 %v1339
    %1373 = vmatprep.subr.mxu0 0.0
    %1374 = vmatpush2.msra.mxu0 0.0
    %1375 = vmatprep.subr.mxu0 0.0
    %1376 = vmatpush2.msra.mxu0 0.0
    %1377 = vmatprep.subr.mxu0 0.0
    %1378 = vmatpush2.msra.mxu0 0.0
    %1379 = vmatprep.subr.mxu0 0.0
    %1380 = vmatpush2.msra.mxu0 0.0
    %1381 = vmatprep.subr.mxu0 0.0
    %1382 = vmatpush2.msra.mxu0 0.0
    %1383 = vmatprep.subr.mxu0 0.0
    %1384 = vmatpush2.msra.mxu0 0.0
    %1385 = vmatprep.subr.mxu0 0.0
    %1386 = vmatpush2.msra.mxu0 0.0
    %1387 = vmatprep.subr.mxu0 0.0
    %1388 = vmatpush2.msra.mxu0 0.0
    %1389 = vmatprep.subr.mxu0 0.0
    %1390 = vmatpush2.msra.mxu0 0.0
    %1391 = vmatprep.subr.mxu0 0.0
    %1392 = vmatpush2.msra.mxu0 0.0
    %1393 = vmatprep.subr.mxu0 0.0
    %1394 = vmatpush2.msra.mxu0 0.0
    %1395 = vmatprep.subr.mxu0 0.0
    %1396 = vmatpush2.msra.mxu0 0.0
    %1397 = vmatprep.subr.mxu0 0.0
    %1398 = vmatpush2.msra.mxu0 0.0
    %1399 = vmatprep.subr.mxu0 0.0
    %1400 = vmatpush2.msra.mxu0 0.0
    %1401 = vmatprep.subr.mxu0 0.0
    %1402 = vmatpush2.msra.mxu0 0.0
    %1403 = vmatprep.subr.mxu0 0.0
    %1404 = vmatpush2.msra.mxu0 0.0
    %1405 = vmatprep.mubr.f32.mxu0 0.0
    %1406 = vmatmul.mubr.f32.gmra.mxu0 %v1265
    %v1407 = vpop.f32.mrf.mxu0
    %v1408 = vadd.f32 %v211, %v1407
    %v1409 = vpop.f32.mrf.mxu0
    %1410 = vdwg.mxu0
    %v1411 = vsel %vm66, %v40, 0
    %1413 = vmatprep.subr.mxu0 0.0
    %1414 = vmatpush1.msra.mxu0 0.0
    %1415 = vmatprep.subr.mxu0 0.0
    %1416 = vmatpush1.msra.mxu0 0.0
    %1417 = vmatprep.subr.mxu0 0.0
    %1418 = vmatpush1.msra.mxu0 0.0
    %1419 = vmatprep.subr.mxu0 0.0
    %1420 = vmatpush1.msra.mxu0 0.0
    %1421 = vmatprep.subr.mxu0 0.0
    %1422 = vmatpush1.msra.mxu0 0.0
    %1423 = vmatprep.subr.mxu0 0.0
    %1424 = vmatpush1.msra.mxu0 0.0
    %1425 = vmatprep.subr.mxu0 0.0
    %1426 = vmatpush1.msra.mxu0 0.0
    %1427 = vmatprep.subr.mxu0 0.0
    %1428 = vmatpush1.msra.mxu0 0.0
    %1429 = vmatprep.subr.mxu0 0.0
    %1430 = vmatpush1.msra.mxu0 0.0
    %1431 = vmatprep.subr.mxu0 0.0
    %1432 = vmatpush1.msra.mxu0 0.0
    %1433 = vmatprep.subr.mxu0 0.0
    %1434 = vmatpush1.msra.mxu0 0.0
    %1435 = vmatprep.subr.mxu0 0.0
    %1436 = vmatpush1.msra.mxu0 0.0
    %1437 = vmatprep.subr.mxu0 0.0
    %1438 = vmatpush1.msra.mxu0 0.0
    %1439 = vmatprep.subr.mxu0 0.0
    %1440 = vmatpush1.msra.mxu0 0.0
    %1441 = vmatprep.subr.mxu0 0.0
    %1442 = vmatpush1.msra.mxu0 0.0
    %1443 = vmatprep.subr.mxu0 0.0
    %1444 = vmatpush1.msra.mxu0 %v1411
    %1445 = vmatprep.subr.mxu0 0.0
    %1446 = vmatpush2.msra.mxu0 0.0
    %1447 = vmatprep.subr.mxu0 0.0
    %1448 = vmatpush2.msra.mxu0 0.0
    %1449 = vmatprep.subr.mxu0 0.0
    %1450 = vmatpush2.msra.mxu0 0.0
    %1451 = vmatprep.subr.mxu0 0.0
    %1452 = vmatpush2.msra.mxu0 0.0
    %1453 = vmatprep.subr.mxu0 0.0
    %1454 = vmatpush2.msra.mxu0 0.0
    %1455 = vmatprep.subr.mxu0 0.0
    %1456 = vmatpush2.msra.mxu0 0.0
    %1457 = vmatprep.subr.mxu0 0.0
    %1458 = vmatpush2.msra.mxu0 0.0
    %1459 = vmatprep.subr.mxu0 0.0
    %1460 = vmatpush2.msra.mxu0 0.0
    %1461 = vmatprep.subr.mxu0 0.0
    %1462 = vmatpush2.msra.mxu0 0.0
    %1463 = vmatprep.subr.mxu0 0.0
    %1464 = vmatpush2.msra.mxu0 0.0
    %1465 = vmatprep.subr.mxu0 0.0
    %1466 = vmatpush2.msra.mxu0 0.0
    %1467 = vmatprep.subr.mxu0 0.0
    %1468 = vmatpush2.msra.mxu0 0.0
    %1469 = vmatprep.subr.mxu0 0.0
    %1470 = vmatpush2.msra.mxu0 0.0
    %1471 = vmatprep.subr.mxu0 0.0
    %1472 = vmatpush2.msra.mxu0 0.0
    %1473 = vmatprep.subr.mxu0 0.0
    %1474 = vmatpush2.msra.mxu0 0.0
    %1475 = vmatprep.subr.mxu0 0.0
    %1476 = vmatpush2.msra.mxu0 0.0
    %1477 = vmatprep.mubr.f32.mxu0 0.0
    %1478 = vmatmul.mubr.f32.gmra.mxu0 %v1265
    %v1479 = vpop.f32.mrf.mxu0
    %v1480 = vadd.f32 %v286, %v1479
    %v1481 = vpop.f32.mrf.mxu0
    %1482 = vdwg.mxu0
    %v1483 = vsel %vm66, %v41, 0
    %1485 = vmatprep.subr.mxu0 0.0
    %1486 = vmatpush1.msra.mxu0 0.0
    %1487 = vmatprep.subr.mxu0 0.0
    %1488 = vmatpush1.msra.mxu0 0.0
    %1489 = vmatprep.subr.mxu0 0.0
    %1490 = vmatpush1.msra.mxu0 0.0
    %1491 = vmatprep.subr.mxu0 0.0
    %1492 = vmatpush1.msra.mxu0 0.0
    %1493 = vmatprep.subr.mxu0 0.0
    %1494 = vmatpush1.msra.mxu0 0.0
    %1495 = vmatprep.subr.mxu0 0.0
    %1496 = vmatpush1.msra.mxu0 0.0
    %1497 = vmatprep.subr.mxu0 0.0
    %1498 = vmatpush1.msra.mxu0 0.0
    %1499 = vmatprep.subr.mxu0 0.0
    %1500 = vmatpush1.msra.mxu0 0.0
    %1501 = vmatprep.subr.mxu0 0.0
    %1502 = vmatpush1.msra.mxu0 0.0
    %1503 = vmatprep.subr.mxu0 0.0
    %1504 = vmatpush1.msra.mxu0 0.0
    %1505 = vmatprep.subr.mxu0 0.0
    %1506 = vmatpush1.msra.mxu0 0.0
    %1507 = vmatprep.subr.mxu0 0.0
    %1508 = vmatpush1.msra.mxu0 0.0
    %1509 = vmatprep.subr.mxu0 0.0
    %1510 = vmatpush1.msra.mxu0 0.0
    %1511 = vmatprep.subr.mxu0 0.0
    %1512 = vmatpush1.msra.mxu0 0.0
    %1513 = vmatprep.subr.mxu0 0.0
    %1514 = vmatpush1.msra.mxu0 0.0
    %1515 = vmatprep.subr.mxu0 0.0
    %1516 = vmatpush1.msra.mxu0 %v1483
    %1517 = vmatprep.subr.mxu0 0.0
    %1518 = vmatpush2.msra.mxu0 0.0
    %1519 = vmatprep.subr.mxu0 0.0
    %1520 = vmatpush2.msra.mxu0 0.0
    %1521 = vmatprep.subr.mxu0 0.0
    %1522 = vmatpush2.msra.mxu0 0.0
    %1523 = vmatprep.subr.mxu0 0.0
    %1524 = vmatpush2.msra.mxu0 0.0
    %1525 = vmatprep.subr.mxu0 0.0
    %1526 = vmatpush2.msra.mxu0 0.0
    %1527 = vmatprep.subr.mxu0 0.0
    %1528 = vmatpush2.msra.mxu0 0.0
    %1529 = vmatprep.subr.mxu0 0.0
    %1530 = vmatpush2.msra.mxu0 0.0
    %1531 = vmatprep.subr.mxu0 0.0
    %1532 = vmatpush2.msra.mxu0 0.0
    %1533 = vmatprep.subr.mxu0 0.0
    %1534 = vmatpush2.msra.mxu0 0.0
    %1535 = vmatprep.subr.mxu0 0.0
    %1536 = vmatpush2.msra.mxu0 0.0
    %1537 = vmatprep.subr.mxu0 0.0
    %1538 = vmatpush2.msra.mxu0 0.0
    %1539 = vmatprep.subr.mxu0 0.0
    %1540 = vmatpush2.msra.mxu0 0.0
    %1541 = vmatprep.subr.mxu0 0.0
    %1542 = vmatpush2.msra.mxu0 0.0
    %1543 = vmatprep.subr.mxu0 0.0
    %1544 = vmatpush2.msra.mxu0 0.0
    %1545 = vmatprep.subr.mxu0 0.0
    %1546 = vmatpush2.msra.mxu0 0.0
    %1547 = vmatprep.subr.mxu0 0.0
    %1548 = vmatpush2.msra.mxu0 0.0
    %1549 = vmatprep.mubr.f32.mxu0 0.0
    %1550 = vmatmul.mubr.f32.gmra.mxu0 %v1265
    %v1551 = vpop.f32.mrf.mxu0
    %v1552 = vadd.f32 %v361, %v1551
    %v1553 = vpop.f32.mrf.mxu0
    %1554 = vdwg.mxu0
    %v1555 = vsel %vm66, %v42, 0
    %1557 = vmatprep.subr.mxu0 0.0
    %1558 = vmatpush1.msra.mxu0 0.0
    %1559 = vmatprep.subr.mxu0 0.0
    %1560 = vmatpush1.msra.mxu0 0.0
    %1561 = vmatprep.subr.mxu0 0.0
    %1562 = vmatpush1.msra.mxu0 0.0
    %1563 = vmatprep.subr.mxu0 0.0
    %1564 = vmatpush1.msra.mxu0 0.0
    %1565 = vmatprep.subr.mxu0 0.0
    %1566 = vmatpush1.msra.mxu0 0.0
    %1567 = vmatprep.subr.mxu0 0.0
    %1568 = vmatpush1.msra.mxu0 0.0
    %1569 = vmatprep.subr.mxu0 0.0
    %1570 = vmatpush1.msra.mxu0 0.0
    %1571 = vmatprep.subr.mxu0 0.0
    %1572 = vmatpush1.msra.mxu0 0.0
    %1573 = vmatprep.subr.mxu0 0.0
    %1574 = vmatpush1.msra.mxu0 0.0
    %1575 = vmatprep.subr.mxu0 0.0
    %1576 = vmatpush1.msra.mxu0 0.0
    %1577 = vmatprep.subr.mxu0 0.0
    %1578 = vmatpush1.msra.mxu0 0.0
    %1579 = vmatprep.subr.mxu0 0.0
    %1580 = vmatpush1.msra.mxu0 0.0
    %1581 = vmatprep.subr.mxu0 0.0
    %1582 = vmatpush1.msra.mxu0 0.0
    %1583 = vmatprep.subr.mxu0 0.0
    %1584 = vmatpush1.msra.mxu0 0.0
    %1585 = vmatprep.subr.mxu0 0.0
    %1586 = vmatpush1.msra.mxu0 0.0
    %1587 = vmatprep.subr.mxu0 0.0
    %1588 = vmatpush1.msra.mxu0 %v1555
    %1589 = vmatprep.subr.mxu0 0.0
    %1590 = vmatpush2.msra.mxu0 0.0
    %1591 = vmatprep.subr.mxu0 0.0
    %1592 = vmatpush2.msra.mxu0 0.0
    %1593 = vmatprep.subr.mxu0 0.0
    %1594 = vmatpush2.msra.mxu0 0.0
    %1595 = vmatprep.subr.mxu0 0.0
    %1596 = vmatpush2.msra.mxu0 0.0
    %1597 = vmatprep.subr.mxu0 0.0
    %1598 = vmatpush2.msra.mxu0 0.0
    %1599 = vmatprep.subr.mxu0 0.0
    %1600 = vmatpush2.msra.mxu0 0.0
    %1601 = vmatprep.subr.mxu0 0.0
    %1602 = vmatpush2.msra.mxu0 0.0
    %1603 = vmatprep.subr.mxu0 0.0
    %1604 = vmatpush2.msra.mxu0 0.0
    %1605 = vmatprep.subr.mxu0 0.0
    %1606 = vmatpush2.msra.mxu0 0.0
    %1607 = vmatprep.subr.mxu0 0.0
    %1608 = vmatpush2.msra.mxu0 0.0
    %1609 = vmatprep.subr.mxu0 0.0
    %1610 = vmatpush2.msra.mxu0 0.0
    %1611 = vmatprep.subr.mxu0 0.0
    %1612 = vmatpush2.msra.mxu0 0.0
    %1613 = vmatprep.subr.mxu0 0.0
    %1614 = vmatpush2.msra.mxu0 0.0
    %1615 = vmatprep.subr.mxu0 0.0
    %1616 = vmatpush2.msra.mxu0 0.0
    %1617 = vmatprep.subr.mxu0 0.0
    %1618 = vmatpush2.msra.mxu0 0.0
    %1619 = vmatprep.subr.mxu0 0.0
    %1620 = vmatpush2.msra.mxu0 0.0
    %1621 = vmatprep.mubr.f32.mxu0 0.0
    %1622 = vmatmul.mubr.f32.gmra.mxu0 %v1265
    %v1623 = vpop.f32.mrf.mxu0
    %v1624 = vadd.f32 %v436, %v1623
    %v1625 = vpop.f32.mrf.mxu0
    %1626 = vdwg.mxu0
    %v1627 = vsel %vm66, %v43, 0
    %1629 = vmatprep.subr.mxu0 0.0
    %1630 = vmatpush1.msra.mxu0 0.0
    %1631 = vmatprep.subr.mxu0 0.0
    %1632 = vmatpush1.msra.mxu0 0.0
    %1633 = vmatprep.subr.mxu0 0.0
    %1634 = vmatpush1.msra.mxu0 0.0
    %1635 = vmatprep.subr.mxu0 0.0
    %1636 = vmatpush1.msra.mxu0 0.0
    %1637 = vmatprep.subr.mxu0 0.0
    %1638 = vmatpush1.msra.mxu0 0.0
    %1639 = vmatprep.subr.mxu0 0.0
    %1640 = vmatpush1.msra.mxu0 0.0
    %1641 = vmatprep.subr.mxu0 0.0
    %1642 = vmatpush1.msra.mxu0 0.0
    %1643 = vmatprep.subr.mxu0 0.0
    %1644 = vmatpush1.msra.mxu0 0.0
    %1645 = vmatprep.subr.mxu0 0.0
    %1646 = vmatpush1.msra.mxu0 0.0
    %1647 = vmatprep.subr.mxu0 0.0
    %1648 = vmatpush1.msra.mxu0 0.0
    %1649 = vmatprep.subr.mxu0 0.0
    %1650 = vmatpush1.msra.mxu0 0.0
    %1651 = vmatprep.subr.mxu0 0.0
    %1652 = vmatpush1.msra.mxu0 0.0
    %1653 = vmatprep.subr.mxu0 0.0
    %1654 = vmatpush1.msra.mxu0 0.0
    %1655 = vmatprep.subr.mxu0 0.0
    %1656 = vmatpush1.msra.mxu0 0.0
    %1657 = vmatprep.subr.mxu0 0.0
    %1658 = vmatpush1.msra.mxu0 0.0
    %1659 = vmatprep.subr.mxu0 0.0
    %1660 = vmatpush1.msra.mxu0 %v1627
    %1661 = vmatprep.subr.mxu0 0.0
    %1662 = vmatpush2.msra.mxu0 0.0
    %1663 = vmatprep.subr.mxu0 0.0
    %1664 = vmatpush2.msra.mxu0 0.0
    %1665 = vmatprep.subr.mxu0 0.0
    %1666 = vmatpush2.msra.mxu0 0.0
    %1667 = vmatprep.subr.mxu0 0.0
    %1668 = vmatpush2.msra.mxu0 0.0
    %1669 = vmatprep.subr.mxu0 0.0
    %1670 = vmatpush2.msra.mxu0 0.0
    %1671 = vmatprep.subr.mxu0 0.0
    %1672 = vmatpush2.msra.mxu0 0.0
    %1673 = vmatprep.subr.mxu0 0.0
    %1674 = vmatpush2.msra.mxu0 0.0
    %1675 = vmatprep.subr.mxu0 0.0
    %1676 = vmatpush2.msra.mxu0 0.0
    %1677 = vmatprep.subr.mxu0 0.0
    %1678 = vmatpush2.msra.mxu0 0.0
    %1679 = vmatprep.subr.mxu0 0.0
    %1680 = vmatpush2.msra.mxu0 0.0
    %1681 = vmatprep.subr.mxu0 0.0
    %1682 = vmatpush2.msra.mxu0 0.0
    %1683 = vmatprep.subr.mxu0 0.0
    %1684 = vmatpush2.msra.mxu0 0.0
    %1685 = vmatprep.subr.mxu0 0.0
    %1686 = vmatpush2.msra.mxu0 0.0
    %1687 = vmatprep.subr.mxu0 0.0
    %1688 = vmatpush2.msra.mxu0 0.0
    %1689 = vmatprep.subr.mxu0 0.0
    %1690 = vmatpush2.msra.mxu0 0.0
    %1691 = vmatprep.subr.mxu0 0.0
    %1692 = vmatpush2.msra.mxu0 0.0
    %1693 = vmatprep.mubr.f32.mxu0 0.0
    %1694 = vmatmul.mubr.f32.gmra.mxu0 %v1265
    %v1695 = vpop.f32.mrf.mxu0
    %v1696 = vadd.f32 %v511, %v1695
    %v1697 = vpop.f32.mrf.mxu0
    %1698 = vdwg.mxu0
    %v1699 = vsel %vm66, %v44, 0
    %1701 = vmatprep.subr.mxu0 0.0
    %1702 = vmatpush1.msra.mxu0 0.0
    %1703 = vmatprep.subr.mxu0 0.0
    %1704 = vmatpush1.msra.mxu0 0.0
    %1705 = vmatprep.subr.mxu0 0.0
    %1706 = vmatpush1.msra.mxu0 0.0
    %1707 = vmatprep.subr.mxu0 0.0
    %1708 = vmatpush1.msra.mxu0 0.0
    %1709 = vmatprep.subr.mxu0 0.0
    %1710 = vmatpush1.msra.mxu0 0.0
    %1711 = vmatprep.subr.mxu0 0.0
    %1712 = vmatpush1.msra.mxu0 0.0
    %1713 = vmatprep.subr.mxu0 0.0
    %1714 = vmatpush1.msra.mxu0 0.0
    %1715 = vmatprep.subr.mxu0 0.0
    %1716 = vmatpush1.msra.mxu0 0.0
    %1717 = vmatprep.subr.mxu0 0.0
    %1718 = vmatpush1.msra.mxu0 0.0
    %1719 = vmatprep.subr.mxu0 0.0
    %1720 = vmatpush1.msra.mxu0 0.0
    %1721 = vmatprep.subr.mxu0 0.0
    %1722 = vmatpush1.msra.mxu0 0.0
    %1723 = vmatprep.subr.mxu0 0.0
    %1724 = vmatpush1.msra.mxu0 0.0
    %1725 = vmatprep.subr.mxu0 0.0
    %1726 = vmatpush1.msra.mxu0 0.0
    %1727 = vmatprep.subr.mxu0 0.0
    %1728 = vmatpush1.msra.mxu0 0.0
    %1729 = vmatprep.subr.mxu0 0.0
    %1730 = vmatpush1.msra.mxu0 0.0
    %1731 = vmatprep.subr.mxu0 0.0
    %1732 = vmatpush1.msra.mxu0 %v1699
    %1733 = vmatprep.subr.mxu0 0.0
    %1734 = vmatpush2.msra.mxu0 0.0
    %1735 = vmatprep.subr.mxu0 0.0
    %1736 = vmatpush2.msra.mxu0 0.0
    %1737 = vmatprep.subr.mxu0 0.0
    %1738 = vmatpush2.msra.mxu0 0.0
    %1739 = vmatprep.subr.mxu0 0.0
    %1740 = vmatpush2.msra.mxu0 0.0
    %1741 = vmatprep.subr.mxu0 0.0
    %1742 = vmatpush2.msra.mxu0 0.0
    %1743 = vmatprep.subr.mxu0 0.0
    %1744 = vmatpush2.msra.mxu0 0.0
    %1745 = vmatprep.subr.mxu0 0.0
    %1746 = vmatpush2.msra.mxu0 0.0
    %1747 = vmatprep.subr.mxu0 0.0
    %1748 = vmatpush2.msra.mxu0 0.0
    %1749 = vmatprep.subr.mxu0 0.0
    %1750 = vmatpush2.msra.mxu0 0.0
    %1751 = vmatprep.subr.mxu0 0.0
    %1752 = vmatpush2.msra.mxu0 0.0
    %1753 = vmatprep.subr.mxu0 0.0
    %1754 = vmatpush2.msra.mxu0 0.0
    %1755 = vmatprep.subr.mxu0 0.0
    %1756 = vmatpush2.msra.mxu0 0.0
    %1757 = vmatprep.subr.mxu0 0.0
    %1758 = vmatpush2.msra.mxu0 0.0
    %1759 = vmatprep.subr.mxu0 0.0
    %1760 = vmatpush2.msra.mxu0 0.0
    %1761 = vmatprep.subr.mxu0 0.0
    %1762 = vmatpush2.msra.mxu0 0.0
    %1763 = vmatprep.subr.mxu0 0.0
    %1764 = vmatpush2.msra.mxu0 0.0
    %1765 = vmatprep.mubr.f32.mxu0 0.0
    %1766 = vmatmul.mubr.f32.gmra.mxu0 %v1265
    %v1767 = vpop.f32.mrf.mxu0
    %v1768 = vadd.f32 %v586, %v1767
    %v1769 = vpop.f32.mrf.mxu0
    %1770 = vdwg.mxu0
    %v1771 = vsel %vm66, %v45, 0
    %1773 = vmatprep.subr.mxu0 0.0
    %1774 = vmatpush1.msra.mxu0 0.0
    %1775 = vmatprep.subr.mxu0 0.0
    %1776 = vmatpush1.msra.mxu0 0.0
    %1777 = vmatprep.subr.mxu0 0.0
    %1778 = vmatpush1.msra.mxu0 0.0
    %1779 = vmatprep.subr.mxu0 0.0
    %1780 = vmatpush1.msra.mxu0 0.0
    %1781 = vmatprep.subr.mxu0 0.0
    %1782 = vmatpush1.msra.mxu0 0.0
    %1783 = vmatprep.subr.mxu0 0.0
    %1784 = vmatpush1.msra.mxu0 0.0
    %1785 = vmatprep.subr.mxu0 0.0
    %1786 = vmatpush1.msra.mxu0 0.0
    %1787 = vmatprep.subr.mxu0 0.0
    %1788 = vmatpush1.msra.mxu0 0.0
    %1789 = vmatprep.subr.mxu0 0.0
    %1790 = vmatpush1.msra.mxu0 0.0
    %1791 = vmatprep.subr.mxu0 0.0
    %1792 = vmatpush1.msra.mxu0 0.0
    %1793 = vmatprep.subr.mxu0 0.0
    %1794 = vmatpush1.msra.mxu0 0.0
    %1795 = vmatprep.subr.mxu0 0.0
    %1796 = vmatpush1.msra.mxu0 0.0
    %1797 = vmatprep.subr.mxu0 0.0
    %1798 = vmatpush1.msra.mxu0 0.0
    %1799 = vmatprep.subr.mxu0 0.0
    %1800 = vmatpush1.msra.mxu0 0.0
    %1801 = vmatprep.subr.mxu0 0.0
    %1802 = vmatpush1.msra.mxu0 0.0
    %1803 = vmatprep.subr.mxu0 0.0
    %1804 = vmatpush1.msra.mxu0 %v1771
    %1805 = vmatprep.subr.mxu0 0.0
    %1806 = vmatpush2.msra.mxu0 0.0
    %1807 = vmatprep.subr.mxu0 0.0
    %1808 = vmatpush2.msra.mxu0 0.0
    %1809 = vmatprep.subr.mxu0 0.0
    %1810 = vmatpush2.msra.mxu0 0.0
    %1811 = vmatprep.subr.mxu0 0.0
    %1812 = vmatpush2.msra.mxu0 0.0
    %1813 = vmatprep.subr.mxu0 0.0
    %1814 = vmatpush2.msra.mxu0 0.0
    %1815 = vmatprep.subr.mxu0 0.0
    %1816 = vmatpush2.msra.mxu0 0.0
    %1817 = vmatprep.subr.mxu0 0.0
    %1818 = vmatpush2.msra.mxu0 0.0
    %1819 = vmatprep.subr.mxu0 0.0
    %1820 = vmatpush2.msra.mxu0 0.0
    %1821 = vmatprep.subr.mxu0 0.0
    %1822 = vmatpush2.msra.mxu0 0.0
    %1823 = vmatprep.subr.mxu0 0.0
    %1824 = vmatpush2.msra.mxu0 0.0
    %1825 = vmatprep.subr.mxu0 0.0
    %1826 = vmatpush2.msra.mxu0 0.0
    %1827 = vmatprep.subr.mxu0 0.0
    %1828 = vmatpush2.msra.mxu0 0.0
    %1829 = vmatprep.subr.mxu0 0.0
    %1830 = vmatpush2.msra.mxu0 0.0
    %1831 = vmatprep.subr.mxu0 0.0
    %1832 = vmatpush2.msra.mxu0 0.0
    %1833 = vmatprep.subr.mxu0 0.0
    %1834 = vmatpush2.msra.mxu0 0.0
    %1835 = vmatprep.subr.mxu0 0.0
    %1836 = vmatpush2.msra.mxu0 0.0
    %1837 = vmatprep.mubr.f32.mxu0 0.0
    %1838 = vmatmul.mubr.f32.gmra.mxu0 %v1265
    %v1839 = vpop.f32.mrf.mxu0
    %v1840 = vadd.f32 %v661, %v1839
    %v1841 = vpop.f32.mrf.mxu0
    %1842 = vdwg.mxu0
    %v1843 = vsel %vm66, %v46, 0
    %1845 = vmatprep.subr.mxu0 0.0
    %1846 = vmatpush1.msra.mxu0 0.0
    %1847 = vmatprep.subr.mxu0 0.0
    %1848 = vmatpush1.msra.mxu0 0.0
    %1849 = vmatprep.subr.mxu0 0.0
    %1850 = vmatpush1.msra.mxu0 0.0
    %1851 = vmatprep.subr.mxu0 0.0
    %1852 = vmatpush1.msra.mxu0 0.0
    %1853 = vmatprep.subr.mxu0 0.0
    %1854 = vmatpush1.msra.mxu0 0.0
    %1855 = vmatprep.subr.mxu0 0.0
    %1856 = vmatpush1.msra.mxu0 0.0
    %1857 = vmatprep.subr.mxu0 0.0
    %1858 = vmatpush1.msra.mxu0 0.0
    %1859 = vmatprep.subr.mxu0 0.0
    %1860 = vmatpush1.msra.mxu0 0.0
    %1861 = vmatprep.subr.mxu0 0.0
    %1862 = vmatpush1.msra.mxu0 0.0
    %1863 = vmatprep.subr.mxu0 0.0
    %1864 = vmatpush1.msra.mxu0 0.0
    %1865 = vmatprep.subr.mxu0 0.0
    %1866 = vmatpush1.msra.mxu0 0.0
    %1867 = vmatprep.subr.mxu0 0.0
    %1868 = vmatpush1.msra.mxu0 0.0
    %1869 = vmatprep.subr.mxu0 0.0
    %1870 = vmatpush1.msra.mxu0 0.0
    %1871 = vmatprep.subr.mxu0 0.0
    %1872 = vmatpush1.msra.mxu0 0.0
    %1873 = vmatprep.subr.mxu0 0.0
    %1874 = vmatpush1.msra.mxu0 0.0
    %1875 = vmatprep.subr.mxu0 0.0
    %1876 = vmatpush1.msra.mxu0 %v1843
    %1877 = vmatprep.subr.mxu0 0.0
    %1878 = vmatpush2.msra.mxu0 0.0
    %1879 = vmatprep.subr.mxu0 0.0
    %1880 = vmatpush2.msra.mxu0 0.0
    %1881 = vmatprep.subr.mxu0 0.0
    %1882 = vmatpush2.msra.mxu0 0.0
    %1883 = vmatprep.subr.mxu0 0.0
    %1884 = vmatpush2.msra.mxu0 0.0
    %1885 = vmatprep.subr.mxu0 0.0
    %1886 = vmatpush2.msra.mxu0 0.0
    %1887 = vmatprep.subr.mxu0 0.0
    %1888 = vmatpush2.msra.mxu0 0.0
    %1889 = vmatprep.subr.mxu0 0.0
    %1890 = vmatpush2.msra.mxu0 0.0
    %1891 = vmatprep.subr.mxu0 0.0
    %1892 = vmatpush2.msra.mxu0 0.0
    %1893 = vmatprep.subr.mxu0 0.0
    %1894 = vmatpush2.msra.mxu0 0.0
    %1895 = vmatprep.subr.mxu0 0.0
    %1896 = vmatpush2.msra.mxu0 0.0
    %1897 = vmatprep.subr.mxu0 0.0
    %1898 = vmatpush2.msra.mxu0 0.0
    %1899 = vmatprep.subr.mxu0 0.0
    %1900 = vmatpush2.msra.mxu0 0.0
    %1901 = vmatprep.subr.mxu0 0.0
    %1902 = vmatpush2.msra.mxu0 0.0
    %1903 = vmatprep.subr.mxu0 0.0
    %1904 = vmatpush2.msra.mxu0 0.0
    %1905 = vmatprep.subr.mxu0 0.0
    %1906 = vmatpush2.msra.mxu0 0.0
    %1907 = vmatprep.subr.mxu0 0.0
    %1908 = vmatpush2.msra.mxu0 0.0
    %1909 = vmatprep.mubr.f32.mxu0 0.0
    %1910 = vmatmul.mubr.f32.gmra.mxu0 %v1265
    %v1911 = vpop.f32.mrf.mxu0
    %v1912 = vadd.f32 %v736, %v1911
    %v1913 = vpop.f32.mrf.mxu0
    %1914 = vdwg.mxu0
    %v1915 = vsel %vm66, %v47, 0
    %1917 = vmatprep.subr.mxu0 0.0
    %1918 = vmatpush1.msra.mxu0 0.0
    %1919 = vmatprep.subr.mxu0 0.0
    %1920 = vmatpush1.msra.mxu0 0.0
    %1921 = vmatprep.subr.mxu0 0.0
    %1922 = vmatpush1.msra.mxu0 0.0
    %1923 = vmatprep.subr.mxu0 0.0
    %1924 = vmatpush1.msra.mxu0 0.0
    %1925 = vmatprep.subr.mxu0 0.0
    %1926 = vmatpush1.msra.mxu0 0.0
    %1927 = vmatprep.subr.mxu0 0.0
    %1928 = vmatpush1.msra.mxu0 0.0
    %1929 = vmatprep.subr.mxu0 0.0
    %1930 = vmatpush1.msra.mxu0 0.0
    %1931 = vmatprep.subr.mxu0 0.0
    %1932 = vmatpush1.msra.mxu0 0.0
    %1933 = vmatprep.subr.mxu0 0.0
    %1934 = vmatpush1.msra.mxu0 0.0
    %1935 = vmatprep.subr.mxu0 0.0
    %1936 = vmatpush1.msra.mxu0 0.0
    %1937 = vmatprep.subr.mxu0 0.0
    %1938 = vmatpush1.msra.mxu0 0.0
    %1939 = vmatprep.subr.mxu0 0.0
    %1940 = vmatpush1.msra.mxu0 0.0
    %1941 = vmatprep.subr.mxu0 0.0
    %1942 = vmatpush1.msra.mxu0 0.0
    %1943 = vmatprep.subr.mxu0 0.0
    %1944 = vmatpush1.msra.mxu0 0.0
    %1945 = vmatprep.subr.mxu0 0.0
    %1946 = vmatpush1.msra.mxu0 0.0
    %1947 = vmatprep.subr.mxu0 0.0
    %1948 = vmatpush1.msra.mxu0 %v1915
    %1949 = vmatprep.subr.mxu0 0.0
    %1950 = vmatpush2.msra.mxu0 0.0
    %1951 = vmatprep.subr.mxu0 0.0
    %1952 = vmatpush2.msra.mxu0 0.0
    %1953 = vmatprep.subr.mxu0 0.0
    %1954 = vmatpush2.msra.mxu0 0.0
    %1955 = vmatprep.subr.mxu0 0.0
    %1956 = vmatpush2.msra.mxu0 0.0
    %1957 = vmatprep.subr.mxu0 0.0
    %1958 = vmatpush2.msra.mxu0 0.0
    %1959 = vmatprep.subr.mxu0 0.0
    %1960 = vmatpush2.msra.mxu0 0.0
    %1961 = vmatprep.subr.mxu0 0.0
    %1962 = vmatpush2.msra.mxu0 0.0
    %1963 = vmatprep.subr.mxu0 0.0
    %1964 = vmatpush2.msra.mxu0 0.0
    %1965 = vmatprep.subr.mxu0 0.0
    %1966 = vmatpush2.msra.mxu0 0.0
    %1967 = vmatprep.subr.mxu0 0.0
    %1968 = vmatpush2.msra.mxu0 0.0
    %1969 = vmatprep.subr.mxu0 0.0
    %1970 = vmatpush2.msra.mxu0 0.0
    %1971 = vmatprep.subr.mxu0 0.0
    %1972 = vmatpush2.msra.mxu0 0.0
    %1973 = vmatprep.subr.mxu0 0.0
    %1974 = vmatpush2.msra.mxu0 0.0
    %1975 = vmatprep.subr.mxu0 0.0
    %1976 = vmatpush2.msra.mxu0 0.0
    %1977 = vmatprep.subr.mxu0 0.0
    %1978 = vmatpush2.msra.mxu0 0.0
    %1979 = vmatprep.subr.mxu0 0.0
    %1980 = vmatpush2.msra.mxu0 0.0
    %1981 = vmatprep.mubr.f32.mxu0 0.0
    %1982 = vmatmul.mubr.f32.gmra.mxu0 %v1265
    %v1983 = vpop.f32.mrf.mxu0
    %v1984 = vadd.f32 %v811, %v1983
    %v1985 = vpop.f32.mrf.mxu0
    %1986 = vdwg.mxu0
    %v1987 = vsel %vm66, %v48, 0
    %1989 = vmatprep.subr.mxu0 0.0
    %1990 = vmatpush1.msra.mxu0 0.0
    %1991 = vmatprep.subr.mxu0 0.0
    %1992 = vmatpush1.msra.mxu0 0.0
    %1993 = vmatprep.subr.mxu0 0.0
    %1994 = vmatpush1.msra.mxu0 0.0
    %1995 = vmatprep.subr.mxu0 0.0
    %1996 = vmatpush1.msra.mxu0 0.0
    %1997 = vmatprep.subr.mxu0 0.0
    %1998 = vmatpush1.msra.mxu0 0.0
    %1999 = vmatprep.subr.mxu0 0.0
    %2000 = vmatpush1.msra.mxu0 0.0
    %2001 = vmatprep.subr.mxu0 0.0
    %2002 = vmatpush1.msra.mxu0 0.0
    %2003 = vmatprep.subr.mxu0 0.0
    %2004 = vmatpush1.msra.mxu0 0.0
    %2005 = vmatprep.subr.mxu0 0.0
    %2006 = vmatpush1.msra.mxu0 0.0
    %2007 = vmatprep.subr.mxu0 0.0
    %2008 = vmatpush1.msra.mxu0 0.0
    %2009 = vmatprep.subr.mxu0 0.0
    %2010 = vmatpush1.msra.mxu0 0.0
    %2011 = vmatprep.subr.mxu0 0.0
    %2012 = vmatpush1.msra.mxu0 0.0
    %2013 = vmatprep.subr.mxu0 0.0
    %2014 = vmatpush1.msra.mxu0 0.0
    %2015 = vmatprep.subr.mxu0 0.0
    %2016 = vmatpush1.msra.mxu0 0.0
    %2017 = vmatprep.subr.mxu0 0.0
    %2018 = vmatpush1.msra.mxu0 0.0
    %2019 = vmatprep.subr.mxu0 0.0
    %2020 = vmatpush1.msra.mxu0 %v1987
    %2021 = vmatprep.subr.mxu0 0.0
    %2022 = vmatpush2.msra.mxu0 0.0
    %2023 = vmatprep.subr.mxu0 0.0
    %2024 = vmatpush2.msra.mxu0 0.0
    %2025 = vmatprep.subr.mxu0 0.0
    %2026 = vmatpush2.msra.mxu0 0.0
    %2027 = vmatprep.subr.mxu0 0.0
    %2028 = vmatpush2.msra.mxu0 0.0
    %2029 = vmatprep.subr.mxu0 0.0
    %2030 = vmatpush2.msra.mxu0 0.0
    %2031 = vmatprep.subr.mxu0 0.0
    %2032 = vmatpush2.msra.mxu0 0.0
    %2033 = vmatprep.subr.mxu0 0.0
    %2034 = vmatpush2.msra.mxu0 0.0
    %2035 = vmatprep.subr.mxu0 0.0
    %2036 = vmatpush2.msra.mxu0 0.0
    %2037 = vmatprep.subr.mxu0 0.0
    %2038 = vmatpush2.msra.mxu0 0.0
    %2039 = vmatprep.subr.mxu0 0.0
    %2040 = vmatpush2.msra.mxu0 0.0
    %2041 = vmatprep.subr.mxu0 0.0
    %2042 = vmatpush2.msra.mxu0 0.0
    %2043 = vmatprep.subr.mxu0 0.0
    %2044 = vmatpush2.msra.mxu0 0.0
    %2045 = vmatprep.subr.mxu0 0.0
    %2046 = vmatpush2.msra.mxu0 0.0
    %2047 = vmatprep.subr.mxu0 0.0
    %2048 = vmatpush2.msra.mxu0 0.0
    %2049 = vmatprep.subr.mxu0 0.0
    %2050 = vmatpush2.msra.mxu0 0.0
    %2051 = vmatprep.subr.mxu0 0.0
    %2052 = vmatpush2.msra.mxu0 0.0
    %2053 = vmatprep.mubr.f32.mxu0 0.0
    %2054 = vmatmul.mubr.f32.gmra.mxu0 %v1265
    %v2055 = vpop.f32.mrf.mxu0
    %v2056 = vadd.f32 %v886, %v2055
    %v2057 = vpop.f32.mrf.mxu0
    %2058 = vdwg.mxu0
    %v2059 = vsel %vm66, %v49, 0
    %2061 = vmatprep.subr.mxu0 0.0
    %2062 = vmatpush1.msra.mxu0 0.0
    %2063 = vmatprep.subr.mxu0 0.0
    %2064 = vmatpush1.msra.mxu0 0.0
    %2065 = vmatprep.subr.mxu0 0.0
    %2066 = vmatpush1.msra.mxu0 0.0
    %2067 = vmatprep.subr.mxu0 0.0
    %2068 = vmatpush1.msra.mxu0 0.0
    %2069 = vmatprep.subr.mxu0 0.0
    %2070 = vmatpush1.msra.mxu0 0.0
    %2071 = vmatprep.subr.mxu0 0.0
    %2072 = vmatpush1.msra.mxu0 0.0
    %2073 = vmatprep.subr.mxu0 0.0
    %2074 = vmatpush1.msra.mxu0 0.0
    %2075 = vmatprep.subr.mxu0 0.0
    %2076 = vmatpush1.msra.mxu0 0.0
    %2077 = vmatprep.subr.mxu0 0.0
    %2078 = vmatpush1.msra.mxu0 0.0
    %2079 = vmatprep.subr.mxu0 0.0
    %2080 = vmatpush1.msra.mxu0 0.0
    %2081 = vmatprep.subr.mxu0 0.0
    %2082 = vmatpush1.msra.mxu0 0.0
    %2083 = vmatprep.subr.mxu0 0.0
    %2084 = vmatpush1.msra.mxu0 0.0
    %2085 = vmatprep.subr.mxu0 0.0
    %2086 = vmatpush1.msra.mxu0 0.0
    %2087 = vmatprep.subr.mxu0 0.0
    %2088 = vmatpush1.msra.mxu0 0.0
    %2089 = vmatprep.subr.mxu0 0.0
    %2090 = vmatpush1.msra.mxu0 0.0
    %2091 = vmatprep.subr.mxu0 0.0
    %2092 = vmatpush1.msra.mxu0 %v2059
    %2093 = vmatprep.subr.mxu0 0.0
    %2094 = vmatpush2.msra.mxu0 0.0
    %2095 = vmatprep.subr.mxu0 0.0
    %2096 = vmatpush2.msra.mxu0 0.0
    %2097 = vmatprep.subr.mxu0 0.0
    %2098 = vmatpush2.msra.mxu0 0.0
    %2099 = vmatprep.subr.mxu0 0.0
    %2100 = vmatpush2.msra.mxu0 0.0
    %2101 = vmatprep.subr.mxu0 0.0
    %2102 = vmatpush2.msra.mxu0 0.0
    %2103 = vmatprep.subr.mxu0 0.0
    %2104 = vmatpush2.msra.mxu0 0.0
    %2105 = vmatprep.subr.mxu0 0.0
    %2106 = vmatpush2.msra.mxu0 0.0
    %2107 = vmatprep.subr.mxu0 0.0
    %2108 = vmatpush2.msra.mxu0 0.0
    %2109 = vmatprep.subr.mxu0 0.0
    %2110 = vmatpush2.msra.mxu0 0.0
    %2111 = vmatprep.subr.mxu0 0.0
    %2112 = vmatpush2.msra.mxu0 0.0
    %2113 = vmatprep.subr.mxu0 0.0
    %2114 = vmatpush2.msra.mxu0 0.0
    %2115 = vmatprep.subr.mxu0 0.0
    %2116 = vmatpush2.msra.mxu0 0.0
    %2117 = vmatprep.subr.mxu0 0.0
    %2118 = vmatpush2.msra.mxu0 0.0
    %2119 = vmatprep.subr.mxu0 0.0
    %2120 = vmatpush2.msra.mxu0 0.0
    %2121 = vmatprep.subr.mxu0 0.0
    %2122 = vmatpush2.msra.mxu0 0.0
    %2123 = vmatprep.subr.mxu0 0.0
    %2124 = vmatpush2.msra.mxu0 0.0
    %2125 = vmatprep.mubr.f32.mxu0 0.0
    %2126 = vmatmul.mubr.f32.gmra.mxu0 %v1265
    %v2127 = vpop.f32.mrf.mxu0
    %v2128 = vadd.f32 %v961, %v2127
    %v2129 = vpop.f32.mrf.mxu0
    %2130 = vdwg.mxu0
    %v2131 = vsel %vm66, %v50, 0
    %2133 = vmatprep.subr.mxu0 0.0
    %2134 = vmatpush1.msra.mxu0 0.0
    %2135 = vmatprep.subr.mxu0 0.0
    %2136 = vmatpush1.msra.mxu0 0.0
    %2137 = vmatprep.subr.mxu0 0.0
    %2138 = vmatpush1.msra.mxu0 0.0
    %2139 = vmatprep.subr.mxu0 0.0
    %2140 = vmatpush1.msra.mxu0 0.0
    %2141 = vmatprep.subr.mxu0 0.0
    %2142 = vmatpush1.msra.mxu0 0.0
    %2143 = vmatprep.subr.mxu0 0.0
    %2144 = vmatpush1.msra.mxu0 0.0
    %2145 = vmatprep.subr.mxu0 0.0
    %2146 = vmatpush1.msra.mxu0 0.0
    %2147 = vmatprep.subr.mxu0 0.0
    %2148 = vmatpush1.msra.mxu0 0.0
    %2149 = vmatprep.subr.mxu0 0.0
    %2150 = vmatpush1.msra.mxu0 0.0
    %2151 = vmatprep.subr.mxu0 0.0
    %2152 = vmatpush1.msra.mxu0 0.0
    %2153 = vmatprep.subr.mxu0 0.0
    %2154 = vmatpush1.msra.mxu0 0.0
    %2155 = vmatprep.subr.mxu0 0.0
    %2156 = vmatpush1.msra.mxu0 0.0
    %2157 = vmatprep.subr.mxu0 0.0
    %2158 = vmatpush1.msra.mxu0 0.0
    %2159 = vmatprep.subr.mxu0 0.0
    %2160 = vmatpush1.msra.mxu0 0.0
    %2161 = vmatprep.subr.mxu0 0.0
    %2162 = vmatpush1.msra.mxu0 0.0
    %2163 = vmatprep.subr.mxu0 0.0
    %2164 = vmatpush1.msra.mxu0 %v2131
    %2165 = vmatprep.subr.mxu0 0.0
    %2166 = vmatpush2.msra.mxu0 0.0
    %2167 = vmatprep.subr.mxu0 0.0
    %2168 = vmatpush2.msra.mxu0 0.0
    %2169 = vmatprep.subr.mxu0 0.0
    %2170 = vmatpush2.msra.mxu0 0.0
    %2171 = vmatprep.subr.mxu0 0.0
    %2172 = vmatpush2.msra.mxu0 0.0
    %2173 = vmatprep.subr.mxu0 0.0
    %2174 = vmatpush2.msra.mxu0 0.0
    %2175 = vmatprep.subr.mxu0 0.0
    %2176 = vmatpush2.msra.mxu0 0.0
    %2177 = vmatprep.subr.mxu0 0.0
    %2178 = vmatpush2.msra.mxu0 0.0
    %2179 = vmatprep.subr.mxu0 0.0
    %2180 = vmatpush2.msra.mxu0 0.0
    %2181 = vmatprep.subr.mxu0 0.0
    %2182 = vmatpush2.msra.mxu0 0.0
    %2183 = vmatprep.subr.mxu0 0.0
    %2184 = vmatpush2.msra.mxu0 0.0
    %2185 = vmatprep.subr.mxu0 0.0
    %2186 = vmatpush2.msra.mxu0 0.0
    %2187 = vmatprep.subr.mxu0 0.0
    %2188 = vmatpush2.msra.mxu0 0.0
    %2189 = vmatprep.subr.mxu0 0.0
    %2190 = vmatpush2.msra.mxu0 0.0
    %2191 = vmatprep.subr.mxu0 0.0
    %2192 = vmatpush2.msra.mxu0 0.0
    %2193 = vmatprep.subr.mxu0 0.0
    %2194 = vmatpush2.msra.mxu0 0.0
    %2195 = vmatprep.subr.mxu0 0.0
    %2196 = vmatpush2.msra.mxu0 0.0
    %2197 = vmatprep.mubr.f32.mxu0 0.0
    %2198 = vmatmul.mubr.f32.gmra.mxu0 %v1265
    %v2199 = vpop.f32.mrf.mxu0
    %v2200 = vadd.f32 %v1036, %v2199
    %v2201 = vpop.f32.mrf.mxu0
    %2202 = vdwg.mxu0
    %v2203 = vsel %vm66, %v51, 0
    %2205 = vmatprep.subr.mxu0 0.0
    %2206 = vmatpush1.msra.mxu0 0.0
    %2207 = vmatprep.subr.mxu0 0.0
    %2208 = vmatpush1.msra.mxu0 0.0
    %2209 = vmatprep.subr.mxu0 0.0
    %2210 = vmatpush1.msra.mxu0 0.0
    %2211 = vmatprep.subr.mxu0 0.0
    %2212 = vmatpush1.msra.mxu0 0.0
    %2213 = vmatprep.subr.mxu0 0.0
    %2214 = vmatpush1.msra.mxu0 0.0
    %2215 = vmatprep.subr.mxu0 0.0
    %2216 = vmatpush1.msra.mxu0 0.0
    %2217 = vmatprep.subr.mxu0 0.0
    %2218 = vmatpush1.msra.mxu0 0.0
    %2219 = vmatprep.subr.mxu0 0.0
    %2220 = vmatpush1.msra.mxu0 0.0
    %2221 = vmatprep.subr.mxu0 0.0
    %2222 = vmatpush1.msra.mxu0 0.0
    %2223 = vmatprep.subr.mxu0 0.0
    %2224 = vmatpush1.msra.mxu0 0.0
    %2225 = vmatprep.subr.mxu0 0.0
    %2226 = vmatpush1.msra.mxu0 0.0
    %2227 = vmatprep.subr.mxu0 0.0
    %2228 = vmatpush1.msra.mxu0 0.0
    %2229 = vmatprep.subr.mxu0 0.0
    %2230 = vmatpush1.msra.mxu0 0.0
    %2231 = vmatprep.subr.mxu0 0.0
    %2232 = vmatpush1.msra.mxu0 0.0
    %2233 = vmatprep.subr.mxu0 0.0
    %2234 = vmatpush1.msra.mxu0 0.0
    %2235 = vmatprep.subr.mxu0 0.0
    %2236 = vmatpush1.msra.mxu0 %v2203
    %2237 = vmatprep.subr.mxu0 0.0
    %2238 = vmatpush2.msra.mxu0 0.0
    %2239 = vmatprep.subr.mxu0 0.0
    %2240 = vmatpush2.msra.mxu0 0.0
    %2241 = vmatprep.subr.mxu0 0.0
    %2242 = vmatpush2.msra.mxu0 0.0
    %2243 = vmatprep.subr.mxu0 0.0
    %2244 = vmatpush2.msra.mxu0 0.0
    %2245 = vmatprep.subr.mxu0 0.0
    %2246 = vmatpush2.msra.mxu0 0.0
    %2247 = vmatprep.subr.mxu0 0.0
    %2248 = vmatpush2.msra.mxu0 0.0
    %2249 = vmatprep.subr.mxu0 0.0
    %2250 = vmatpush2.msra.mxu0 0.0
    %2251 = vmatprep.subr.mxu0 0.0
    %2252 = vmatpush2.msra.mxu0 0.0
    %2253 = vmatprep.subr.mxu0 0.0
    %2254 = vmatpush2.msra.mxu0 0.0
    %2255 = vmatprep.subr.mxu0 0.0
    %2256 = vmatpush2.msra.mxu0 0.0
    %2257 = vmatprep.subr.mxu0 0.0
    %2258 = vmatpush2.msra.mxu0 0.0
    %2259 = vmatprep.subr.mxu0 0.0
    %2260 = vmatpush2.msra.mxu0 0.0
    %2261 = vmatprep.subr.mxu0 0.0
    %2262 = vmatpush2.msra.mxu0 0.0
    %2263 = vmatprep.subr.mxu0 0.0
    %2264 = vmatpush2.msra.mxu0 0.0
    %2265 = vmatprep.subr.mxu0 0.0
    %2266 = vmatpush2.msra.mxu0 0.0
    %2267 = vmatprep.subr.mxu0 0.0
    %2268 = vmatpush2.msra.mxu0 0.0
    %2269 = vmatprep.mubr.f32.mxu0 0.0
    %2270 = vmatmul.mubr.f32.gmra.mxu0 %v1265
    %v2271 = vpop.f32.mrf.mxu0
    %v2272 = vadd.f32 %v1111, %v2271
    %v2273 = vpop.f32.mrf.mxu0
    %2274 = vdwg.mxu0
    %v2275 = vsel %vm66, %v52, 0
    %2277 = vmatprep.subr.mxu0 0.0
    %2278 = vmatpush1.msra.mxu0 0.0
    %2279 = vmatprep.subr.mxu0 0.0
    %2280 = vmatpush1.msra.mxu0 0.0
    %2281 = vmatprep.subr.mxu0 0.0
    %2282 = vmatpush1.msra.mxu0 0.0
    %2283 = vmatprep.subr.mxu0 0.0
    %2284 = vmatpush1.msra.mxu0 0.0
    %2285 = vmatprep.subr.mxu0 0.0
    %2286 = vmatpush1.msra.mxu0 0.0
    %2287 = vmatprep.subr.mxu0 0.0
    %2288 = vmatpush1.msra.mxu0 0.0
    %2289 = vmatprep.subr.mxu0 0.0
    %2290 = vmatpush1.msra.mxu0 0.0
    %2291 = vmatprep.subr.mxu0 0.0
    %2292 = vmatpush1.msra.mxu0 0.0
    %2293 = vmatprep.subr.mxu0 0.0
    %2294 = vmatpush1.msra.mxu0 0.0
    %2295 = vmatprep.subr.mxu0 0.0
    %2296 = vmatpush1.msra.mxu0 0.0
    %2297 = vmatprep.subr.mxu0 0.0
    %2298 = vmatpush1.msra.mxu0 0.0
    %2299 = vmatprep.subr.mxu0 0.0
    %2300 = vmatpush1.msra.mxu0 0.0
    %2301 = vmatprep.subr.mxu0 0.0
    %2302 = vmatpush1.msra.mxu0 0.0
    %2303 = vmatprep.subr.mxu0 0.0
    %2304 = vmatpush1.msra.mxu0 0.0
    %2305 = vmatprep.subr.mxu0 0.0
    %2306 = vmatpush1.msra.mxu0 0.0
    %2307 = vmatprep.subr.mxu0 0.0
    %2308 = vmatpush1.msra.mxu0 %v2275
    %2309 = vmatprep.subr.mxu0 0.0
    %2310 = vmatpush2.msra.mxu0 0.0
    %2311 = vmatprep.subr.mxu0 0.0
    %2312 = vmatpush2.msra.mxu0 0.0
    %2313 = vmatprep.subr.mxu0 0.0
    %2314 = vmatpush2.msra.mxu0 0.0
    %2315 = vmatprep.subr.mxu0 0.0
    %2316 = vmatpush2.msra.mxu0 0.0
    %2317 = vmatprep.subr.mxu0 0.0
    %2318 = vmatpush2.msra.mxu0 0.0
    %2319 = vmatprep.subr.mxu0 0.0
    %2320 = vmatpush2.msra.mxu0 0.0
    %2321 = vmatprep.subr.mxu0 0.0
    %2322 = vmatpush2.msra.mxu0 0.0
    %2323 = vmatprep.subr.mxu0 0.0
    %2324 = vmatpush2.msra.mxu0 0.0
    %2325 = vmatprep.subr.mxu0 0.0
    %2326 = vmatpush2.msra.mxu0 0.0
    %2327 = vmatprep.subr.mxu0 0.0
    %2328 = vmatpush2.msra.mxu0 0.0
    %2329 = vmatprep.subr.mxu0 0.0
    %2330 = vmatpush2.msra.mxu0 0.0
    %2331 = vmatprep.subr.mxu0 0.0
    %2332 = vmatpush2.msra.mxu0 0.0
    %2333 = vmatprep.subr.mxu0 0.0
    %2334 = vmatpush2.msra.mxu0 0.0
    %2335 = vmatprep.subr.mxu0 0.0
    %2336 = vmatpush2.msra.mxu0 0.0
    %2337 = vmatprep.subr.mxu0 0.0
    %2338 = vmatpush2.msra.mxu0 0.0
    %2339 = vmatprep.subr.mxu0 0.0
    %2340 = vmatpush2.msra.mxu0 0.0
    %2341 = vmatprep.mubr.f32.mxu0 0.0
    %2342 = vmatmul.mubr.f32.gmra.mxu0 %v1265
    %v2343 = vpop.f32.mrf.mxu0
    %v2344 = vadd.f32 %v1186, %v2343
    %v2345 = vpop.f32.mrf.mxu0
    %2346 = vdwg.mxu0
    %v2347 = vsel %vm66, %v53, 0
    %2349 = vmatprep.subr.mxu0 0.0
    %2350 = vmatpush1.msra.mxu0 0.0
    %2351 = vmatprep.subr.mxu0 0.0
    %2352 = vmatpush1.msra.mxu0 0.0
    %2353 = vmatprep.subr.mxu0 0.0
    %2354 = vmatpush1.msra.mxu0 0.0
    %2355 = vmatprep.subr.mxu0 0.0
    %2356 = vmatpush1.msra.mxu0 0.0
    %2357 = vmatprep.subr.mxu0 0.0
    %2358 = vmatpush1.msra.mxu0 0.0
    %2359 = vmatprep.subr.mxu0 0.0
    %2360 = vmatpush1.msra.mxu0 0.0
    %2361 = vmatprep.subr.mxu0 0.0
    %2362 = vmatpush1.msra.mxu0 0.0
    %2363 = vmatprep.subr.mxu0 0.0
    %2364 = vmatpush1.msra.mxu0 0.0
    %2365 = vmatprep.subr.mxu0 0.0
    %2366 = vmatpush1.msra.mxu0 0.0
    %2367 = vmatprep.subr.mxu0 0.0
    %2368 = vmatpush1.msra.mxu0 0.0
    %2369 = vmatprep.subr.mxu0 0.0
    %2370 = vmatpush1.msra.mxu0 0.0
    %2371 = vmatprep.subr.mxu0 0.0
    %2372 = vmatpush1.msra.mxu0 0.0
    %2373 = vmatprep.subr.mxu0 0.0
    %2374 = vmatpush1.msra.mxu0 0.0
    %2375 = vmatprep.subr.mxu0 0.0
    %2376 = vmatpush1.msra.mxu0 0.0
    %2377 = vmatprep.subr.mxu0 0.0
    %2378 = vmatpush1.msra.mxu0 0.0
    %2379 = vmatprep.subr.mxu0 0.0
    %2380 = vmatpush1.msra.mxu0 %v2347
    %2381 = vmatprep.subr.mxu0 0.0
    %2382 = vmatpush2.msra.mxu0 0.0
    %2383 = vmatprep.subr.mxu0 0.0
    %2384 = vmatpush2.msra.mxu0 0.0
    %2385 = vmatprep.subr.mxu0 0.0
    %2386 = vmatpush2.msra.mxu0 0.0
    %2387 = vmatprep.subr.mxu0 0.0
    %2388 = vmatpush2.msra.mxu0 0.0
    %2389 = vmatprep.subr.mxu0 0.0
    %2390 = vmatpush2.msra.mxu0 0.0
    %2391 = vmatprep.subr.mxu0 0.0
    %2392 = vmatpush2.msra.mxu0 0.0
    %2393 = vmatprep.subr.mxu0 0.0
    %2394 = vmatpush2.msra.mxu0 0.0
    %2395 = vmatprep.subr.mxu0 0.0
    %2396 = vmatpush2.msra.mxu0 0.0
    %2397 = vmatprep.subr.mxu0 0.0
    %2398 = vmatpush2.msra.mxu0 0.0
    %2399 = vmatprep.subr.mxu0 0.0
    %2400 = vmatpush2.msra.mxu0 0.0
    %2401 = vmatprep.subr.mxu0 0.0
    %2402 = vmatpush2.msra.mxu0 0.0
    %2403 = vmatprep.subr.mxu0 0.0
    %2404 = vmatpush2.msra.mxu0 0.0
    %2405 = vmatprep.subr.mxu0 0.0
    %2406 = vmatpush2.msra.mxu0 0.0
    %2407 = vmatprep.subr.mxu0 0.0
    %2408 = vmatpush2.msra.mxu0 0.0
    %2409 = vmatprep.subr.mxu0 0.0
    %2410 = vmatpush2.msra.mxu0 0.0
    %2411 = vmatprep.subr.mxu0 0.0
    %2412 = vmatpush2.msra.mxu0 0.0
    %2413 = vmatprep.mubr.f32.mxu0 0.0
    %2414 = vmatmul.mubr.f32.gmra.mxu0 %v1265
    %v2415 = vpop.f32.mrf.mxu0
    %v2416 = vadd.f32 %v1261, %v2415
    %v2417 = vpop.f32.mrf.mxu0
    %2418 = vdwg.mxu0
    %2419 = vrot.lane.b32.xlu0 %v38, 126
    %v2420 = vpop.permute.xlu0 %2419
    %v2422 = vsel %vm62, %v56, 0
    %v2424 = vsel %vm66, %v2420, 0
    %2426 = vmatprep.subr.mxu0 0.0
    %2427 = vmatpush1.msra.mxu0 0.0
    %2428 = vmatprep.subr.mxu0 0.0
    %2429 = vmatpush1.msra.mxu0 0.0
    %2430 = vmatprep.subr.mxu0 0.0
    %2431 = vmatpush1.msra.mxu0 0.0
    %2432 = vmatprep.subr.mxu0 0.0
    %2433 = vmatpush1.msra.mxu0 0.0
    %2434 = vmatprep.subr.mxu0 0.0
    %2435 = vmatpush1.msra.mxu0 0.0
    %2436 = vmatprep.subr.mxu0 0.0
    %2437 = vmatpush1.msra.mxu0 0.0
    %2438 = vmatprep.subr.mxu0 0.0
    %2439 = vmatpush1.msra.mxu0 0.0
    %2440 = vmatprep.subr.mxu0 0.0
    %2441 = vmatpush1.msra.mxu0 0.0
    %2442 = vmatprep.subr.mxu0 0.0
    %2443 = vmatpush1.msra.mxu0 0.0
    %2444 = vmatprep.subr.mxu0 0.0
    %2445 = vmatpush1.msra.mxu0 0.0
    %2446 = vmatprep.subr.mxu0 0.0
    %2447 = vmatpush1.msra.mxu0 0.0
    %2448 = vmatprep.subr.mxu0 0.0
    %2449 = vmatpush1.msra.mxu0 0.0
    %2450 = vmatprep.subr.mxu0 0.0
    %2451 = vmatpush1.msra.mxu0 0.0
    %2452 = vmatprep.subr.mxu0 0.0
    %2453 = vmatpush1.msra.mxu0 0.0
    %2454 = vmatprep.subr.mxu0 0.0
    %2455 = vmatpush1.msra.mxu0 0.0
    %2456 = vmatprep.subr.mxu0 0.0
    %2457 = vmatpush1.msra.mxu0 %v2424
    %2458 = vmatprep.subr.mxu0 0.0
    %2459 = vmatpush2.msra.mxu0 0.0
    %2460 = vmatprep.subr.mxu0 0.0
    %2461 = vmatpush2.msra.mxu0 0.0
    %2462 = vmatprep.subr.mxu0 0.0
    %2463 = vmatpush2.msra.mxu0 0.0
    %2464 = vmatprep.subr.mxu0 0.0
    %2465 = vmatpush2.msra.mxu0 0.0
    %2466 = vmatprep.subr.mxu0 0.0
    %2467 = vmatpush2.msra.mxu0 0.0
    %2468 = vmatprep.subr.mxu0 0.0
    %2469 = vmatpush2.msra.mxu0 0.0
    %2470 = vmatprep.subr.mxu0 0.0
    %2471 = vmatpush2.msra.mxu0 0.0
    %2472 = vmatprep.subr.mxu0 0.0
    %2473 = vmatpush2.msra.mxu0 0.0
    %2474 = vmatprep.subr.mxu0 0.0
    %2475 = vmatpush2.msra.mxu0 0.0
    %2476 = vmatprep.subr.mxu0 0.0
    %2477 = vmatpush2.msra.mxu0 0.0
    %2478 = vmatprep.subr.mxu0 0.0
    %2479 = vmatpush2.msra.mxu0 0.0
    %2480 = vmatprep.subr.mxu0 0.0
    %2481 = vmatpush2.msra.mxu0 0.0
    %2482 = vmatprep.subr.mxu0 0.0
    %2483 = vmatpush2.msra.mxu0 0.0
    %2484 = vmatprep.subr.mxu0 0.0
    %2485 = vmatpush2.msra.mxu0 0.0
    %2486 = vmatprep.subr.mxu0 0.0
    %2487 = vmatpush2.msra.mxu0 0.0
    %2488 = vmatprep.subr.mxu0 0.0
    %2489 = vmatpush2.msra.mxu0 0.0
    %2490 = vmatprep.mubr.f32.mxu0 0.0
    %2491 = vmatmul.mubr.f32.gmra.mxu0 %v2422
    %v2492 = vpop.f32.mrf.mxu0
    %v2493 = vadd.f32 0.0, %v2492
    %v2494 = vpop.f32.mrf.mxu0
    %2495 = vdwg.mxu0
    %2496 = vrot.lane.b32.xlu0 %v39, 126
    %v2497 = vpop.permute.xlu0 %2496
    %v2498 = vsel %vm66, %v2497, 0
    %2500 = vmatprep.subr.mxu0 0.0
    %2501 = vmatpush1.msra.mxu0 0.0
    %2502 = vmatprep.subr.mxu0 0.0
    %2503 = vmatpush1.msra.mxu0 0.0
    %2504 = vmatprep.subr.mxu0 0.0
    %2505 = vmatpush1.msra.mxu0 0.0
    %2506 = vmatprep.subr.mxu0 0.0
    %2507 = vmatpush1.msra.mxu0 0.0
    %2508 = vmatprep.subr.mxu0 0.0
    %2509 = vmatpush1.msra.mxu0 0.0
    %2510 = vmatprep.subr.mxu0 0.0
    %2511 = vmatpush1.msra.mxu0 0.0
    %2512 = vmatprep.subr.mxu0 0.0
    %2513 = vmatpush1.msra.mxu0 0.0
    %2514 = vmatprep.subr.mxu0 0.0
    %2515 = vmatpush1.msra.mxu0 0.0
    %2516 = vmatprep.subr.mxu0 0.0
    %2517 = vmatpush1.msra.mxu0 0.0
    %2518 = vmatprep.subr.mxu0 0.0
    %2519 = vmatpush1.msra.mxu0 0.0
    %2520 = vmatprep.subr.mxu0 0.0
    %2521 = vmatpush1.msra.mxu0 0.0
    %2522 = vmatprep.subr.mxu0 0.0
    %2523 = vmatpush1.msra.mxu0 0.0
    %2524 = vmatprep.subr.mxu0 0.0
    %2525 = vmatpush1.msra.mxu0 0.0
    %2526 = vmatprep.subr.mxu0 0.0
    %2527 = vmatpush1.msra.mxu0 0.0
    %2528 = vmatprep.subr.mxu0 0.0
    %2529 = vmatpush1.msra.mxu0 0.0
    %2530 = vmatprep.subr.mxu0 0.0
    %2531 = vmatpush1.msra.mxu0 %v2498
    %2532 = vmatprep.subr.mxu0 0.0
    %2533 = vmatpush2.msra.mxu0 0.0
    %2534 = vmatprep.subr.mxu0 0.0
    %2535 = vmatpush2.msra.mxu0 0.0
    %2536 = vmatprep.subr.mxu0 0.0
    %2537 = vmatpush2.msra.mxu0 0.0
    %2538 = vmatprep.subr.mxu0 0.0
    %2539 = vmatpush2.msra.mxu0 0.0
    %2540 = vmatprep.subr.mxu0 0.0
    %2541 = vmatpush2.msra.mxu0 0.0
    %2542 = vmatprep.subr.mxu0 0.0
    %2543 = vmatpush2.msra.mxu0 0.0
    %2544 = vmatprep.subr.mxu0 0.0
    %2545 = vmatpush2.msra.mxu0 0.0
    %2546 = vmatprep.subr.mxu0 0.0
    %2547 = vmatpush2.msra.mxu0 0.0
    %2548 = vmatprep.subr.mxu0 0.0
    %2549 = vmatpush2.msra.mxu0 0.0
    %2550 = vmatprep.subr.mxu0 0.0
    %2551 = vmatpush2.msra.mxu0 0.0
    %2552 = vmatprep.subr.mxu0 0.0
    %2553 = vmatpush2.msra.mxu0 0.0
    %2554 = vmatprep.subr.mxu0 0.0
    %2555 = vmatpush2.msra.mxu0 0.0
    %2556 = vmatprep.subr.mxu0 0.0
    %2557 = vmatpush2.msra.mxu0 0.0
    %2558 = vmatprep.subr.mxu0 0.0
    %2559 = vmatpush2.msra.mxu0 0.0
    %2560 = vmatprep.subr.mxu0 0.0
    %2561 = vmatpush2.msra.mxu0 0.0
    %2562 = vmatprep.subr.mxu0 0.0
    %2563 = vmatpush2.msra.mxu0 0.0
    %2564 = vmatprep.mubr.f32.mxu0 0.0
    %2565 = vmatmul.mubr.f32.gmra.mxu0 %v2422
    %v2566 = vpop.f32.mrf.mxu0
    %v2567 = vadd.f32 0.0, %v2566
    %v2568 = vpop.f32.mrf.mxu0
    %2569 = vdwg.mxu0
    %2570 = vrot.lane.b32.xlu0 %v40, 126
    %v2571 = vpop.permute.xlu0 %2570
    %v2572 = vsel %vm66, %v2571, 0
    %2574 = vmatprep.subr.mxu0 0.0
    %2575 = vmatpush1.msra.mxu0 0.0
    %2576 = vmatprep.subr.mxu0 0.0
    %2577 = vmatpush1.msra.mxu0 0.0
    %2578 = vmatprep.subr.mxu0 0.0
    %2579 = vmatpush1.msra.mxu0 0.0
    %2580 = vmatprep.subr.mxu0 0.0
    %2581 = vmatpush1.msra.mxu0 0.0
    %2582 = vmatprep.subr.mxu0 0.0
    %2583 = vmatpush1.msra.mxu0 0.0
    %2584 = vmatprep.subr.mxu0 0.0
    %2585 = vmatpush1.msra.mxu0 0.0
    %2586 = vmatprep.subr.mxu0 0.0
    %2587 = vmatpush1.msra.mxu0 0.0
    %2588 = vmatprep.subr.mxu0 0.0
    %2589 = vmatpush1.msra.mxu0 0.0
    %2590 = vmatprep.subr.mxu0 0.0
    %2591 = vmatpush1.msra.mxu0 0.0
    %2592 = vmatprep.subr.mxu0 0.0
    %2593 = vmatpush1.msra.mxu0 0.0
    %2594 = vmatprep.subr.mxu0 0.0
    %2595 = vmatpush1.msra.mxu0 0.0
    %2596 = vmatprep.subr.mxu0 0.0
    %2597 = vmatpush1.msra.mxu0 0.0
    %2598 = vmatprep.subr.mxu0 0.0
    %2599 = vmatpush1.msra.mxu0 0.0
    %2600 = vmatprep.subr.mxu0 0.0
    %2601 = vmatpush1.msra.mxu0 0.0
    %2602 = vmatprep.subr.mxu0 0.0
    %2603 = vmatpush1.msra.mxu0 0.0
    %2604 = vmatprep.subr.mxu0 0.0
    %2605 = vmatpush1.msra.mxu0 %v2572
    %2606 = vmatprep.subr.mxu0 0.0
    %2607 = vmatpush2.msra.mxu0 0.0
    %2608 = vmatprep.subr.mxu0 0.0
    %2609 = vmatpush2.msra.mxu0 0.0
    %2610 = vmatprep.subr.mxu0 0.0
    %2611 = vmatpush2.msra.mxu0 0.0
    %2612 = vmatprep.subr.mxu0 0.0
    %2613 = vmatpush2.msra.mxu0 0.0
    %2614 = vmatprep.subr.mxu0 0.0
    %2615 = vmatpush2.msra.mxu0 0.0
    %2616 = vmatprep.subr.mxu0 0.0
    %2617 = vmatpush2.msra.mxu0 0.0
    %2618 = vmatprep.subr.mxu0 0.0
    %2619 = vmatpush2.msra.mxu0 0.0
    %2620 = vmatprep.subr.mxu0 0.0
    %2621 = vmatpush2.msra.mxu0 0.0
    %2622 = vmatprep.subr.mxu0 0.0
    %2623 = vmatpush2.msra.mxu0 0.0
    %2624 = vmatprep.subr.mxu0 0.0
    %2625 = vmatpush2.msra.mxu0 0.0
    %2626 = vmatprep.subr.mxu0 0.0
    %2627 = vmatpush2.msra.mxu0 0.0
    %2628 = vmatprep.subr.mxu0 0.0
    %2629 = vmatpush2.msra.mxu0 0.0
    %2630 = vmatprep.subr.mxu0 0.0
    %2631 = vmatpush2.msra.mxu0 0.0
    %2632 = vmatprep.subr.mxu0 0.0
    %2633 = vmatpush2.msra.mxu0 0.0
    %2634 = vmatprep.subr.mxu0 0.0
    %2635 = vmatpush2.msra.mxu0 0.0
    %2636 = vmatprep.subr.mxu0 0.0
    %2637 = vmatpush2.msra.mxu0 0.0
    %2638 = vmatprep.mubr.f32.mxu0 0.0
    %2639 = vmatmul.mubr.f32.gmra.mxu0 %v2422
    %v2640 = vpop.f32.mrf.mxu0
    %v2641 = vadd.f32 0.0, %v2640
    %v2642 = vpop.f32.mrf.mxu0
    %2643 = vdwg.mxu0
    %2644 = vrot.lane.b32.xlu0 %v41, 126
    %v2645 = vpop.permute.xlu0 %2644
    %v2646 = vsel %vm66, %v2645, 0
    %2648 = vmatprep.subr.mxu0 0.0
    %2649 = vmatpush1.msra.mxu0 0.0
    %2650 = vmatprep.subr.mxu0 0.0
    %2651 = vmatpush1.msra.mxu0 0.0
    %2652 = vmatprep.subr.mxu0 0.0
    %2653 = vmatpush1.msra.mxu0 0.0
    %2654 = vmatprep.subr.mxu0 0.0
    %2655 = vmatpush1.msra.mxu0 0.0
    %2656 = vmatprep.subr.mxu0 0.0
    %2657 = vmatpush1.msra.mxu0 0.0
    %2658 = vmatprep.subr.mxu0 0.0
    %2659 = vmatpush1.msra.mxu0 0.0
    %2660 = vmatprep.subr.mxu0 0.0
    %2661 = vmatpush1.msra.mxu0 0.0
    %2662 = vmatprep.subr.mxu0 0.0
    %2663 = vmatpush1.msra.mxu0 0.0
    %2664 = vmatprep.subr.mxu0 0.0
    %2665 = vmatpush1.msra.mxu0 0.0
    %2666 = vmatprep.subr.mxu0 0.0
    %2667 = vmatpush1.msra.mxu0 0.0
    %2668 = vmatprep.subr.mxu0 0.0
    %2669 = vmatpush1.msra.mxu0 0.0
    %2670 = vmatprep.subr.mxu0 0.0
    %2671 = vmatpush1.msra.mxu0 0.0
    %2672 = vmatprep.subr.mxu0 0.0
    %2673 = vmatpush1.msra.mxu0 0.0
    %2674 = vmatprep.subr.mxu0 0.0
    %2675 = vmatpush1.msra.mxu0 0.0
    %2676 = vmatprep.subr.mxu0 0.0
    %2677 = vmatpush1.msra.mxu0 0.0
    %2678 = vmatprep.subr.mxu0 0.0
    %2679 = vmatpush1.msra.mxu0 %v2646
    %2680 = vmatprep.subr.mxu0 0.0
    %2681 = vmatpush2.msra.mxu0 0.0
    %2682 = vmatprep.subr.mxu0 0.0
    %2683 = vmatpush2.msra.mxu0 0.0
    %2684 = vmatprep.subr.mxu0 0.0
    %2685 = vmatpush2.msra.mxu0 0.0
    %2686 = vmatprep.subr.mxu0 0.0
    %2687 = vmatpush2.msra.mxu0 0.0
    %2688 = vmatprep.subr.mxu0 0.0
    %2689 = vmatpush2.msra.mxu0 0.0
    %2690 = vmatprep.subr.mxu0 0.0
    %2691 = vmatpush2.msra.mxu0 0.0
    %2692 = vmatprep.subr.mxu0 0.0
    %2693 = vmatpush2.msra.mxu0 0.0
    %2694 = vmatprep.subr.mxu0 0.0
    %2695 = vmatpush2.msra.mxu0 0.0
    %2696 = vmatprep.subr.mxu0 0.0
    %2697 = vmatpush2.msra.mxu0 0.0
    %2698 = vmatprep.subr.mxu0 0.0
    %2699 = vmatpush2.msra.mxu0 0.0
    %2700 = vmatprep.subr.mxu0 0.0
    %2701 = vmatpush2.msra.mxu0 0.0
    %2702 = vmatprep.subr.mxu0 0.0
    %2703 = vmatpush2.msra.mxu0 0.0
    %2704 = vmatprep.subr.mxu0 0.0
    %2705 = vmatpush2.msra.mxu0 0.0
    %2706 = vmatprep.subr.mxu0 0.0
    %2707 = vmatpush2.msra.mxu0 0.0
    %2708 = vmatprep.subr.mxu0 0.0
    %2709 = vmatpush2.msra.mxu0 0.0
    %2710 = vmatprep.subr.mxu0 0.0
    %2711 = vmatpush2.msra.mxu0 0.0
    %2712 = vmatprep.mubr.f32.mxu0 0.0
    %2713 = vmatmul.mubr.f32.gmra.mxu0 %v2422
    %v2714 = vpop.f32.mrf.mxu0
    %v2715 = vadd.f32 0.0, %v2714
    %v2716 = vpop.f32.mrf.mxu0
    %2717 = vdwg.mxu0
    %2718 = vrot.lane.b32.xlu0 %v42, 126
    %v2719 = vpop.permute.xlu0 %2718
    %v2720 = vsel %vm66, %v2719, 0
    %2722 = vmatprep.subr.mxu0 0.0
    %2723 = vmatpush1.msra.mxu0 0.0
    %2724 = vmatprep.subr.mxu0 0.0
    %2725 = vmatpush1.msra.mxu0 0.0
    %2726 = vmatprep.subr.mxu0 0.0
    %2727 = vmatpush1.msra.mxu0 0.0
    %2728 = vmatprep.subr.mxu0 0.0
    %2729 = vmatpush1.msra.mxu0 0.0
    %2730 = vmatprep.subr.mxu0 0.0
    %2731 = vmatpush1.msra.mxu0 0.0
    %2732 = vmatprep.subr.mxu0 0.0
    %2733 = vmatpush1.msra.mxu0 0.0
    %2734 = vmatprep.subr.mxu0 0.0
    %2735 = vmatpush1.msra.mxu0 0.0
    %2736 = vmatprep.subr.mxu0 0.0
    %2737 = vmatpush1.msra.mxu0 0.0
    %2738 = vmatprep.subr.mxu0 0.0
    %2739 = vmatpush1.msra.mxu0 0.0
    %2740 = vmatprep.subr.mxu0 0.0
    %2741 = vmatpush1.msra.mxu0 0.0
    %2742 = vmatprep.subr.mxu0 0.0
    %2743 = vmatpush1.msra.mxu0 0.0
    %2744 = vmatprep.subr.mxu0 0.0
    %2745 = vmatpush1.msra.mxu0 0.0
    %2746 = vmatprep.subr.mxu0 0.0
    %2747 = vmatpush1.msra.mxu0 0.0
    %2748 = vmatprep.subr.mxu0 0.0
    %2749 = vmatpush1.msra.mxu0 0.0
    %2750 = vmatprep.subr.mxu0 0.0
    %2751 = vmatpush1.msra.mxu0 0.0
    %2752 = vmatprep.subr.mxu0 0.0
    %2753 = vmatpush1.msra.mxu0 %v2720
    %2754 = vmatprep.subr.mxu0 0.0
    %2755 = vmatpush2.msra.mxu0 0.0
    %2756 = vmatprep.subr.mxu0 0.0
    %2757 = vmatpush2.msra.mxu0 0.0
    %2758 = vmatprep.subr.mxu0 0.0
    %2759 = vmatpush2.msra.mxu0 0.0
    %2760 = vmatprep.subr.mxu0 0.0
    %2761 = vmatpush2.msra.mxu0 0.0
    %2762 = vmatprep.subr.mxu0 0.0
    %2763 = vmatpush2.msra.mxu0 0.0
    %2764 = vmatprep.subr.mxu0 0.0
    %2765 = vmatpush2.msra.mxu0 0.0
    %2766 = vmatprep.subr.mxu0 0.0
    %2767 = vmatpush2.msra.mxu0 0.0
    %2768 = vmatprep.subr.mxu0 0.0
    %2769 = vmatpush2.msra.mxu0 0.0
    %2770 = vmatprep.subr.mxu0 0.0
    %2771 = vmatpush2.msra.mxu0 0.0
    %2772 = vmatprep.subr.mxu0 0.0
    %2773 = vmatpush2.msra.mxu0 0.0
    %2774 = vmatprep.subr.mxu0 0.0
    %2775 = vmatpush2.msra.mxu0 0.0
    %2776 = vmatprep.subr.mxu0 0.0
    %2777 = vmatpush2.msra.mxu0 0.0
    %2778 = vmatprep.subr.mxu0 0.0
    %2779 = vmatpush2.msra.mxu0 0.0
    %2780 = vmatprep.subr.mxu0 0.0
    %2781 = vmatpush2.msra.mxu0 0.0
    %2782 = vmatprep.subr.mxu0 0.0
    %2783 = vmatpush2.msra.mxu0 0.0
    %2784 = vmatprep.subr.mxu0 0.0
    %2785 = vmatpush2.msra.mxu0 0.0
    %2786 = vmatprep.mubr.f32.mxu0 0.0
    %2787 = vmatmul.mubr.f32.gmra.mxu0 %v2422
    %v2788 = vpop.f32.mrf.mxu0
    %v2789 = vadd.f32 0.0, %v2788
    %v2790 = vpop.f32.mrf.mxu0
    %2791 = vdwg.mxu0
    %2792 = vrot.lane.b32.xlu0 %v43, 126
    %v2793 = vpop.permute.xlu0 %2792
    %v2794 = vsel %vm66, %v2793, 0
    %2796 = vmatprep.subr.mxu0 0.0
    %2797 = vmatpush1.msra.mxu0 0.0
    %2798 = vmatprep.subr.mxu0 0.0
    %2799 = vmatpush1.msra.mxu0 0.0
    %2800 = vmatprep.subr.mxu0 0.0
    %2801 = vmatpush1.msra.mxu0 0.0
    %2802 = vmatprep.subr.mxu0 0.0
    %2803 = vmatpush1.msra.mxu0 0.0
    %2804 = vmatprep.subr.mxu0 0.0
    %2805 = vmatpush1.msra.mxu0 0.0
    %2806 = vmatprep.subr.mxu0 0.0
    %2807 = vmatpush1.msra.mxu0 0.0
    %2808 = vmatprep.subr.mxu0 0.0
    %2809 = vmatpush1.msra.mxu0 0.0
    %2810 = vmatprep.subr.mxu0 0.0
    %2811 = vmatpush1.msra.mxu0 0.0
    %2812 = vmatprep.subr.mxu0 0.0
    %2813 = vmatpush1.msra.mxu0 0.0
    %2814 = vmatprep.subr.mxu0 0.0
    %2815 = vmatpush1.msra.mxu0 0.0
    %2816 = vmatprep.subr.mxu0 0.0
    %2817 = vmatpush1.msra.mxu0 0.0
    %2818 = vmatprep.subr.mxu0 0.0
    %2819 = vmatpush1.msra.mxu0 0.0
    %2820 = vmatprep.subr.mxu0 0.0
    %2821 = vmatpush1.msra.mxu0 0.0
    %2822 = vmatprep.subr.mxu0 0.0
    %2823 = vmatpush1.msra.mxu0 0.0
    %2824 = vmatprep.subr.mxu0 0.0
    %2825 = vmatpush1.msra.mxu0 0.0
    %2826 = vmatprep.subr.mxu0 0.0
    %2827 = vmatpush1.msra.mxu0 %v2794
    %2828 = vmatprep.subr.mxu0 0.0
    %2829 = vmatpush2.msra.mxu0 0.0
    %2830 = vmatprep.subr.mxu0 0.0
    %2831 = vmatpush2.msra.mxu0 0.0
    %2832 = vmatprep.subr.mxu0 0.0
    %2833 = vmatpush2.msra.mxu0 0.0
    %2834 = vmatprep.subr.mxu0 0.0
    %2835 = vmatpush2.msra.mxu0 0.0
    %2836 = vmatprep.subr.mxu0 0.0
    %2837 = vmatpush2.msra.mxu0 0.0
    %2838 = vmatprep.subr.mxu0 0.0
    %2839 = vmatpush2.msra.mxu0 0.0
    %2840 = vmatprep.subr.mxu0 0.0
    %2841 = vmatpush2.msra.mxu0 0.0
    %2842 = vmatprep.subr.mxu0 0.0
    %2843 = vmatpush2.msra.mxu0 0.0
    %2844 = vmatprep.subr.mxu0 0.0
    %2845 = vmatpush2.msra.mxu0 0.0
    %2846 = vmatprep.subr.mxu0 0.0
    %2847 = vmatpush2.msra.mxu0 0.0
    %2848 = vmatprep.subr.mxu0 0.0
    %2849 = vmatpush2.msra.mxu0 0.0
    %2850 = vmatprep.subr.mxu0 0.0
    %2851 = vmatpush2.msra.mxu0 0.0
    %2852 = vmatprep.subr.mxu0 0.0
    %2853 = vmatpush2.msra.mxu0 0.0
    %2854 = vmatprep.subr.mxu0 0.0
    %2855 = vmatpush2.msra.mxu0 0.0
    %2856 = vmatprep.subr.mxu0 0.0
    %2857 = vmatpush2.msra.mxu0 0.0
    %2858 = vmatprep.subr.mxu0 0.0
    %2859 = vmatpush2.msra.mxu0 0.0
    %2860 = vmatprep.mubr.f32.mxu0 0.0
    %2861 = vmatmul.mubr.f32.gmra.mxu0 %v2422
    %v2862 = vpop.f32.mrf.mxu0
    %v2863 = vadd.f32 0.0, %v2862
    %v2864 = vpop.f32.mrf.mxu0
    %2865 = vdwg.mxu0
    %2866 = vrot.lane.b32.xlu0 %v44, 126
    %v2867 = vpop.permute.xlu0 %2866
    %v2868 = vsel %vm66, %v2867, 0
    %2870 = vmatprep.subr.mxu0 0.0
    %2871 = vmatpush1.msra.mxu0 0.0
    %2872 = vmatprep.subr.mxu0 0.0
    %2873 = vmatpush1.msra.mxu0 0.0
    %2874 = vmatprep.subr.mxu0 0.0
    %2875 = vmatpush1.msra.mxu0 0.0
    %2876 = vmatprep.subr.mxu0 0.0
    %2877 = vmatpush1.msra.mxu0 0.0
    %2878 = vmatprep.subr.mxu0 0.0
    %2879 = vmatpush1.msra.mxu0 0.0
    %2880 = vmatprep.subr.mxu0 0.0
    %2881 = vmatpush1.msra.mxu0 0.0
    %2882 = vmatprep.subr.mxu0 0.0
    %2883 = vmatpush1.msra.mxu0 0.0
    %2884 = vmatprep.subr.mxu0 0.0
    %2885 = vmatpush1.msra.mxu0 0.0
    %2886 = vmatprep.subr.mxu0 0.0
    %2887 = vmatpush1.msra.mxu0 0.0
    %2888 = vmatprep.subr.mxu0 0.0
    %2889 = vmatpush1.msra.mxu0 0.0
    %2890 = vmatprep.subr.mxu0 0.0
    %2891 = vmatpush1.msra.mxu0 0.0
    %2892 = vmatprep.subr.mxu0 0.0
    %2893 = vmatpush1.msra.mxu0 0.0
    %2894 = vmatprep.subr.mxu0 0.0
    %2895 = vmatpush1.msra.mxu0 0.0
    %2896 = vmatprep.subr.mxu0 0.0
    %2897 = vmatpush1.msra.mxu0 0.0
    %2898 = vmatprep.subr.mxu0 0.0
    %2899 = vmatpush1.msra.mxu0 0.0
    %2900 = vmatprep.subr.mxu0 0.0
    %2901 = vmatpush1.msra.mxu0 %v2868
    %2902 = vmatprep.subr.mxu0 0.0
    %2903 = vmatpush2.msra.mxu0 0.0
    %2904 = vmatprep.subr.mxu0 0.0
    %2905 = vmatpush2.msra.mxu0 0.0
    %2906 = vmatprep.subr.mxu0 0.0
    %2907 = vmatpush2.msra.mxu0 0.0
    %2908 = vmatprep.subr.mxu0 0.0
    %2909 = vmatpush2.msra.mxu0 0.0
    %2910 = vmatprep.subr.mxu0 0.0
    %2911 = vmatpush2.msra.mxu0 0.0
    %2912 = vmatprep.subr.mxu0 0.0
    %2913 = vmatpush2.msra.mxu0 0.0
    %2914 = vmatprep.subr.mxu0 0.0
    %2915 = vmatpush2.msra.mxu0 0.0
    %2916 = vmatprep.subr.mxu0 0.0
    %2917 = vmatpush2.msra.mxu0 0.0
    %2918 = vmatprep.subr.mxu0 0.0
    %2919 = vmatpush2.msra.mxu0 0.0
    %2920 = vmatprep.subr.mxu0 0.0
    %2921 = vmatpush2.msra.mxu0 0.0
    %2922 = vmatprep.subr.mxu0 0.0
    %2923 = vmatpush2.msra.mxu0 0.0
    %2924 = vmatprep.subr.mxu0 0.0
    %2925 = vmatpush2.msra.mxu0 0.0
    %2926 = vmatprep.subr.mxu0 0.0
    %2927 = vmatpush2.msra.mxu0 0.0
    %2928 = vmatprep.subr.mxu0 0.0
    %2929 = vmatpush2.msra.mxu0 0.0
    %2930 = vmatprep.subr.mxu0 0.0
    %2931 = vmatpush2.msra.mxu0 0.0
    %2932 = vmatprep.subr.mxu0 0.0
    %2933 = vmatpush2.msra.mxu0 0.0
    %2934 = vmatprep.mubr.f32.mxu0 0.0
    %2935 = vmatmul.mubr.f32.gmra.mxu0 %v2422
    %v2936 = vpop.f32.mrf.mxu0
    %v2937 = vadd.f32 0.0, %v2936
    %v2938 = vpop.f32.mrf.mxu0
    %2939 = vdwg.mxu0
    %2940 = vrot.lane.b32.xlu0 %v45, 126
    %v2941 = vpop.permute.xlu0 %2940
    %v2942 = vsel %vm66, %v2941, 0
    %2944 = vmatprep.subr.mxu0 0.0
    %2945 = vmatpush1.msra.mxu0 0.0
    %2946 = vmatprep.subr.mxu0 0.0
    %2947 = vmatpush1.msra.mxu0 0.0
    %2948 = vmatprep.subr.mxu0 0.0
    %2949 = vmatpush1.msra.mxu0 0.0
    %2950 = vmatprep.subr.mxu0 0.0
    %2951 = vmatpush1.msra.mxu0 0.0
    %2952 = vmatprep.subr.mxu0 0.0
    %2953 = vmatpush1.msra.mxu0 0.0
    %2954 = vmatprep.subr.mxu0 0.0
    %2955 = vmatpush1.msra.mxu0 0.0
    %2956 = vmatprep.subr.mxu0 0.0
    %2957 = vmatpush1.msra.mxu0 0.0
    %2958 = vmatprep.subr.mxu0 0.0
    %2959 = vmatpush1.msra.mxu0 0.0
    %2960 = vmatprep.subr.mxu0 0.0
    %2961 = vmatpush1.msra.mxu0 0.0
    %2962 = vmatprep.subr.mxu0 0.0
    %2963 = vmatpush1.msra.mxu0 0.0
    %2964 = vmatprep.subr.mxu0 0.0
    %2965 = vmatpush1.msra.mxu0 0.0
    %2966 = vmatprep.subr.mxu0 0.0
    %2967 = vmatpush1.msra.mxu0 0.0
    %2968 = vmatprep.subr.mxu0 0.0
    %2969 = vmatpush1.msra.mxu0 0.0
    %2970 = vmatprep.subr.mxu0 0.0
    %2971 = vmatpush1.msra.mxu0 0.0
    %2972 = vmatprep.subr.mxu0 0.0
    %2973 = vmatpush1.msra.mxu0 0.0
    %2974 = vmatprep.subr.mxu0 0.0
    %2975 = vmatpush1.msra.mxu0 %v2942
    %2976 = vmatprep.subr.mxu0 0.0
    %2977 = vmatpush2.msra.mxu0 0.0
    %2978 = vmatprep.subr.mxu0 0.0
    %2979 = vmatpush2.msra.mxu0 0.0
    %2980 = vmatprep.subr.mxu0 0.0
    %2981 = vmatpush2.msra.mxu0 0.0
    %2982 = vmatprep.subr.mxu0 0.0
    %2983 = vmatpush2.msra.mxu0 0.0
    %2984 = vmatprep.subr.mxu0 0.0
    %2985 = vmatpush2.msra.mxu0 0.0
    %2986 = vmatprep.subr.mxu0 0.0
    %2987 = vmatpush2.msra.mxu0 0.0
    %2988 = vmatprep.subr.mxu0 0.0
    %2989 = vmatpush2.msra.mxu0 0.0
    %2990 = vmatprep.subr.mxu0 0.0
    %2991 = vmatpush2.msra.mxu0 0.0
    %2992 = vmatprep.subr.mxu0 0.0
    %2993 = vmatpush2.msra.mxu0 0.0
    %2994 = vmatprep.subr.mxu0 0.0
    %2995 = vmatpush2.msra.mxu0 0.0
    %2996 = vmatprep.subr.mxu0 0.0
    %2997 = vmatpush2.msra.mxu0 0.0
    %2998 = vmatprep.subr.mxu0 0.0
    %2999 = vmatpush2.msra.mxu0 0.0
    %3000 = vmatprep.subr.mxu0 0.0
    %3001 = vmatpush2.msra.mxu0 0.0
    %3002 = vmatprep.subr.mxu0 0.0
    %3003 = vmatpush2.msra.mxu0 0.0
    %3004 = vmatprep.subr.mxu0 0.0
    %3005 = vmatpush2.msra.mxu0 0.0
    %3006 = vmatprep.subr.mxu0 0.0
    %3007 = vmatpush2.msra.mxu0 0.0
    %3008 = vmatprep.mubr.f32.mxu0 0.0
    %3009 = vmatmul.mubr.f32.gmra.mxu0 %v2422
    %v3010 = vpop.f32.mrf.mxu0
    %v3011 = vadd.f32 0.0, %v3010
    %v3012 = vpop.f32.mrf.mxu0
    %3013 = vdwg.mxu0
    %3014 = vrot.lane.b32.xlu0 %v46, 126
    %v3015 = vpop.permute.xlu0 %3014
    %v3016 = vsel %vm66, %v3015, 0
    %3018 = vmatprep.subr.mxu0 0.0
    %3019 = vmatpush1.msra.mxu0 0.0
    %3020 = vmatprep.subr.mxu0 0.0
    %3021 = vmatpush1.msra.mxu0 0.0
    %3022 = vmatprep.subr.mxu0 0.0
    %3023 = vmatpush1.msra.mxu0 0.0
    %3024 = vmatprep.subr.mxu0 0.0
    %3025 = vmatpush1.msra.mxu0 0.0
    %3026 = vmatprep.subr.mxu0 0.0
    %3027 = vmatpush1.msra.mxu0 0.0
    %3028 = vmatprep.subr.mxu0 0.0
    %3029 = vmatpush1.msra.mxu0 0.0
    %3030 = vmatprep.subr.mxu0 0.0
    %3031 = vmatpush1.msra.mxu0 0.0
    %3032 = vmatprep.subr.mxu0 0.0
    %3033 = vmatpush1.msra.mxu0 0.0
    %3034 = vmatprep.subr.mxu0 0.0
    %3035 = vmatpush1.msra.mxu0 0.0
    %3036 = vmatprep.subr.mxu0 0.0
    %3037 = vmatpush1.msra.mxu0 0.0
    %3038 = vmatprep.subr.mxu0 0.0
    %3039 = vmatpush1.msra.mxu0 0.0
    %3040 = vmatprep.subr.mxu0 0.0
    %3041 = vmatpush1.msra.mxu0 0.0
    %3042 = vmatprep.subr.mxu0 0.0
    %3043 = vmatpush1.msra.mxu0 0.0
    %3044 = vmatprep.subr.mxu0 0.0
    %3045 = vmatpush1.msra.mxu0 0.0
    %3046 = vmatprep.subr.mxu0 0.0
    %3047 = vmatpush1.msra.mxu0 0.0
    %3048 = vmatprep.subr.mxu0 0.0
    %3049 = vmatpush1.msra.mxu0 %v3016
    %3050 = vmatprep.subr.mxu0 0.0
    %3051 = vmatpush2.msra.mxu0 0.0
    %3052 = vmatprep.subr.mxu0 0.0
    %3053 = vmatpush2.msra.mxu0 0.0
    %3054 = vmatprep.subr.mxu0 0.0
    %3055 = vmatpush2.msra.mxu0 0.0
    %3056 = vmatprep.subr.mxu0 0.0
    %3057 = vmatpush2.msra.mxu0 0.0
    %3058 = vmatprep.subr.mxu0 0.0
    %3059 = vmatpush2.msra.mxu0 0.0
    %3060 = vmatprep.subr.mxu0 0.0
    %3061 = vmatpush2.msra.mxu0 0.0
    %3062 = vmatprep.subr.mxu0 0.0
    %3063 = vmatpush2.msra.mxu0 0.0
    %3064 = vmatprep.subr.mxu0 0.0
    %3065 = vmatpush2.msra.mxu0 0.0
    %3066 = vmatprep.subr.mxu0 0.0
    %3067 = vmatpush2.msra.mxu0 0.0
    %3068 = vmatprep.subr.mxu0 0.0
    %3069 = vmatpush2.msra.mxu0 0.0
    %3070 = vmatprep.subr.mxu0 0.0
    %3071 = vmatpush2.msra.mxu0 0.0
    %3072 = vmatprep.subr.mxu0 0.0
    %3073 = vmatpush2.msra.mxu0 0.0
    %3074 = vmatprep.subr.mxu0 0.0
    %3075 = vmatpush2.msra.mxu0 0.0
    %3076 = vmatprep.subr.mxu0 0.0
    %3077 = vmatpush2.msra.mxu0 0.0
    %3078 = vmatprep.subr.mxu0 0.0
    %3079 = vmatpush2.msra.mxu0 0.0
    %3080 = vmatprep.subr.mxu0 0.0
    %3081 = vmatpush2.msra.mxu0 0.0
    %3082 = vmatprep.mubr.f32.mxu0 0.0
    %3083 = vmatmul.mubr.f32.gmra.mxu0 %v2422
    %v3084 = vpop.f32.mrf.mxu0
    %v3085 = vadd.f32 0.0, %v3084
    %v3086 = vpop.f32.mrf.mxu0
    %3087 = vdwg.mxu0
    %3088 = vrot.lane.b32.xlu0 %v47, 126
    %v3089 = vpop.permute.xlu0 %3088
    %v3090 = vsel %vm66, %v3089, 0
    %3092 = vmatprep.subr.mxu0 0.0
    %3093 = vmatpush1.msra.mxu0 0.0
    %3094 = vmatprep.subr.mxu0 0.0
    %3095 = vmatpush1.msra.mxu0 0.0
    %3096 = vmatprep.subr.mxu0 0.0
    %3097 = vmatpush1.msra.mxu0 0.0
    %3098 = vmatprep.subr.mxu0 0.0
    %3099 = vmatpush1.msra.mxu0 0.0
    %3100 = vmatprep.subr.mxu0 0.0
    %3101 = vmatpush1.msra.mxu0 0.0
    %3102 = vmatprep.subr.mxu0 0.0
    %3103 = vmatpush1.msra.mxu0 0.0
    %3104 = vmatprep.subr.mxu0 0.0
    %3105 = vmatpush1.msra.mxu0 0.0
    %3106 = vmatprep.subr.mxu0 0.0
    %3107 = vmatpush1.msra.mxu0 0.0
    %3108 = vmatprep.subr.mxu0 0.0
    %3109 = vmatpush1.msra.mxu0 0.0
    %3110 = vmatprep.subr.mxu0 0.0
    %3111 = vmatpush1.msra.mxu0 0.0
    %3112 = vmatprep.subr.mxu0 0.0
    %3113 = vmatpush1.msra.mxu0 0.0
    %3114 = vmatprep.subr.mxu0 0.0
    %3115 = vmatpush1.msra.mxu0 0.0
    %3116 = vmatprep.subr.mxu0 0.0
    %3117 = vmatpush1.msra.mxu0 0.0
    %3118 = vmatprep.subr.mxu0 0.0
    %3119 = vmatpush1.msra.mxu0 0.0
    %3120 = vmatprep.subr.mxu0 0.0
    %3121 = vmatpush1.msra.mxu0 0.0
    %3122 = vmatprep.subr.mxu0 0.0
    %3123 = vmatpush1.msra.mxu0 %v3090
    %3124 = vmatprep.subr.mxu0 0.0
    %3125 = vmatpush2.msra.mxu0 0.0
    %3126 = vmatprep.subr.mxu0 0.0
    %3127 = vmatpush2.msra.mxu0 0.0
    %3128 = vmatprep.subr.mxu0 0.0
    %3129 = vmatpush2.msra.mxu0 0.0
    %3130 = vmatprep.subr.mxu0 0.0
    %3131 = vmatpush2.msra.mxu0 0.0
    %3132 = vmatprep.subr.mxu0 0.0
    %3133 = vmatpush2.msra.mxu0 0.0
    %3134 = vmatprep.subr.mxu0 0.0
    %3135 = vmatpush2.msra.mxu0 0.0
    %3136 = vmatprep.subr.mxu0 0.0
    %3137 = vmatpush2.msra.mxu0 0.0
    %3138 = vmatprep.subr.mxu0 0.0
    %3139 = vmatpush2.msra.mxu0 0.0
    %3140 = vmatprep.subr.mxu0 0.0
    %3141 = vmatpush2.msra.mxu0 0.0
    %3142 = vmatprep.subr.mxu0 0.0
    %3143 = vmatpush2.msra.mxu0 0.0
    %3144 = vmatprep.subr.mxu0 0.0
    %3145 = vmatpush2.msra.mxu0 0.0
    %3146 = vmatprep.subr.mxu0 0.0
    %3147 = vmatpush2.msra.mxu0 0.0
    %3148 = vmatprep.subr.mxu0 0.0
    %3149 = vmatpush2.msra.mxu0 0.0
    %3150 = vmatprep.subr.mxu0 0.0
    %3151 = vmatpush2.msra.mxu0 0.0
    %3152 = vmatprep.subr.mxu0 0.0
    %3153 = vmatpush2.msra.mxu0 0.0
    %3154 = vmatprep.subr.mxu0 0.0
    %3155 = vmatpush2.msra.mxu0 0.0
    %3156 = vmatprep.mubr.f32.mxu0 0.0
    %3157 = vmatmul.mubr.f32.gmra.mxu0 %v2422
    %v3158 = vpop.f32.mrf.mxu0
    %v3159 = vadd.f32 0.0, %v3158
    %v3160 = vpop.f32.mrf.mxu0
    %3161 = vdwg.mxu0
    %3162 = vrot.lane.b32.xlu0 %v48, 126
    %v3163 = vpop.permute.xlu0 %3162
    %v3164 = vsel %vm66, %v3163, 0
    %3166 = vmatprep.subr.mxu0 0.0
    %3167 = vmatpush1.msra.mxu0 0.0
    %3168 = vmatprep.subr.mxu0 0.0
    %3169 = vmatpush1.msra.mxu0 0.0
    %3170 = vmatprep.subr.mxu0 0.0
    %3171 = vmatpush1.msra.mxu0 0.0
    %3172 = vmatprep.subr.mxu0 0.0
    %3173 = vmatpush1.msra.mxu0 0.0
    %3174 = vmatprep.subr.mxu0 0.0
    %3175 = vmatpush1.msra.mxu0 0.0
    %3176 = vmatprep.subr.mxu0 0.0
    %3177 = vmatpush1.msra.mxu0 0.0
    %3178 = vmatprep.subr.mxu0 0.0
    %3179 = vmatpush1.msra.mxu0 0.0
    %3180 = vmatprep.subr.mxu0 0.0
    %3181 = vmatpush1.msra.mxu0 0.0
    %3182 = vmatprep.subr.mxu0 0.0
    %3183 = vmatpush1.msra.mxu0 0.0
    %3184 = vmatprep.subr.mxu0 0.0
    %3185 = vmatpush1.msra.mxu0 0.0
    %3186 = vmatprep.subr.mxu0 0.0
    %3187 = vmatpush1.msra.mxu0 0.0
    %3188 = vmatprep.subr.mxu0 0.0
    %3189 = vmatpush1.msra.mxu0 0.0
    %3190 = vmatprep.subr.mxu0 0.0
    %3191 = vmatpush1.msra.mxu0 0.0
    %3192 = vmatprep.subr.mxu0 0.0
    %3193 = vmatpush1.msra.mxu0 0.0
    %3194 = vmatprep.subr.mxu0 0.0
    %3195 = vmatpush1.msra.mxu0 0.0
    %3196 = vmatprep.subr.mxu0 0.0
    %3197 = vmatpush1.msra.mxu0 %v3164
    %3198 = vmatprep.subr.mxu0 0.0
    %3199 = vmatpush2.msra.mxu0 0.0
    %3200 = vmatprep.subr.mxu0 0.0
    %3201 = vmatpush2.msra.mxu0 0.0
    %3202 = vmatprep.subr.mxu0 0.0
    %3203 = vmatpush2.msra.mxu0 0.0
    %3204 = vmatprep.subr.mxu0 0.0
    %3205 = vmatpush2.msra.mxu0 0.0
    %3206 = vmatprep.subr.mxu0 0.0
    %3207 = vmatpush2.msra.mxu0 0.0
    %3208 = vmatprep.subr.mxu0 0.0
    %3209 = vmatpush2.msra.mxu0 0.0
    %3210 = vmatprep.subr.mxu0 0.0
    %3211 = vmatpush2.msra.mxu0 0.0
    %3212 = vmatprep.subr.mxu0 0.0
    %3213 = vmatpush2.msra.mxu0 0.0
    %3214 = vmatprep.subr.mxu0 0.0
    %3215 = vmatpush2.msra.mxu0 0.0
    %3216 = vmatprep.subr.mxu0 0.0
    %3217 = vmatpush2.msra.mxu0 0.0
    %3218 = vmatprep.subr.mxu0 0.0
    %3219 = vmatpush2.msra.mxu0 0.0
    %3220 = vmatprep.subr.mxu0 0.0
    %3221 = vmatpush2.msra.mxu0 0.0
    %3222 = vmatprep.subr.mxu0 0.0
    %3223 = vmatpush2.msra.mxu0 0.0
    %3224 = vmatprep.subr.mxu0 0.0
    %3225 = vmatpush2.msra.mxu0 0.0
    %3226 = vmatprep.subr.mxu0 0.0
    %3227 = vmatpush2.msra.mxu0 0.0
    %3228 = vmatprep.subr.mxu0 0.0
    %3229 = vmatpush2.msra.mxu0 0.0
    %3230 = vmatprep.mubr.f32.mxu0 0.0
    %3231 = vmatmul.mubr.f32.gmra.mxu0 %v2422
    %v3232 = vpop.f32.mrf.mxu0
    %v3233 = vadd.f32 0.0, %v3232
    %v3234 = vpop.f32.mrf.mxu0
    %3235 = vdwg.mxu0
    %3236 = vrot.lane.b32.xlu0 %v49, 126
    %v3237 = vpop.permute.xlu0 %3236
    %v3238 = vsel %vm66, %v3237, 0
    %3240 = vmatprep.subr.mxu0 0.0
    %3241 = vmatpush1.msra.mxu0 0.0
    %3242 = vmatprep.subr.mxu0 0.0
    %3243 = vmatpush1.msra.mxu0 0.0
    %3244 = vmatprep.subr.mxu0 0.0
    %3245 = vmatpush1.msra.mxu0 0.0
    %3246 = vmatprep.subr.mxu0 0.0
    %3247 = vmatpush1.msra.mxu0 0.0
    %3248 = vmatprep.subr.mxu0 0.0
    %3249 = vmatpush1.msra.mxu0 0.0
    %3250 = vmatprep.subr.mxu0 0.0
    %3251 = vmatpush1.msra.mxu0 0.0
    %3252 = vmatprep.subr.mxu0 0.0
    %3253 = vmatpush1.msra.mxu0 0.0
    %3254 = vmatprep.subr.mxu0 0.0
    %3255 = vmatpush1.msra.mxu0 0.0
    %3256 = vmatprep.subr.mxu0 0.0
    %3257 = vmatpush1.msra.mxu0 0.0
    %3258 = vmatprep.subr.mxu0 0.0
    %3259 = vmatpush1.msra.mxu0 0.0
    %3260 = vmatprep.subr.mxu0 0.0
    %3261 = vmatpush1.msra.mxu0 0.0
    %3262 = vmatprep.subr.mxu0 0.0
    %3263 = vmatpush1.msra.mxu0 0.0
    %3264 = vmatprep.subr.mxu0 0.0
    %3265 = vmatpush1.msra.mxu0 0.0
    %3266 = vmatprep.subr.mxu0 0.0
    %3267 = vmatpush1.msra.mxu0 0.0
    %3268 = vmatprep.subr.mxu0 0.0
    %3269 = vmatpush1.msra.mxu0 0.0
    %3270 = vmatprep.subr.mxu0 0.0
    %3271 = vmatpush1.msra.mxu0 %v3238
    %3272 = vmatprep.subr.mxu0 0.0
    %3273 = vmatpush2.msra.mxu0 0.0
    %3274 = vmatprep.subr.mxu0 0.0
    %3275 = vmatpush2.msra.mxu0 0.0
    %3276 = vmatprep.subr.mxu0 0.0
    %3277 = vmatpush2.msra.mxu0 0.0
    %3278 = vmatprep.subr.mxu0 0.0
    %3279 = vmatpush2.msra.mxu0 0.0
    %3280 = vmatprep.subr.mxu0 0.0
    %3281 = vmatpush2.msra.mxu0 0.0
    %3282 = vmatprep.subr.mxu0 0.0
    %3283 = vmatpush2.msra.mxu0 0.0
    %3284 = vmatprep.subr.mxu0 0.0
    %3285 = vmatpush2.msra.mxu0 0.0
    %3286 = vmatprep.subr.mxu0 0.0
    %3287 = vmatpush2.msra.mxu0 0.0
    %3288 = vmatprep.subr.mxu0 0.0
    %3289 = vmatpush2.msra.mxu0 0.0
    %3290 = vmatprep.subr.mxu0 0.0
    %3291 = vmatpush2.msra.mxu0 0.0
    %3292 = vmatprep.subr.mxu0 0.0
    %3293 = vmatpush2.msra.mxu0 0.0
    %3294 = vmatprep.subr.mxu0 0.0
    %3295 = vmatpush2.msra.mxu0 0.0
    %3296 = vmatprep.subr.mxu0 0.0
    %3297 = vmatpush2.msra.mxu0 0.0
    %3298 = vmatprep.subr.mxu0 0.0
    %3299 = vmatpush2.msra.mxu0 0.0
    %3300 = vmatprep.subr.mxu0 0.0
    %3301 = vmatpush2.msra.mxu0 0.0
    %3302 = vmatprep.subr.mxu0 0.0
    %3303 = vmatpush2.msra.mxu0 0.0
    %3304 = vmatprep.mubr.f32.mxu0 0.0
    %3305 = vmatmul.mubr.f32.gmra.mxu0 %v2422
    %v3306 = vpop.f32.mrf.mxu0
    %v3307 = vadd.f32 0.0, %v3306
    %v3308 = vpop.f32.mrf.mxu0
    %3309 = vdwg.mxu0
    %3310 = vrot.lane.b32.xlu0 %v50, 126
    %v3311 = vpop.permute.xlu0 %3310
    %v3312 = vsel %vm66, %v3311, 0
    %3314 = vmatprep.subr.mxu0 0.0
    %3315 = vmatpush1.msra.mxu0 0.0
    %3316 = vmatprep.subr.mxu0 0.0
    %3317 = vmatpush1.msra.mxu0 0.0
    %3318 = vmatprep.subr.mxu0 0.0
    %3319 = vmatpush1.msra.mxu0 0.0
    %3320 = vmatprep.subr.mxu0 0.0
    %3321 = vmatpush1.msra.mxu0 0.0
    %3322 = vmatprep.subr.mxu0 0.0
    %3323 = vmatpush1.msra.mxu0 0.0
    %3324 = vmatprep.subr.mxu0 0.0
    %3325 = vmatpush1.msra.mxu0 0.0
    %3326 = vmatprep.subr.mxu0 0.0
    %3327 = vmatpush1.msra.mxu0 0.0
    %3328 = vmatprep.subr.mxu0 0.0
    %3329 = vmatpush1.msra.mxu0 0.0
    %3330 = vmatprep.subr.mxu0 0.0
    %3331 = vmatpush1.msra.mxu0 0.0
    %3332 = vmatprep.subr.mxu0 0.0
    %3333 = vmatpush1.msra.mxu0 0.0
    %3334 = vmatprep.subr.mxu0 0.0
    %3335 = vmatpush1.msra.mxu0 0.0
    %3336 = vmatprep.subr.mxu0 0.0
    %3337 = vmatpush1.msra.mxu0 0.0
    %3338 = vmatprep.subr.mxu0 0.0
    %3339 = vmatpush1.msra.mxu0 0.0
    %3340 = vmatprep.subr.mxu0 0.0
    %3341 = vmatpush1.msra.mxu0 0.0
    %3342 = vmatprep.subr.mxu0 0.0
    %3343 = vmatpush1.msra.mxu0 0.0
    %3344 = vmatprep.subr.mxu0 0.0
    %3345 = vmatpush1.msra.mxu0 %v3312
    %3346 = vmatprep.subr.mxu0 0.0
    %3347 = vmatpush2.msra.mxu0 0.0
    %3348 = vmatprep.subr.mxu0 0.0
    %3349 = vmatpush2.msra.mxu0 0.0
    %3350 = vmatprep.subr.mxu0 0.0
    %3351 = vmatpush2.msra.mxu0 0.0
    %3352 = vmatprep.subr.mxu0 0.0
    %3353 = vmatpush2.msra.mxu0 0.0
    %3354 = vmatprep.subr.mxu0 0.0
    %3355 = vmatpush2.msra.mxu0 0.0
    %3356 = vmatprep.subr.mxu0 0.0
    %3357 = vmatpush2.msra.mxu0 0.0
    %3358 = vmatprep.subr.mxu0 0.0
    %3359 = vmatpush2.msra.mxu0 0.0
    %3360 = vmatprep.subr.mxu0 0.0
    %3361 = vmatpush2.msra.mxu0 0.0
    %3362 = vmatprep.subr.mxu0 0.0
    %3363 = vmatpush2.msra.mxu0 0.0
    %3364 = vmatprep.subr.mxu0 0.0
    %3365 = vmatpush2.msra.mxu0 0.0
    %3366 = vmatprep.subr.mxu0 0.0
    %3367 = vmatpush2.msra.mxu0 0.0
    %3368 = vmatprep.subr.mxu0 0.0
    %3369 = vmatpush2.msra.mxu0 0.0
    %3370 = vmatprep.subr.mxu0 0.0
    %3371 = vmatpush2.msra.mxu0 0.0
    %3372 = vmatprep.subr.mxu0 0.0
    %3373 = vmatpush2.msra.mxu0 0.0
    %3374 = vmatprep.subr.mxu0 0.0
    %3375 = vmatpush2.msra.mxu0 0.0
    %3376 = vmatprep.subr.mxu0 0.0
    %3377 = vmatpush2.msra.mxu0 0.0
    %3378 = vmatprep.mubr.f32.mxu0 0.0
    %3379 = vmatmul.mubr.f32.gmra.mxu0 %v2422
    %v3380 = vpop.f32.mrf.mxu0
    %v3381 = vadd.f32 0.0, %v3380
    %v3382 = vpop.f32.mrf.mxu0
    %3383 = vdwg.mxu0
    %3384 = vrot.lane.b32.xlu0 %v51, 126
    %v3385 = vpop.permute.xlu0 %3384
    %v3386 = vsel %vm66, %v3385, 0
    %3388 = vmatprep.subr.mxu0 0.0
    %3389 = vmatpush1.msra.mxu0 0.0
    %3390 = vmatprep.subr.mxu0 0.0
    %3391 = vmatpush1.msra.mxu0 0.0
    %3392 = vmatprep.subr.mxu0 0.0
    %3393 = vmatpush1.msra.mxu0 0.0
    %3394 = vmatprep.subr.mxu0 0.0
    %3395 = vmatpush1.msra.mxu0 0.0
    %3396 = vmatprep.subr.mxu0 0.0
    %3397 = vmatpush1.msra.mxu0 0.0
    %3398 = vmatprep.subr.mxu0 0.0
    %3399 = vmatpush1.msra.mxu0 0.0
    %3400 = vmatprep.subr.mxu0 0.0
    %3401 = vmatpush1.msra.mxu0 0.0
    %3402 = vmatprep.subr.mxu0 0.0
    %3403 = vmatpush1.msra.mxu0 0.0
    %3404 = vmatprep.subr.mxu0 0.0
    %3405 = vmatpush1.msra.mxu0 0.0
    %3406 = vmatprep.subr.mxu0 0.0
    %3407 = vmatpush1.msra.mxu0 0.0
    %3408 = vmatprep.subr.mxu0 0.0
    %3409 = vmatpush1.msra.mxu0 0.0
    %3410 = vmatprep.subr.mxu0 0.0
    %3411 = vmatpush1.msra.mxu0 0.0
    %3412 = vmatprep.subr.mxu0 0.0
    %3413 = vmatpush1.msra.mxu0 0.0
    %3414 = vmatprep.subr.mxu0 0.0
    %3415 = vmatpush1.msra.mxu0 0.0
    %3416 = vmatprep.subr.mxu0 0.0
    %3417 = vmatpush1.msra.mxu0 0.0
    %3418 = vmatprep.subr.mxu0 0.0
    %3419 = vmatpush1.msra.mxu0 %v3386
    %3420 = vmatprep.subr.mxu0 0.0
    %3421 = vmatpush2.msra.mxu0 0.0
    %3422 = vmatprep.subr.mxu0 0.0
    %3423 = vmatpush2.msra.mxu0 0.0
    %3424 = vmatprep.subr.mxu0 0.0
    %3425 = vmatpush2.msra.mxu0 0.0
    %3426 = vmatprep.subr.mxu0 0.0
    %3427 = vmatpush2.msra.mxu0 0.0
    %3428 = vmatprep.subr.mxu0 0.0
    %3429 = vmatpush2.msra.mxu0 0.0
    %3430 = vmatprep.subr.mxu0 0.0
    %3431 = vmatpush2.msra.mxu0 0.0
    %3432 = vmatprep.subr.mxu0 0.0
    %3433 = vmatpush2.msra.mxu0 0.0
    %3434 = vmatprep.subr.mxu0 0.0
    %3435 = vmatpush2.msra.mxu0 0.0
    %3436 = vmatprep.subr.mxu0 0.0
    %3437 = vmatpush2.msra.mxu0 0.0
    %3438 = vmatprep.subr.mxu0 0.0
    %3439 = vmatpush2.msra.mxu0 0.0
    %3440 = vmatprep.subr.mxu0 0.0
    %3441 = vmatpush2.msra.mxu0 0.0
    %3442 = vmatprep.subr.mxu0 0.0
    %3443 = vmatpush2.msra.mxu0 0.0
    %3444 = vmatprep.subr.mxu0 0.0
    %3445 = vmatpush2.msra.mxu0 0.0
    %3446 = vmatprep.subr.mxu0 0.0
    %3447 = vmatpush2.msra.mxu0 0.0
    %3448 = vmatprep.subr.mxu0 0.0
    %3449 = vmatpush2.msra.mxu0 0.0
    %3450 = vmatprep.subr.mxu0 0.0
    %3451 = vmatpush2.msra.mxu0 0.0
    %3452 = vmatprep.mubr.f32.mxu0 0.0
    %3453 = vmatmul.mubr.f32.gmra.mxu0 %v2422
    %v3454 = vpop.f32.mrf.mxu0
    %v3455 = vadd.f32 0.0, %v3454
    %v3456 = vpop.f32.mrf.mxu0
    %3457 = vdwg.mxu0
    %3458 = vrot.lane.b32.xlu0 %v52, 126
    %v3459 = vpop.permute.xlu0 %3458
    %v3460 = vsel %vm66, %v3459, 0
    %3462 = vmatprep.subr.mxu0 0.0
    %3463 = vmatpush1.msra.mxu0 0.0
    %3464 = vmatprep.subr.mxu0 0.0
    %3465 = vmatpush1.msra.mxu0 0.0
    %3466 = vmatprep.subr.mxu0 0.0
    %3467 = vmatpush1.msra.mxu0 0.0
    %3468 = vmatprep.subr.mxu0 0.0
    %3469 = vmatpush1.msra.mxu0 0.0
    %3470 = vmatprep.subr.mxu0 0.0
    %3471 = vmatpush1.msra.mxu0 0.0
    %3472 = vmatprep.subr.mxu0 0.0
    %3473 = vmatpush1.msra.mxu0 0.0
    %3474 = vmatprep.subr.mxu0 0.0
    %3475 = vmatpush1.msra.mxu0 0.0
    %3476 = vmatprep.subr.mxu0 0.0
    %3477 = vmatpush1.msra.mxu0 0.0
    %3478 = vmatprep.subr.mxu0 0.0
    %3479 = vmatpush1.msra.mxu0 0.0
    %3480 = vmatprep.subr.mxu0 0.0
    %3481 = vmatpush1.msra.mxu0 0.0
    %3482 = vmatprep.subr.mxu0 0.0
    %3483 = vmatpush1.msra.mxu0 0.0
    %3484 = vmatprep.subr.mxu0 0.0
    %3485 = vmatpush1.msra.mxu0 0.0
    %3486 = vmatprep.subr.mxu0 0.0
    %3487 = vmatpush1.msra.mxu0 0.0
    %3488 = vmatprep.subr.mxu0 0.0
    %3489 = vmatpush1.msra.mxu0 0.0
    %3490 = vmatprep.subr.mxu0 0.0
    %3491 = vmatpush1.msra.mxu0 0.0
    %3492 = vmatprep.subr.mxu0 0.0
    %3493 = vmatpush1.msra.mxu0 %v3460
    %3494 = vmatprep.subr.mxu0 0.0
    %3495 = vmatpush2.msra.mxu0 0.0
    %3496 = vmatprep.subr.mxu0 0.0
    %3497 = vmatpush2.msra.mxu0 0.0
    %3498 = vmatprep.subr.mxu0 0.0
    %3499 = vmatpush2.msra.mxu0 0.0
    %3500 = vmatprep.subr.mxu0 0.0
    %3501 = vmatpush2.msra.mxu0 0.0
    %3502 = vmatprep.subr.mxu0 0.0
    %3503 = vmatpush2.msra.mxu0 0.0
    %3504 = vmatprep.subr.mxu0 0.0
    %3505 = vmatpush2.msra.mxu0 0.0
    %3506 = vmatprep.subr.mxu0 0.0
    %3507 = vmatpush2.msra.mxu0 0.0
    %3508 = vmatprep.subr.mxu0 0.0
    %3509 = vmatpush2.msra.mxu0 0.0
    %3510 = vmatprep.subr.mxu0 0.0
    %3511 = vmatpush2.msra.mxu0 0.0
    %3512 = vmatprep.subr.mxu0 0.0
    %3513 = vmatpush2.msra.mxu0 0.0
    %3514 = vmatprep.subr.mxu0 0.0
    %3515 = vmatpush2.msra.mxu0 0.0
    %3516 = vmatprep.subr.mxu0 0.0
    %3517 = vmatpush2.msra.mxu0 0.0
    %3518 = vmatprep.subr.mxu0 0.0
    %3519 = vmatpush2.msra.mxu0 0.0
    %3520 = vmatprep.subr.mxu0 0.0
    %3521 = vmatpush2.msra.mxu0 0.0
    %3522 = vmatprep.subr.mxu0 0.0
    %3523 = vmatpush2.msra.mxu0 0.0
    %3524 = vmatprep.subr.mxu0 0.0
    %3525 = vmatpush2.msra.mxu0 0.0
    %3526 = vmatprep.mubr.f32.mxu0 0.0
    %3527 = vmatmul.mubr.f32.gmra.mxu0 %v2422
    %v3528 = vpop.f32.mrf.mxu0
    %v3529 = vadd.f32 0.0, %v3528
    %v3530 = vpop.f32.mrf.mxu0
    %3531 = vdwg.mxu0
    %3532 = vrot.lane.b32.xlu0 %v53, 126
    %v3533 = vpop.permute.xlu0 %3532
    %v3534 = vsel %vm66, %v3533, 0
    %3536 = vmatprep.subr.mxu0 0.0
    %3537 = vmatpush1.msra.mxu0 0.0
    %3538 = vmatprep.subr.mxu0 0.0
    %3539 = vmatpush1.msra.mxu0 0.0
    %3540 = vmatprep.subr.mxu0 0.0
    %3541 = vmatpush1.msra.mxu0 0.0
    %3542 = vmatprep.subr.mxu0 0.0
    %3543 = vmatpush1.msra.mxu0 0.0
    %3544 = vmatprep.subr.mxu0 0.0
    %3545 = vmatpush1.msra.mxu0 0.0
    %3546 = vmatprep.subr.mxu0 0.0
    %3547 = vmatpush1.msra.mxu0 0.0
    %3548 = vmatprep.subr.mxu0 0.0
    %3549 = vmatpush1.msra.mxu0 0.0
    %3550 = vmatprep.subr.mxu0 0.0
    %3551 = vmatpush1.msra.mxu0 0.0
    %3552 = vmatprep.subr.mxu0 0.0
    %3553 = vmatpush1.msra.mxu0 0.0
    %3554 = vmatprep.subr.mxu0 0.0
    %3555 = vmatpush1.msra.mxu0 0.0
    %3556 = vmatprep.subr.mxu0 0.0
    %3557 = vmatpush1.msra.mxu0 0.0
    %3558 = vmatprep.subr.mxu0 0.0
    %3559 = vmatpush1.msra.mxu0 0.0
    %3560 = vmatprep.subr.mxu0 0.0
    %3561 = vmatpush1.msra.mxu0 0.0
    %3562 = vmatprep.subr.mxu0 0.0
    %3563 = vmatpush1.msra.mxu0 0.0
    %3564 = vmatprep.subr.mxu0 0.0
    %3565 = vmatpush1.msra.mxu0 0.0
    %3566 = vmatprep.subr.mxu0 0.0
    %3567 = vmatpush1.msra.mxu0 %v3534
    %3568 = vmatprep.subr.mxu0 0.0
    %3569 = vmatpush2.msra.mxu0 0.0
    %3570 = vmatprep.subr.mxu0 0.0
    %3571 = vmatpush2.msra.mxu0 0.0
    %3572 = vmatprep.subr.mxu0 0.0
    %3573 = vmatpush2.msra.mxu0 0.0
    %3574 = vmatprep.subr.mxu0 0.0
    %3575 = vmatpush2.msra.mxu0 0.0
    %3576 = vmatprep.subr.mxu0 0.0
    %3577 = vmatpush2.msra.mxu0 0.0
    %3578 = vmatprep.subr.mxu0 0.0
    %3579 = vmatpush2.msra.mxu0 0.0
    %3580 = vmatprep.subr.mxu0 0.0
    %3581 = vmatpush2.msra.mxu0 0.0
    %3582 = vmatprep.subr.mxu0 0.0
    %3583 = vmatpush2.msra.mxu0 0.0
    %3584 = vmatprep.subr.mxu0 0.0
    %3585 = vmatpush2.msra.mxu0 0.0
    %3586 = vmatprep.subr.mxu0 0.0
    %3587 = vmatpush2.msra.mxu0 0.0
    %3588 = vmatprep.subr.mxu0 0.0
    %3589 = vmatpush2.msra.mxu0 0.0
    %3590 = vmatprep.subr.mxu0 0.0
    %3591 = vmatpush2.msra.mxu0 0.0
    %3592 = vmatprep.subr.mxu0 0.0
    %3593 = vmatpush2.msra.mxu0 0.0
    %3594 = vmatprep.subr.mxu0 0.0
    %3595 = vmatpush2.msra.mxu0 0.0
    %3596 = vmatprep.subr.mxu0 0.0
    %3597 = vmatpush2.msra.mxu0 0.0
    %3598 = vmatprep.subr.mxu0 0.0
    %3599 = vmatpush2.msra.mxu0 0.0
    %3600 = vmatprep.mubr.f32.mxu0 0.0
    %3601 = vmatmul.mubr.f32.gmra.mxu0 %v2422
    %v3602 = vpop.f32.mrf.mxu0
    %v3603 = vadd.f32 0.0, %v3602
    %v3604 = vpop.f32.mrf.mxu0
    %3605 = vdwg.mxu0
    %v3606 = vadd.f32 %v1336, %v2493
    %v3607 = vadd.f32 %v1408, %v2567
    %v3608 = vadd.f32 %v1480, %v2641
    %v3609 = vadd.f32 %v1552, %v2715
    %v3610 = vadd.f32 %v1624, %v2789
    %v3611 = vadd.f32 %v1696, %v2863
    %v3612 = vadd.f32 %v1768, %v2937
    %v3613 = vadd.f32 %v1840, %v3011
    %v3614 = vadd.f32 %v1912, %v3085
    %v3615 = vadd.f32 %v1984, %v3159
    %v3616 = vadd.f32 %v2056, %v3233
    %v3617 = vadd.f32 %v2128, %v3307
    %v3618 = vadd.f32 %v2200, %v3381
    %v3619 = vadd.f32 %v2272, %v3455
    %v3620 = vadd.f32 %v2344, %v3529
    %v3621 = vadd.f32 %v2416, %v3603
    %3622 = vrot.lane.b32.xlu0 %v38, 125
    %v3623 = vpop.permute.xlu0 %3622
    %v3625 = vsel %vm62, %v57, 0
    %v3627 = vsel %vm66, %v3623, 0
    %3629 = vmatprep.subr.mxu0 0.0
    %3630 = vmatpush1.msra.mxu0 0.0
    %3631 = vmatprep.subr.mxu0 0.0
    %3632 = vmatpush1.msra.mxu0 0.0
    %3633 = vmatprep.subr.mxu0 0.0
    %3634 = vmatpush1.msra.mxu0 0.0
    %3635 = vmatprep.subr.mxu0 0.0
    %3636 = vmatpush1.msra.mxu0 0.0
    %3637 = vmatprep.subr.mxu0 0.0
    %3638 = vmatpush1.msra.mxu0 0.0
    %3639 = vmatprep.subr.mxu0 0.0
    %3640 = vmatpush1.msra.mxu0 0.0
    %3641 = vmatprep.subr.mxu0 0.0
    %3642 = vmatpush1.msra.mxu0 0.0
    %3643 = vmatprep.subr.mxu0 0.0
    %3644 = vmatpush1.msra.mxu0 0.0
    %3645 = vmatprep.subr.mxu0 0.0
    %3646 = vmatpush1.msra.mxu0 0.0
    %3647 = vmatprep.subr.mxu0 0.0
    %3648 = vmatpush1.msra.mxu0 0.0
    %3649 = vmatprep.subr.mxu0 0.0
    %3650 = vmatpush1.msra.mxu0 0.0
    %3651 = vmatprep.subr.mxu0 0.0
    %3652 = vmatpush1.msra.mxu0 0.0
    %3653 = vmatprep.subr.mxu0 0.0
    %3654 = vmatpush1.msra.mxu0 0.0
    %3655 = vmatprep.subr.mxu0 0.0
    %3656 = vmatpush1.msra.mxu0 0.0
    %3657 = vmatprep.subr.mxu0 0.0
    %3658 = vmatpush1.msra.mxu0 0.0
    %3659 = vmatprep.subr.mxu0 0.0
    %3660 = vmatpush1.msra.mxu0 %v3627
    %3661 = vmatprep.subr.mxu0 0.0
    %3662 = vmatpush2.msra.mxu0 0.0
    %3663 = vmatprep.subr.mxu0 0.0
    %3664 = vmatpush2.msra.mxu0 0.0
    %3665 = vmatprep.subr.mxu0 0.0
    %3666 = vmatpush2.msra.mxu0 0.0
    %3667 = vmatprep.subr.mxu0 0.0
    %3668 = vmatpush2.msra.mxu0 0.0
    %3669 = vmatprep.subr.mxu0 0.0
    %3670 = vmatpush2.msra.mxu0 0.0
    %3671 = vmatprep.subr.mxu0 0.0
    %3672 = vmatpush2.msra.mxu0 0.0
    %3673 = vmatprep.subr.mxu0 0.0
    %3674 = vmatpush2.msra.mxu0 0.0
    %3675 = vmatprep.subr.mxu0 0.0
    %3676 = vmatpush2.msra.mxu0 0.0
    %3677 = vmatprep.subr.mxu0 0.0
    %3678 = vmatpush2.msra.mxu0 0.0
    %3679 = vmatprep.subr.mxu0 0.0
    %3680 = vmatpush2.msra.mxu0 0.0
    %3681 = vmatprep.subr.mxu0 0.0
    %3682 = vmatpush2.msra.mxu0 0.0
    %3683 = vmatprep.subr.mxu0 0.0
    %3684 = vmatpush2.msra.mxu0 0.0
    %3685 = vmatprep.subr.mxu0 0.0
    %3686 = vmatpush2.msra.mxu0 0.0
    %3687 = vmatprep.subr.mxu0 0.0
    %3688 = vmatpush2.msra.mxu0 0.0
    %3689 = vmatprep.subr.mxu0 0.0
    %3690 = vmatpush2.msra.mxu0 0.0
    %3691 = vmatprep.subr.mxu0 0.0
    %3692 = vmatpush2.msra.mxu0 0.0
    %3693 = vmatprep.mubr.f32.mxu0 0.0
    %3694 = vmatmul.mubr.f32.gmra.mxu0 %v3625
    %v3695 = vpop.f32.mrf.mxu0
    %v3696 = vadd.f32 0.0, %v3695
    %v3697 = vpop.f32.mrf.mxu0
    %3698 = vdwg.mxu0
    %3699 = vrot.lane.b32.xlu0 %v39, 125
    %v3700 = vpop.permute.xlu0 %3699
    %v3701 = vsel %vm66, %v3700, 0
    %3703 = vmatprep.subr.mxu0 0.0
    %3704 = vmatpush1.msra.mxu0 0.0
    %3705 = vmatprep.subr.mxu0 0.0
    %3706 = vmatpush1.msra.mxu0 0.0
    %3707 = vmatprep.subr.mxu0 0.0
    %3708 = vmatpush1.msra.mxu0 0.0
    %3709 = vmatprep.subr.mxu0 0.0
    %3710 = vmatpush1.msra.mxu0 0.0
    %3711 = vmatprep.subr.mxu0 0.0
    %3712 = vmatpush1.msra.mxu0 0.0
    %3713 = vmatprep.subr.mxu0 0.0
    %3714 = vmatpush1.msra.mxu0 0.0
    %3715 = vmatprep.subr.mxu0 0.0
    %3716 = vmatpush1.msra.mxu0 0.0
    %3717 = vmatprep.subr.mxu0 0.0
    %3718 = vmatpush1.msra.mxu0 0.0
    %3719 = vmatprep.subr.mxu0 0.0
    %3720 = vmatpush1.msra.mxu0 0.0
    %3721 = vmatprep.subr.mxu0 0.0
    %3722 = vmatpush1.msra.mxu0 0.0
    %3723 = vmatprep.subr.mxu0 0.0
    %3724 = vmatpush1.msra.mxu0 0.0
    %3725 = vmatprep.subr.mxu0 0.0
    %3726 = vmatpush1.msra.mxu0 0.0
    %3727 = vmatprep.subr.mxu0 0.0
    %3728 = vmatpush1.msra.mxu0 0.0
    %3729 = vmatprep.subr.mxu0 0.0
    %3730 = vmatpush1.msra.mxu0 0.0
    %3731 = vmatprep.subr.mxu0 0.0
    %3732 = vmatpush1.msra.mxu0 0.0
    %3733 = vmatprep.subr.mxu0 0.0
    %3734 = vmatpush1.msra.mxu0 %v3701
    %3735 = vmatprep.subr.mxu0 0.0
    %3736 = vmatpush2.msra.mxu0 0.0
    %3737 = vmatprep.subr.mxu0 0.0
    %3738 = vmatpush2.msra.mxu0 0.0
    %3739 = vmatprep.subr.mxu0 0.0
    %3740 = vmatpush2.msra.mxu0 0.0
    %3741 = vmatprep.subr.mxu0 0.0
    %3742 = vmatpush2.msra.mxu0 0.0
    %3743 = vmatprep.subr.mxu0 0.0
    %3744 = vmatpush2.msra.mxu0 0.0
    %3745 = vmatprep.subr.mxu0 0.0
    %3746 = vmatpush2.msra.mxu0 0.0
    %3747 = vmatprep.subr.mxu0 0.0
    %3748 = vmatpush2.msra.mxu0 0.0
    %3749 = vmatprep.subr.mxu0 0.0
    %3750 = vmatpush2.msra.mxu0 0.0
    %3751 = vmatprep.subr.mxu0 0.0
    %3752 = vmatpush2.msra.mxu0 0.0
    %3753 = vmatprep.subr.mxu0 0.0
    %3754 = vmatpush2.msra.mxu0 0.0
    %3755 = vmatprep.subr.mxu0 0.0
    %3756 = vmatpush2.msra.mxu0 0.0
    %3757 = vmatprep.subr.mxu0 0.0
    %3758 = vmatpush2.msra.mxu0 0.0
    %3759 = vmatprep.subr.mxu0 0.0
    %3760 = vmatpush2.msra.mxu0 0.0
    %3761 = vmatprep.subr.mxu0 0.0
    %3762 = vmatpush2.msra.mxu0 0.0
    %3763 = vmatprep.subr.mxu0 0.0
    %3764 = vmatpush2.msra.mxu0 0.0
    %3765 = vmatprep.subr.mxu0 0.0
    %3766 = vmatpush2.msra.mxu0 0.0
    %3767 = vmatprep.mubr.f32.mxu0 0.0
    %3768 = vmatmul.mubr.f32.gmra.mxu0 %v3625
    %v3769 = vpop.f32.mrf.mxu0
    %v3770 = vadd.f32 0.0, %v3769
    %v3771 = vpop.f32.mrf.mxu0
    %3772 = vdwg.mxu0
    %3773 = vrot.lane.b32.xlu0 %v40, 125
    %v3774 = vpop.permute.xlu0 %3773
    %v3775 = vsel %vm66, %v3774, 0
    %3777 = vmatprep.subr.mxu0 0.0
    %3778 = vmatpush1.msra.mxu0 0.0
    %3779 = vmatprep.subr.mxu0 0.0
    %3780 = vmatpush1.msra.mxu0 0.0
    %3781 = vmatprep.subr.mxu0 0.0
    %3782 = vmatpush1.msra.mxu0 0.0
    %3783 = vmatprep.subr.mxu0 0.0
    %3784 = vmatpush1.msra.mxu0 0.0
    %3785 = vmatprep.subr.mxu0 0.0
    %3786 = vmatpush1.msra.mxu0 0.0
    %3787 = vmatprep.subr.mxu0 0.0
    %3788 = vmatpush1.msra.mxu0 0.0
    %3789 = vmatprep.subr.mxu0 0.0
    %3790 = vmatpush1.msra.mxu0 0.0
    %3791 = vmatprep.subr.mxu0 0.0
    %3792 = vmatpush1.msra.mxu0 0.0
    %3793 = vmatprep.subr.mxu0 0.0
    %3794 = vmatpush1.msra.mxu0 0.0
    %3795 = vmatprep.subr.mxu0 0.0
    %3796 = vmatpush1.msra.mxu0 0.0
    %3797 = vmatprep.subr.mxu0 0.0
    %3798 = vmatpush1.msra.mxu0 0.0
    %3799 = vmatprep.subr.mxu0 0.0
    %3800 = vmatpush1.msra.mxu0 0.0
    %3801 = vmatprep.subr.mxu0 0.0
    %3802 = vmatpush1.msra.mxu0 0.0
    %3803 = vmatprep.subr.mxu0 0.0
    %3804 = vmatpush1.msra.mxu0 0.0
    %3805 = vmatprep.subr.mxu0 0.0
    %3806 = vmatpush1.msra.mxu0 0.0
    %3807 = vmatprep.subr.mxu0 0.0
    %3808 = vmatpush1.msra.mxu0 %v3775
    %3809 = vmatprep.subr.mxu0 0.0
    %3810 = vmatpush2.msra.mxu0 0.0
    %3811 = vmatprep.subr.mxu0 0.0
    %3812 = vmatpush2.msra.mxu0 0.0
    %3813 = vmatprep.subr.mxu0 0.0
    %3814 = vmatpush2.msra.mxu0 0.0
    %3815 = vmatprep.subr.mxu0 0.0
    %3816 = vmatpush2.msra.mxu0 0.0
    %3817 = vmatprep.subr.mxu0 0.0
    %3818 = vmatpush2.msra.mxu0 0.0
    %3819 = vmatprep.subr.mxu0 0.0
    %3820 = vmatpush2.msra.mxu0 0.0
    %3821 = vmatprep.subr.mxu0 0.0
    %3822 = vmatpush2.msra.mxu0 0.0
    %3823 = vmatprep.subr.mxu0 0.0
    %3824 = vmatpush2.msra.mxu0 0.0
    %3825 = vmatprep.subr.mxu0 0.0
    %3826 = vmatpush2.msra.mxu0 0.0
    %3827 = vmatprep.subr.mxu0 0.0
    %3828 = vmatpush2.msra.mxu0 0.0
    %3829 = vmatprep.subr.mxu0 0.0
    %3830 = vmatpush2.msra.mxu0 0.0
    %3831 = vmatprep.subr.mxu0 0.0
    %3832 = vmatpush2.msra.mxu0 0.0
    %3833 = vmatprep.subr.mxu0 0.0
    %3834 = vmatpush2.msra.mxu0 0.0
    %3835 = vmatprep.subr.mxu0 0.0
    %3836 = vmatpush2.msra.mxu0 0.0
    %3837 = vmatprep.subr.mxu0 0.0
    %3838 = vmatpush2.msra.mxu0 0.0
    %3839 = vmatprep.subr.mxu0 0.0
    %3840 = vmatpush2.msra.mxu0 0.0
    %3841 = vmatprep.mubr.f32.mxu0 0.0
    %3842 = vmatmul.mubr.f32.gmra.mxu0 %v3625
    %v3843 = vpop.f32.mrf.mxu0
    %v3844 = vadd.f32 0.0, %v3843
    %v3845 = vpop.f32.mrf.mxu0
    %3846 = vdwg.mxu0
    %3847 = vrot.lane.b32.xlu0 %v41, 125
    %v3848 = vpop.permute.xlu0 %3847
    %v3849 = vsel %vm66, %v3848, 0
    %3851 = vmatprep.subr.mxu0 0.0
    %3852 = vmatpush1.msra.mxu0 0.0
    %3853 = vmatprep.subr.mxu0 0.0
    %3854 = vmatpush1.msra.mxu0 0.0
    %3855 = vmatprep.subr.mxu0 0.0
    %3856 = vmatpush1.msra.mxu0 0.0
    %3857 = vmatprep.subr.mxu0 0.0
    %3858 = vmatpush1.msra.mxu0 0.0
    %3859 = vmatprep.subr.mxu0 0.0
    %3860 = vmatpush1.msra.mxu0 0.0
    %3861 = vmatprep.subr.mxu0 0.0
    %3862 = vmatpush1.msra.mxu0 0.0
    %3863 = vmatprep.subr.mxu0 0.0
    %3864 = vmatpush1.msra.mxu0 0.0
    %3865 = vmatprep.subr.mxu0 0.0
    %3866 = vmatpush1.msra.mxu0 0.0
    %3867 = vmatprep.subr.mxu0 0.0
    %3868 = vmatpush1.msra.mxu0 0.0
    %3869 = vmatprep.subr.mxu0 0.0
    %3870 = vmatpush1.msra.mxu0 0.0
    %3871 = vmatprep.subr.mxu0 0.0
    %3872 = vmatpush1.msra.mxu0 0.0
    %3873 = vmatprep.subr.mxu0 0.0
    %3874 = vmatpush1.msra.mxu0 0.0
    %3875 = vmatprep.subr.mxu0 0.0
    %3876 = vmatpush1.msra.mxu0 0.0
    %3877 = vmatprep.subr.mxu0 0.0
    %3878 = vmatpush1.msra.mxu0 0.0
    %3879 = vmatprep.subr.mxu0 0.0
    %3880 = vmatpush1.msra.mxu0 0.0
    %3881 = vmatprep.subr.mxu0 0.0
    %3882 = vmatpush1.msra.mxu0 %v3849
    %3883 = vmatprep.subr.mxu0 0.0
    %3884 = vmatpush2.msra.mxu0 0.0
    %3885 = vmatprep.subr.mxu0 0.0
    %3886 = vmatpush2.msra.mxu0 0.0
    %3887 = vmatprep.subr.mxu0 0.0
    %3888 = vmatpush2.msra.mxu0 0.0
    %3889 = vmatprep.subr.mxu0 0.0
    %3890 = vmatpush2.msra.mxu0 0.0
    %3891 = vmatprep.subr.mxu0 0.0
    %3892 = vmatpush2.msra.mxu0 0.0
    %3893 = vmatprep.subr.mxu0 0.0
    %3894 = vmatpush2.msra.mxu0 0.0
    %3895 = vmatprep.subr.mxu0 0.0
    %3896 = vmatpush2.msra.mxu0 0.0
    %3897 = vmatprep.subr.mxu0 0.0
    %3898 = vmatpush2.msra.mxu0 0.0
    %3899 = vmatprep.subr.mxu0 0.0
    %3900 = vmatpush2.msra.mxu0 0.0
    %3901 = vmatprep.subr.mxu0 0.0
    %3902 = vmatpush2.msra.mxu0 0.0
    %3903 = vmatprep.subr.mxu0 0.0
    %3904 = vmatpush2.msra.mxu0 0.0
    %3905 = vmatprep.subr.mxu0 0.0
    %3906 = vmatpush2.msra.mxu0 0.0
    %3907 = vmatprep.subr.mxu0 0.0
    %3908 = vmatpush2.msra.mxu0 0.0
    %3909 = vmatprep.subr.mxu0 0.0
    %3910 = vmatpush2.msra.mxu0 0.0
    %3911 = vmatprep.subr.mxu0 0.0
    %3912 = vmatpush2.msra.mxu0 0.0
    %3913 = vmatprep.subr.mxu0 0.0
    %3914 = vmatpush2.msra.mxu0 0.0
    %3915 = vmatprep.mubr.f32.mxu0 0.0
    %3916 = vmatmul.mubr.f32.gmra.mxu0 %v3625
    %v3917 = vpop.f32.mrf.mxu0
    %v3918 = vadd.f32 0.0, %v3917
    %v3919 = vpop.f32.mrf.mxu0
    %3920 = vdwg.mxu0
    %3921 = vrot.lane.b32.xlu0 %v42, 125
    %v3922 = vpop.permute.xlu0 %3921
    %v3923 = vsel %vm66, %v3922, 0
    %3925 = vmatprep.subr.mxu0 0.0
    %3926 = vmatpush1.msra.mxu0 0.0
    %3927 = vmatprep.subr.mxu0 0.0
    %3928 = vmatpush1.msra.mxu0 0.0
    %3929 = vmatprep.subr.mxu0 0.0
    %3930 = vmatpush1.msra.mxu0 0.0
    %3931 = vmatprep.subr.mxu0 0.0
    %3932 = vmatpush1.msra.mxu0 0.0
    %3933 = vmatprep.subr.mxu0 0.0
    %3934 = vmatpush1.msra.mxu0 0.0
    %3935 = vmatprep.subr.mxu0 0.0
    %3936 = vmatpush1.msra.mxu0 0.0
    %3937 = vmatprep.subr.mxu0 0.0
    %3938 = vmatpush1.msra.mxu0 0.0
    %3939 = vmatprep.subr.mxu0 0.0
    %3940 = vmatpush1.msra.mxu0 0.0
    %3941 = vmatprep.subr.mxu0 0.0
    %3942 = vmatpush1.msra.mxu0 0.0
    %3943 = vmatprep.subr.mxu0 0.0
    %3944 = vmatpush1.msra.mxu0 0.0
    %3945 = vmatprep.subr.mxu0 0.0
    %3946 = vmatpush1.msra.mxu0 0.0
    %3947 = vmatprep.subr.mxu0 0.0
    %3948 = vmatpush1.msra.mxu0 0.0
    %3949 = vmatprep.subr.mxu0 0.0
    %3950 = vmatpush1.msra.mxu0 0.0
    %3951 = vmatprep.subr.mxu0 0.0
    %3952 = vmatpush1.msra.mxu0 0.0
    %3953 = vmatprep.subr.mxu0 0.0
    %3954 = vmatpush1.msra.mxu0 0.0
    %3955 = vmatprep.subr.mxu0 0.0
    %3956 = vmatpush1.msra.mxu0 %v3923
    %3957 = vmatprep.subr.mxu0 0.0
    %3958 = vmatpush2.msra.mxu0 0.0
    %3959 = vmatprep.subr.mxu0 0.0
    %3960 = vmatpush2.msra.mxu0 0.0
    %3961 = vmatprep.subr.mxu0 0.0
    %3962 = vmatpush2.msra.mxu0 0.0
    %3963 = vmatprep.subr.mxu0 0.0
    %3964 = vmatpush2.msra.mxu0 0.0
    %3965 = vmatprep.subr.mxu0 0.0
    %3966 = vmatpush2.msra.mxu0 0.0
    %3967 = vmatprep.subr.mxu0 0.0
    %3968 = vmatpush2.msra.mxu0 0.0
    %3969 = vmatprep.subr.mxu0 0.0
    %3970 = vmatpush2.msra.mxu0 0.0
    %3971 = vmatprep.subr.mxu0 0.0
    %3972 = vmatpush2.msra.mxu0 0.0
    %3973 = vmatprep.subr.mxu0 0.0
    %3974 = vmatpush2.msra.mxu0 0.0
    %3975 = vmatprep.subr.mxu0 0.0
    %3976 = vmatpush2.msra.mxu0 0.0
    %3977 = vmatprep.subr.mxu0 0.0
    %3978 = vmatpush2.msra.mxu0 0.0
    %3979 = vmatprep.subr.mxu0 0.0
    %3980 = vmatpush2.msra.mxu0 0.0
    %3981 = vmatprep.subr.mxu0 0.0
    %3982 = vmatpush2.msra.mxu0 0.0
    %3983 = vmatprep.subr.mxu0 0.0
    %3984 = vmatpush2.msra.mxu0 0.0
    %3985 = vmatprep.subr.mxu0 0.0
    %3986 = vmatpush2.msra.mxu0 0.0
    %3987 = vmatprep.subr.mxu0 0.0
    %3988 = vmatpush2.msra.mxu0 0.0
    %3989 = vmatprep.mubr.f32.mxu0 0.0
    %3990 = vmatmul.mubr.f32.gmra.mxu0 %v3625
    %v3991 = vpop.f32.mrf.mxu0
    %v3992 = vadd.f32 0.0, %v3991
    %v3993 = vpop.f32.mrf.mxu0
    %3994 = vdwg.mxu0
    %3995 = vrot.lane.b32.xlu0 %v43, 125
    %v3996 = vpop.permute.xlu0 %3995
    %v3997 = vsel %vm66, %v3996, 0
    %3999 = vmatprep.subr.mxu0 0.0
    %4000 = vmatpush1.msra.mxu0 0.0
    %4001 = vmatprep.subr.mxu0 0.0
    %4002 = vmatpush1.msra.mxu0 0.0
    %4003 = vmatprep.subr.mxu0 0.0
    %4004 = vmatpush1.msra.mxu0 0.0
    %4005 = vmatprep.subr.mxu0 0.0
    %4006 = vmatpush1.msra.mxu0 0.0
    %4007 = vmatprep.subr.mxu0 0.0
    %4008 = vmatpush1.msra.mxu0 0.0
    %4009 = vmatprep.subr.mxu0 0.0
    %4010 = vmatpush1.msra.mxu0 0.0
    %4011 = vmatprep.subr.mxu0 0.0
    %4012 = vmatpush1.msra.mxu0 0.0
    %4013 = vmatprep.subr.mxu0 0.0
    %4014 = vmatpush1.msra.mxu0 0.0
    %4015 = vmatprep.subr.mxu0 0.0
    %4016 = vmatpush1.msra.mxu0 0.0
    %4017 = vmatprep.subr.mxu0 0.0
    %4018 = vmatpush1.msra.mxu0 0.0
    %4019 = vmatprep.subr.mxu0 0.0
    %4020 = vmatpush1.msra.mxu0 0.0
    %4021 = vmatprep.subr.mxu0 0.0
    %4022 = vmatpush1.msra.mxu0 0.0
    %4023 = vmatprep.subr.mxu0 0.0
    %4024 = vmatpush1.msra.mxu0 0.0
    %4025 = vmatprep.subr.mxu0 0.0
    %4026 = vmatpush1.msra.mxu0 0.0
    %4027 = vmatprep.subr.mxu0 0.0
    %4028 = vmatpush1.msra.mxu0 0.0
    %4029 = vmatprep.subr.mxu0 0.0
    %4030 = vmatpush1.msra.mxu0 %v3997
    %4031 = vmatprep.subr.mxu0 0.0
    %4032 = vmatpush2.msra.mxu0 0.0
    %4033 = vmatprep.subr.mxu0 0.0
    %4034 = vmatpush2.msra.mxu0 0.0
    %4035 = vmatprep.subr.mxu0 0.0
    %4036 = vmatpush2.msra.mxu0 0.0
    %4037 = vmatprep.subr.mxu0 0.0
    %4038 = vmatpush2.msra.mxu0 0.0
    %4039 = vmatprep.subr.mxu0 0.0
    %4040 = vmatpush2.msra.mxu0 0.0
    %4041 = vmatprep.subr.mxu0 0.0
    %4042 = vmatpush2.msra.mxu0 0.0
    %4043 = vmatprep.subr.mxu0 0.0
    %4044 = vmatpush2.msra.mxu0 0.0
    %4045 = vmatprep.subr.mxu0 0.0
    %4046 = vmatpush2.msra.mxu0 0.0
    %4047 = vmatprep.subr.mxu0 0.0
    %4048 = vmatpush2.msra.mxu0 0.0
    %4049 = vmatprep.subr.mxu0 0.0
    %4050 = vmatpush2.msra.mxu0 0.0
    %4051 = vmatprep.subr.mxu0 0.0
    %4052 = vmatpush2.msra.mxu0 0.0
    %4053 = vmatprep.subr.mxu0 0.0
    %4054 = vmatpush2.msra.mxu0 0.0
    %4055 = vmatprep.subr.mxu0 0.0
    %4056 = vmatpush2.msra.mxu0 0.0
    %4057 = vmatprep.subr.mxu0 0.0
    %4058 = vmatpush2.msra.mxu0 0.0
    %4059 = vmatprep.subr.mxu0 0.0
    %4060 = vmatpush2.msra.mxu0 0.0
    %4061 = vmatprep.subr.mxu0 0.0
    %4062 = vmatpush2.msra.mxu0 0.0
    %4063 = vmatprep.mubr.f32.mxu0 0.0
    %4064 = vmatmul.mubr.f32.gmra.mxu0 %v3625
    %v4065 = vpop.f32.mrf.mxu0
    %v4066 = vadd.f32 0.0, %v4065
    %v4067 = vpop.f32.mrf.mxu0
    %4068 = vdwg.mxu0
    %4069 = vrot.lane.b32.xlu0 %v44, 125
    %v4070 = vpop.permute.xlu0 %4069
    %v4071 = vsel %vm66, %v4070, 0
    %4073 = vmatprep.subr.mxu0 0.0
    %4074 = vmatpush1.msra.mxu0 0.0
    %4075 = vmatprep.subr.mxu0 0.0
    %4076 = vmatpush1.msra.mxu0 0.0
    %4077 = vmatprep.subr.mxu0 0.0
    %4078 = vmatpush1.msra.mxu0 0.0
    %4079 = vmatprep.subr.mxu0 0.0
    %4080 = vmatpush1.msra.mxu0 0.0
    %4081 = vmatprep.subr.mxu0 0.0
    %4082 = vmatpush1.msra.mxu0 0.0
    %4083 = vmatprep.subr.mxu0 0.0
    %4084 = vmatpush1.msra.mxu0 0.0
    %4085 = vmatprep.subr.mxu0 0.0
    %4086 = vmatpush1.msra.mxu0 0.0
    %4087 = vmatprep.subr.mxu0 0.0
    %4088 = vmatpush1.msra.mxu0 0.0
    %4089 = vmatprep.subr.mxu0 0.0
    %4090 = vmatpush1.msra.mxu0 0.0
    %4091 = vmatprep.subr.mxu0 0.0
    %4092 = vmatpush1.msra.mxu0 0.0
    %4093 = vmatprep.subr.mxu0 0.0
    %4094 = vmatpush1.msra.mxu0 0.0
    %4095 = vmatprep.subr.mxu0 0.0
    %4096 = vmatpush1.msra.mxu0 0.0
    %4097 = vmatprep.subr.mxu0 0.0
    %4098 = vmatpush1.msra.mxu0 0.0
    %4099 = vmatprep.subr.mxu0 0.0
    %4100 = vmatpush1.msra.mxu0 0.0
    %4101 = vmatprep.subr.mxu0 0.0
    %4102 = vmatpush1.msra.mxu0 0.0
    %4103 = vmatprep.subr.mxu0 0.0
    %4104 = vmatpush1.msra.mxu0 %v4071
    %4105 = vmatprep.subr.mxu0 0.0
    %4106 = vmatpush2.msra.mxu0 0.0
    %4107 = vmatprep.subr.mxu0 0.0
    %4108 = vmatpush2.msra.mxu0 0.0
    %4109 = vmatprep.subr.mxu0 0.0
    %4110 = vmatpush2.msra.mxu0 0.0
    %4111 = vmatprep.subr.mxu0 0.0
    %4112 = vmatpush2.msra.mxu0 0.0
    %4113 = vmatprep.subr.mxu0 0.0
    %4114 = vmatpush2.msra.mxu0 0.0
    %4115 = vmatprep.subr.mxu0 0.0
    %4116 = vmatpush2.msra.mxu0 0.0
    %4117 = vmatprep.subr.mxu0 0.0
    %4118 = vmatpush2.msra.mxu0 0.0
    %4119 = vmatprep.subr.mxu0 0.0
    %4120 = vmatpush2.msra.mxu0 0.0
    %4121 = vmatprep.subr.mxu0 0.0
    %4122 = vmatpush2.msra.mxu0 0.0
    %4123 = vmatprep.subr.mxu0 0.0
    %4124 = vmatpush2.msra.mxu0 0.0
    %4125 = vmatprep.subr.mxu0 0.0
    %4126 = vmatpush2.msra.mxu0 0.0
    %4127 = vmatprep.subr.mxu0 0.0
    %4128 = vmatpush2.msra.mxu0 0.0
    %4129 = vmatprep.subr.mxu0 0.0
    %4130 = vmatpush2.msra.mxu0 0.0
    %4131 = vmatprep.subr.mxu0 0.0
    %4132 = vmatpush2.msra.mxu0 0.0
    %4133 = vmatprep.subr.mxu0 0.0
    %4134 = vmatpush2.msra.mxu0 0.0
    %4135 = vmatprep.subr.mxu0 0.0
    %4136 = vmatpush2.msra.mxu0 0.0
    %4137 = vmatprep.mubr.f32.mxu0 0.0
    %4138 = vmatmul.mubr.f32.gmra.mxu0 %v3625
    %v4139 = vpop.f32.mrf.mxu0
    %v4140 = vadd.f32 0.0, %v4139
    %v4141 = vpop.f32.mrf.mxu0
    %4142 = vdwg.mxu0
    %4143 = vrot.lane.b32.xlu0 %v45, 125
    %v4144 = vpop.permute.xlu0 %4143
    %v4145 = vsel %vm66, %v4144, 0
    %4147 = vmatprep.subr.mxu0 0.0
    %4148 = vmatpush1.msra.mxu0 0.0
    %4149 = vmatprep.subr.mxu0 0.0
    %4150 = vmatpush1.msra.mxu0 0.0
    %4151 = vmatprep.subr.mxu0 0.0
    %4152 = vmatpush1.msra.mxu0 0.0
    %4153 = vmatprep.subr.mxu0 0.0
    %4154 = vmatpush1.msra.mxu0 0.0
    %4155 = vmatprep.subr.mxu0 0.0
    %4156 = vmatpush1.msra.mxu0 0.0
    %4157 = vmatprep.subr.mxu0 0.0
    %4158 = vmatpush1.msra.mxu0 0.0
    %4159 = vmatprep.subr.mxu0 0.0
    %4160 = vmatpush1.msra.mxu0 0.0
    %4161 = vmatprep.subr.mxu0 0.0
    %4162 = vmatpush1.msra.mxu0 0.0
    %4163 = vmatprep.subr.mxu0 0.0
    %4164 = vmatpush1.msra.mxu0 0.0
    %4165 = vmatprep.subr.mxu0 0.0
    %4166 = vmatpush1.msra.mxu0 0.0
    %4167 = vmatprep.subr.mxu0 0.0
    %4168 = vmatpush1.msra.mxu0 0.0
    %4169 = vmatprep.subr.mxu0 0.0
    %4170 = vmatpush1.msra.mxu0 0.0
    %4171 = vmatprep.subr.mxu0 0.0
    %4172 = vmatpush1.msra.mxu0 0.0
    %4173 = vmatprep.subr.mxu0 0.0
    %4174 = vmatpush1.msra.mxu0 0.0
    %4175 = vmatprep.subr.mxu0 0.0
    %4176 = vmatpush1.msra.mxu0 0.0
    %4177 = vmatprep.subr.mxu0 0.0
    %4178 = vmatpush1.msra.mxu0 %v4145
    %4179 = vmatprep.subr.mxu0 0.0
    %4180 = vmatpush2.msra.mxu0 0.0
    %4181 = vmatprep.subr.mxu0 0.0
    %4182 = vmatpush2.msra.mxu0 0.0
    %4183 = vmatprep.subr.mxu0 0.0
    %4184 = vmatpush2.msra.mxu0 0.0
    %4185 = vmatprep.subr.mxu0 0.0
    %4186 = vmatpush2.msra.mxu0 0.0
    %4187 = vmatprep.subr.mxu0 0.0
    %4188 = vmatpush2.msra.mxu0 0.0
    %4189 = vmatprep.subr.mxu0 0.0
    %4190 = vmatpush2.msra.mxu0 0.0
    %4191 = vmatprep.subr.mxu0 0.0
    %4192 = vmatpush2.msra.mxu0 0.0
    %4193 = vmatprep.subr.mxu0 0.0
    %4194 = vmatpush2.msra.mxu0 0.0
    %4195 = vmatprep.subr.mxu0 0.0
    %4196 = vmatpush2.msra.mxu0 0.0
    %4197 = vmatprep.subr.mxu0 0.0
    %4198 = vmatpush2.msra.mxu0 0.0
    %4199 = vmatprep.subr.mxu0 0.0
    %4200 = vmatpush2.msra.mxu0 0.0
    %4201 = vmatprep.subr.mxu0 0.0
    %4202 = vmatpush2.msra.mxu0 0.0
    %4203 = vmatprep.subr.mxu0 0.0
    %4204 = vmatpush2.msra.mxu0 0.0
    %4205 = vmatprep.subr.mxu0 0.0
    %4206 = vmatpush2.msra.mxu0 0.0
    %4207 = vmatprep.subr.mxu0 0.0
    %4208 = vmatpush2.msra.mxu0 0.0
    %4209 = vmatprep.subr.mxu0 0.0
    %4210 = vmatpush2.msra.mxu0 0.0
    %4211 = vmatprep.mubr.f32.mxu0 0.0
    %4212 = vmatmul.mubr.f32.gmra.mxu0 %v3625
    %v4213 = vpop.f32.mrf.mxu0
    %v4214 = vadd.f32 0.0, %v4213
    %v4215 = vpop.f32.mrf.mxu0
    %4216 = vdwg.mxu0
    %4217 = vrot.lane.b32.xlu0 %v46, 125
    %v4218 = vpop.permute.xlu0 %4217
    %v4219 = vsel %vm66, %v4218, 0
    %4221 = vmatprep.subr.mxu0 0.0
    %4222 = vmatpush1.msra.mxu0 0.0
    %4223 = vmatprep.subr.mxu0 0.0
    %4224 = vmatpush1.msra.mxu0 0.0
    %4225 = vmatprep.subr.mxu0 0.0
    %4226 = vmatpush1.msra.mxu0 0.0
    %4227 = vmatprep.subr.mxu0 0.0
    %4228 = vmatpush1.msra.mxu0 0.0
    %4229 = vmatprep.subr.mxu0 0.0
    %4230 = vmatpush1.msra.mxu0 0.0
    %4231 = vmatprep.subr.mxu0 0.0
    %4232 = vmatpush1.msra.mxu0 0.0
    %4233 = vmatprep.subr.mxu0 0.0
    %4234 = vmatpush1.msra.mxu0 0.0
    %4235 = vmatprep.subr.mxu0 0.0
    %4236 = vmatpush1.msra.mxu0 0.0
    %4237 = vmatprep.subr.mxu0 0.0
    %4238 = vmatpush1.msra.mxu0 0.0
    %4239 = vmatprep.subr.mxu0 0.0
    %4240 = vmatpush1.msra.mxu0 0.0
    %4241 = vmatprep.subr.mxu0 0.0
    %4242 = vmatpush1.msra.mxu0 0.0
    %4243 = vmatprep.subr.mxu0 0.0
    %4244 = vmatpush1.msra.mxu0 0.0
    %4245 = vmatprep.subr.mxu0 0.0
    %4246 = vmatpush1.msra.mxu0 0.0
    %4247 = vmatprep.subr.mxu0 0.0
    %4248 = vmatpush1.msra.mxu0 0.0
    %4249 = vmatprep.subr.mxu0 0.0
    %4250 = vmatpush1.msra.mxu0 0.0
    %4251 = vmatprep.subr.mxu0 0.0
    %4252 = vmatpush1.msra.mxu0 %v4219
    %4253 = vmatprep.subr.mxu0 0.0
    %4254 = vmatpush2.msra.mxu0 0.0
    %4255 = vmatprep.subr.mxu0 0.0
    %4256 = vmatpush2.msra.mxu0 0.0
    %4257 = vmatprep.subr.mxu0 0.0
    %4258 = vmatpush2.msra.mxu0 0.0
    %4259 = vmatprep.subr.mxu0 0.0
    %4260 = vmatpush2.msra.mxu0 0.0
    %4261 = vmatprep.subr.mxu0 0.0
    %4262 = vmatpush2.msra.mxu0 0.0
    %4263 = vmatprep.subr.mxu0 0.0
    %4264 = vmatpush2.msra.mxu0 0.0
    %4265 = vmatprep.subr.mxu0 0.0
    %4266 = vmatpush2.msra.mxu0 0.0
    %4267 = vmatprep.subr.mxu0 0.0
    %4268 = vmatpush2.msra.mxu0 0.0
    %4269 = vmatprep.subr.mxu0 0.0
    %4270 = vmatpush2.msra.mxu0 0.0
    %4271 = vmatprep.subr.mxu0 0.0
    %4272 = vmatpush2.msra.mxu0 0.0
    %4273 = vmatprep.subr.mxu0 0.0
    %4274 = vmatpush2.msra.mxu0 0.0
    %4275 = vmatprep.subr.mxu0 0.0
    %4276 = vmatpush2.msra.mxu0 0.0
    %4277 = vmatprep.subr.mxu0 0.0
    %4278 = vmatpush2.msra.mxu0 0.0
    %4279 = vmatprep.subr.mxu0 0.0
    %4280 = vmatpush2.msra.mxu0 0.0
    %4281 = vmatprep.subr.mxu0 0.0
    %4282 = vmatpush2.msra.mxu0 0.0
    %4283 = vmatprep.subr.mxu0 0.0
    %4284 = vmatpush2.msra.mxu0 0.0
    %4285 = vmatprep.mubr.f32.mxu0 0.0
    %4286 = vmatmul.mubr.f32.gmra.mxu0 %v3625
    %v4287 = vpop.f32.mrf.mxu0
    %v4288 = vadd.f32 0.0, %v4287
    %v4289 = vpop.f32.mrf.mxu0
    %4290 = vdwg.mxu0
    %4291 = vrot.lane.b32.xlu0 %v47, 125
    %v4292 = vpop.permute.xlu0 %4291
    %v4293 = vsel %vm66, %v4292, 0
    %4295 = vmatprep.subr.mxu0 0.0
    %4296 = vmatpush1.msra.mxu0 0.0
    %4297 = vmatprep.subr.mxu0 0.0
    %4298 = vmatpush1.msra.mxu0 0.0
    %4299 = vmatprep.subr.mxu0 0.0
    %4300 = vmatpush1.msra.mxu0 0.0
    %4301 = vmatprep.subr.mxu0 0.0
    %4302 = vmatpush1.msra.mxu0 0.0
    %4303 = vmatprep.subr.mxu0 0.0
    %4304 = vmatpush1.msra.mxu0 0.0
    %4305 = vmatprep.subr.mxu0 0.0
    %4306 = vmatpush1.msra.mxu0 0.0
    %4307 = vmatprep.subr.mxu0 0.0
    %4308 = vmatpush1.msra.mxu0 0.0
    %4309 = vmatprep.subr.mxu0 0.0
    %4310 = vmatpush1.msra.mxu0 0.0
    %4311 = vmatprep.subr.mxu0 0.0
    %4312 = vmatpush1.msra.mxu0 0.0
    %4313 = vmatprep.subr.mxu0 0.0
    %4314 = vmatpush1.msra.mxu0 0.0
    %4315 = vmatprep.subr.mxu0 0.0
    %4316 = vmatpush1.msra.mxu0 0.0
    %4317 = vmatprep.subr.mxu0 0.0
    %4318 = vmatpush1.msra.mxu0 0.0
    %4319 = vmatprep.subr.mxu0 0.0
    %4320 = vmatpush1.msra.mxu0 0.0
    %4321 = vmatprep.subr.mxu0 0.0
    %4322 = vmatpush1.msra.mxu0 0.0
    %4323 = vmatprep.subr.mxu0 0.0
    %4324 = vmatpush1.msra.mxu0 0.0
    %4325 = vmatprep.subr.mxu0 0.0
    %4326 = vmatpush1.msra.mxu0 %v4293
    %4327 = vmatprep.subr.mxu0 0.0
    %4328 = vmatpush2.msra.mxu0 0.0
    %4329 = vmatprep.subr.mxu0 0.0
    %4330 = vmatpush2.msra.mxu0 0.0
    %4331 = vmatprep.subr.mxu0 0.0
    %4332 = vmatpush2.msra.mxu0 0.0
    %4333 = vmatprep.subr.mxu0 0.0
    %4334 = vmatpush2.msra.mxu0 0.0
    %4335 = vmatprep.subr.mxu0 0.0
    %4336 = vmatpush2.msra.mxu0 0.0
    %4337 = vmatprep.subr.mxu0 0.0
    %4338 = vmatpush2.msra.mxu0 0.0
    %4339 = vmatprep.subr.mxu0 0.0
    %4340 = vmatpush2.msra.mxu0 0.0
    %4341 = vmatprep.subr.mxu0 0.0
    %4342 = vmatpush2.msra.mxu0 0.0
    %4343 = vmatprep.subr.mxu0 0.0
    %4344 = vmatpush2.msra.mxu0 0.0
    %4345 = vmatprep.subr.mxu0 0.0
    %4346 = vmatpush2.msra.mxu0 0.0
    %4347 = vmatprep.subr.mxu0 0.0
    %4348 = vmatpush2.msra.mxu0 0.0
    %4349 = vmatprep.subr.mxu0 0.0
    %4350 = vmatpush2.msra.mxu0 0.0
    %4351 = vmatprep.subr.mxu0 0.0
    %4352 = vmatpush2.msra.mxu0 0.0
    %4353 = vmatprep.subr.mxu0 0.0
    %4354 = vmatpush2.msra.mxu0 0.0
    %4355 = vmatprep.subr.mxu0 0.0
    %4356 = vmatpush2.msra.mxu0 0.0
    %4357 = vmatprep.subr.mxu0 0.0
    %4358 = vmatpush2.msra.mxu0 0.0
    %4359 = vmatprep.mubr.f32.mxu0 0.0
    %4360 = vmatmul.mubr.f32.gmra.mxu0 %v3625
    %v4361 = vpop.f32.mrf.mxu0
    %v4362 = vadd.f32 0.0, %v4361
    %v4363 = vpop.f32.mrf.mxu0
    %4364 = vdwg.mxu0
    %4365 = vrot.lane.b32.xlu0 %v48, 125
    %v4366 = vpop.permute.xlu0 %4365
    %v4367 = vsel %vm66, %v4366, 0
    %4369 = vmatprep.subr.mxu0 0.0
    %4370 = vmatpush1.msra.mxu0 0.0
    %4371 = vmatprep.subr.mxu0 0.0
    %4372 = vmatpush1.msra.mxu0 0.0
    %4373 = vmatprep.subr.mxu0 0.0
    %4374 = vmatpush1.msra.mxu0 0.0
    %4375 = vmatprep.subr.mxu0 0.0
    %4376 = vmatpush1.msra.mxu0 0.0
    %4377 = vmatprep.subr.mxu0 0.0
    %4378 = vmatpush1.msra.mxu0 0.0
    %4379 = vmatprep.subr.mxu0 0.0
    %4380 = vmatpush1.msra.mxu0 0.0
    %4381 = vmatprep.subr.mxu0 0.0
    %4382 = vmatpush1.msra.mxu0 0.0
    %4383 = vmatprep.subr.mxu0 0.0
    %4384 = vmatpush1.msra.mxu0 0.0
    %4385 = vmatprep.subr.mxu0 0.0
    %4386 = vmatpush1.msra.mxu0 0.0
    %4387 = vmatprep.subr.mxu0 0.0
    %4388 = vmatpush1.msra.mxu0 0.0
    %4389 = vmatprep.subr.mxu0 0.0
    %4390 = vmatpush1.msra.mxu0 0.0
    %4391 = vmatprep.subr.mxu0 0.0
    %4392 = vmatpush1.msra.mxu0 0.0
    %4393 = vmatprep.subr.mxu0 0.0
    %4394 = vmatpush1.msra.mxu0 0.0
    %4395 = vmatprep.subr.mxu0 0.0
    %4396 = vmatpush1.msra.mxu0 0.0
    %4397 = vmatprep.subr.mxu0 0.0
    %4398 = vmatpush1.msra.mxu0 0.0
    %4399 = vmatprep.subr.mxu0 0.0
    %4400 = vmatpush1.msra.mxu0 %v4367
    %4401 = vmatprep.subr.mxu0 0.0
    %4402 = vmatpush2.msra.mxu0 0.0
    %4403 = vmatprep.subr.mxu0 0.0
    %4404 = vmatpush2.msra.mxu0 0.0
    %4405 = vmatprep.subr.mxu0 0.0
    %4406 = vmatpush2.msra.mxu0 0.0
    %4407 = vmatprep.subr.mxu0 0.0
    %4408 = vmatpush2.msra.mxu0 0.0
    %4409 = vmatprep.subr.mxu0 0.0
    %4410 = vmatpush2.msra.mxu0 0.0
    %4411 = vmatprep.subr.mxu0 0.0
    %4412 = vmatpush2.msra.mxu0 0.0
    %4413 = vmatprep.subr.mxu0 0.0
    %4414 = vmatpush2.msra.mxu0 0.0
    %4415 = vmatprep.subr.mxu0 0.0
    %4416 = vmatpush2.msra.mxu0 0.0
    %4417 = vmatprep.subr.mxu0 0.0
    %4418 = vmatpush2.msra.mxu0 0.0
    %4419 = vmatprep.subr.mxu0 0.0
    %4420 = vmatpush2.msra.mxu0 0.0
    %4421 = vmatprep.subr.mxu0 0.0
    %4422 = vmatpush2.msra.mxu0 0.0
    %4423 = vmatprep.subr.mxu0 0.0
    %4424 = vmatpush2.msra.mxu0 0.0
    %4425 = vmatprep.subr.mxu0 0.0
    %4426 = vmatpush2.msra.mxu0 0.0
    %4427 = vmatprep.subr.mxu0 0.0
    %4428 = vmatpush2.msra.mxu0 0.0
    %4429 = vmatprep.subr.mxu0 0.0
    %4430 = vmatpush2.msra.mxu0 0.0
    %4431 = vmatprep.subr.mxu0 0.0
    %4432 = vmatpush2.msra.mxu0 0.0
    %4433 = vmatprep.mubr.f32.mxu0 0.0
    %4434 = vmatmul.mubr.f32.gmra.mxu0 %v3625
    %v4435 = vpop.f32.mrf.mxu0
    %v4436 = vadd.f32 0.0, %v4435
    %v4437 = vpop.f32.mrf.mxu0
    %4438 = vdwg.mxu0
    %4439 = vrot.lane.b32.xlu0 %v49, 125
    %v4440 = vpop.permute.xlu0 %4439
    %v4441 = vsel %vm66, %v4440, 0
    %4443 = vmatprep.subr.mxu0 0.0
    %4444 = vmatpush1.msra.mxu0 0.0
    %4445 = vmatprep.subr.mxu0 0.0
    %4446 = vmatpush1.msra.mxu0 0.0
    %4447 = vmatprep.subr.mxu0 0.0
    %4448 = vmatpush1.msra.mxu0 0.0
    %4449 = vmatprep.subr.mxu0 0.0
    %4450 = vmatpush1.msra.mxu0 0.0
    %4451 = vmatprep.subr.mxu0 0.0
    %4452 = vmatpush1.msra.mxu0 0.0
    %4453 = vmatprep.subr.mxu0 0.0
    %4454 = vmatpush1.msra.mxu0 0.0
    %4455 = vmatprep.subr.mxu0 0.0
    %4456 = vmatpush1.msra.mxu0 0.0
    %4457 = vmatprep.subr.mxu0 0.0
    %4458 = vmatpush1.msra.mxu0 0.0
    %4459 = vmatprep.subr.mxu0 0.0
    %4460 = vmatpush1.msra.mxu0 0.0
    %4461 = vmatprep.subr.mxu0 0.0
    %4462 = vmatpush1.msra.mxu0 0.0
    %4463 = vmatprep.subr.mxu0 0.0
    %4464 = vmatpush1.msra.mxu0 0.0
    %4465 = vmatprep.subr.mxu0 0.0
    %4466 = vmatpush1.msra.mxu0 0.0
    %4467 = vmatprep.subr.mxu0 0.0
    %4468 = vmatpush1.msra.mxu0 0.0
    %4469 = vmatprep.subr.mxu0 0.0
    %4470 = vmatpush1.msra.mxu0 0.0
    %4471 = vmatprep.subr.mxu0 0.0
    %4472 = vmatpush1.msra.mxu0 0.0
    %4473 = vmatprep.subr.mxu0 0.0
    %4474 = vmatpush1.msra.mxu0 %v4441
    %4475 = vmatprep.subr.mxu0 0.0
    %4476 = vmatpush2.msra.mxu0 0.0
    %4477 = vmatprep.subr.mxu0 0.0
    %4478 = vmatpush2.msra.mxu0 0.0
    %4479 = vmatprep.subr.mxu0 0.0
    %4480 = vmatpush2.msra.mxu0 0.0
    %4481 = vmatprep.subr.mxu0 0.0
    %4482 = vmatpush2.msra.mxu0 0.0
    %4483 = vmatprep.subr.mxu0 0.0
    %4484 = vmatpush2.msra.mxu0 0.0
    %4485 = vmatprep.subr.mxu0 0.0
    %4486 = vmatpush2.msra.mxu0 0.0
    %4487 = vmatprep.subr.mxu0 0.0
    %4488 = vmatpush2.msra.mxu0 0.0
    %4489 = vmatprep.subr.mxu0 0.0
    %4490 = vmatpush2.msra.mxu0 0.0
    %4491 = vmatprep.subr.mxu0 0.0
    %4492 = vmatpush2.msra.mxu0 0.0
    %4493 = vmatprep.subr.mxu0 0.0
    %4494 = vmatpush2.msra.mxu0 0.0
    %4495 = vmatprep.subr.mxu0 0.0
    %4496 = vmatpush2.msra.mxu0 0.0
    %4497 = vmatprep.subr.mxu0 0.0
    %4498 = vmatpush2.msra.mxu0 0.0
    %4499 = vmatprep.subr.mxu0 0.0
    %4500 = vmatpush2.msra.mxu0 0.0
    %4501 = vmatprep.subr.mxu0 0.0
    %4502 = vmatpush2.msra.mxu0 0.0
    %4503 = vmatprep.subr.mxu0 0.0
    %4504 = vmatpush2.msra.mxu0 0.0
    %4505 = vmatprep.subr.mxu0 0.0
    %4506 = vmatpush2.msra.mxu0 0.0
    %4507 = vmatprep.mubr.f32.mxu0 0.0
    %4508 = vmatmul.mubr.f32.gmra.mxu0 %v3625
    %v4509 = vpop.f32.mrf.mxu0
    %v4510 = vadd.f32 0.0, %v4509
    %v4511 = vpop.f32.mrf.mxu0
    %4512 = vdwg.mxu0
    %4513 = vrot.lane.b32.xlu0 %v50, 125
    %v4514 = vpop.permute.xlu0 %4513
    %v4515 = vsel %vm66, %v4514, 0
    %4517 = vmatprep.subr.mxu0 0.0
    %4518 = vmatpush1.msra.mxu0 0.0
    %4519 = vmatprep.subr.mxu0 0.0
    %4520 = vmatpush1.msra.mxu0 0.0
    %4521 = vmatprep.subr.mxu0 0.0
    %4522 = vmatpush1.msra.mxu0 0.0
    %4523 = vmatprep.subr.mxu0 0.0
    %4524 = vmatpush1.msra.mxu0 0.0
    %4525 = vmatprep.subr.mxu0 0.0
    %4526 = vmatpush1.msra.mxu0 0.0
    %4527 = vmatprep.subr.mxu0 0.0
    %4528 = vmatpush1.msra.mxu0 0.0
    %4529 = vmatprep.subr.mxu0 0.0
    %4530 = vmatpush1.msra.mxu0 0.0
    %4531 = vmatprep.subr.mxu0 0.0
    %4532 = vmatpush1.msra.mxu0 0.0
    %4533 = vmatprep.subr.mxu0 0.0
    %4534 = vmatpush1.msra.mxu0 0.0
    %4535 = vmatprep.subr.mxu0 0.0
    %4536 = vmatpush1.msra.mxu0 0.0
    %4537 = vmatprep.subr.mxu0 0.0
    %4538 = vmatpush1.msra.mxu0 0.0
    %4539 = vmatprep.subr.mxu0 0.0
    %4540 = vmatpush1.msra.mxu0 0.0
    %4541 = vmatprep.subr.mxu0 0.0
    %4542 = vmatpush1.msra.mxu0 0.0
    %4543 = vmatprep.subr.mxu0 0.0
    %4544 = vmatpush1.msra.mxu0 0.0
    %4545 = vmatprep.subr.mxu0 0.0
    %4546 = vmatpush1.msra.mxu0 0.0
    %4547 = vmatprep.subr.mxu0 0.0
    %4548 = vmatpush1.msra.mxu0 %v4515
    %4549 = vmatprep.subr.mxu0 0.0
    %4550 = vmatpush2.msra.mxu0 0.0
    %4551 = vmatprep.subr.mxu0 0.0
    %4552 = vmatpush2.msra.mxu0 0.0
    %4553 = vmatprep.subr.mxu0 0.0
    %4554 = vmatpush2.msra.mxu0 0.0
    %4555 = vmatprep.subr.mxu0 0.0
    %4556 = vmatpush2.msra.mxu0 0.0
    %4557 = vmatprep.subr.mxu0 0.0
    %4558 = vmatpush2.msra.mxu0 0.0
    %4559 = vmatprep.subr.mxu0 0.0
    %4560 = vmatpush2.msra.mxu0 0.0
    %4561 = vmatprep.subr.mxu0 0.0
    %4562 = vmatpush2.msra.mxu0 0.0
    %4563 = vmatprep.subr.mxu0 0.0
    %4564 = vmatpush2.msra.mxu0 0.0
    %4565 = vmatprep.subr.mxu0 0.0
    %4566 = vmatpush2.msra.mxu0 0.0
    %4567 = vmatprep.subr.mxu0 0.0
    %4568 = vmatpush2.msra.mxu0 0.0
    %4569 = vmatprep.subr.mxu0 0.0
    %4570 = vmatpush2.msra.mxu0 0.0
    %4571 = vmatprep.subr.mxu0 0.0
    %4572 = vmatpush2.msra.mxu0 0.0
    %4573 = vmatprep.subr.mxu0 0.0
    %4574 = vmatpush2.msra.mxu0 0.0
    %4575 = vmatprep.subr.mxu0 0.0
    %4576 = vmatpush2.msra.mxu0 0.0
    %4577 = vmatprep.subr.mxu0 0.0
    %4578 = vmatpush2.msra.mxu0 0.0
    %4579 = vmatprep.subr.mxu0 0.0
    %4580 = vmatpush2.msra.mxu0 0.0
    %4581 = vmatprep.mubr.f32.mxu0 0.0
    %4582 = vmatmul.mubr.f32.gmra.mxu0 %v3625
    %v4583 = vpop.f32.mrf.mxu0
    %v4584 = vadd.f32 0.0, %v4583
    %v4585 = vpop.f32.mrf.mxu0
    %4586 = vdwg.mxu0
    %4587 = vrot.lane.b32.xlu0 %v51, 125
    %v4588 = vpop.permute.xlu0 %4587
    %v4589 = vsel %vm66, %v4588, 0
    %4591 = vmatprep.subr.mxu0 0.0
    %4592 = vmatpush1.msra.mxu0 0.0
    %4593 = vmatprep.subr.mxu0 0.0
    %4594 = vmatpush1.msra.mxu0 0.0
    %4595 = vmatprep.subr.mxu0 0.0
    %4596 = vmatpush1.msra.mxu0 0.0
    %4597 = vmatprep.subr.mxu0 0.0
    %4598 = vmatpush1.msra.mxu0 0.0
    %4599 = vmatprep.subr.mxu0 0.0
    %4600 = vmatpush1.msra.mxu0 0.0
    %4601 = vmatprep.subr.mxu0 0.0
    %4602 = vmatpush1.msra.mxu0 0.0
    %4603 = vmatprep.subr.mxu0 0.0
    %4604 = vmatpush1.msra.mxu0 0.0
    %4605 = vmatprep.subr.mxu0 0.0
    %4606 = vmatpush1.msra.mxu0 0.0
    %4607 = vmatprep.subr.mxu0 0.0
    %4608 = vmatpush1.msra.mxu0 0.0
    %4609 = vmatprep.subr.mxu0 0.0
    %4610 = vmatpush1.msra.mxu0 0.0
    %4611 = vmatprep.subr.mxu0 0.0
    %4612 = vmatpush1.msra.mxu0 0.0
    %4613 = vmatprep.subr.mxu0 0.0
    %4614 = vmatpush1.msra.mxu0 0.0
    %4615 = vmatprep.subr.mxu0 0.0
    %4616 = vmatpush1.msra.mxu0 0.0
    %4617 = vmatprep.subr.mxu0 0.0
    %4618 = vmatpush1.msra.mxu0 0.0
    %4619 = vmatprep.subr.mxu0 0.0
    %4620 = vmatpush1.msra.mxu0 0.0
    %4621 = vmatprep.subr.mxu0 0.0
    %4622 = vmatpush1.msra.mxu0 %v4589
    %4623 = vmatprep.subr.mxu0 0.0
    %4624 = vmatpush2.msra.mxu0 0.0
    %4625 = vmatprep.subr.mxu0 0.0
    %4626 = vmatpush2.msra.mxu0 0.0
    %4627 = vmatprep.subr.mxu0 0.0
    %4628 = vmatpush2.msra.mxu0 0.0
    %4629 = vmatprep.subr.mxu0 0.0
    %4630 = vmatpush2.msra.mxu0 0.0
    %4631 = vmatprep.subr.mxu0 0.0
    %4632 = vmatpush2.msra.mxu0 0.0
    %4633 = vmatprep.subr.mxu0 0.0
    %4634 = vmatpush2.msra.mxu0 0.0
    %4635 = vmatprep.subr.mxu0 0.0
    %4636 = vmatpush2.msra.mxu0 0.0
    %4637 = vmatprep.subr.mxu0 0.0
    %4638 = vmatpush2.msra.mxu0 0.0
    %4639 = vmatprep.subr.mxu0 0.0
    %4640 = vmatpush2.msra.mxu0 0.0
    %4641 = vmatprep.subr.mxu0 0.0
    %4642 = vmatpush2.msra.mxu0 0.0
    %4643 = vmatprep.subr.mxu0 0.0
    %4644 = vmatpush2.msra.mxu0 0.0
    %4645 = vmatprep.subr.mxu0 0.0
    %4646 = vmatpush2.msra.mxu0 0.0
    %4647 = vmatprep.subr.mxu0 0.0
    %4648 = vmatpush2.msra.mxu0 0.0
    %4649 = vmatprep.subr.mxu0 0.0
    %4650 = vmatpush2.msra.mxu0 0.0
    %4651 = vmatprep.subr.mxu0 0.0
    %4652 = vmatpush2.msra.mxu0 0.0
    %4653 = vmatprep.subr.mxu0 0.0
    %4654 = vmatpush2.msra.mxu0 0.0
    %4655 = vmatprep.mubr.f32.mxu0 0.0
    %4656 = vmatmul.mubr.f32.gmra.mxu0 %v3625
    %v4657 = vpop.f32.mrf.mxu0
    %v4658 = vadd.f32 0.0, %v4657
    %v4659 = vpop.f32.mrf.mxu0
    %4660 = vdwg.mxu0
    %4661 = vrot.lane.b32.xlu0 %v52, 125
    %v4662 = vpop.permute.xlu0 %4661
    %v4663 = vsel %vm66, %v4662, 0
    %4665 = vmatprep.subr.mxu0 0.0
    %4666 = vmatpush1.msra.mxu0 0.0
    %4667 = vmatprep.subr.mxu0 0.0
    %4668 = vmatpush1.msra.mxu0 0.0
    %4669 = vmatprep.subr.mxu0 0.0
    %4670 = vmatpush1.msra.mxu0 0.0
    %4671 = vmatprep.subr.mxu0 0.0
    %4672 = vmatpush1.msra.mxu0 0.0
    %4673 = vmatprep.subr.mxu0 0.0
    %4674 = vmatpush1.msra.mxu0 0.0
    %4675 = vmatprep.subr.mxu0 0.0
    %4676 = vmatpush1.msra.mxu0 0.0
    %4677 = vmatprep.subr.mxu0 0.0
    %4678 = vmatpush1.msra.mxu0 0.0
    %4679 = vmatprep.subr.mxu0 0.0
    %4680 = vmatpush1.msra.mxu0 0.0
    %4681 = vmatprep.subr.mxu0 0.0
    %4682 = vmatpush1.msra.mxu0 0.0
    %4683 = vmatprep.subr.mxu0 0.0
    %4684 = vmatpush1.msra.mxu0 0.0
    %4685 = vmatprep.subr.mxu0 0.0
    %4686 = vmatpush1.msra.mxu0 0.0
    %4687 = vmatprep.subr.mxu0 0.0
    %4688 = vmatpush1.msra.mxu0 0.0
    %4689 = vmatprep.subr.mxu0 0.0
    %4690 = vmatpush1.msra.mxu0 0.0
    %4691 = vmatprep.subr.mxu0 0.0
    %4692 = vmatpush1.msra.mxu0 0.0
    %4693 = vmatprep.subr.mxu0 0.0
    %4694 = vmatpush1.msra.mxu0 0.0
    %4695 = vmatprep.subr.mxu0 0.0
    %4696 = vmatpush1.msra.mxu0 %v4663
    %4697 = vmatprep.subr.mxu0 0.0
    %4698 = vmatpush2.msra.mxu0 0.0
    %4699 = vmatprep.subr.mxu0 0.0
    %4700 = vmatpush2.msra.mxu0 0.0
    %4701 = vmatprep.subr.mxu0 0.0
    %4702 = vmatpush2.msra.mxu0 0.0
    %4703 = vmatprep.subr.mxu0 0.0
    %4704 = vmatpush2.msra.mxu0 0.0
    %4705 = vmatprep.subr.mxu0 0.0
    %4706 = vmatpush2.msra.mxu0 0.0
    %4707 = vmatprep.subr.mxu0 0.0
    %4708 = vmatpush2.msra.mxu0 0.0
    %4709 = vmatprep.subr.mxu0 0.0
    %4710 = vmatpush2.msra.mxu0 0.0
    %4711 = vmatprep.subr.mxu0 0.0
    %4712 = vmatpush2.msra.mxu0 0.0
    %4713 = vmatprep.subr.mxu0 0.0
    %4714 = vmatpush2.msra.mxu0 0.0
    %4715 = vmatprep.subr.mxu0 0.0
    %4716 = vmatpush2.msra.mxu0 0.0
    %4717 = vmatprep.subr.mxu0 0.0
    %4718 = vmatpush2.msra.mxu0 0.0
    %4719 = vmatprep.subr.mxu0 0.0
    %4720 = vmatpush2.msra.mxu0 0.0
    %4721 = vmatprep.subr.mxu0 0.0
    %4722 = vmatpush2.msra.mxu0 0.0
    %4723 = vmatprep.subr.mxu0 0.0
    %4724 = vmatpush2.msra.mxu0 0.0
    %4725 = vmatprep.subr.mxu0 0.0
    %4726 = vmatpush2.msra.mxu0 0.0
    %4727 = vmatprep.subr.mxu0 0.0
    %4728 = vmatpush2.msra.mxu0 0.0
    %4729 = vmatprep.mubr.f32.mxu0 0.0
    %4730 = vmatmul.mubr.f32.gmra.mxu0 %v3625
    %v4731 = vpop.f32.mrf.mxu0
    %v4732 = vadd.f32 0.0, %v4731
    %v4733 = vpop.f32.mrf.mxu0
    %4734 = vdwg.mxu0
    %4735 = vrot.lane.b32.xlu0 %v53, 125
    %v4736 = vpop.permute.xlu0 %4735
    %v4737 = vsel %vm66, %v4736, 0
    %4739 = vmatprep.subr.mxu0 0.0
    %4740 = vmatpush1.msra.mxu0 0.0
    %4741 = vmatprep.subr.mxu0 0.0
    %4742 = vmatpush1.msra.mxu0 0.0
    %4743 = vmatprep.subr.mxu0 0.0
    %4744 = vmatpush1.msra.mxu0 0.0
    %4745 = vmatprep.subr.mxu0 0.0
    %4746 = vmatpush1.msra.mxu0 0.0
    %4747 = vmatprep.subr.mxu0 0.0
    %4748 = vmatpush1.msra.mxu0 0.0
    %4749 = vmatprep.subr.mxu0 0.0
    %4750 = vmatpush1.msra.mxu0 0.0
    %4751 = vmatprep.subr.mxu0 0.0
    %4752 = vmatpush1.msra.mxu0 0.0
    %4753 = vmatprep.subr.mxu0 0.0
    %4754 = vmatpush1.msra.mxu0 0.0
    %4755 = vmatprep.subr.mxu0 0.0
    %4756 = vmatpush1.msra.mxu0 0.0
    %4757 = vmatprep.subr.mxu0 0.0
    %4758 = vmatpush1.msra.mxu0 0.0
    %4759 = vmatprep.subr.mxu0 0.0
    %4760 = vmatpush1.msra.mxu0 0.0
    %4761 = vmatprep.subr.mxu0 0.0
    %4762 = vmatpush1.msra.mxu0 0.0
    %4763 = vmatprep.subr.mxu0 0.0
    %4764 = vmatpush1.msra.mxu0 0.0
    %4765 = vmatprep.subr.mxu0 0.0
    %4766 = vmatpush1.msra.mxu0 0.0
    %4767 = vmatprep.subr.mxu0 0.0
    %4768 = vmatpush1.msra.mxu0 0.0
    %4769 = vmatprep.subr.mxu0 0.0
    %4770 = vmatpush1.msra.mxu0 %v4737
    %4771 = vmatprep.subr.mxu0 0.0
    %4772 = vmatpush2.msra.mxu0 0.0
    %4773 = vmatprep.subr.mxu0 0.0
    %4774 = vmatpush2.msra.mxu0 0.0
    %4775 = vmatprep.subr.mxu0 0.0
    %4776 = vmatpush2.msra.mxu0 0.0
    %4777 = vmatprep.subr.mxu0 0.0
    %4778 = vmatpush2.msra.mxu0 0.0
    %4779 = vmatprep.subr.mxu0 0.0
    %4780 = vmatpush2.msra.mxu0 0.0
    %4781 = vmatprep.subr.mxu0 0.0
    %4782 = vmatpush2.msra.mxu0 0.0
    %4783 = vmatprep.subr.mxu0 0.0
    %4784 = vmatpush2.msra.mxu0 0.0
    %4785 = vmatprep.subr.mxu0 0.0
    %4786 = vmatpush2.msra.mxu0 0.0
    %4787 = vmatprep.subr.mxu0 0.0
    %4788 = vmatpush2.msra.mxu0 0.0
    %4789 = vmatprep.subr.mxu0 0.0
    %4790 = vmatpush2.msra.mxu0 0.0
    %4791 = vmatprep.subr.mxu0 0.0
    %4792 = vmatpush2.msra.mxu0 0.0
    %4793 = vmatprep.subr.mxu0 0.0
    %4794 = vmatpush2.msra.mxu0 0.0
    %4795 = vmatprep.subr.mxu0 0.0
    %4796 = vmatpush2.msra.mxu0 0.0
    %4797 = vmatprep.subr.mxu0 0.0
    %4798 = vmatpush2.msra.mxu0 0.0
    %4799 = vmatprep.subr.mxu0 0.0
    %4800 = vmatpush2.msra.mxu0 0.0
    %4801 = vmatprep.subr.mxu0 0.0
    %4802 = vmatpush2.msra.mxu0 0.0
    %4803 = vmatprep.mubr.f32.mxu0 0.0
    %4804 = vmatmul.mubr.f32.gmra.mxu0 %v3625
    %v4805 = vpop.f32.mrf.mxu0
    %v4806 = vadd.f32 0.0, %v4805
    %v4807 = vpop.f32.mrf.mxu0
    %4808 = vdwg.mxu0
    %v4809 = vadd.f32 %v3606, %v3696
    %v4810 = vadd.f32 %v3607, %v3770
    %v4811 = vadd.f32 %v3608, %v3844
    %v4812 = vadd.f32 %v3609, %v3918
    %v4813 = vadd.f32 %v3610, %v3992
    %v4814 = vadd.f32 %v3611, %v4066
    %v4815 = vadd.f32 %v3612, %v4140
    %v4816 = vadd.f32 %v3613, %v4214
    %v4817 = vadd.f32 %v3614, %v4288
    %v4818 = vadd.f32 %v3615, %v4362
    %v4819 = vadd.f32 %v3616, %v4436
    %v4820 = vadd.f32 %v3617, %v4510
    %v4821 = vadd.f32 %v3618, %v4584
    %v4822 = vadd.f32 %v3619, %v4658
    %v4823 = vadd.f32 %v3620, %v4732
    %v4824 = vadd.f32 %v3621, %v4806
    %4825 = vrot.lane.b32.xlu0 %v38, 124
    %v4826 = vpop.permute.xlu0 %4825
    %v4828 = vsel %vm62, %v58, 0
    %v4830 = vsel %vm66, %v4826, 0
    %4832 = vmatprep.subr.mxu0 0.0
    %4833 = vmatpush1.msra.mxu0 0.0
    %4834 = vmatprep.subr.mxu0 0.0
    %4835 = vmatpush1.msra.mxu0 0.0
    %4836 = vmatprep.subr.mxu0 0.0
    %4837 = vmatpush1.msra.mxu0 0.0
    %4838 = vmatprep.subr.mxu0 0.0
    %4839 = vmatpush1.msra.mxu0 0.0
    %4840 = vmatprep.subr.mxu0 0.0
    %4841 = vmatpush1.msra.mxu0 0.0
    %4842 = vmatprep.subr.mxu0 0.0
    %4843 = vmatpush1.msra.mxu0 0.0
    %4844 = vmatprep.subr.mxu0 0.0
    %4845 = vmatpush1.msra.mxu0 0.0
    %4846 = vmatprep.subr.mxu0 0.0
    %4847 = vmatpush1.msra.mxu0 0.0
    %4848 = vmatprep.subr.mxu0 0.0
    %4849 = vmatpush1.msra.mxu0 0.0
    %4850 = vmatprep.subr.mxu0 0.0
    %4851 = vmatpush1.msra.mxu0 0.0
    %4852 = vmatprep.subr.mxu0 0.0
    %4853 = vmatpush1.msra.mxu0 0.0
    %4854 = vmatprep.subr.mxu0 0.0
    %4855 = vmatpush1.msra.mxu0 0.0
    %4856 = vmatprep.subr.mxu0 0.0
    %4857 = vmatpush1.msra.mxu0 0.0
    %4858 = vmatprep.subr.mxu0 0.0
    %4859 = vmatpush1.msra.mxu0 0.0
    %4860 = vmatprep.subr.mxu0 0.0
    %4861 = vmatpush1.msra.mxu0 0.0
    %4862 = vmatprep.subr.mxu0 0.0
    %4863 = vmatpush1.msra.mxu0 %v4830
    %4864 = vmatprep.subr.mxu0 0.0
    %4865 = vmatpush2.msra.mxu0 0.0
    %4866 = vmatprep.subr.mxu0 0.0
    %4867 = vmatpush2.msra.mxu0 0.0
    %4868 = vmatprep.subr.mxu0 0.0
    %4869 = vmatpush2.msra.mxu0 0.0
    %4870 = vmatprep.subr.mxu0 0.0
    %4871 = vmatpush2.msra.mxu0 0.0
    %4872 = vmatprep.subr.mxu0 0.0
    %4873 = vmatpush2.msra.mxu0 0.0
    %4874 = vmatprep.subr.mxu0 0.0
    %4875 = vmatpush2.msra.mxu0 0.0
    %4876 = vmatprep.subr.mxu0 0.0
    %4877 = vmatpush2.msra.mxu0 0.0
    %4878 = vmatprep.subr.mxu0 0.0
    %4879 = vmatpush2.msra.mxu0 0.0
    %4880 = vmatprep.subr.mxu0 0.0
    %4881 = vmatpush2.msra.mxu0 0.0
    %4882 = vmatprep.subr.mxu0 0.0
    %4883 = vmatpush2.msra.mxu0 0.0
    %4884 = vmatprep.subr.mxu0 0.0
    %4885 = vmatpush2.msra.mxu0 0.0
    %4886 = vmatprep.subr.mxu0 0.0
    %4887 = vmatpush2.msra.mxu0 0.0
    %4888 = vmatprep.subr.mxu0 0.0
    %4889 = vmatpush2.msra.mxu0 0.0
    %4890 = vmatprep.subr.mxu0 0.0
    %4891 = vmatpush2.msra.mxu0 0.0
    %4892 = vmatprep.subr.mxu0 0.0
    %4893 = vmatpush2.msra.mxu0 0.0
    %4894 = vmatprep.subr.mxu0 0.0
    %4895 = vmatpush2.msra.mxu0 0.0
    %4896 = vmatprep.mubr.f32.mxu0 0.0
    %4897 = vmatmul.mubr.f32.gmra.mxu0 %v4828
    %v4898 = vpop.f32.mrf.mxu0
    %v4899 = vadd.f32 0.0, %v4898
    %v4900 = vpop.f32.mrf.mxu0
    %4901 = vdwg.mxu0
    %4902 = vrot.lane.b32.xlu0 %v39, 124
    %v4903 = vpop.permute.xlu0 %4902
    %v4904 = vsel %vm66, %v4903, 0
    %4906 = vmatprep.subr.mxu0 0.0
    %4907 = vmatpush1.msra.mxu0 0.0
    %4908 = vmatprep.subr.mxu0 0.0
    %4909 = vmatpush1.msra.mxu0 0.0
    %4910 = vmatprep.subr.mxu0 0.0
    %4911 = vmatpush1.msra.mxu0 0.0
    %4912 = vmatprep.subr.mxu0 0.0
    %4913 = vmatpush1.msra.mxu0 0.0
    %4914 = vmatprep.subr.mxu0 0.0
    %4915 = vmatpush1.msra.mxu0 0.0
    %4916 = vmatprep.subr.mxu0 0.0
    %4917 = vmatpush1.msra.mxu0 0.0
    %4918 = vmatprep.subr.mxu0 0.0
    %4919 = vmatpush1.msra.mxu0 0.0
    %4920 = vmatprep.subr.mxu0 0.0
    %4921 = vmatpush1.msra.mxu0 0.0
    %4922 = vmatprep.subr.mxu0 0.0
    %4923 = vmatpush1.msra.mxu0 0.0
    %4924 = vmatprep.subr.mxu0 0.0
    %4925 = vmatpush1.msra.mxu0 0.0
    %4926 = vmatprep.subr.mxu0 0.0
    %4927 = vmatpush1.msra.mxu0 0.0
    %4928 = vmatprep.subr.mxu0 0.0
    %4929 = vmatpush1.msra.mxu0 0.0
    %4930 = vmatprep.subr.mxu0 0.0
    %4931 = vmatpush1.msra.mxu0 0.0
    %4932 = vmatprep.subr.mxu0 0.0
    %4933 = vmatpush1.msra.mxu0 0.0
    %4934 = vmatprep.subr.mxu0 0.0
    %4935 = vmatpush1.msra.mxu0 0.0
    %4936 = vmatprep.subr.mxu0 0.0
    %4937 = vmatpush1.msra.mxu0 %v4904
    %4938 = vmatprep.subr.mxu0 0.0
    %4939 = vmatpush2.msra.mxu0 0.0
    %4940 = vmatprep.subr.mxu0 0.0
    %4941 = vmatpush2.msra.mxu0 0.0
    %4942 = vmatprep.subr.mxu0 0.0
    %4943 = vmatpush2.msra.mxu0 0.0
    %4944 = vmatprep.subr.mxu0 0.0
    %4945 = vmatpush2.msra.mxu0 0.0
    %4946 = vmatprep.subr.mxu0 0.0
    %4947 = vmatpush2.msra.mxu0 0.0
    %4948 = vmatprep.subr.mxu0 0.0
    %4949 = vmatpush2.msra.mxu0 0.0
    %4950 = vmatprep.subr.mxu0 0.0
    %4951 = vmatpush2.msra.mxu0 0.0
    %4952 = vmatprep.subr.mxu0 0.0
    %4953 = vmatpush2.msra.mxu0 0.0
    %4954 = vmatprep.subr.mxu0 0.0
    %4955 = vmatpush2.msra.mxu0 0.0
    %4956 = vmatprep.subr.mxu0 0.0
    %4957 = vmatpush2.msra.mxu0 0.0
    %4958 = vmatprep.subr.mxu0 0.0
    %4959 = vmatpush2.msra.mxu0 0.0
    %4960 = vmatprep.subr.mxu0 0.0
    %4961 = vmatpush2.msra.mxu0 0.0
    %4962 = vmatprep.subr.mxu0 0.0
    %4963 = vmatpush2.msra.mxu0 0.0
    %4964 = vmatprep.subr.mxu0 0.0
    %4965 = vmatpush2.msra.mxu0 0.0
    %4966 = vmatprep.subr.mxu0 0.0
    %4967 = vmatpush2.msra.mxu0 0.0
    %4968 = vmatprep.subr.mxu0 0.0
    %4969 = vmatpush2.msra.mxu0 0.0
    %4970 = vmatprep.mubr.f32.mxu0 0.0
    %4971 = vmatmul.mubr.f32.gmra.mxu0 %v4828
    %v4972 = vpop.f32.mrf.mxu0
    %v4973 = vadd.f32 0.0, %v4972
    %v4974 = vpop.f32.mrf.mxu0
    %4975 = vdwg.mxu0
    %4976 = vrot.lane.b32.xlu0 %v40, 124
    %v4977 = vpop.permute.xlu0 %4976
    %v4978 = vsel %vm66, %v4977, 0
    %4980 = vmatprep.subr.mxu0 0.0
    %4981 = vmatpush1.msra.mxu0 0.0
    %4982 = vmatprep.subr.mxu0 0.0
    %4983 = vmatpush1.msra.mxu0 0.0
    %4984 = vmatprep.subr.mxu0 0.0
    %4985 = vmatpush1.msra.mxu0 0.0
    %4986 = vmatprep.subr.mxu0 0.0
    %4987 = vmatpush1.msra.mxu0 0.0
    %4988 = vmatprep.subr.mxu0 0.0
    %4989 = vmatpush1.msra.mxu0 0.0
    %4990 = vmatprep.subr.mxu0 0.0
    %4991 = vmatpush1.msra.mxu0 0.0
    %4992 = vmatprep.subr.mxu0 0.0
    %4993 = vmatpush1.msra.mxu0 0.0
    %4994 = vmatprep.subr.mxu0 0.0
    %4995 = vmatpush1.msra.mxu0 0.0
    %4996 = vmatprep.subr.mxu0 0.0
    %4997 = vmatpush1.msra.mxu0 0.0
    %4998 = vmatprep.subr.mxu0 0.0
    %4999 = vmatpush1.msra.mxu0 0.0
    %5000 = vmatprep.subr.mxu0 0.0
    %5001 = vmatpush1.msra.mxu0 0.0
    %5002 = vmatprep.subr.mxu0 0.0
    %5003 = vmatpush1.msra.mxu0 0.0
    %5004 = vmatprep.subr.mxu0 0.0
    %5005 = vmatpush1.msra.mxu0 0.0
    %5006 = vmatprep.subr.mxu0 0.0
    %5007 = vmatpush1.msra.mxu0 0.0
    %5008 = vmatprep.subr.mxu0 0.0
    %5009 = vmatpush1.msra.mxu0 0.0
    %5010 = vmatprep.subr.mxu0 0.0
    %5011 = vmatpush1.msra.mxu0 %v4978
    %5012 = vmatprep.subr.mxu0 0.0
    %5013 = vmatpush2.msra.mxu0 0.0
    %5014 = vmatprep.subr.mxu0 0.0
    %5015 = vmatpush2.msra.mxu0 0.0
    %5016 = vmatprep.subr.mxu0 0.0
    %5017 = vmatpush2.msra.mxu0 0.0
    %5018 = vmatprep.subr.mxu0 0.0
    %5019 = vmatpush2.msra.mxu0 0.0
    %5020 = vmatprep.subr.mxu0 0.0
    %5021 = vmatpush2.msra.mxu0 0.0
    %5022 = vmatprep.subr.mxu0 0.0
    %5023 = vmatpush2.msra.mxu0 0.0
    %5024 = vmatprep.subr.mxu0 0.0
    %5025 = vmatpush2.msra.mxu0 0.0
    %5026 = vmatprep.subr.mxu0 0.0
    %5027 = vmatpush2.msra.mxu0 0.0
    %5028 = vmatprep.subr.mxu0 0.0
    %5029 = vmatpush2.msra.mxu0 0.0
    %5030 = vmatprep.subr.mxu0 0.0
    %5031 = vmatpush2.msra.mxu0 0.0
    %5032 = vmatprep.subr.mxu0 0.0
    %5033 = vmatpush2.msra.mxu0 0.0
    %5034 = vmatprep.subr.mxu0 0.0
    %5035 = vmatpush2.msra.mxu0 0.0
    %5036 = vmatprep.subr.mxu0 0.0
    %5037 = vmatpush2.msra.mxu0 0.0
    %5038 = vmatprep.subr.mxu0 0.0
    %5039 = vmatpush2.msra.mxu0 0.0
    %5040 = vmatprep.subr.mxu0 0.0
    %5041 = vmatpush2.msra.mxu0 0.0
    %5042 = vmatprep.subr.mxu0 0.0
    %5043 = vmatpush2.msra.mxu0 0.0
    %5044 = vmatprep.mubr.f32.mxu0 0.0
    %5045 = vmatmul.mubr.f32.gmra.mxu0 %v4828
    %v5046 = vpop.f32.mrf.mxu0
    %v5047 = vadd.f32 0.0, %v5046
    %v5048 = vpop.f32.mrf.mxu0
    %5049 = vdwg.mxu0
    %5050 = vrot.lane.b32.xlu0 %v41, 124
    %v5051 = vpop.permute.xlu0 %5050
    %v5052 = vsel %vm66, %v5051, 0
    %5054 = vmatprep.subr.mxu0 0.0
    %5055 = vmatpush1.msra.mxu0 0.0
    %5056 = vmatprep.subr.mxu0 0.0
    %5057 = vmatpush1.msra.mxu0 0.0
    %5058 = vmatprep.subr.mxu0 0.0
    %5059 = vmatpush1.msra.mxu0 0.0
    %5060 = vmatprep.subr.mxu0 0.0
    %5061 = vmatpush1.msra.mxu0 0.0
    %5062 = vmatprep.subr.mxu0 0.0
    %5063 = vmatpush1.msra.mxu0 0.0
    %5064 = vmatprep.subr.mxu0 0.0
    %5065 = vmatpush1.msra.mxu0 0.0
    %5066 = vmatprep.subr.mxu0 0.0
    %5067 = vmatpush1.msra.mxu0 0.0
    %5068 = vmatprep.subr.mxu0 0.0
    %5069 = vmatpush1.msra.mxu0 0.0
    %5070 = vmatprep.subr.mxu0 0.0
    %5071 = vmatpush1.msra.mxu0 0.0
    %5072 = vmatprep.subr.mxu0 0.0
    %5073 = vmatpush1.msra.mxu0 0.0
    %5074 = vmatprep.subr.mxu0 0.0
    %5075 = vmatpush1.msra.mxu0 0.0
    %5076 = vmatprep.subr.mxu0 0.0
    %5077 = vmatpush1.msra.mxu0 0.0
    %5078 = vmatprep.subr.mxu0 0.0
    %5079 = vmatpush1.msra.mxu0 0.0
    %5080 = vmatprep.subr.mxu0 0.0
    %5081 = vmatpush1.msra.mxu0 0.0
    %5082 = vmatprep.subr.mxu0 0.0
    %5083 = vmatpush1.msra.mxu0 0.0
    %5084 = vmatprep.subr.mxu0 0.0
    %5085 = vmatpush1.msra.mxu0 %v5052
    %5086 = vmatprep.subr.mxu0 0.0
    %5087 = vmatpush2.msra.mxu0 0.0
    %5088 = vmatprep.subr.mxu0 0.0
    %5089 = vmatpush2.msra.mxu0 0.0
    %5090 = vmatprep.subr.mxu0 0.0
    %5091 = vmatpush2.msra.mxu0 0.0
    %5092 = vmatprep.subr.mxu0 0.0
    %5093 = vmatpush2.msra.mxu0 0.0
    %5094 = vmatprep.subr.mxu0 0.0
    %5095 = vmatpush2.msra.mxu0 0.0
    %5096 = vmatprep.subr.mxu0 0.0
    %5097 = vmatpush2.msra.mxu0 0.0
    %5098 = vmatprep.subr.mxu0 0.0
    %5099 = vmatpush2.msra.mxu0 0.0
    %5100 = vmatprep.subr.mxu0 0.0
    %5101 = vmatpush2.msra.mxu0 0.0
    %5102 = vmatprep.subr.mxu0 0.0
    %5103 = vmatpush2.msra.mxu0 0.0
    %5104 = vmatprep.subr.mxu0 0.0
    %5105 = vmatpush2.msra.mxu0 0.0
    %5106 = vmatprep.subr.mxu0 0.0
    %5107 = vmatpush2.msra.mxu0 0.0
    %5108 = vmatprep.subr.mxu0 0.0
    %5109 = vmatpush2.msra.mxu0 0.0
    %5110 = vmatprep.subr.mxu0 0.0
    %5111 = vmatpush2.msra.mxu0 0.0
    %5112 = vmatprep.subr.mxu0 0.0
    %5113 = vmatpush2.msra.mxu0 0.0
    %5114 = vmatprep.subr.mxu0 0.0
    %5115 = vmatpush2.msra.mxu0 0.0
    %5116 = vmatprep.subr.mxu0 0.0
    %5117 = vmatpush2.msra.mxu0 0.0
    %5118 = vmatprep.mubr.f32.mxu0 0.0
    %5119 = vmatmul.mubr.f32.gmra.mxu0 %v4828
    %v5120 = vpop.f32.mrf.mxu0
    %v5121 = vadd.f32 0.0, %v5120
    %v5122 = vpop.f32.mrf.mxu0
    %5123 = vdwg.mxu0
    %5124 = vrot.lane.b32.xlu0 %v42, 124
    %v5125 = vpop.permute.xlu0 %5124
    %v5126 = vsel %vm66, %v5125, 0
    %5128 = vmatprep.subr.mxu0 0.0
    %5129 = vmatpush1.msra.mxu0 0.0
    %5130 = vmatprep.subr.mxu0 0.0
    %5131 = vmatpush1.msra.mxu0 0.0
    %5132 = vmatprep.subr.mxu0 0.0
    %5133 = vmatpush1.msra.mxu0 0.0
    %5134 = vmatprep.subr.mxu0 0.0
    %5135 = vmatpush1.msra.mxu0 0.0
    %5136 = vmatprep.subr.mxu0 0.0
    %5137 = vmatpush1.msra.mxu0 0.0
    %5138 = vmatprep.subr.mxu0 0.0
    %5139 = vmatpush1.msra.mxu0 0.0
    %5140 = vmatprep.subr.mxu0 0.0
    %5141 = vmatpush1.msra.mxu0 0.0
    %5142 = vmatprep.subr.mxu0 0.0
    %5143 = vmatpush1.msra.mxu0 0.0
    %5144 = vmatprep.subr.mxu0 0.0
    %5145 = vmatpush1.msra.mxu0 0.0
    %5146 = vmatprep.subr.mxu0 0.0
    %5147 = vmatpush1.msra.mxu0 0.0
    %5148 = vmatprep.subr.mxu0 0.0
    %5149 = vmatpush1.msra.mxu0 0.0
    %5150 = vmatprep.subr.mxu0 0.0
    %5151 = vmatpush1.msra.mxu0 0.0
    %5152 = vmatprep.subr.mxu0 0.0
    %5153 = vmatpush1.msra.mxu0 0.0
    %5154 = vmatprep.subr.mxu0 0.0
    %5155 = vmatpush1.msra.mxu0 0.0
    %5156 = vmatprep.subr.mxu0 0.0
    %5157 = vmatpush1.msra.mxu0 0.0
    %5158 = vmatprep.subr.mxu0 0.0
    %5159 = vmatpush1.msra.mxu0 %v5126
    %5160 = vmatprep.subr.mxu0 0.0
    %5161 = vmatpush2.msra.mxu0 0.0
    %5162 = vmatprep.subr.mxu0 0.0
    %5163 = vmatpush2.msra.mxu0 0.0
    %5164 = vmatprep.subr.mxu0 0.0
    %5165 = vmatpush2.msra.mxu0 0.0
    %5166 = vmatprep.subr.mxu0 0.0
    %5167 = vmatpush2.msra.mxu0 0.0
    %5168 = vmatprep.subr.mxu0 0.0
    %5169 = vmatpush2.msra.mxu0 0.0
    %5170 = vmatprep.subr.mxu0 0.0
    %5171 = vmatpush2.msra.mxu0 0.0
    %5172 = vmatprep.subr.mxu0 0.0
    %5173 = vmatpush2.msra.mxu0 0.0
    %5174 = vmatprep.subr.mxu0 0.0
    %5175 = vmatpush2.msra.mxu0 0.0
    %5176 = vmatprep.subr.mxu0 0.0
    %5177 = vmatpush2.msra.mxu0 0.0
    %5178 = vmatprep.subr.mxu0 0.0
    %5179 = vmatpush2.msra.mxu0 0.0
    %5180 = vmatprep.subr.mxu0 0.0
    %5181 = vmatpush2.msra.mxu0 0.0
    %5182 = vmatprep.subr.mxu0 0.0
    %5183 = vmatpush2.msra.mxu0 0.0
    %5184 = vmatprep.subr.mxu0 0.0
    %5185 = vmatpush2.msra.mxu0 0.0
    %5186 = vmatprep.subr.mxu0 0.0
    %5187 = vmatpush2.msra.mxu0 0.0
    %5188 = vmatprep.subr.mxu0 0.0
    %5189 = vmatpush2.msra.mxu0 0.0
    %5190 = vmatprep.subr.mxu0 0.0
    %5191 = vmatpush2.msra.mxu0 0.0
    %5192 = vmatprep.mubr.f32.mxu0 0.0
    %5193 = vmatmul.mubr.f32.gmra.mxu0 %v4828
    %v5194 = vpop.f32.mrf.mxu0
    %v5195 = vadd.f32 0.0, %v5194
    %v5196 = vpop.f32.mrf.mxu0
    %5197 = vdwg.mxu0
    %5198 = vrot.lane.b32.xlu0 %v43, 124
    %v5199 = vpop.permute.xlu0 %5198
    %v5200 = vsel %vm66, %v5199, 0
    %5202 = vmatprep.subr.mxu0 0.0
    %5203 = vmatpush1.msra.mxu0 0.0
    %5204 = vmatprep.subr.mxu0 0.0
    %5205 = vmatpush1.msra.mxu0 0.0
    %5206 = vmatprep.subr.mxu0 0.0
    %5207 = vmatpush1.msra.mxu0 0.0
    %5208 = vmatprep.subr.mxu0 0.0
    %5209 = vmatpush1.msra.mxu0 0.0
    %5210 = vmatprep.subr.mxu0 0.0
    %5211 = vmatpush1.msra.mxu0 0.0
    %5212 = vmatprep.subr.mxu0 0.0
    %5213 = vmatpush1.msra.mxu0 0.0
    %5214 = vmatprep.subr.mxu0 0.0
    %5215 = vmatpush1.msra.mxu0 0.0
    %5216 = vmatprep.subr.mxu0 0.0
    %5217 = vmatpush1.msra.mxu0 0.0
    %5218 = vmatprep.subr.mxu0 0.0
    %5219 = vmatpush1.msra.mxu0 0.0
    %5220 = vmatprep.subr.mxu0 0.0
    %5221 = vmatpush1.msra.mxu0 0.0
    %5222 = vmatprep.subr.mxu0 0.0
    %5223 = vmatpush1.msra.mxu0 0.0
    %5224 = vmatprep.subr.mxu0 0.0
    %5225 = vmatpush1.msra.mxu0 0.0
    %5226 = vmatprep.subr.mxu0 0.0
    %5227 = vmatpush1.msra.mxu0 0.0
    %5228 = vmatprep.subr.mxu0 0.0
    %5229 = vmatpush1.msra.mxu0 0.0
    %5230 = vmatprep.subr.mxu0 0.0
    %5231 = vmatpush1.msra.mxu0 0.0
    %5232 = vmatprep.subr.mxu0 0.0
    %5233 = vmatpush1.msra.mxu0 %v5200
    %5234 = vmatprep.subr.mxu0 0.0
    %5235 = vmatpush2.msra.mxu0 0.0
    %5236 = vmatprep.subr.mxu0 0.0
    %5237 = vmatpush2.msra.mxu0 0.0
    %5238 = vmatprep.subr.mxu0 0.0
    %5239 = vmatpush2.msra.mxu0 0.0
    %5240 = vmatprep.subr.mxu0 0.0
    %5241 = vmatpush2.msra.mxu0 0.0
    %5242 = vmatprep.subr.mxu0 0.0
    %5243 = vmatpush2.msra.mxu0 0.0
    %5244 = vmatprep.subr.mxu0 0.0
    %5245 = vmatpush2.msra.mxu0 0.0
    %5246 = vmatprep.subr.mxu0 0.0
    %5247 = vmatpush2.msra.mxu0 0.0
    %5248 = vmatprep.subr.mxu0 0.0
    %5249 = vmatpush2.msra.mxu0 0.0
    %5250 = vmatprep.subr.mxu0 0.0
    %5251 = vmatpush2.msra.mxu0 0.0
    %5252 = vmatprep.subr.mxu0 0.0
    %5253 = vmatpush2.msra.mxu0 0.0
    %5254 = vmatprep.subr.mxu0 0.0
    %5255 = vmatpush2.msra.mxu0 0.0
    %5256 = vmatprep.subr.mxu0 0.0
    %5257 = vmatpush2.msra.mxu0 0.0
    %5258 = vmatprep.subr.mxu0 0.0
    %5259 = vmatpush2.msra.mxu0 0.0
    %5260 = vmatprep.subr.mxu0 0.0
    %5261 = vmatpush2.msra.mxu0 0.0
    %5262 = vmatprep.subr.mxu0 0.0
    %5263 = vmatpush2.msra.mxu0 0.0
    %5264 = vmatprep.subr.mxu0 0.0
    %5265 = vmatpush2.msra.mxu0 0.0
    %5266 = vmatprep.mubr.f32.mxu0 0.0
    %5267 = vmatmul.mubr.f32.gmra.mxu0 %v4828
    %v5268 = vpop.f32.mrf.mxu0
    %v5269 = vadd.f32 0.0, %v5268
    %v5270 = vpop.f32.mrf.mxu0
    %5271 = vdwg.mxu0
    %5272 = vrot.lane.b32.xlu0 %v44, 124
    %v5273 = vpop.permute.xlu0 %5272
    %v5274 = vsel %vm66, %v5273, 0
    %5276 = vmatprep.subr.mxu0 0.0
    %5277 = vmatpush1.msra.mxu0 0.0
    %5278 = vmatprep.subr.mxu0 0.0
    %5279 = vmatpush1.msra.mxu0 0.0
    %5280 = vmatprep.subr.mxu0 0.0
    %5281 = vmatpush1.msra.mxu0 0.0
    %5282 = vmatprep.subr.mxu0 0.0
    %5283 = vmatpush1.msra.mxu0 0.0
    %5284 = vmatprep.subr.mxu0 0.0
    %5285 = vmatpush1.msra.mxu0 0.0
    %5286 = vmatprep.subr.mxu0 0.0
    %5287 = vmatpush1.msra.mxu0 0.0
    %5288 = vmatprep.subr.mxu0 0.0
    %5289 = vmatpush1.msra.mxu0 0.0
    %5290 = vmatprep.subr.mxu0 0.0
    %5291 = vmatpush1.msra.mxu0 0.0
    %5292 = vmatprep.subr.mxu0 0.0
    %5293 = vmatpush1.msra.mxu0 0.0
    %5294 = vmatprep.subr.mxu0 0.0
    %5295 = vmatpush1.msra.mxu0 0.0
    %5296 = vmatprep.subr.mxu0 0.0
    %5297 = vmatpush1.msra.mxu0 0.0
    %5298 = vmatprep.subr.mxu0 0.0
    %5299 = vmatpush1.msra.mxu0 0.0
    %5300 = vmatprep.subr.mxu0 0.0
    %5301 = vmatpush1.msra.mxu0 0.0
    %5302 = vmatprep.subr.mxu0 0.0
    %5303 = vmatpush1.msra.mxu0 0.0
    %5304 = vmatprep.subr.mxu0 0.0
    %5305 = vmatpush1.msra.mxu0 0.0
    %5306 = vmatprep.subr.mxu0 0.0
    %5307 = vmatpush1.msra.mxu0 %v5274
    %5308 = vmatprep.subr.mxu0 0.0
    %5309 = vmatpush2.msra.mxu0 0.0
    %5310 = vmatprep.subr.mxu0 0.0
    %5311 = vmatpush2.msra.mxu0 0.0
    %5312 = vmatprep.subr.mxu0 0.0
    %5313 = vmatpush2.msra.mxu0 0.0
    %5314 = vmatprep.subr.mxu0 0.0
    %5315 = vmatpush2.msra.mxu0 0.0
    %5316 = vmatprep.subr.mxu0 0.0
    %5317 = vmatpush2.msra.mxu0 0.0
    %5318 = vmatprep.subr.mxu0 0.0
    %5319 = vmatpush2.msra.mxu0 0.0
    %5320 = vmatprep.subr.mxu0 0.0
    %5321 = vmatpush2.msra.mxu0 0.0
    %5322 = vmatprep.subr.mxu0 0.0
    %5323 = vmatpush2.msra.mxu0 0.0
    %5324 = vmatprep.subr.mxu0 0.0
    %5325 = vmatpush2.msra.mxu0 0.0
    %5326 = vmatprep.subr.mxu0 0.0
    %5327 = vmatpush2.msra.mxu0 0.0
    %5328 = vmatprep.subr.mxu0 0.0
    %5329 = vmatpush2.msra.mxu0 0.0
    %5330 = vmatprep.subr.mxu0 0.0
    %5331 = vmatpush2.msra.mxu0 0.0
    %5332 = vmatprep.subr.mxu0 0.0
    %5333 = vmatpush2.msra.mxu0 0.0
    %5334 = vmatprep.subr.mxu0 0.0
    %5335 = vmatpush2.msra.mxu0 0.0
    %5336 = vmatprep.subr.mxu0 0.0
    %5337 = vmatpush2.msra.mxu0 0.0
    %5338 = vmatprep.subr.mxu0 0.0
    %5339 = vmatpush2.msra.mxu0 0.0
    %5340 = vmatprep.mubr.f32.mxu0 0.0
    %5341 = vmatmul.mubr.f32.gmra.mxu0 %v4828
    %v5342 = vpop.f32.mrf.mxu0
    %v5343 = vadd.f32 0.0, %v5342
    %v5344 = vpop.f32.mrf.mxu0
    %5345 = vdwg.mxu0
    %5346 = vrot.lane.b32.xlu0 %v45, 124
    %v5347 = vpop.permute.xlu0 %5346
    %v5348 = vsel %vm66, %v5347, 0
    %5350 = vmatprep.subr.mxu0 0.0
    %5351 = vmatpush1.msra.mxu0 0.0
    %5352 = vmatprep.subr.mxu0 0.0
    %5353 = vmatpush1.msra.mxu0 0.0
    %5354 = vmatprep.subr.mxu0 0.0
    %5355 = vmatpush1.msra.mxu0 0.0
    %5356 = vmatprep.subr.mxu0 0.0
    %5357 = vmatpush1.msra.mxu0 0.0
    %5358 = vmatprep.subr.mxu0 0.0
    %5359 = vmatpush1.msra.mxu0 0.0
    %5360 = vmatprep.subr.mxu0 0.0
    %5361 = vmatpush1.msra.mxu0 0.0
    %5362 = vmatprep.subr.mxu0 0.0
    %5363 = vmatpush1.msra.mxu0 0.0
    %5364 = vmatprep.subr.mxu0 0.0
    %5365 = vmatpush1.msra.mxu0 0.0
    %5366 = vmatprep.subr.mxu0 0.0
    %5367 = vmatpush1.msra.mxu0 0.0
    %5368 = vmatprep.subr.mxu0 0.0
    %5369 = vmatpush1.msra.mxu0 0.0
    %5370 = vmatprep.subr.mxu0 0.0
    %5371 = vmatpush1.msra.mxu0 0.0
    %5372 = vmatprep.subr.mxu0 0.0
    %5373 = vmatpush1.msra.mxu0 0.0
    %5374 = vmatprep.subr.mxu0 0.0
    %5375 = vmatpush1.msra.mxu0 0.0
    %5376 = vmatprep.subr.mxu0 0.0
    %5377 = vmatpush1.msra.mxu0 0.0
    %5378 = vmatprep.subr.mxu0 0.0
    %5379 = vmatpush1.msra.mxu0 0.0
    %5380 = vmatprep.subr.mxu0 0.0
    %5381 = vmatpush1.msra.mxu0 %v5348
    %5382 = vmatprep.subr.mxu0 0.0
    %5383 = vmatpush2.msra.mxu0 0.0
    %5384 = vmatprep.subr.mxu0 0.0
    %5385 = vmatpush2.msra.mxu0 0.0
    %5386 = vmatprep.subr.mxu0 0.0
    %5387 = vmatpush2.msra.mxu0 0.0
    %5388 = vmatprep.subr.mxu0 0.0
    %5389 = vmatpush2.msra.mxu0 0.0
    %5390 = vmatprep.subr.mxu0 0.0
    %5391 = vmatpush2.msra.mxu0 0.0
    %5392 = vmatprep.subr.mxu0 0.0
    %5393 = vmatpush2.msra.mxu0 0.0
    %5394 = vmatprep.subr.mxu0 0.0
    %5395 = vmatpush2.msra.mxu0 0.0
    %5396 = vmatprep.subr.mxu0 0.0
    %5397 = vmatpush2.msra.mxu0 0.0
    %5398 = vmatprep.subr.mxu0 0.0
    %5399 = vmatpush2.msra.mxu0 0.0
    %5400 = vmatprep.subr.mxu0 0.0
    %5401 = vmatpush2.msra.mxu0 0.0
    %5402 = vmatprep.subr.mxu0 0.0
    %5403 = vmatpush2.msra.mxu0 0.0
    %5404 = vmatprep.subr.mxu0 0.0
    %5405 = vmatpush2.msra.mxu0 0.0
    %5406 = vmatprep.subr.mxu0 0.0
    %5407 = vmatpush2.msra.mxu0 0.0
    %5408 = vmatprep.subr.mxu0 0.0
    %5409 = vmatpush2.msra.mxu0 0.0
    %5410 = vmatprep.subr.mxu0 0.0
    %5411 = vmatpush2.msra.mxu0 0.0
    %5412 = vmatprep.subr.mxu0 0.0
    %5413 = vmatpush2.msra.mxu0 0.0
    %5414 = vmatprep.mubr.f32.mxu0 0.0
    %5415 = vmatmul.mubr.f32.gmra.mxu0 %v4828
    %v5416 = vpop.f32.mrf.mxu0
    %v5417 = vadd.f32 0.0, %v5416
    %v5418 = vpop.f32.mrf.mxu0
    %5419 = vdwg.mxu0
    %5420 = vrot.lane.b32.xlu0 %v46, 124
    %v5421 = vpop.permute.xlu0 %5420
    %v5422 = vsel %vm66, %v5421, 0
    %5424 = vmatprep.subr.mxu0 0.0
    %5425 = vmatpush1.msra.mxu0 0.0
    %5426 = vmatprep.subr.mxu0 0.0
    %5427 = vmatpush1.msra.mxu0 0.0
    %5428 = vmatprep.subr.mxu0 0.0
    %5429 = vmatpush1.msra.mxu0 0.0
    %5430 = vmatprep.subr.mxu0 0.0
    %5431 = vmatpush1.msra.mxu0 0.0
    %5432 = vmatprep.subr.mxu0 0.0
    %5433 = vmatpush1.msra.mxu0 0.0
    %5434 = vmatprep.subr.mxu0 0.0
    %5435 = vmatpush1.msra.mxu0 0.0
    %5436 = vmatprep.subr.mxu0 0.0
    %5437 = vmatpush1.msra.mxu0 0.0
    %5438 = vmatprep.subr.mxu0 0.0
    %5439 = vmatpush1.msra.mxu0 0.0
    %5440 = vmatprep.subr.mxu0 0.0
    %5441 = vmatpush1.msra.mxu0 0.0
    %5442 = vmatprep.subr.mxu0 0.0
    %5443 = vmatpush1.msra.mxu0 0.0
    %5444 = vmatprep.subr.mxu0 0.0
    %5445 = vmatpush1.msra.mxu0 0.0
    %5446 = vmatprep.subr.mxu0 0.0
    %5447 = vmatpush1.msra.mxu0 0.0
    %5448 = vmatprep.subr.mxu0 0.0
    %5449 = vmatpush1.msra.mxu0 0.0
    %5450 = vmatprep.subr.mxu0 0.0
    %5451 = vmatpush1.msra.mxu0 0.0
    %5452 = vmatprep.subr.mxu0 0.0
    %5453 = vmatpush1.msra.mxu0 0.0
    %5454 = vmatprep.subr.mxu0 0.0
    %5455 = vmatpush1.msra.mxu0 %v5422
    %5456 = vmatprep.subr.mxu0 0.0
    %5457 = vmatpush2.msra.mxu0 0.0
    %5458 = vmatprep.subr.mxu0 0.0
    %5459 = vmatpush2.msra.mxu0 0.0
    %5460 = vmatprep.subr.mxu0 0.0
    %5461 = vmatpush2.msra.mxu0 0.0
    %5462 = vmatprep.subr.mxu0 0.0
    %5463 = vmatpush2.msra.mxu0 0.0
    %5464 = vmatprep.subr.mxu0 0.0
    %5465 = vmatpush2.msra.mxu0 0.0
    %5466 = vmatprep.subr.mxu0 0.0
    %5467 = vmatpush2.msra.mxu0 0.0
    %5468 = vmatprep.subr.mxu0 0.0
    %5469 = vmatpush2.msra.mxu0 0.0
    %5470 = vmatprep.subr.mxu0 0.0
    %5471 = vmatpush2.msra.mxu0 0.0
    %5472 = vmatprep.subr.mxu0 0.0
    %5473 = vmatpush2.msra.mxu0 0.0
    %5474 = vmatprep.subr.mxu0 0.0
    %5475 = vmatpush2.msra.mxu0 0.0
    %5476 = vmatprep.subr.mxu0 0.0
    %5477 = vmatpush2.msra.mxu0 0.0
    %5478 = vmatprep.subr.mxu0 0.0
    %5479 = vmatpush2.msra.mxu0 0.0
    %5480 = vmatprep.subr.mxu0 0.0
    %5481 = vmatpush2.msra.mxu0 0.0
    %5482 = vmatprep.subr.mxu0 0.0
    %5483 = vmatpush2.msra.mxu0 0.0
    %5484 = vmatprep.subr.mxu0 0.0
    %5485 = vmatpush2.msra.mxu0 0.0
    %5486 = vmatprep.subr.mxu0 0.0
    %5487 = vmatpush2.msra.mxu0 0.0
    %5488 = vmatprep.mubr.f32.mxu0 0.0
    %5489 = vmatmul.mubr.f32.gmra.mxu0 %v4828
    %v5490 = vpop.f32.mrf.mxu0
    %v5491 = vadd.f32 0.0, %v5490
    %v5492 = vpop.f32.mrf.mxu0
    %5493 = vdwg.mxu0
    %5494 = vrot.lane.b32.xlu0 %v47, 124
    %v5495 = vpop.permute.xlu0 %5494
    %v5496 = vsel %vm66, %v5495, 0
    %5498 = vmatprep.subr.mxu0 0.0
    %5499 = vmatpush1.msra.mxu0 0.0
    %5500 = vmatprep.subr.mxu0 0.0
    %5501 = vmatpush1.msra.mxu0 0.0
    %5502 = vmatprep.subr.mxu0 0.0
    %5503 = vmatpush1.msra.mxu0 0.0
    %5504 = vmatprep.subr.mxu0 0.0
    %5505 = vmatpush1.msra.mxu0 0.0
    %5506 = vmatprep.subr.mxu0 0.0
    %5507 = vmatpush1.msra.mxu0 0.0
    %5508 = vmatprep.subr.mxu0 0.0
    %5509 = vmatpush1.msra.mxu0 0.0
    %5510 = vmatprep.subr.mxu0 0.0
    %5511 = vmatpush1.msra.mxu0 0.0
    %5512 = vmatprep.subr.mxu0 0.0
    %5513 = vmatpush1.msra.mxu0 0.0
    %5514 = vmatprep.subr.mxu0 0.0
    %5515 = vmatpush1.msra.mxu0 0.0
    %5516 = vmatprep.subr.mxu0 0.0
    %5517 = vmatpush1.msra.mxu0 0.0
    %5518 = vmatprep.subr.mxu0 0.0
    %5519 = vmatpush1.msra.mxu0 0.0
    %5520 = vmatprep.subr.mxu0 0.0
    %5521 = vmatpush1.msra.mxu0 0.0
    %5522 = vmatprep.subr.mxu0 0.0
    %5523 = vmatpush1.msra.mxu0 0.0
    %5524 = vmatprep.subr.mxu0 0.0
    %5525 = vmatpush1.msra.mxu0 0.0
    %5526 = vmatprep.subr.mxu0 0.0
    %5527 = vmatpush1.msra.mxu0 0.0
    %5528 = vmatprep.subr.mxu0 0.0
    %5529 = vmatpush1.msra.mxu0 %v5496
    %5530 = vmatprep.subr.mxu0 0.0
    %5531 = vmatpush2.msra.mxu0 0.0
    %5532 = vmatprep.subr.mxu0 0.0
    %5533 = vmatpush2.msra.mxu0 0.0
    %5534 = vmatprep.subr.mxu0 0.0
    %5535 = vmatpush2.msra.mxu0 0.0
    %5536 = vmatprep.subr.mxu0 0.0
    %5537 = vmatpush2.msra.mxu0 0.0
    %5538 = vmatprep.subr.mxu0 0.0
    %5539 = vmatpush2.msra.mxu0 0.0
    %5540 = vmatprep.subr.mxu0 0.0
    %5541 = vmatpush2.msra.mxu0 0.0
    %5542 = vmatprep.subr.mxu0 0.0
    %5543 = vmatpush2.msra.mxu0 0.0
    %5544 = vmatprep.subr.mxu0 0.0
    %5545 = vmatpush2.msra.mxu0 0.0
    %5546 = vmatprep.subr.mxu0 0.0
    %5547 = vmatpush2.msra.mxu0 0.0
    %5548 = vmatprep.subr.mxu0 0.0
    %5549 = vmatpush2.msra.mxu0 0.0
    %5550 = vmatprep.subr.mxu0 0.0
    %5551 = vmatpush2.msra.mxu0 0.0
    %5552 = vmatprep.subr.mxu0 0.0
    %5553 = vmatpush2.msra.mxu0 0.0
    %5554 = vmatprep.subr.mxu0 0.0
    %5555 = vmatpush2.msra.mxu0 0.0
    %5556 = vmatprep.subr.mxu0 0.0
    %5557 = vmatpush2.msra.mxu0 0.0
    %5558 = vmatprep.subr.mxu0 0.0
    %5559 = vmatpush2.msra.mxu0 0.0
    %5560 = vmatprep.subr.mxu0 0.0
    %5561 = vmatpush2.msra.mxu0 0.0
    %5562 = vmatprep.mubr.f32.mxu0 0.0
    %5563 = vmatmul.mubr.f32.gmra.mxu0 %v4828
    %v5564 = vpop.f32.mrf.mxu0
    %v5565 = vadd.f32 0.0, %v5564
    %v5566 = vpop.f32.mrf.mxu0
    %5567 = vdwg.mxu0
    %5568 = vrot.lane.b32.xlu0 %v48, 124
    %v5569 = vpop.permute.xlu0 %5568
    %v5570 = vsel %vm66, %v5569, 0
    %5572 = vmatprep.subr.mxu0 0.0
    %5573 = vmatpush1.msra.mxu0 0.0
    %5574 = vmatprep.subr.mxu0 0.0
    %5575 = vmatpush1.msra.mxu0 0.0
    %5576 = vmatprep.subr.mxu0 0.0
    %5577 = vmatpush1.msra.mxu0 0.0
    %5578 = vmatprep.subr.mxu0 0.0
    %5579 = vmatpush1.msra.mxu0 0.0
    %5580 = vmatprep.subr.mxu0 0.0
    %5581 = vmatpush1.msra.mxu0 0.0
    %5582 = vmatprep.subr.mxu0 0.0
    %5583 = vmatpush1.msra.mxu0 0.0
    %5584 = vmatprep.subr.mxu0 0.0
    %5585 = vmatpush1.msra.mxu0 0.0
    %5586 = vmatprep.subr.mxu0 0.0
    %5587 = vmatpush1.msra.mxu0 0.0
    %5588 = vmatprep.subr.mxu0 0.0
    %5589 = vmatpush1.msra.mxu0 0.0
    %5590 = vmatprep.subr.mxu0 0.0
    %5591 = vmatpush1.msra.mxu0 0.0
    %5592 = vmatprep.subr.mxu0 0.0
    %5593 = vmatpush1.msra.mxu0 0.0
    %5594 = vmatprep.subr.mxu0 0.0
    %5595 = vmatpush1.msra.mxu0 0.0
    %5596 = vmatprep.subr.mxu0 0.0
    %5597 = vmatpush1.msra.mxu0 0.0
    %5598 = vmatprep.subr.mxu0 0.0
    %5599 = vmatpush1.msra.mxu0 0.0
    %5600 = vmatprep.subr.mxu0 0.0
    %5601 = vmatpush1.msra.mxu0 0.0
    %5602 = vmatprep.subr.mxu0 0.0
    %5603 = vmatpush1.msra.mxu0 %v5570
    %5604 = vmatprep.subr.mxu0 0.0
    %5605 = vmatpush2.msra.mxu0 0.0
    %5606 = vmatprep.subr.mxu0 0.0
    %5607 = vmatpush2.msra.mxu0 0.0
    %5608 = vmatprep.subr.mxu0 0.0
    %5609 = vmatpush2.msra.mxu0 0.0
    %5610 = vmatprep.subr.mxu0 0.0
    %5611 = vmatpush2.msra.mxu0 0.0
    %5612 = vmatprep.subr.mxu0 0.0
    %5613 = vmatpush2.msra.mxu0 0.0
    %5614 = vmatprep.subr.mxu0 0.0
    %5615 = vmatpush2.msra.mxu0 0.0
    %5616 = vmatprep.subr.mxu0 0.0
    %5617 = vmatpush2.msra.mxu0 0.0
    %5618 = vmatprep.subr.mxu0 0.0
    %5619 = vmatpush2.msra.mxu0 0.0
    %5620 = vmatprep.subr.mxu0 0.0
    %5621 = vmatpush2.msra.mxu0 0.0
    %5622 = vmatprep.subr.mxu0 0.0
    %5623 = vmatpush2.msra.mxu0 0.0
    %5624 = vmatprep.subr.mxu0 0.0
    %5625 = vmatpush2.msra.mxu0 0.0
    %5626 = vmatprep.subr.mxu0 0.0
    %5627 = vmatpush2.msra.mxu0 0.0
    %5628 = vmatprep.subr.mxu0 0.0
    %5629 = vmatpush2.msra.mxu0 0.0
    %5630 = vmatprep.subr.mxu0 0.0
    %5631 = vmatpush2.msra.mxu0 0.0
    %5632 = vmatprep.subr.mxu0 0.0
    %5633 = vmatpush2.msra.mxu0 0.0
    %5634 = vmatprep.subr.mxu0 0.0
    %5635 = vmatpush2.msra.mxu0 0.0
    %5636 = vmatprep.mubr.f32.mxu0 0.0
    %5637 = vmatmul.mubr.f32.gmra.mxu0 %v4828
    %v5638 = vpop.f32.mrf.mxu0
    %v5639 = vadd.f32 0.0, %v5638
    %v5640 = vpop.f32.mrf.mxu0
    %5641 = vdwg.mxu0
    %5642 = vrot.lane.b32.xlu0 %v49, 124
    %v5643 = vpop.permute.xlu0 %5642
    %v5644 = vsel %vm66, %v5643, 0
    %5646 = vmatprep.subr.mxu0 0.0
    %5647 = vmatpush1.msra.mxu0 0.0
    %5648 = vmatprep.subr.mxu0 0.0
    %5649 = vmatpush1.msra.mxu0 0.0
    %5650 = vmatprep.subr.mxu0 0.0
    %5651 = vmatpush1.msra.mxu0 0.0
    %5652 = vmatprep.subr.mxu0 0.0
    %5653 = vmatpush1.msra.mxu0 0.0
    %5654 = vmatprep.subr.mxu0 0.0
    %5655 = vmatpush1.msra.mxu0 0.0
    %5656 = vmatprep.subr.mxu0 0.0
    %5657 = vmatpush1.msra.mxu0 0.0
    %5658 = vmatprep.subr.mxu0 0.0
    %5659 = vmatpush1.msra.mxu0 0.0
    %5660 = vmatprep.subr.mxu0 0.0
    %5661 = vmatpush1.msra.mxu0 0.0
    %5662 = vmatprep.subr.mxu0 0.0
    %5663 = vmatpush1.msra.mxu0 0.0
    %5664 = vmatprep.subr.mxu0 0.0
    %5665 = vmatpush1.msra.mxu0 0.0
    %5666 = vmatprep.subr.mxu0 0.0
    %5667 = vmatpush1.msra.mxu0 0.0
    %5668 = vmatprep.subr.mxu0 0.0
    %5669 = vmatpush1.msra.mxu0 0.0
    %5670 = vmatprep.subr.mxu0 0.0
    %5671 = vmatpush1.msra.mxu0 0.0
    %5672 = vmatprep.subr.mxu0 0.0
    %5673 = vmatpush1.msra.mxu0 0.0
    %5674 = vmatprep.subr.mxu0 0.0
    %5675 = vmatpush1.msra.mxu0 0.0
    %5676 = vmatprep.subr.mxu0 0.0
    %5677 = vmatpush1.msra.mxu0 %v5644
    %5678 = vmatprep.subr.mxu0 0.0
    %5679 = vmatpush2.msra.mxu0 0.0
    %5680 = vmatprep.subr.mxu0 0.0
    %5681 = vmatpush2.msra.mxu0 0.0
    %5682 = vmatprep.subr.mxu0 0.0
    %5683 = vmatpush2.msra.mxu0 0.0
    %5684 = vmatprep.subr.mxu0 0.0
    %5685 = vmatpush2.msra.mxu0 0.0
    %5686 = vmatprep.subr.mxu0 0.0
    %5687 = vmatpush2.msra.mxu0 0.0
    %5688 = vmatprep.subr.mxu0 0.0
    %5689 = vmatpush2.msra.mxu0 0.0
    %5690 = vmatprep.subr.mxu0 0.0
    %5691 = vmatpush2.msra.mxu0 0.0
    %5692 = vmatprep.subr.mxu0 0.0
    %5693 = vmatpush2.msra.mxu0 0.0
    %5694 = vmatprep.subr.mxu0 0.0
    %5695 = vmatpush2.msra.mxu0 0.0
    %5696 = vmatprep.subr.mxu0 0.0
    %5697 = vmatpush2.msra.mxu0 0.0
    %5698 = vmatprep.subr.mxu0 0.0
    %5699 = vmatpush2.msra.mxu0 0.0
    %5700 = vmatprep.subr.mxu0 0.0
    %5701 = vmatpush2.msra.mxu0 0.0
    %5702 = vmatprep.subr.mxu0 0.0
    %5703 = vmatpush2.msra.mxu0 0.0
    %5704 = vmatprep.subr.mxu0 0.0
    %5705 = vmatpush2.msra.mxu0 0.0
    %5706 = vmatprep.subr.mxu0 0.0
    %5707 = vmatpush2.msra.mxu0 0.0
    %5708 = vmatprep.subr.mxu0 0.0
    %5709 = vmatpush2.msra.mxu0 0.0
    %5710 = vmatprep.mubr.f32.mxu0 0.0
    %5711 = vmatmul.mubr.f32.gmra.mxu0 %v4828
    %v5712 = vpop.f32.mrf.mxu0
    %v5713 = vadd.f32 0.0, %v5712
    %v5714 = vpop.f32.mrf.mxu0
    %5715 = vdwg.mxu0
    %5716 = vrot.lane.b32.xlu0 %v50, 124
    %v5717 = vpop.permute.xlu0 %5716
    %v5718 = vsel %vm66, %v5717, 0
    %5720 = vmatprep.subr.mxu0 0.0
    %5721 = vmatpush1.msra.mxu0 0.0
    %5722 = vmatprep.subr.mxu0 0.0
    %5723 = vmatpush1.msra.mxu0 0.0
    %5724 = vmatprep.subr.mxu0 0.0
    %5725 = vmatpush1.msra.mxu0 0.0
    %5726 = vmatprep.subr.mxu0 0.0
    %5727 = vmatpush1.msra.mxu0 0.0
    %5728 = vmatprep.subr.mxu0 0.0
    %5729 = vmatpush1.msra.mxu0 0.0
    %5730 = vmatprep.subr.mxu0 0.0
    %5731 = vmatpush1.msra.mxu0 0.0
    %5732 = vmatprep.subr.mxu0 0.0
    %5733 = vmatpush1.msra.mxu0 0.0
    %5734 = vmatprep.subr.mxu0 0.0
    %5735 = vmatpush1.msra.mxu0 0.0
    %5736 = vmatprep.subr.mxu0 0.0
    %5737 = vmatpush1.msra.mxu0 0.0
    %5738 = vmatprep.subr.mxu0 0.0
    %5739 = vmatpush1.msra.mxu0 0.0
    %5740 = vmatprep.subr.mxu0 0.0
    %5741 = vmatpush1.msra.mxu0 0.0
    %5742 = vmatprep.subr.mxu0 0.0
    %5743 = vmatpush1.msra.mxu0 0.0
    %5744 = vmatprep.subr.mxu0 0.0
    %5745 = vmatpush1.msra.mxu0 0.0
    %5746 = vmatprep.subr.mxu0 0.0
    %5747 = vmatpush1.msra.mxu0 0.0
    %5748 = vmatprep.subr.mxu0 0.0
    %5749 = vmatpush1.msra.mxu0 0.0
    %5750 = vmatprep.subr.mxu0 0.0
    %5751 = vmatpush1.msra.mxu0 %v5718
    %5752 = vmatprep.subr.mxu0 0.0
    %5753 = vmatpush2.msra.mxu0 0.0
    %5754 = vmatprep.subr.mxu0 0.0
    %5755 = vmatpush2.msra.mxu0 0.0
    %5756 = vmatprep.subr.mxu0 0.0
    %5757 = vmatpush2.msra.mxu0 0.0
    %5758 = vmatprep.subr.mxu0 0.0
    %5759 = vmatpush2.msra.mxu0 0.0
    %5760 = vmatprep.subr.mxu0 0.0
    %5761 = vmatpush2.msra.mxu0 0.0
    %5762 = vmatprep.subr.mxu0 0.0
    %5763 = vmatpush2.msra.mxu0 0.0
    %5764 = vmatprep.subr.mxu0 0.0
    %5765 = vmatpush2.msra.mxu0 0.0
    %5766 = vmatprep.subr.mxu0 0.0
    %5767 = vmatpush2.msra.mxu0 0.0
    %5768 = vmatprep.subr.mxu0 0.0
    %5769 = vmatpush2.msra.mxu0 0.0
    %5770 = vmatprep.subr.mxu0 0.0
    %5771 = vmatpush2.msra.mxu0 0.0
    %5772 = vmatprep.subr.mxu0 0.0
    %5773 = vmatpush2.msra.mxu0 0.0
    %5774 = vmatprep.subr.mxu0 0.0
    %5775 = vmatpush2.msra.mxu0 0.0
    %5776 = vmatprep.subr.mxu0 0.0
    %5777 = vmatpush2.msra.mxu0 0.0
    %5778 = vmatprep.subr.mxu0 0.0
    %5779 = vmatpush2.msra.mxu0 0.0
    %5780 = vmatprep.subr.mxu0 0.0
    %5781 = vmatpush2.msra.mxu0 0.0
    %5782 = vmatprep.subr.mxu0 0.0
    %5783 = vmatpush2.msra.mxu0 0.0
    %5784 = vmatprep.mubr.f32.mxu0 0.0
    %5785 = vmatmul.mubr.f32.gmra.mxu0 %v4828
    %v5786 = vpop.f32.mrf.mxu0
    %v5787 = vadd.f32 0.0, %v5786
    %v5788 = vpop.f32.mrf.mxu0
    %5789 = vdwg.mxu0
    %5790 = vrot.lane.b32.xlu0 %v51, 124
    %v5791 = vpop.permute.xlu0 %5790
    %v5792 = vsel %vm66, %v5791, 0
    %5794 = vmatprep.subr.mxu0 0.0
    %5795 = vmatpush1.msra.mxu0 0.0
    %5796 = vmatprep.subr.mxu0 0.0
    %5797 = vmatpush1.msra.mxu0 0.0
    %5798 = vmatprep.subr.mxu0 0.0
    %5799 = vmatpush1.msra.mxu0 0.0
    %5800 = vmatprep.subr.mxu0 0.0
    %5801 = vmatpush1.msra.mxu0 0.0
    %5802 = vmatprep.subr.mxu0 0.0
    %5803 = vmatpush1.msra.mxu0 0.0
    %5804 = vmatprep.subr.mxu0 0.0
    %5805 = vmatpush1.msra.mxu0 0.0
    %5806 = vmatprep.subr.mxu0 0.0
    %5807 = vmatpush1.msra.mxu0 0.0
    %5808 = vmatprep.subr.mxu0 0.0
    %5809 = vmatpush1.msra.mxu0 0.0
    %5810 = vmatprep.subr.mxu0 0.0
    %5811 = vmatpush1.msra.mxu0 0.0
    %5812 = vmatprep.subr.mxu0 0.0
    %5813 = vmatpush1.msra.mxu0 0.0
    %5814 = vmatprep.subr.mxu0 0.0
    %5815 = vmatpush1.msra.mxu0 0.0
    %5816 = vmatprep.subr.mxu0 0.0
    %5817 = vmatpush1.msra.mxu0 0.0
    %5818 = vmatprep.subr.mxu0 0.0
    %5819 = vmatpush1.msra.mxu0 0.0
    %5820 = vmatprep.subr.mxu0 0.0
    %5821 = vmatpush1.msra.mxu0 0.0
    %5822 = vmatprep.subr.mxu0 0.0
    %5823 = vmatpush1.msra.mxu0 0.0
    %5824 = vmatprep.subr.mxu0 0.0
    %5825 = vmatpush1.msra.mxu0 %v5792
    %5826 = vmatprep.subr.mxu0 0.0
    %5827 = vmatpush2.msra.mxu0 0.0
    %5828 = vmatprep.subr.mxu0 0.0
    %5829 = vmatpush2.msra.mxu0 0.0
    %5830 = vmatprep.subr.mxu0 0.0
    %5831 = vmatpush2.msra.mxu0 0.0
    %5832 = vmatprep.subr.mxu0 0.0
    %5833 = vmatpush2.msra.mxu0 0.0
    %5834 = vmatprep.subr.mxu0 0.0
    %5835 = vmatpush2.msra.mxu0 0.0
    %5836 = vmatprep.subr.mxu0 0.0
    %5837 = vmatpush2.msra.mxu0 0.0
    %5838 = vmatprep.subr.mxu0 0.0
    %5839 = vmatpush2.msra.mxu0 0.0
    %5840 = vmatprep.subr.mxu0 0.0
    %5841 = vmatpush2.msra.mxu0 0.0
    %5842 = vmatprep.subr.mxu0 0.0
    %5843 = vmatpush2.msra.mxu0 0.0
    %5844 = vmatprep.subr.mxu0 0.0
    %5845 = vmatpush2.msra.mxu0 0.0
    %5846 = vmatprep.subr.mxu0 0.0
    %5847 = vmatpush2.msra.mxu0 0.0
    %5848 = vmatprep.subr.mxu0 0.0
    %5849 = vmatpush2.msra.mxu0 0.0
    %5850 = vmatprep.subr.mxu0 0.0
    %5851 = vmatpush2.msra.mxu0 0.0
    %5852 = vmatprep.subr.mxu0 0.0
    %5853 = vmatpush2.msra.mxu0 0.0
    %5854 = vmatprep.subr.mxu0 0.0
    %5855 = vmatpush2.msra.mxu0 0.0
    %5856 = vmatprep.subr.mxu0 0.0
    %5857 = vmatpush2.msra.mxu0 0.0
    %5858 = vmatprep.mubr.f32.mxu0 0.0
    %5859 = vmatmul.mubr.f32.gmra.mxu0 %v4828
    %v5860 = vpop.f32.mrf.mxu0
    %v5861 = vadd.f32 0.0, %v5860
    %v5862 = vpop.f32.mrf.mxu0
    %5863 = vdwg.mxu0
    %5864 = vrot.lane.b32.xlu0 %v52, 124
    %v5865 = vpop.permute.xlu0 %5864
    %v5866 = vsel %vm66, %v5865, 0
    %5868 = vmatprep.subr.mxu0 0.0
    %5869 = vmatpush1.msra.mxu0 0.0
    %5870 = vmatprep.subr.mxu0 0.0
    %5871 = vmatpush1.msra.mxu0 0.0
    %5872 = vmatprep.subr.mxu0 0.0
    %5873 = vmatpush1.msra.mxu0 0.0
    %5874 = vmatprep.subr.mxu0 0.0
    %5875 = vmatpush1.msra.mxu0 0.0
    %5876 = vmatprep.subr.mxu0 0.0
    %5877 = vmatpush1.msra.mxu0 0.0
    %5878 = vmatprep.subr.mxu0 0.0
    %5879 = vmatpush1.msra.mxu0 0.0
    %5880 = vmatprep.subr.mxu0 0.0
    %5881 = vmatpush1.msra.mxu0 0.0
    %5882 = vmatprep.subr.mxu0 0.0
    %5883 = vmatpush1.msra.mxu0 0.0
    %5884 = vmatprep.subr.mxu0 0.0
    %5885 = vmatpush1.msra.mxu0 0.0
    %5886 = vmatprep.subr.mxu0 0.0
    %5887 = vmatpush1.msra.mxu0 0.0
    %5888 = vmatprep.subr.mxu0 0.0
    %5889 = vmatpush1.msra.mxu0 0.0
    %5890 = vmatprep.subr.mxu0 0.0
    %5891 = vmatpush1.msra.mxu0 0.0
    %5892 = vmatprep.subr.mxu0 0.0
    %5893 = vmatpush1.msra.mxu0 0.0
    %5894 = vmatprep.subr.mxu0 0.0
    %5895 = vmatpush1.msra.mxu0 0.0
    %5896 = vmatprep.subr.mxu0 0.0
    %5897 = vmatpush1.msra.mxu0 0.0
    %5898 = vmatprep.subr.mxu0 0.0
    %5899 = vmatpush1.msra.mxu0 %v5866
    %5900 = vmatprep.subr.mxu0 0.0
    %5901 = vmatpush2.msra.mxu0 0.0
    %5902 = vmatprep.subr.mxu0 0.0
    %5903 = vmatpush2.msra.mxu0 0.0
    %5904 = vmatprep.subr.mxu0 0.0
    %5905 = vmatpush2.msra.mxu0 0.0
    %5906 = vmatprep.subr.mxu0 0.0
    %5907 = vmatpush2.msra.mxu0 0.0
    %5908 = vmatprep.subr.mxu0 0.0
    %5909 = vmatpush2.msra.mxu0 0.0
    %5910 = vmatprep.subr.mxu0 0.0
    %5911 = vmatpush2.msra.mxu0 0.0
    %5912 = vmatprep.subr.mxu0 0.0
    %5913 = vmatpush2.msra.mxu0 0.0
    %5914 = vmatprep.subr.mxu0 0.0
    %5915 = vmatpush2.msra.mxu0 0.0
    %5916 = vmatprep.subr.mxu0 0.0
    %5917 = vmatpush2.msra.mxu0 0.0
    %5918 = vmatprep.subr.mxu0 0.0
    %5919 = vmatpush2.msra.mxu0 0.0
    %5920 = vmatprep.subr.mxu0 0.0
    %5921 = vmatpush2.msra.mxu0 0.0
    %5922 = vmatprep.subr.mxu0 0.0
    %5923 = vmatpush2.msra.mxu0 0.0
    %5924 = vmatprep.subr.mxu0 0.0
    %5925 = vmatpush2.msra.mxu0 0.0
    %5926 = vmatprep.subr.mxu0 0.0
    %5927 = vmatpush2.msra.mxu0 0.0
    %5928 = vmatprep.subr.mxu0 0.0
    %5929 = vmatpush2.msra.mxu0 0.0
    %5930 = vmatprep.subr.mxu0 0.0
    %5931 = vmatpush2.msra.mxu0 0.0
    %5932 = vmatprep.mubr.f32.mxu0 0.0
    %5933 = vmatmul.mubr.f32.gmra.mxu0 %v4828
    %v5934 = vpop.f32.mrf.mxu0
    %v5935 = vadd.f32 0.0, %v5934
    %v5936 = vpop.f32.mrf.mxu0
    %5937 = vdwg.mxu0
    %5938 = vrot.lane.b32.xlu0 %v53, 124
    %v5939 = vpop.permute.xlu0 %5938
    %v5940 = vsel %vm66, %v5939, 0
    %5942 = vmatprep.subr.mxu0 0.0
    %5943 = vmatpush1.msra.mxu0 0.0
    %5944 = vmatprep.subr.mxu0 0.0
    %5945 = vmatpush1.msra.mxu0 0.0
    %5946 = vmatprep.subr.mxu0 0.0
    %5947 = vmatpush1.msra.mxu0 0.0
    %5948 = vmatprep.subr.mxu0 0.0
    %5949 = vmatpush1.msra.mxu0 0.0
    %5950 = vmatprep.subr.mxu0 0.0
    %5951 = vmatpush1.msra.mxu0 0.0
    %5952 = vmatprep.subr.mxu0 0.0
    %5953 = vmatpush1.msra.mxu0 0.0
    %5954 = vmatprep.subr.mxu0 0.0
    %5955 = vmatpush1.msra.mxu0 0.0
    %5956 = vmatprep.subr.mxu0 0.0
    %5957 = vmatpush1.msra.mxu0 0.0
    %5958 = vmatprep.subr.mxu0 0.0
    %5959 = vmatpush1.msra.mxu0 0.0
    %5960 = vmatprep.subr.mxu0 0.0
    %5961 = vmatpush1.msra.mxu0 0.0
    %5962 = vmatprep.subr.mxu0 0.0
    %5963 = vmatpush1.msra.mxu0 0.0
    %5964 = vmatprep.subr.mxu0 0.0
    %5965 = vmatpush1.msra.mxu0 0.0
    %5966 = vmatprep.subr.mxu0 0.0
    %5967 = vmatpush1.msra.mxu0 0.0
    %5968 = vmatprep.subr.mxu0 0.0
    %5969 = vmatpush1.msra.mxu0 0.0
    %5970 = vmatprep.subr.mxu0 0.0
    %5971 = vmatpush1.msra.mxu0 0.0
    %5972 = vmatprep.subr.mxu0 0.0
    %5973 = vmatpush1.msra.mxu0 %v5940
    %5974 = vmatprep.subr.mxu0 0.0
    %5975 = vmatpush2.msra.mxu0 0.0
    %5976 = vmatprep.subr.mxu0 0.0
    %5977 = vmatpush2.msra.mxu0 0.0
    %5978 = vmatprep.subr.mxu0 0.0
    %5979 = vmatpush2.msra.mxu0 0.0
    %5980 = vmatprep.subr.mxu0 0.0
    %5981 = vmatpush2.msra.mxu0 0.0
    %5982 = vmatprep.subr.mxu0 0.0
    %5983 = vmatpush2.msra.mxu0 0.0
    %5984 = vmatprep.subr.mxu0 0.0
    %5985 = vmatpush2.msra.mxu0 0.0
    %5986 = vmatprep.subr.mxu0 0.0
    %5987 = vmatpush2.msra.mxu0 0.0
    %5988 = vmatprep.subr.mxu0 0.0
    %5989 = vmatpush2.msra.mxu0 0.0
    %5990 = vmatprep.subr.mxu0 0.0
    %5991 = vmatpush2.msra.mxu0 0.0
    %5992 = vmatprep.subr.mxu0 0.0
    %5993 = vmatpush2.msra.mxu0 0.0
    %5994 = vmatprep.subr.mxu0 0.0
    %5995 = vmatpush2.msra.mxu0 0.0
    %5996 = vmatprep.subr.mxu0 0.0
    %5997 = vmatpush2.msra.mxu0 0.0
    %5998 = vmatprep.subr.mxu0 0.0
    %5999 = vmatpush2.msra.mxu0 0.0
    %6000 = vmatprep.subr.mxu0 0.0
    %6001 = vmatpush2.msra.mxu0 0.0
    %6002 = vmatprep.subr.mxu0 0.0
    %6003 = vmatpush2.msra.mxu0 0.0
    %6004 = vmatprep.subr.mxu0 0.0
    %6005 = vmatpush2.msra.mxu0 0.0
    %6006 = vmatprep.mubr.f32.mxu0 0.0
    %6007 = vmatmul.mubr.f32.gmra.mxu0 %v4828
    %v6008 = vpop.f32.mrf.mxu0
    %v6009 = vadd.f32 0.0, %v6008
    %v6010 = vpop.f32.mrf.mxu0
    %6011 = vdwg.mxu0
    %v6012 = vadd.f32 %v4809, %v4899
    %v6013 = vadd.f32 %v4810, %v4973
    %v6014 = vadd.f32 %v4811, %v5047
    %v6015 = vadd.f32 %v4812, %v5121
    %v6016 = vadd.f32 %v4813, %v5195
    %v6017 = vadd.f32 %v4814, %v5269
    %v6018 = vadd.f32 %v4815, %v5343
    %v6019 = vadd.f32 %v4816, %v5417
    %v6020 = vadd.f32 %v4817, %v5491
    %v6021 = vadd.f32 %v4818, %v5565
    %v6022 = vadd.f32 %v4819, %v5639
    %v6023 = vadd.f32 %v4820, %v5713
    %v6024 = vadd.f32 %v4821, %v5787
    %v6025 = vadd.f32 %v4822, %v5861
    %v6026 = vadd.f32 %v4823, %v5935
    %v6027 = vadd.f32 %v4824, %v6009
    %v6028 = vld [vmem:[%s2] sm:$0xff]
    %6030 = vset.pattern.permute.xlu0 0
    %6031 = vperm.xlu0 %6030, %v6028
    %v6032 = vpop.permute.xlu0 %6031
    %v6034 = vadd.f32 %v6012, %v6032
    %v6035 = vadd.f32 %v6013, %v6032
    %v6036 = vadd.f32 %v6014, %v6032
    %v6037 = vadd.f32 %v6015, %v6032
    %v6038 = vadd.f32 %v6016, %v6032
    %v6039 = vadd.f32 %v6017, %v6032
    %v6040 = vadd.f32 %v6018, %v6032
    %v6041 = vadd.f32 %v6019, %v6032
    %v6042 = vadd.f32 %v6020, %v6032
    %v6043 = vadd.f32 %v6021, %v6032
    %v6044 = vadd.f32 %v6022, %v6032
    %v6045 = vadd.f32 %v6023, %v6032
    %v6046 = vadd.f32 %v6024, %v6032
    %v6047 = vadd.f32 %v6025, %v6032
    %v6048 = vadd.f32 %v6026, %v6032
    %v6049 = vadd.f32 %v6027, %v6032
    %v6050 = vmul.f32 %v6034, %v6034
    %v6051 = vmul.f32 %v6035, %v6035
    %v6052 = vmul.f32 %v6036, %v6036
    %v6053 = vmul.f32 %v6037, %v6037
    %v6054 = vmul.f32 %v6038, %v6038
    %v6055 = vmul.f32 %v6039, %v6039
    %v6056 = vmul.f32 %v6040, %v6040
    %v6057 = vmul.f32 %v6041, %v6041
    %v6058 = vmul.f32 %v6042, %v6042
    %v6059 = vmul.f32 %v6043, %v6043
    %v6060 = vmul.f32 %v6044, %v6044
    %v6061 = vmul.f32 %v6045, %v6045
    %v6062 = vmul.f32 %v6046, %v6046
    %v6063 = vmul.f32 %v6047, %v6047
    %v6064 = vmul.f32 %v6048, %v6048
    %v6065 = vmul.f32 %v6049, %v6049
    %v6066 = vld [vmem:[%s3] sm:$0x3f]
    %vm6067 = vcmask 228352
    %v6069 = vsel %vm6067, %v6066, 0
    %v6072 = vsel %vm6067, %v6050, 0
    %6074 = vmatprep.subr.mxu0 0.0
    %6075 = vmatpush1.xpose.msra.mxu0 0.0
    %6076 = vmatprep.subr.mxu0 0.0
    %6077 = vmatpush1.xpose.msra.mxu0 0.0
    %6078 = vmatprep.subr.mxu0 0.0
    %6079 = vmatpush1.xpose.msra.mxu0 0.0
    %6080 = vmatprep.subr.mxu0 0.0
    %6081 = vmatpush1.xpose.msra.mxu0 0.0
    %6082 = vmatprep.subr.mxu0 0.0
    %6083 = vmatpush1.xpose.msra.mxu0 0.0
    %6084 = vmatprep.subr.mxu0 0.0
    %6085 = vmatpush1.xpose.msra.mxu0 0.0
    %6086 = vmatprep.subr.mxu0 0.0
    %6087 = vmatpush1.xpose.msra.mxu0 0.0
    %6088 = vmatprep.subr.mxu0 0.0
    %6089 = vmatpush1.xpose.msra.mxu0 0.0
    %6090 = vmatprep.subr.mxu0 0.0
    %6091 = vmatpush1.xpose.msra.mxu0 0.0
    %6092 = vmatprep.subr.mxu0 0.0
    %6093 = vmatpush1.xpose.msra.mxu0 0.0
    %6094 = vmatprep.subr.mxu0 0.0
    %6095 = vmatpush1.xpose.msra.mxu0 0.0
    %6096 = vmatprep.subr.mxu0 0.0
    %6097 = vmatpush1.xpose.msra.mxu0 0.0
    %6098 = vmatprep.subr.mxu0 0.0
    %6099 = vmatpush1.xpose.msra.mxu0 0.0
    %6100 = vmatprep.subr.mxu0 0.0
    %6101 = vmatpush1.xpose.msra.mxu0 0.0
    %6102 = vmatprep.subr.mxu0 0.0
    %6103 = vmatpush1.xpose.msra.mxu0 0.0
    %6104 = vmatprep.subr.mxu0 0.0
    %6105 = vmatpush1.xpose.msra.mxu0 %v6072
    %6106 = vmatprep.subr.mxu0 0.0
    %6107 = vmatpush2.xpose.msra.mxu0 0.0
    %6108 = vmatprep.subr.mxu0 0.0
    %6109 = vmatpush2.xpose.msra.mxu0 0.0
    %6110 = vmatprep.subr.mxu0 0.0
    %6111 = vmatpush2.xpose.msra.mxu0 0.0
    %6112 = vmatprep.subr.mxu0 0.0
    %6113 = vmatpush2.xpose.msra.mxu0 0.0
    %6114 = vmatprep.subr.mxu0 0.0
    %6115 = vmatpush2.xpose.msra.mxu0 0.0
    %6116 = vmatprep.subr.mxu0 0.0
    %6117 = vmatpush2.xpose.msra.mxu0 0.0
    %6118 = vmatprep.subr.mxu0 0.0
    %6119 = vmatpush2.xpose.msra.mxu0 0.0
    %6120 = vmatprep.subr.mxu0 0.0
    %6121 = vmatpush2.xpose.msra.mxu0 0.0
    %6122 = vmatprep.subr.mxu0 0.0
    %6123 = vmatpush2.xpose.msra.mxu0 0.0
    %6124 = vmatprep.subr.mxu0 0.0
    %6125 = vmatpush2.xpose.msra.mxu0 0.0
    %6126 = vmatprep.subr.mxu0 0.0
    %6127 = vmatpush2.xpose.msra.mxu0 0.0
    %6128 = vmatprep.subr.mxu0 0.0
    %6129 = vmatpush2.xpose.msra.mxu0 0.0
    %6130 = vmatprep.subr.mxu0 0.0
    %6131 = vmatpush2.xpose.msra.mxu0 0.0
    %6132 = vmatprep.subr.mxu0 0.0
    %6133 = vmatpush2.xpose.msra.mxu0 0.0
    %6134 = vmatprep.subr.mxu0 0.0
    %6135 = vmatpush2.xpose.msra.mxu0 0.0
    %6136 = vmatprep.subr.mxu0 0.0
    %6137 = vmatpush2.xpose.msra.mxu0 0.0
    %6138 = vmatprep.mubr.f32.mxu0 0.0
    %6139 = vmatmul.mubr.f32.gmra.mxu0 %v6069
    %v6140 = vpop.f32.mrf.mxu0
    %v6141 = vadd.f32 0.0, %v6140
    %v6142 = vpop.f32.mrf.mxu0
    %6143 = vdwg.mxu0
    %v6145 = vsel %vm6067, %v6051, 0
    %6147 = vmatprep.subr.mxu0 0.0
    %6148 = vmatpush1.xpose.msra.mxu0 0.0
    %6149 = vmatprep.subr.mxu0 0.0
    %6150 = vmatpush1.xpose.msra.mxu0 0.0
    %6151 = vmatprep.subr.mxu0 0.0
    %6152 = vmatpush1.xpose.msra.mxu0 0.0
    %6153 = vmatprep.subr.mxu0 0.0
    %6154 = vmatpush1.xpose.msra.mxu0 0.0
    %6155 = vmatprep.subr.mxu0 0.0
    %6156 = vmatpush1.xpose.msra.mxu0 0.0
    %6157 = vmatprep.subr.mxu0 0.0
    %6158 = vmatpush1.xpose.msra.mxu0 0.0
    %6159 = vmatprep.subr.mxu0 0.0
    %6160 = vmatpush1.xpose.msra.mxu0 0.0
    %6161 = vmatprep.subr.mxu0 0.0
    %6162 = vmatpush1.xpose.msra.mxu0 0.0
    %6163 = vmatprep.subr.mxu0 0.0
    %6164 = vmatpush1.xpose.msra.mxu0 0.0
    %6165 = vmatprep.subr.mxu0 0.0
    %6166 = vmatpush1.xpose.msra.mxu0 0.0
    %6167 = vmatprep.subr.mxu0 0.0
    %6168 = vmatpush1.xpose.msra.mxu0 0.0
    %6169 = vmatprep.subr.mxu0 0.0
    %6170 = vmatpush1.xpose.msra.mxu0 0.0
    %6171 = vmatprep.subr.mxu0 0.0
    %6172 = vmatpush1.xpose.msra.mxu0 0.0
    %6173 = vmatprep.subr.mxu0 0.0
    %6174 = vmatpush1.xpose.msra.mxu0 0.0
    %6175 = vmatprep.subr.mxu0 0.0
    %6176 = vmatpush1.xpose.msra.mxu0 0.0
    %6177 = vmatprep.subr.mxu0 0.0
    %6178 = vmatpush1.xpose.msra.mxu0 %v6145
    %6179 = vmatprep.subr.mxu0 0.0
    %6180 = vmatpush2.xpose.msra.mxu0 0.0
    %6181 = vmatprep.subr.mxu0 0.0
    %6182 = vmatpush2.xpose.msra.mxu0 0.0
    %6183 = vmatprep.subr.mxu0 0.0
    %6184 = vmatpush2.xpose.msra.mxu0 0.0
    %6185 = vmatprep.subr.mxu0 0.0
    %6186 = vmatpush2.xpose.msra.mxu0 0.0
    %6187 = vmatprep.subr.mxu0 0.0
    %6188 = vmatpush2.xpose.msra.mxu0 0.0
    %6189 = vmatprep.subr.mxu0 0.0
    %6190 = vmatpush2.xpose.msra.mxu0 0.0
    %6191 = vmatprep.subr.mxu0 0.0
    %6192 = vmatpush2.xpose.msra.mxu0 0.0
    %6193 = vmatprep.subr.mxu0 0.0
    %6194 = vmatpush2.xpose.msra.mxu0 0.0
    %6195 = vmatprep.subr.mxu0 0.0
    %6196 = vmatpush2.xpose.msra.mxu0 0.0
    %6197 = vmatprep.subr.mxu0 0.0
    %6198 = vmatpush2.xpose.msra.mxu0 0.0
    %6199 = vmatprep.subr.mxu0 0.0
    %6200 = vmatpush2.xpose.msra.mxu0 0.0
    %6201 = vmatprep.subr.mxu0 0.0
    %6202 = vmatpush2.xpose.msra.mxu0 0.0
    %6203 = vmatprep.subr.mxu0 0.0
    %6204 = vmatpush2.xpose.msra.mxu0 0.0
    %6205 = vmatprep.subr.mxu0 0.0
    %6206 = vmatpush2.xpose.msra.mxu0 0.0
    %6207 = vmatprep.subr.mxu0 0.0
    %6208 = vmatpush2.xpose.msra.mxu0 0.0
    %6209 = vmatprep.subr.mxu0 0.0
    %6210 = vmatpush2.xpose.msra.mxu0 0.0
    %6211 = vmatprep.mubr.f32.mxu0 0.0
    %6212 = vmatmul.mubr.f32.gmra.mxu0 %v6069
    %v6213 = vpop.f32.mrf.mxu0
    %v6214 = vadd.f32 0.0, %v6213
    %v6215 = vpop.f32.mrf.mxu0
    %6216 = vdwg.mxu0
    %v6218 = vsel %vm6067, %v6052, 0
    %6220 = vmatprep.subr.mxu0 0.0
    %6221 = vmatpush1.xpose.msra.mxu0 0.0
    %6222 = vmatprep.subr.mxu0 0.0
    %6223 = vmatpush1.xpose.msra.mxu0 0.0
    %6224 = vmatprep.subr.mxu0 0.0
    %6225 = vmatpush1.xpose.msra.mxu0 0.0
    %6226 = vmatprep.subr.mxu0 0.0
    %6227 = vmatpush1.xpose.msra.mxu0 0.0
    %6228 = vmatprep.subr.mxu0 0.0
    %6229 = vmatpush1.xpose.msra.mxu0 0.0
    %6230 = vmatprep.subr.mxu0 0.0
    %6231 = vmatpush1.xpose.msra.mxu0 0.0
    %6232 = vmatprep.subr.mxu0 0.0
    %6233 = vmatpush1.xpose.msra.mxu0 0.0
    %6234 = vmatprep.subr.mxu0 0.0
    %6235 = vmatpush1.xpose.msra.mxu0 0.0
    %6236 = vmatprep.subr.mxu0 0.0
    %6237 = vmatpush1.xpose.msra.mxu0 0.0
    %6238 = vmatprep.subr.mxu0 0.0
    %6239 = vmatpush1.xpose.msra.mxu0 0.0
    %6240 = vmatprep.subr.mxu0 0.0
    %6241 = vmatpush1.xpose.msra.mxu0 0.0
    %6242 = vmatprep.subr.mxu0 0.0
    %6243 = vmatpush1.xpose.msra.mxu0 0.0
    %6244 = vmatprep.subr.mxu0 0.0
    %6245 = vmatpush1.xpose.msra.mxu0 0.0
    %6246 = vmatprep.subr.mxu0 0.0
    %6247 = vmatpush1.xpose.msra.mxu0 0.0
    %6248 = vmatprep.subr.mxu0 0.0
    %6249 = vmatpush1.xpose.msra.mxu0 0.0
    %6250 = vmatprep.subr.mxu0 0.0
    %6251 = vmatpush1.xpose.msra.mxu0 %v6218
    %6252 = vmatprep.subr.mxu0 0.0
    %6253 = vmatpush2.xpose.msra.mxu0 0.0
    %6254 = vmatprep.subr.mxu0 0.0
    %6255 = vmatpush2.xpose.msra.mxu0 0.0
    %6256 = vmatprep.subr.mxu0 0.0
    %6257 = vmatpush2.xpose.msra.mxu0 0.0
    %6258 = vmatprep.subr.mxu0 0.0
    %6259 = vmatpush2.xpose.msra.mxu0 0.0
    %6260 = vmatprep.subr.mxu0 0.0
    %6261 = vmatpush2.xpose.msra.mxu0 0.0
    %6262 = vmatprep.subr.mxu0 0.0
    %6263 = vmatpush2.xpose.msra.mxu0 0.0
    %6264 = vmatprep.subr.mxu0 0.0
    %6265 = vmatpush2.xpose.msra.mxu0 0.0
    %6266 = vmatprep.subr.mxu0 0.0
    %6267 = vmatpush2.xpose.msra.mxu0 0.0
    %6268 = vmatprep.subr.mxu0 0.0
    %6269 = vmatpush2.xpose.msra.mxu0 0.0
    %6270 = vmatprep.subr.mxu0 0.0
    %6271 = vmatpush2.xpose.msra.mxu0 0.0
    %6272 = vmatprep.subr.mxu0 0.0
    %6273 = vmatpush2.xpose.msra.mxu0 0.0
    %6274 = vmatprep.subr.mxu0 0.0
    %6275 = vmatpush2.xpose.msra.mxu0 0.0
    %6276 = vmatprep.subr.mxu0 0.0
    %6277 = vmatpush2.xpose.msra.mxu0 0.0
    %6278 = vmatprep.subr.mxu0 0.0
    %6279 = vmatpush2.xpose.msra.mxu0 0.0
    %6280 = vmatprep.subr.mxu0 0.0
    %6281 = vmatpush2.xpose.msra.mxu0 0.0
    %6282 = vmatprep.subr.mxu0 0.0
    %6283 = vmatpush2.xpose.msra.mxu0 0.0
    %6284 = vmatprep.mubr.f32.mxu0 0.0
    %6285 = vmatmul.mubr.f32.gmra.mxu0 %v6069
    %v6286 = vpop.f32.mrf.mxu0
    %v6287 = vadd.f32 0.0, %v6286
    %v6288 = vpop.f32.mrf.mxu0
    %6289 = vdwg.mxu0
    %v6291 = vsel %vm6067, %v6053, 0
    %6293 = vmatprep.subr.mxu0 0.0
    %6294 = vmatpush1.xpose.msra.mxu0 0.0
    %6295 = vmatprep.subr.mxu0 0.0
    %6296 = vmatpush1.xpose.msra.mxu0 0.0
    %6297 = vmatprep.subr.mxu0 0.0
    %6298 = vmatpush1.xpose.msra.mxu0 0.0
    %6299 = vmatprep.subr.mxu0 0.0
    %6300 = vmatpush1.xpose.msra.mxu0 0.0
    %6301 = vmatprep.subr.mxu0 0.0
    %6302 = vmatpush1.xpose.msra.mxu0 0.0
    %6303 = vmatprep.subr.mxu0 0.0
    %6304 = vmatpush1.xpose.msra.mxu0 0.0
    %6305 = vmatprep.subr.mxu0 0.0
    %6306 = vmatpush1.xpose.msra.mxu0 0.0
    %6307 = vmatprep.subr.mxu0 0.0
    %6308 = vmatpush1.xpose.msra.mxu0 0.0
    %6309 = vmatprep.subr.mxu0 0.0
    %6310 = vmatpush1.xpose.msra.mxu0 0.0
    %6311 = vmatprep.subr.mxu0 0.0
    %6312 = vmatpush1.xpose.msra.mxu0 0.0
    %6313 = vmatprep.subr.mxu0 0.0
    %6314 = vmatpush1.xpose.msra.mxu0 0.0
    %6315 = vmatprep.subr.mxu0 0.0
    %6316 = vmatpush1.xpose.msra.mxu0 0.0
    %6317 = vmatprep.subr.mxu0 0.0
    %6318 = vmatpush1.xpose.msra.mxu0 0.0
    %6319 = vmatprep.subr.mxu0 0.0
    %6320 = vmatpush1.xpose.msra.mxu0 0.0
    %6321 = vmatprep.subr.mxu0 0.0
    %6322 = vmatpush1.xpose.msra.mxu0 0.0
    %6323 = vmatprep.subr.mxu0 0.0
    %6324 = vmatpush1.xpose.msra.mxu0 %v6291
    %6325 = vmatprep.subr.mxu0 0.0
    %6326 = vmatpush2.xpose.msra.mxu0 0.0
    %6327 = vmatprep.subr.mxu0 0.0
    %6328 = vmatpush2.xpose.msra.mxu0 0.0
    %6329 = vmatprep.subr.mxu0 0.0
    %6330 = vmatpush2.xpose.msra.mxu0 0.0
    %6331 = vmatprep.subr.mxu0 0.0
    %6332 = vmatpush2.xpose.msra.mxu0 0.0
    %6333 = vmatprep.subr.mxu0 0.0
    %6334 = vmatpush2.xpose.msra.mxu0 0.0
    %6335 = vmatprep.subr.mxu0 0.0
    %6336 = vmatpush2.xpose.msra.mxu0 0.0
    %6337 = vmatprep.subr.mxu0 0.0
    %6338 = vmatpush2.xpose.msra.mxu0 0.0
    %6339 = vmatprep.subr.mxu0 0.0
    %6340 = vmatpush2.xpose.msra.mxu0 0.0
    %6341 = vmatprep.subr.mxu0 0.0
    %6342 = vmatpush2.xpose.msra.mxu0 0.0
    %6343 = vmatprep.subr.mxu0 0.0
    %6344 = vmatpush2.xpose.msra.mxu0 0.0
    %6345 = vmatprep.subr.mxu0 0.0
    %6346 = vmatpush2.xpose.msra.mxu0 0.0
    %6347 = vmatprep.subr.mxu0 0.0
    %6348 = vmatpush2.xpose.msra.mxu0 0.0
    %6349 = vmatprep.subr.mxu0 0.0
    %6350 = vmatpush2.xpose.msra.mxu0 0.0
    %6351 = vmatprep.subr.mxu0 0.0
    %6352 = vmatpush2.xpose.msra.mxu0 0.0
    %6353 = vmatprep.subr.mxu0 0.0
    %6354 = vmatpush2.xpose.msra.mxu0 0.0
    %6355 = vmatprep.subr.mxu0 0.0
    %6356 = vmatpush2.xpose.msra.mxu0 0.0
    %6357 = vmatprep.mubr.f32.mxu0 0.0
    %6358 = vmatmul.mubr.f32.gmra.mxu0 %v6069
    %v6359 = vpop.f32.mrf.mxu0
    %v6360 = vadd.f32 0.0, %v6359
    %v6361 = vpop.f32.mrf.mxu0
    %6362 = vdwg.mxu0
    %v6364 = vsel %vm6067, %v6054, 0
    %6366 = vmatprep.subr.mxu0 0.0
    %6367 = vmatpush1.xpose.msra.mxu0 0.0
    %6368 = vmatprep.subr.mxu0 0.0
    %6369 = vmatpush1.xpose.msra.mxu0 0.0
    %6370 = vmatprep.subr.mxu0 0.0
    %6371 = vmatpush1.xpose.msra.mxu0 0.0
    %6372 = vmatprep.subr.mxu0 0.0
    %6373 = vmatpush1.xpose.msra.mxu0 0.0
    %6374 = vmatprep.subr.mxu0 0.0
    %6375 = vmatpush1.xpose.msra.mxu0 0.0
    %6376 = vmatprep.subr.mxu0 0.0
    %6377 = vmatpush1.xpose.msra.mxu0 0.0
    %6378 = vmatprep.subr.mxu0 0.0
    %6379 = vmatpush1.xpose.msra.mxu0 0.0
    %6380 = vmatprep.subr.mxu0 0.0
    %6381 = vmatpush1.xpose.msra.mxu0 0.0
    %6382 = vmatprep.subr.mxu0 0.0
    %6383 = vmatpush1.xpose.msra.mxu0 0.0
    %6384 = vmatprep.subr.mxu0 0.0
    %6385 = vmatpush1.xpose.msra.mxu0 0.0
    %6386 = vmatprep.subr.mxu0 0.0
    %6387 = vmatpush1.xpose.msra.mxu0 0.0
    %6388 = vmatprep.subr.mxu0 0.0
    %6389 = vmatpush1.xpose.msra.mxu0 0.0
    %6390 = vmatprep.subr.mxu0 0.0
    %6391 = vmatpush1.xpose.msra.mxu0 0.0
    %6392 = vmatprep.subr.mxu0 0.0
    %6393 = vmatpush1.xpose.msra.mxu0 0.0
    %6394 = vmatprep.subr.mxu0 0.0
    %6395 = vmatpush1.xpose.msra.mxu0 0.0
    %6396 = vmatprep.subr.mxu0 0.0
    %6397 = vmatpush1.xpose.msra.mxu0 %v6364
    %6398 = vmatprep.subr.mxu0 0.0
    %6399 = vmatpush2.xpose.msra.mxu0 0.0
    %6400 = vmatprep.subr.mxu0 0.0
    %6401 = vmatpush2.xpose.msra.mxu0 0.0
    %6402 = vmatprep.subr.mxu0 0.0
    %6403 = vmatpush2.xpose.msra.mxu0 0.0
    %6404 = vmatprep.subr.mxu0 0.0
    %6405 = vmatpush2.xpose.msra.mxu0 0.0
    %6406 = vmatprep.subr.mxu0 0.0
    %6407 = vmatpush2.xpose.msra.mxu0 0.0
    %6408 = vmatprep.subr.mxu0 0.0
    %6409 = vmatpush2.xpose.msra.mxu0 0.0
    %6410 = vmatprep.subr.mxu0 0.0
    %6411 = vmatpush2.xpose.msra.mxu0 0.0
    %6412 = vmatprep.subr.mxu0 0.0
    %6413 = vmatpush2.xpose.msra.mxu0 0.0
    %6414 = vmatprep.subr.mxu0 0.0
    %6415 = vmatpush2.xpose.msra.mxu0 0.0
    %6416 = vmatprep.subr.mxu0 0.0
    %6417 = vmatpush2.xpose.msra.mxu0 0.0
    %6418 = vmatprep.subr.mxu0 0.0
    %6419 = vmatpush2.xpose.msra.mxu0 0.0
    %6420 = vmatprep.subr.mxu0 0.0
    %6421 = vmatpush2.xpose.msra.mxu0 0.0
    %6422 = vmatprep.subr.mxu0 0.0
    %6423 = vmatpush2.xpose.msra.mxu0 0.0
    %6424 = vmatprep.subr.mxu0 0.0
    %6425 = vmatpush2.xpose.msra.mxu0 0.0
    %6426 = vmatprep.subr.mxu0 0.0
    %6427 = vmatpush2.xpose.msra.mxu0 0.0
    %6428 = vmatprep.subr.mxu0 0.0
    %6429 = vmatpush2.xpose.msra.mxu0 0.0
    %6430 = vmatprep.mubr.f32.mxu0 0.0
    %6431 = vmatmul.mubr.f32.gmra.mxu0 %v6069
    %v6432 = vpop.f32.mrf.mxu0
    %v6433 = vadd.f32 0.0, %v6432
    %v6434 = vpop.f32.mrf.mxu0
    %6435 = vdwg.mxu0
    %v6437 = vsel %vm6067, %v6055, 0
    %6439 = vmatprep.subr.mxu0 0.0
    %6440 = vmatpush1.xpose.msra.mxu0 0.0
    %6441 = vmatprep.subr.mxu0 0.0
    %6442 = vmatpush1.xpose.msra.mxu0 0.0
    %6443 = vmatprep.subr.mxu0 0.0
    %6444 = vmatpush1.xpose.msra.mxu0 0.0
    %6445 = vmatprep.subr.mxu0 0.0
    %6446 = vmatpush1.xpose.msra.mxu0 0.0
    %6447 = vmatprep.subr.mxu0 0.0
    %6448 = vmatpush1.xpose.msra.mxu0 0.0
    %6449 = vmatprep.subr.mxu0 0.0
    %6450 = vmatpush1.xpose.msra.mxu0 0.0
    %6451 = vmatprep.subr.mxu0 0.0
    %6452 = vmatpush1.xpose.msra.mxu0 0.0
    %6453 = vmatprep.subr.mxu0 0.0
    %6454 = vmatpush1.xpose.msra.mxu0 0.0
    %6455 = vmatprep.subr.mxu0 0.0
    %6456 = vmatpush1.xpose.msra.mxu0 0.0
    %6457 = vmatprep.subr.mxu0 0.0
    %6458 = vmatpush1.xpose.msra.mxu0 0.0
    %6459 = vmatprep.subr.mxu0 0.0
    %6460 = vmatpush1.xpose.msra.mxu0 0.0
    %6461 = vmatprep.subr.mxu0 0.0
    %6462 = vmatpush1.xpose.msra.mxu0 0.0
    %6463 = vmatprep.subr.mxu0 0.0
    %6464 = vmatpush1.xpose.msra.mxu0 0.0
    %6465 = vmatprep.subr.mxu0 0.0
    %6466 = vmatpush1.xpose.msra.mxu0 0.0
    %6467 = vmatprep.subr.mxu0 0.0
    %6468 = vmatpush1.xpose.msra.mxu0 0.0
    %6469 = vmatprep.subr.mxu0 0.0
    %6470 = vmatpush1.xpose.msra.mxu0 %v6437
    %6471 = vmatprep.subr.mxu0 0.0
    %6472 = vmatpush2.xpose.msra.mxu0 0.0
    %6473 = vmatprep.subr.mxu0 0.0
    %6474 = vmatpush2.xpose.msra.mxu0 0.0
    %6475 = vmatprep.subr.mxu0 0.0
    %6476 = vmatpush2.xpose.msra.mxu0 0.0
    %6477 = vmatprep.subr.mxu0 0.0
    %6478 = vmatpush2.xpose.msra.mxu0 0.0
    %6479 = vmatprep.subr.mxu0 0.0
    %6480 = vmatpush2.xpose.msra.mxu0 0.0
    %6481 = vmatprep.subr.mxu0 0.0
    %6482 = vmatpush2.xpose.msra.mxu0 0.0
    %6483 = vmatprep.subr.mxu0 0.0
    %6484 = vmatpush2.xpose.msra.mxu0 0.0
    %6485 = vmatprep.subr.mxu0 0.0
    %6486 = vmatpush2.xpose.msra.mxu0 0.0
    %6487 = vmatprep.subr.mxu0 0.0
    %6488 = vmatpush2.xpose.msra.mxu0 0.0
    %6489 = vmatprep.subr.mxu0 0.0
    %6490 = vmatpush2.xpose.msra.mxu0 0.0
    %6491 = vmatprep.subr.mxu0 0.0
    %6492 = vmatpush2.xpose.msra.mxu0 0.0
    %6493 = vmatprep.subr.mxu0 0.0
    %6494 = vmatpush2.xpose.msra.mxu0 0.0
    %6495 = vmatprep.subr.mxu0 0.0
    %6496 = vmatpush2.xpose.msra.mxu0 0.0
    %6497 = vmatprep.subr.mxu0 0.0
    %6498 = vmatpush2.xpose.msra.mxu0 0.0
    %6499 = vmatprep.subr.mxu0 0.0
    %6500 = vmatpush2.xpose.msra.mxu0 0.0
    %6501 = vmatprep.subr.mxu0 0.0
    %6502 = vmatpush2.xpose.msra.mxu0 0.0
    %6503 = vmatprep.mubr.f32.mxu0 0.0
    %6504 = vmatmul.mubr.f32.gmra.mxu0 %v6069
    %v6505 = vpop.f32.mrf.mxu0
    %v6506 = vadd.f32 0.0, %v6505
    %v6507 = vpop.f32.mrf.mxu0
    %6508 = vdwg.mxu0
    %v6510 = vsel %vm6067, %v6056, 0
    %6512 = vmatprep.subr.mxu0 0.0
    %6513 = vmatpush1.xpose.msra.mxu0 0.0
    %6514 = vmatprep.subr.mxu0 0.0
    %6515 = vmatpush1.xpose.msra.mxu0 0.0
    %6516 = vmatprep.subr.mxu0 0.0
    %6517 = vmatpush1.xpose.msra.mxu0 0.0
    %6518 = vmatprep.subr.mxu0 0.0
    %6519 = vmatpush1.xpose.msra.mxu0 0.0
    %6520 = vmatprep.subr.mxu0 0.0
    %6521 = vmatpush1.xpose.msra.mxu0 0.0
    %6522 = vmatprep.subr.mxu0 0.0
    %6523 = vmatpush1.xpose.msra.mxu0 0.0
    %6524 = vmatprep.subr.mxu0 0.0
    %6525 = vmatpush1.xpose.msra.mxu0 0.0
    %6526 = vmatprep.subr.mxu0 0.0
    %6527 = vmatpush1.xpose.msra.mxu0 0.0
    %6528 = vmatprep.subr.mxu0 0.0
    %6529 = vmatpush1.xpose.msra.mxu0 0.0
    %6530 = vmatprep.subr.mxu0 0.0
    %6531 = vmatpush1.xpose.msra.mxu0 0.0
    %6532 = vmatprep.subr.mxu0 0.0
    %6533 = vmatpush1.xpose.msra.mxu0 0.0
    %6534 = vmatprep.subr.mxu0 0.0
    %6535 = vmatpush1.xpose.msra.mxu0 0.0
    %6536 = vmatprep.subr.mxu0 0.0
    %6537 = vmatpush1.xpose.msra.mxu0 0.0
    %6538 = vmatprep.subr.mxu0 0.0
    %6539 = vmatpush1.xpose.msra.mxu0 0.0
    %6540 = vmatprep.subr.mxu0 0.0
    %6541 = vmatpush1.xpose.msra.mxu0 0.0
    %6542 = vmatprep.subr.mxu0 0.0
    %6543 = vmatpush1.xpose.msra.mxu0 %v6510
    %6544 = vmatprep.subr.mxu0 0.0
    %6545 = vmatpush2.xpose.msra.mxu0 0.0
    %6546 = vmatprep.subr.mxu0 0.0
    %6547 = vmatpush2.xpose.msra.mxu0 0.0
    %6548 = vmatprep.subr.mxu0 0.0
    %6549 = vmatpush2.xpose.msra.mxu0 0.0
    %6550 = vmatprep.subr.mxu0 0.0
    %6551 = vmatpush2.xpose.msra.mxu0 0.0
    %6552 = vmatprep.subr.mxu0 0.0
    %6553 = vmatpush2.xpose.msra.mxu0 0.0
    %6554 = vmatprep.subr.mxu0 0.0
    %6555 = vmatpush2.xpose.msra.mxu0 0.0
    %6556 = vmatprep.subr.mxu0 0.0
    %6557 = vmatpush2.xpose.msra.mxu0 0.0
    %6558 = vmatprep.subr.mxu0 0.0
    %6559 = vmatpush2.xpose.msra.mxu0 0.0
    %6560 = vmatprep.subr.mxu0 0.0
    %6561 = vmatpush2.xpose.msra.mxu0 0.0
    %6562 = vmatprep.subr.mxu0 0.0
    %6563 = vmatpush2.xpose.msra.mxu0 0.0
    %6564 = vmatprep.subr.mxu0 0.0
    %6565 = vmatpush2.xpose.msra.mxu0 0.0
    %6566 = vmatprep.subr.mxu0 0.0
    %6567 = vmatpush2.xpose.msra.mxu0 0.0
    %6568 = vmatprep.subr.mxu0 0.0
    %6569 = vmatpush2.xpose.msra.mxu0 0.0
    %6570 = vmatprep.subr.mxu0 0.0
    %6571 = vmatpush2.xpose.msra.mxu0 0.0
    %6572 = vmatprep.subr.mxu0 0.0
    %6573 = vmatpush2.xpose.msra.mxu0 0.0
    %6574 = vmatprep.subr.mxu0 0.0
    %6575 = vmatpush2.xpose.msra.mxu0 0.0
    %6576 = vmatprep.mubr.f32.mxu0 0.0
    %6577 = vmatmul.mubr.f32.gmra.mxu0 %v6069
    %v6578 = vpop.f32.mrf.mxu0
    %v6579 = vadd.f32 0.0, %v6578
    %v6580 = vpop.f32.mrf.mxu0
    %6581 = vdwg.mxu0
    %v6583 = vsel %vm6067, %v6057, 0
    %6585 = vmatprep.subr.mxu0 0.0
    %6586 = vmatpush1.xpose.msra.mxu0 0.0
    %6587 = vmatprep.subr.mxu0 0.0
    %6588 = vmatpush1.xpose.msra.mxu0 0.0
    %6589 = vmatprep.subr.mxu0 0.0
    %6590 = vmatpush1.xpose.msra.mxu0 0.0
    %6591 = vmatprep.subr.mxu0 0.0
    %6592 = vmatpush1.xpose.msra.mxu0 0.0
    %6593 = vmatprep.subr.mxu0 0.0
    %6594 = vmatpush1.xpose.msra.mxu0 0.0
    %6595 = vmatprep.subr.mxu0 0.0
    %6596 = vmatpush1.xpose.msra.mxu0 0.0
    %6597 = vmatprep.subr.mxu0 0.0
    %6598 = vmatpush1.xpose.msra.mxu0 0.0
    %6599 = vmatprep.subr.mxu0 0.0
    %6600 = vmatpush1.xpose.msra.mxu0 0.0
    %6601 = vmatprep.subr.mxu0 0.0
    %6602 = vmatpush1.xpose.msra.mxu0 0.0
    %6603 = vmatprep.subr.mxu0 0.0
    %6604 = vmatpush1.xpose.msra.mxu0 0.0
    %6605 = vmatprep.subr.mxu0 0.0
    %6606 = vmatpush1.xpose.msra.mxu0 0.0
    %6607 = vmatprep.subr.mxu0 0.0
    %6608 = vmatpush1.xpose.msra.mxu0 0.0
    %6609 = vmatprep.subr.mxu0 0.0
    %6610 = vmatpush1.xpose.msra.mxu0 0.0
    %6611 = vmatprep.subr.mxu0 0.0
    %6612 = vmatpush1.xpose.msra.mxu0 0.0
    %6613 = vmatprep.subr.mxu0 0.0
    %6614 = vmatpush1.xpose.msra.mxu0 0.0
    %6615 = vmatprep.subr.mxu0 0.0
    %6616 = vmatpush1.xpose.msra.mxu0 %v6583
    %6617 = vmatprep.subr.mxu0 0.0
    %6618 = vmatpush2.xpose.msra.mxu0 0.0
    %6619 = vmatprep.subr.mxu0 0.0
    %6620 = vmatpush2.xpose.msra.mxu0 0.0
    %6621 = vmatprep.subr.mxu0 0.0
    %6622 = vmatpush2.xpose.msra.mxu0 0.0
    %6623 = vmatprep.subr.mxu0 0.0
    %6624 = vmatpush2.xpose.msra.mxu0 0.0
    %6625 = vmatprep.subr.mxu0 0.0
    %6626 = vmatpush2.xpose.msra.mxu0 0.0
    %6627 = vmatprep.subr.mxu0 0.0
    %6628 = vmatpush2.xpose.msra.mxu0 0.0
    %6629 = vmatprep.subr.mxu0 0.0
    %6630 = vmatpush2.xpose.msra.mxu0 0.0
    %6631 = vmatprep.subr.mxu0 0.0
    %6632 = vmatpush2.xpose.msra.mxu0 0.0
    %6633 = vmatprep.subr.mxu0 0.0
    %6634 = vmatpush2.xpose.msra.mxu0 0.0
    %6635 = vmatprep.subr.mxu0 0.0
    %6636 = vmatpush2.xpose.msra.mxu0 0.0
    %6637 = vmatprep.subr.mxu0 0.0
    %6638 = vmatpush2.xpose.msra.mxu0 0.0
    %6639 = vmatprep.subr.mxu0 0.0
    %6640 = vmatpush2.xpose.msra.mxu0 0.0
    %6641 = vmatprep.subr.mxu0 0.0
    %6642 = vmatpush2.xpose.msra.mxu0 0.0
    %6643 = vmatprep.subr.mxu0 0.0
    %6644 = vmatpush2.xpose.msra.mxu0 0.0
    %6645 = vmatprep.subr.mxu0 0.0
    %6646 = vmatpush2.xpose.msra.mxu0 0.0
    %6647 = vmatprep.subr.mxu0 0.0
    %6648 = vmatpush2.xpose.msra.mxu0 0.0
    %6649 = vmatprep.mubr.f32.mxu0 0.0
    %6650 = vmatmul.mubr.f32.gmra.mxu0 %v6069
    %v6651 = vpop.f32.mrf.mxu0
    %v6652 = vadd.f32 0.0, %v6651
    %v6653 = vpop.f32.mrf.mxu0
    %6654 = vdwg.mxu0
    %v6656 = vsel %vm6067, %v6058, 0
    %6658 = vmatprep.subr.mxu0 0.0
    %6659 = vmatpush1.xpose.msra.mxu0 0.0
    %6660 = vmatprep.subr.mxu0 0.0
    %6661 = vmatpush1.xpose.msra.mxu0 0.0
    %6662 = vmatprep.subr.mxu0 0.0
    %6663 = vmatpush1.xpose.msra.mxu0 0.0
    %6664 = vmatprep.subr.mxu0 0.0
    %6665 = vmatpush1.xpose.msra.mxu0 0.0
    %6666 = vmatprep.subr.mxu0 0.0
    %6667 = vmatpush1.xpose.msra.mxu0 0.0
    %6668 = vmatprep.subr.mxu0 0.0
    %6669 = vmatpush1.xpose.msra.mxu0 0.0
    %6670 = vmatprep.subr.mxu0 0.0
    %6671 = vmatpush1.xpose.msra.mxu0 0.0
    %6672 = vmatprep.subr.mxu0 0.0
    %6673 = vmatpush1.xpose.msra.mxu0 0.0
    %6674 = vmatprep.subr.mxu0 0.0
    %6675 = vmatpush1.xpose.msra.mxu0 0.0
    %6676 = vmatprep.subr.mxu0 0.0
    %6677 = vmatpush1.xpose.msra.mxu0 0.0
    %6678 = vmatprep.subr.mxu0 0.0
    %6679 = vmatpush1.xpose.msra.mxu0 0.0
    %6680 = vmatprep.subr.mxu0 0.0
    %6681 = vmatpush1.xpose.msra.mxu0 0.0
    %6682 = vmatprep.subr.mxu0 0.0
    %6683 = vmatpush1.xpose.msra.mxu0 0.0
    %6684 = vmatprep.subr.mxu0 0.0
    %6685 = vmatpush1.xpose.msra.mxu0 0.0
    %6686 = vmatprep.subr.mxu0 0.0
    %6687 = vmatpush1.xpose.msra.mxu0 0.0
    %6688 = vmatprep.subr.mxu0 0.0
    %6689 = vmatpush1.xpose.msra.mxu0 %v6656
    %6690 = vmatprep.subr.mxu0 0.0
    %6691 = vmatpush2.xpose.msra.mxu0 0.0
    %6692 = vmatprep.subr.mxu0 0.0
    %6693 = vmatpush2.xpose.msra.mxu0 0.0
    %6694 = vmatprep.subr.mxu0 0.0
    %6695 = vmatpush2.xpose.msra.mxu0 0.0
    %6696 = vmatprep.subr.mxu0 0.0
    %6697 = vmatpush2.xpose.msra.mxu0 0.0
    %6698 = vmatprep.subr.mxu0 0.0
    %6699 = vmatpush2.xpose.msra.mxu0 0.0
    %6700 = vmatprep.subr.mxu0 0.0
    %6701 = vmatpush2.xpose.msra.mxu0 0.0
    %6702 = vmatprep.subr.mxu0 0.0
    %6703 = vmatpush2.xpose.msra.mxu0 0.0
    %6704 = vmatprep.subr.mxu0 0.0
    %6705 = vmatpush2.xpose.msra.mxu0 0.0
    %6706 = vmatprep.subr.mxu0 0.0
    %6707 = vmatpush2.xpose.msra.mxu0 0.0
    %6708 = vmatprep.subr.mxu0 0.0
    %6709 = vmatpush2.xpose.msra.mxu0 0.0
    %6710 = vmatprep.subr.mxu0 0.0
    %6711 = vmatpush2.xpose.msra.mxu0 0.0
    %6712 = vmatprep.subr.mxu0 0.0
    %6713 = vmatpush2.xpose.msra.mxu0 0.0
    %6714 = vmatprep.subr.mxu0 0.0
    %6715 = vmatpush2.xpose.msra.mxu0 0.0
    %6716 = vmatprep.subr.mxu0 0.0
    %6717 = vmatpush2.xpose.msra.mxu0 0.0
    %6718 = vmatprep.subr.mxu0 0.0
    %6719 = vmatpush2.xpose.msra.mxu0 0.0
    %6720 = vmatprep.subr.mxu0 0.0
    %6721 = vmatpush2.xpose.msra.mxu0 0.0
    %6722 = vmatprep.mubr.f32.mxu0 0.0
    %6723 = vmatmul.mubr.f32.gmra.mxu0 %v6069
    %v6724 = vpop.f32.mrf.mxu0
    %v6725 = vadd.f32 0.0, %v6724
    %v6726 = vpop.f32.mrf.mxu0
    %6727 = vdwg.mxu0
    %v6729 = vsel %vm6067, %v6059, 0
    %6731 = vmatprep.subr.mxu0 0.0
    %6732 = vmatpush1.xpose.msra.mxu0 0.0
    %6733 = vmatprep.subr.mxu0 0.0
    %6734 = vmatpush1.xpose.msra.mxu0 0.0
    %6735 = vmatprep.subr.mxu0 0.0
    %6736 = vmatpush1.xpose.msra.mxu0 0.0
    %6737 = vmatprep.subr.mxu0 0.0
    %6738 = vmatpush1.xpose.msra.mxu0 0.0
    %6739 = vmatprep.subr.mxu0 0.0
    %6740 = vmatpush1.xpose.msra.mxu0 0.0
    %6741 = vmatprep.subr.mxu0 0.0
    %6742 = vmatpush1.xpose.msra.mxu0 0.0
    %6743 = vmatprep.subr.mxu0 0.0
    %6744 = vmatpush1.xpose.msra.mxu0 0.0
    %6745 = vmatprep.subr.mxu0 0.0
    %6746 = vmatpush1.xpose.msra.mxu0 0.0
    %6747 = vmatprep.subr.mxu0 0.0
    %6748 = vmatpush1.xpose.msra.mxu0 0.0
    %6749 = vmatprep.subr.mxu0 0.0
    %6750 = vmatpush1.xpose.msra.mxu0 0.0
    %6751 = vmatprep.subr.mxu0 0.0
    %6752 = vmatpush1.xpose.msra.mxu0 0.0
    %6753 = vmatprep.subr.mxu0 0.0
    %6754 = vmatpush1.xpose.msra.mxu0 0.0
    %6755 = vmatprep.subr.mxu0 0.0
    %6756 = vmatpush1.xpose.msra.mxu0 0.0
    %6757 = vmatprep.subr.mxu0 0.0
    %6758 = vmatpush1.xpose.msra.mxu0 0.0
    %6759 = vmatprep.subr.mxu0 0.0
    %6760 = vmatpush1.xpose.msra.mxu0 0.0
    %6761 = vmatprep.subr.mxu0 0.0
    %6762 = vmatpush1.xpose.msra.mxu0 %v6729
    %6763 = vmatprep.subr.mxu0 0.0
    %6764 = vmatpush2.xpose.msra.mxu0 0.0
    %6765 = vmatprep.subr.mxu0 0.0
    %6766 = vmatpush2.xpose.msra.mxu0 0.0
    %6767 = vmatprep.subr.mxu0 0.0
    %6768 = vmatpush2.xpose.msra.mxu0 0.0
    %6769 = vmatprep.subr.mxu0 0.0
    %6770 = vmatpush2.xpose.msra.mxu0 0.0
    %6771 = vmatprep.subr.mxu0 0.0
    %6772 = vmatpush2.xpose.msra.mxu0 0.0
    %6773 = vmatprep.subr.mxu0 0.0
    %6774 = vmatpush2.xpose.msra.mxu0 0.0
    %6775 = vmatprep.subr.mxu0 0.0
    %6776 = vmatpush2.xpose.msra.mxu0 0.0
    %6777 = vmatprep.subr.mxu0 0.0
    %6778 = vmatpush2.xpose.msra.mxu0 0.0
    %6779 = vmatprep.subr.mxu0 0.0
    %6780 = vmatpush2.xpose.msra.mxu0 0.0
    %6781 = vmatprep.subr.mxu0 0.0
    %6782 = vmatpush2.xpose.msra.mxu0 0.0
    %6783 = vmatprep.subr.mxu0 0.0
    %6784 = vmatpush2.xpose.msra.mxu0 0.0
    %6785 = vmatprep.subr.mxu0 0.0
    %6786 = vmatpush2.xpose.msra.mxu0 0.0
    %6787 = vmatprep.subr.mxu0 0.0
    %6788 = vmatpush2.xpose.msra.mxu0 0.0
    %6789 = vmatprep.subr.mxu0 0.0
    %6790 = vmatpush2.xpose.msra.mxu0 0.0
    %6791 = vmatprep.subr.mxu0 0.0
    %6792 = vmatpush2.xpose.msra.mxu0 0.0
    %6793 = vmatprep.subr.mxu0 0.0
    %6794 = vmatpush2.xpose.msra.mxu0 0.0
    %6795 = vmatprep.mubr.f32.mxu0 0.0
    %6796 = vmatmul.mubr.f32.gmra.mxu0 %v6069
    %v6797 = vpop.f32.mrf.mxu0
    %v6798 = vadd.f32 0.0, %v6797
    %v6799 = vpop.f32.mrf.mxu0
    %6800 = vdwg.mxu0
    %v6802 = vsel %vm6067, %v6060, 0
    %6804 = vmatprep.subr.mxu0 0.0
    %6805 = vmatpush1.xpose.msra.mxu0 0.0
    %6806 = vmatprep.subr.mxu0 0.0
    %6807 = vmatpush1.xpose.msra.mxu0 0.0
    %6808 = vmatprep.subr.mxu0 0.0
    %6809 = vmatpush1.xpose.msra.mxu0 0.0
    %6810 = vmatprep.subr.mxu0 0.0
    %6811 = vmatpush1.xpose.msra.mxu0 0.0
    %6812 = vmatprep.subr.mxu0 0.0
    %6813 = vmatpush1.xpose.msra.mxu0 0.0
    %6814 = vmatprep.subr.mxu0 0.0
    %6815 = vmatpush1.xpose.msra.mxu0 0.0
    %6816 = vmatprep.subr.mxu0 0.0
    %6817 = vmatpush1.xpose.msra.mxu0 0.0
    %6818 = vmatprep.subr.mxu0 0.0
    %6819 = vmatpush1.xpose.msra.mxu0 0.0
    %6820 = vmatprep.subr.mxu0 0.0
    %6821 = vmatpush1.xpose.msra.mxu0 0.0
    %6822 = vmatprep.subr.mxu0 0.0
    %6823 = vmatpush1.xpose.msra.mxu0 0.0
    %6824 = vmatprep.subr.mxu0 0.0
    %6825 = vmatpush1.xpose.msra.mxu0 0.0
    %6826 = vmatprep.subr.mxu0 0.0
    %6827 = vmatpush1.xpose.msra.mxu0 0.0
    %6828 = vmatprep.subr.mxu0 0.0
    %6829 = vmatpush1.xpose.msra.mxu0 0.0
    %6830 = vmatprep.subr.mxu0 0.0
    %6831 = vmatpush1.xpose.msra.mxu0 0.0
    %6832 = vmatprep.subr.mxu0 0.0
    %6833 = vmatpush1.xpose.msra.mxu0 0.0
    %6834 = vmatprep.subr.mxu0 0.0
    %6835 = vmatpush1.xpose.msra.mxu0 %v6802
    %6836 = vmatprep.subr.mxu0 0.0
    %6837 = vmatpush2.xpose.msra.mxu0 0.0
    %6838 = vmatprep.subr.mxu0 0.0
    %6839 = vmatpush2.xpose.msra.mxu0 0.0
    %6840 = vmatprep.subr.mxu0 0.0
    %6841 = vmatpush2.xpose.msra.mxu0 0.0
    %6842 = vmatprep.subr.mxu0 0.0
    %6843 = vmatpush2.xpose.msra.mxu0 0.0
    %6844 = vmatprep.subr.mxu0 0.0
    %6845 = vmatpush2.xpose.msra.mxu0 0.0
    %6846 = vmatprep.subr.mxu0 0.0
    %6847 = vmatpush2.xpose.msra.mxu0 0.0
    %6848 = vmatprep.subr.mxu0 0.0
    %6849 = vmatpush2.xpose.msra.mxu0 0.0
    %6850 = vmatprep.subr.mxu0 0.0
    %6851 = vmatpush2.xpose.msra.mxu0 0.0
    %6852 = vmatprep.subr.mxu0 0.0
    %6853 = vmatpush2.xpose.msra.mxu0 0.0
    %6854 = vmatprep.subr.mxu0 0.0
    %6855 = vmatpush2.xpose.msra.mxu0 0.0
    %6856 = vmatprep.subr.mxu0 0.0
    %6857 = vmatpush2.xpose.msra.mxu0 0.0
    %6858 = vmatprep.subr.mxu0 0.0
    %6859 = vmatpush2.xpose.msra.mxu0 0.0
    %6860 = vmatprep.subr.mxu0 0.0
    %6861 = vmatpush2.xpose.msra.mxu0 0.0
    %6862 = vmatprep.subr.mxu0 0.0
    %6863 = vmatpush2.xpose.msra.mxu0 0.0
    %6864 = vmatprep.subr.mxu0 0.0
    %6865 = vmatpush2.xpose.msra.mxu0 0.0
    %6866 = vmatprep.subr.mxu0 0.0
    %6867 = vmatpush2.xpose.msra.mxu0 0.0
    %6868 = vmatprep.mubr.f32.mxu0 0.0
    %6869 = vmatmul.mubr.f32.gmra.mxu0 %v6069
    %v6870 = vpop.f32.mrf.mxu0
    %v6871 = vadd.f32 0.0, %v6870
    %v6872 = vpop.f32.mrf.mxu0
    %6873 = vdwg.mxu0
    %v6875 = vsel %vm6067, %v6061, 0
    %6877 = vmatprep.subr.mxu0 0.0
    %6878 = vmatpush1.xpose.msra.mxu0 0.0
    %6879 = vmatprep.subr.mxu0 0.0
    %6880 = vmatpush1.xpose.msra.mxu0 0.0
    %6881 = vmatprep.subr.mxu0 0.0
    %6882 = vmatpush1.xpose.msra.mxu0 0.0
    %6883 = vmatprep.subr.mxu0 0.0
    %6884 = vmatpush1.xpose.msra.mxu0 0.0
    %6885 = vmatprep.subr.mxu0 0.0
    %6886 = vmatpush1.xpose.msra.mxu0 0.0
    %6887 = vmatprep.subr.mxu0 0.0
    %6888 = vmatpush1.xpose.msra.mxu0 0.0
    %6889 = vmatprep.subr.mxu0 0.0
    %6890 = vmatpush1.xpose.msra.mxu0 0.0
    %6891 = vmatprep.subr.mxu0 0.0
    %6892 = vmatpush1.xpose.msra.mxu0 0.0
    %6893 = vmatprep.subr.mxu0 0.0
    %6894 = vmatpush1.xpose.msra.mxu0 0.0
    %6895 = vmatprep.subr.mxu0 0.0
    %6896 = vmatpush1.xpose.msra.mxu0 0.0
    %6897 = vmatprep.subr.mxu0 0.0
    %6898 = vmatpush1.xpose.msra.mxu0 0.0
    %6899 = vmatprep.subr.mxu0 0.0
    %6900 = vmatpush1.xpose.msra.mxu0 0.0
    %6901 = vmatprep.subr.mxu0 0.0
    %6902 = vmatpush1.xpose.msra.mxu0 0.0
    %6903 = vmatprep.subr.mxu0 0.0
    %6904 = vmatpush1.xpose.msra.mxu0 0.0
    %6905 = vmatprep.subr.mxu0 0.0
    %6906 = vmatpush1.xpose.msra.mxu0 0.0
    %6907 = vmatprep.subr.mxu0 0.0
    %6908 = vmatpush1.xpose.msra.mxu0 %v6875
    %6909 = vmatprep.subr.mxu0 0.0
    %6910 = vmatpush2.xpose.msra.mxu0 0.0
    %6911 = vmatprep.subr.mxu0 0.0
    %6912 = vmatpush2.xpose.msra.mxu0 0.0
    %6913 = vmatprep.subr.mxu0 0.0
    %6914 = vmatpush2.xpose.msra.mxu0 0.0
    %6915 = vmatprep.subr.mxu0 0.0
    %6916 = vmatpush2.xpose.msra.mxu0 0.0
    %6917 = vmatprep.subr.mxu0 0.0
    %6918 = vmatpush2.xpose.msra.mxu0 0.0
    %6919 = vmatprep.subr.mxu0 0.0
    %6920 = vmatpush2.xpose.msra.mxu0 0.0
    %6921 = vmatprep.subr.mxu0 0.0
    %6922 = vmatpush2.xpose.msra.mxu0 0.0
    %6923 = vmatprep.subr.mxu0 0.0
    %6924 = vmatpush2.xpose.msra.mxu0 0.0
    %6925 = vmatprep.subr.mxu0 0.0
    %6926 = vmatpush2.xpose.msra.mxu0 0.0
    %6927 = vmatprep.subr.mxu0 0.0
    %6928 = vmatpush2.xpose.msra.mxu0 0.0
    %6929 = vmatprep.subr.mxu0 0.0
    %6930 = vmatpush2.xpose.msra.mxu0 0.0
    %6931 = vmatprep.subr.mxu0 0.0
    %6932 = vmatpush2.xpose.msra.mxu0 0.0
    %6933 = vmatprep.subr.mxu0 0.0
    %6934 = vmatpush2.xpose.msra.mxu0 0.0
    %6935 = vmatprep.subr.mxu0 0.0
    %6936 = vmatpush2.xpose.msra.mxu0 0.0
    %6937 = vmatprep.subr.mxu0 0.0
    %6938 = vmatpush2.xpose.msra.mxu0 0.0
    %6939 = vmatprep.subr.mxu0 0.0
    %6940 = vmatpush2.xpose.msra.mxu0 0.0
    %6941 = vmatprep.mubr.f32.mxu0 0.0
    %6942 = vmatmul.mubr.f32.gmra.mxu0 %v6069
    %v6943 = vpop.f32.mrf.mxu0
    %v6944 = vadd.f32 0.0, %v6943
    %v6945 = vpop.f32.mrf.mxu0
    %6946 = vdwg.mxu0
    %v6948 = vsel %vm6067, %v6062, 0
    %6950 = vmatprep.subr.mxu0 0.0
    %6951 = vmatpush1.xpose.msra.mxu0 0.0
    %6952 = vmatprep.subr.mxu0 0.0
    %6953 = vmatpush1.xpose.msra.mxu0 0.0
    %6954 = vmatprep.subr.mxu0 0.0
    %6955 = vmatpush1.xpose.msra.mxu0 0.0
    %6956 = vmatprep.subr.mxu0 0.0
    %6957 = vmatpush1.xpose.msra.mxu0 0.0
    %6958 = vmatprep.subr.mxu0 0.0
    %6959 = vmatpush1.xpose.msra.mxu0 0.0
    %6960 = vmatprep.subr.mxu0 0.0
    %6961 = vmatpush1.xpose.msra.mxu0 0.0
    %6962 = vmatprep.subr.mxu0 0.0
    %6963 = vmatpush1.xpose.msra.mxu0 0.0
    %6964 = vmatprep.subr.mxu0 0.0
    %6965 = vmatpush1.xpose.msra.mxu0 0.0
    %6966 = vmatprep.subr.mxu0 0.0
    %6967 = vmatpush1.xpose.msra.mxu0 0.0
    %6968 = vmatprep.subr.mxu0 0.0
    %6969 = vmatpush1.xpose.msra.mxu0 0.0
    %6970 = vmatprep.subr.mxu0 0.0
    %6971 = vmatpush1.xpose.msra.mxu0 0.0
    %6972 = vmatprep.subr.mxu0 0.0
    %6973 = vmatpush1.xpose.msra.mxu0 0.0
    %6974 = vmatprep.subr.mxu0 0.0
    %6975 = vmatpush1.xpose.msra.mxu0 0.0
    %6976 = vmatprep.subr.mxu0 0.0
    %6977 = vmatpush1.xpose.msra.mxu0 0.0
    %6978 = vmatprep.subr.mxu0 0.0
    %6979 = vmatpush1.xpose.msra.mxu0 0.0
    %6980 = vmatprep.subr.mxu0 0.0
    %6981 = vmatpush1.xpose.msra.mxu0 %v6948
    %6982 = vmatprep.subr.mxu0 0.0
    %6983 = vmatpush2.xpose.msra.mxu0 0.0
    %6984 = vmatprep.subr.mxu0 0.0
    %6985 = vmatpush2.xpose.msra.mxu0 0.0
    %6986 = vmatprep.subr.mxu0 0.0
    %6987 = vmatpush2.xpose.msra.mxu0 0.0
    %6988 = vmatprep.subr.mxu0 0.0
    %6989 = vmatpush2.xpose.msra.mxu0 0.0
    %6990 = vmatprep.subr.mxu0 0.0
    %6991 = vmatpush2.xpose.msra.mxu0 0.0
    %6992 = vmatprep.subr.mxu0 0.0
    %6993 = vmatpush2.xpose.msra.mxu0 0.0
    %6994 = vmatprep.subr.mxu0 0.0
    %6995 = vmatpush2.xpose.msra.mxu0 0.0
    %6996 = vmatprep.subr.mxu0 0.0
    %6997 = vmatpush2.xpose.msra.mxu0 0.0
    %6998 = vmatprep.subr.mxu0 0.0
    %6999 = vmatpush2.xpose.msra.mxu0 0.0
    %7000 = vmatprep.subr.mxu0 0.0
    %7001 = vmatpush2.xpose.msra.mxu0 0.0
    %7002 = vmatprep.subr.mxu0 0.0
    %7003 = vmatpush2.xpose.msra.mxu0 0.0
    %7004 = vmatprep.subr.mxu0 0.0
    %7005 = vmatpush2.xpose.msra.mxu0 0.0
    %7006 = vmatprep.subr.mxu0 0.0
    %7007 = vmatpush2.xpose.msra.mxu0 0.0
    %7008 = vmatprep.subr.mxu0 0.0
    %7009 = vmatpush2.xpose.msra.mxu0 0.0
    %7010 = vmatprep.subr.mxu0 0.0
    %7011 = vmatpush2.xpose.msra.mxu0 0.0
    %7012 = vmatprep.subr.mxu0 0.0
    %7013 = vmatpush2.xpose.msra.mxu0 0.0
    %7014 = vmatprep.mubr.f32.mxu0 0.0
    %7015 = vmatmul.mubr.f32.gmra.mxu0 %v6069
    %v7016 = vpop.f32.mrf.mxu0
    %v7017 = vadd.f32 0.0, %v7016
    %v7018 = vpop.f32.mrf.mxu0
    %7019 = vdwg.mxu0
    %v7021 = vsel %vm6067, %v6063, 0
    %7023 = vmatprep.subr.mxu0 0.0
    %7024 = vmatpush1.xpose.msra.mxu0 0.0
    %7025 = vmatprep.subr.mxu0 0.0
    %7026 = vmatpush1.xpose.msra.mxu0 0.0
    %7027 = vmatprep.subr.mxu0 0.0
    %7028 = vmatpush1.xpose.msra.mxu0 0.0
    %7029 = vmatprep.subr.mxu0 0.0
    %7030 = vmatpush1.xpose.msra.mxu0 0.0
    %7031 = vmatprep.subr.mxu0 0.0
    %7032 = vmatpush1.xpose.msra.mxu0 0.0
    %7033 = vmatprep.subr.mxu0 0.0
    %7034 = vmatpush1.xpose.msra.mxu0 0.0
    %7035 = vmatprep.subr.mxu0 0.0
    %7036 = vmatpush1.xpose.msra.mxu0 0.0
    %7037 = vmatprep.subr.mxu0 0.0
    %7038 = vmatpush1.xpose.msra.mxu0 0.0
    %7039 = vmatprep.subr.mxu0 0.0
    %7040 = vmatpush1.xpose.msra.mxu0 0.0
    %7041 = vmatprep.subr.mxu0 0.0
    %7042 = vmatpush1.xpose.msra.mxu0 0.0
    %7043 = vmatprep.subr.mxu0 0.0
    %7044 = vmatpush1.xpose.msra.mxu0 0.0
    %7045 = vmatprep.subr.mxu0 0.0
    %7046 = vmatpush1.xpose.msra.mxu0 0.0
    %7047 = vmatprep.subr.mxu0 0.0
    %7048 = vmatpush1.xpose.msra.mxu0 0.0
    %7049 = vmatprep.subr.mxu0 0.0
    %7050 = vmatpush1.xpose.msra.mxu0 0.0
    %7051 = vmatprep.subr.mxu0 0.0
    %7052 = vmatpush1.xpose.msra.mxu0 0.0
    %7053 = vmatprep.subr.mxu0 0.0
    %7054 = vmatpush1.xpose.msra.mxu0 %v7021
    %7055 = vmatprep.subr.mxu0 0.0
    %7056 = vmatpush2.xpose.msra.mxu0 0.0
    %7057 = vmatprep.subr.mxu0 0.0
    %7058 = vmatpush2.xpose.msra.mxu0 0.0
    %7059 = vmatprep.subr.mxu0 0.0
    %7060 = vmatpush2.xpose.msra.mxu0 0.0
    %7061 = vmatprep.subr.mxu0 0.0
    %7062 = vmatpush2.xpose.msra.mxu0 0.0
    %7063 = vmatprep.subr.mxu0 0.0
    %7064 = vmatpush2.xpose.msra.mxu0 0.0
    %7065 = vmatprep.subr.mxu0 0.0
    %7066 = vmatpush2.xpose.msra.mxu0 0.0
    %7067 = vmatprep.subr.mxu0 0.0
    %7068 = vmatpush2.xpose.msra.mxu0 0.0
    %7069 = vmatprep.subr.mxu0 0.0
    %7070 = vmatpush2.xpose.msra.mxu0 0.0
    %7071 = vmatprep.subr.mxu0 0.0
    %7072 = vmatpush2.xpose.msra.mxu0 0.0
    %7073 = vmatprep.subr.mxu0 0.0
    %7074 = vmatpush2.xpose.msra.mxu0 0.0
    %7075 = vmatprep.subr.mxu0 0.0
    %7076 = vmatpush2.xpose.msra.mxu0 0.0
    %7077 = vmatprep.subr.mxu0 0.0
    %7078 = vmatpush2.xpose.msra.mxu0 0.0
    %7079 = vmatprep.subr.mxu0 0.0
    %7080 = vmatpush2.xpose.msra.mxu0 0.0
    %7081 = vmatprep.subr.mxu0 0.0
    %7082 = vmatpush2.xpose.msra.mxu0 0.0
    %7083 = vmatprep.subr.mxu0 0.0
    %7084 = vmatpush2.xpose.msra.mxu0 0.0
    %7085 = vmatprep.subr.mxu0 0.0
    %7086 = vmatpush2.xpose.msra.mxu0 0.0
    %7087 = vmatprep.mubr.f32.mxu0 0.0
    %7088 = vmatmul.mubr.f32.gmra.mxu0 %v6069
    %v7089 = vpop.f32.mrf.mxu0
    %v7090 = vadd.f32 0.0, %v7089
    %v7091 = vpop.f32.mrf.mxu0
    %7092 = vdwg.mxu0
    %v7094 = vsel %vm6067, %v6064, 0
    %7096 = vmatprep.subr.mxu0 0.0
    %7097 = vmatpush1.xpose.msra.mxu0 0.0
    %7098 = vmatprep.subr.mxu0 0.0
    %7099 = vmatpush1.xpose.msra.mxu0 0.0
    %7100 = vmatprep.subr.mxu0 0.0
    %7101 = vmatpush1.xpose.msra.mxu0 0.0
    %7102 = vmatprep.subr.mxu0 0.0
    %7103 = vmatpush1.xpose.msra.mxu0 0.0
    %7104 = vmatprep.subr.mxu0 0.0
    %7105 = vmatpush1.xpose.msra.mxu0 0.0
    %7106 = vmatprep.subr.mxu0 0.0
    %7107 = vmatpush1.xpose.msra.mxu0 0.0
    %7108 = vmatprep.subr.mxu0 0.0
    %7109 = vmatpush1.xpose.msra.mxu0 0.0
    %7110 = vmatprep.subr.mxu0 0.0
    %7111 = vmatpush1.xpose.msra.mxu0 0.0
    %7112 = vmatprep.subr.mxu0 0.0
    %7113 = vmatpush1.xpose.msra.mxu0 0.0
    %7114 = vmatprep.subr.mxu0 0.0
    %7115 = vmatpush1.xpose.msra.mxu0 0.0
    %7116 = vmatprep.subr.mxu0 0.0
    %7117 = vmatpush1.xpose.msra.mxu0 0.0
    %7118 = vmatprep.subr.mxu0 0.0
    %7119 = vmatpush1.xpose.msra.mxu0 0.0
    %7120 = vmatprep.subr.mxu0 0.0
    %7121 = vmatpush1.xpose.msra.mxu0 0.0
    %7122 = vmatprep.subr.mxu0 0.0
    %7123 = vmatpush1.xpose.msra.mxu0 0.0
    %7124 = vmatprep.subr.mxu0 0.0
    %7125 = vmatpush1.xpose.msra.mxu0 0.0
    %7126 = vmatprep.subr.mxu0 0.0
    %7127 = vmatpush1.xpose.msra.mxu0 %v7094
    %7128 = vmatprep.subr.mxu0 0.0
    %7129 = vmatpush2.xpose.msra.mxu0 0.0
    %7130 = vmatprep.subr.mxu0 0.0
    %7131 = vmatpush2.xpose.msra.mxu0 0.0
    %7132 = vmatprep.subr.mxu0 0.0
    %7133 = vmatpush2.xpose.msra.mxu0 0.0
    %7134 = vmatprep.subr.mxu0 0.0
    %7135 = vmatpush2.xpose.msra.mxu0 0.0
    %7136 = vmatprep.subr.mxu0 0.0
    %7137 = vmatpush2.xpose.msra.mxu0 0.0
    %7138 = vmatprep.subr.mxu0 0.0
    %7139 = vmatpush2.xpose.msra.mxu0 0.0
    %7140 = vmatprep.subr.mxu0 0.0
    %7141 = vmatpush2.xpose.msra.mxu0 0.0
    %7142 = vmatprep.subr.mxu0 0.0
    %7143 = vmatpush2.xpose.msra.mxu0 0.0
    %7144 = vmatprep.subr.mxu0 0.0
    %7145 = vmatpush2.xpose.msra.mxu0 0.0
    %7146 = vmatprep.subr.mxu0 0.0
    %7147 = vmatpush2.xpose.msra.mxu0 0.0
    %7148 = vmatprep.subr.mxu0 0.0
    %7149 = vmatpush2.xpose.msra.mxu0 0.0
    %7150 = vmatprep.subr.mxu0 0.0
    %7151 = vmatpush2.xpose.msra.mxu0 0.0
    %7152 = vmatprep.subr.mxu0 0.0
    %7153 = vmatpush2.xpose.msra.mxu0 0.0
    %7154 = vmatprep.subr.mxu0 0.0
    %7155 = vmatpush2.xpose.msra.mxu0 0.0
    %7156 = vmatprep.subr.mxu0 0.0
    %7157 = vmatpush2.xpose.msra.mxu0 0.0
    %7158 = vmatprep.subr.mxu0 0.0
    %7159 = vmatpush2.xpose.msra.mxu0 0.0
    %7160 = vmatprep.mubr.f32.mxu0 0.0
    %7161 = vmatmul.mubr.f32.gmra.mxu0 %v6069
    %v7162 = vpop.f32.mrf.mxu0
    %v7163 = vadd.f32 0.0, %v7162
    %v7164 = vpop.f32.mrf.mxu0
    %7165 = vdwg.mxu0
    %v7167 = vsel %vm6067, %v6065, 0
    %7169 = vmatprep.subr.mxu0 0.0
    %7170 = vmatpush1.xpose.msra.mxu0 0.0
    %7171 = vmatprep.subr.mxu0 0.0
    %7172 = vmatpush1.xpose.msra.mxu0 0.0
    %7173 = vmatprep.subr.mxu0 0.0
    %7174 = vmatpush1.xpose.msra.mxu0 0.0
    %7175 = vmatprep.subr.mxu0 0.0
    %7176 = vmatpush1.xpose.msra.mxu0 0.0
    %7177 = vmatprep.subr.mxu0 0.0
    %7178 = vmatpush1.xpose.msra.mxu0 0.0
    %7179 = vmatprep.subr.mxu0 0.0
    %7180 = vmatpush1.xpose.msra.mxu0 0.0
    %7181 = vmatprep.subr.mxu0 0.0
    %7182 = vmatpush1.xpose.msra.mxu0 0.0
    %7183 = vmatprep.subr.mxu0 0.0
    %7184 = vmatpush1.xpose.msra.mxu0 0.0
    %7185 = vmatprep.subr.mxu0 0.0
    %7186 = vmatpush1.xpose.msra.mxu0 0.0
    %7187 = vmatprep.subr.mxu0 0.0
    %7188 = vmatpush1.xpose.msra.mxu0 0.0
    %7189 = vmatprep.subr.mxu0 0.0
    %7190 = vmatpush1.xpose.msra.mxu0 0.0
    %7191 = vmatprep.subr.mxu0 0.0
    %7192 = vmatpush1.xpose.msra.mxu0 0.0
    %7193 = vmatprep.subr.mxu0 0.0
    %7194 = vmatpush1.xpose.msra.mxu0 0.0
    %7195 = vmatprep.subr.mxu0 0.0
    %7196 = vmatpush1.xpose.msra.mxu0 0.0
    %7197 = vmatprep.subr.mxu0 0.0
    %7198 = vmatpush1.xpose.msra.mxu0 0.0
    %7199 = vmatprep.subr.mxu0 0.0
    %7200 = vmatpush1.xpose.msra.mxu0 %v7167
    %7201 = vmatprep.subr.mxu0 0.0
    %7202 = vmatpush2.xpose.msra.mxu0 0.0
    %7203 = vmatprep.subr.mxu0 0.0
    %7204 = vmatpush2.xpose.msra.mxu0 0.0
    %7205 = vmatprep.subr.mxu0 0.0
    %7206 = vmatpush2.xpose.msra.mxu0 0.0
    %7207 = vmatprep.subr.mxu0 0.0
    %7208 = vmatpush2.xpose.msra.mxu0 0.0
    %7209 = vmatprep.subr.mxu0 0.0
    %7210 = vmatpush2.xpose.msra.mxu0 0.0
    %7211 = vmatprep.subr.mxu0 0.0
    %7212 = vmatpush2.xpose.msra.mxu0 0.0
    %7213 = vmatprep.subr.mxu0 0.0
    %7214 = vmatpush2.xpose.msra.mxu0 0.0
    %7215 = vmatprep.subr.mxu0 0.0
    %7216 = vmatpush2.xpose.msra.mxu0 0.0
    %7217 = vmatprep.subr.mxu0 0.0
    %7218 = vmatpush2.xpose.msra.mxu0 0.0
    %7219 = vmatprep.subr.mxu0 0.0
    %7220 = vmatpush2.xpose.msra.mxu0 0.0
    %7221 = vmatprep.subr.mxu0 0.0
    %7222 = vmatpush2.xpose.msra.mxu0 0.0
    %7223 = vmatprep.subr.mxu0 0.0
    %7224 = vmatpush2.xpose.msra.mxu0 0.0
    %7225 = vmatprep.subr.mxu0 0.0
    %7226 = vmatpush2.xpose.msra.mxu0 0.0
    %7227 = vmatprep.subr.mxu0 0.0
    %7228 = vmatpush2.xpose.msra.mxu0 0.0
    %7229 = vmatprep.subr.mxu0 0.0
    %7230 = vmatpush2.xpose.msra.mxu0 0.0
    %7231 = vmatprep.subr.mxu0 0.0
    %7232 = vmatpush2.xpose.msra.mxu0 0.0
    %7233 = vmatprep.mubr.f32.mxu0 0.0
    %7234 = vmatmul.mubr.f32.gmra.mxu0 %v6069
    %v7235 = vpop.f32.mrf.mxu0
    %v7236 = vadd.f32 0.0, %v7235
    %v7237 = vpop.f32.mrf.mxu0
    %7238 = vdwg.mxu0
    %v7239 = vmax.f32 %v6141, 1e-06
    %v7240 = vmax.f32 %v6214, 1e-06
    %v7241 = vmax.f32 %v6287, 1e-06
    %v7242 = vmax.f32 %v6360, 1e-06
    %v7243 = vmax.f32 %v6433, 1e-06
    %v7244 = vmax.f32 %v6506, 1e-06
    %v7245 = vmax.f32 %v6579, 1e-06
    %v7246 = vmax.f32 %v6652, 1e-06
    %v7247 = vmax.f32 %v6725, 1e-06
    %v7248 = vmax.f32 %v6798, 1e-06
    %v7249 = vmax.f32 %v6871, 1e-06
    %v7250 = vmax.f32 %v6944, 1e-06
    %v7251 = vmax.f32 %v7017, 1e-06
    %v7252 = vmax.f32 %v7090, 1e-06
    %v7253 = vmax.f32 %v7163, 1e-06
    %v7254 = vmax.f32 %v7236, 1e-06
    %v7255 = vlog2.pop %v7239
    %v7256 = vmul.f32 %v7255, 0.6931472
    %v7257 = vlog2.pop %v7240
    %v7258 = vmul.f32 %v7257, 0.6931472
    %v7259 = vlog2.pop %v7241
    %v7260 = vmul.f32 %v7259, 0.6931472
    %v7261 = vlog2.pop %v7242
    %v7262 = vmul.f32 %v7261, 0.6931472
    %v7263 = vlog2.pop %v7243
    %v7264 = vmul.f32 %v7263, 0.6931472
    %v7265 = vlog2.pop %v7244
    %v7266 = vmul.f32 %v7265, 0.6931472
    %v7267 = vlog2.pop %v7245
    %v7268 = vmul.f32 %v7267, 0.6931472
    %v7269 = vlog2.pop %v7246
    %v7270 = vmul.f32 %v7269, 0.6931472
    %v7271 = vlog2.pop %v7247
    %v7272 = vmul.f32 %v7271, 0.6931472
    %v7273 = vlog2.pop %v7248
    %v7274 = vmul.f32 %v7273, 0.6931472
    %v7275 = vlog2.pop %v7249
    %v7276 = vmul.f32 %v7275, 0.6931472
    %v7277 = vlog2.pop %v7250
    %v7278 = vmul.f32 %v7277, 0.6931472
    %v7279 = vlog2.pop %v7251
    %v7280 = vmul.f32 %v7279, 0.6931472
    %v7281 = vlog2.pop %v7252
    %v7282 = vmul.f32 %v7281, 0.6931472
    %v7283 = vlog2.pop %v7253
    %v7284 = vmul.f32 %v7283, 0.6931472
    %v7285 = vlog2.pop %v7254
    %v7286 = vmul.f32 %v7285, 0.6931472
    %v7287 = vld [vmem:[#allocation2] sm:$0xff]
    %s7288 = scalar_lea.vmem [#allocation2], 8
    %v7289 = vld [vmem:[%s7288] sm:$0xff]
    %v7306 = vrot.slane %v7256, 1
    %vm7307 = vcmask 1041409
    %v7308 = vsel %vm7307, %v7258, %v7306
    %v7309 = vrot.slane %v7260, 7
    %vm7310 = vcmask 1042434
    %v7311 = vsel %vm7310, %v7309, %v7308
    %v7312 = vrot.slane %v7262, 6
    %vm7313 = vcmask 1043459
    %v7314 = vsel %vm7313, %v7312, %v7311
    %v7315 = vrot.slane %v7264, 5
    %vm7316 = vcmask 1044484
    %v7317 = vsel %vm7316, %v7315, %v7314
    %v7318 = vrot.slane %v7266, 4
    %vm7319 = vcmask 1045509
    %v7320 = vsel %vm7319, %v7318, %v7317
    %v7321 = vrot.slane %v7268, 3
    %vm7322 = vcmask 1046534
    %v7323 = vsel %vm7322, %v7321, %v7320
    %v7324 = vrot.slane %v7270, 2
    %vm7325 = vcmask 1047559
    %v7326 = vsel %vm7325, %v7324, %v7323
    %v7327 = vrot.slane %v7272, 1
    %v7328 = vsel %vm7307, %v7274, %v7327
    %v7329 = vrot.slane %v7276, 7
    %v7330 = vsel %vm7310, %v7329, %v7328
    %v7331 = vrot.slane %v7278, 6
    %v7332 = vsel %vm7313, %v7331, %v7330
    %v7333 = vrot.slane %v7280, 5
    %v7334 = vsel %vm7316, %v7333, %v7332
    %v7335 = vrot.slane %v7282, 4
    %v7336 = vsel %vm7319, %v7335, %v7334
    %v7337 = vrot.slane %v7284, 3
    %v7338 = vsel %vm7322, %v7337, %v7336
    %v7339 = vrot.slane %v7286, 2
    %v7340 = vsel %vm7325, %v7339, %v7338
    %vm7341 = vcmask 64512
    %v7342 = vsel %vm7341, %v7326, 0
    %v7344 = vsel %vm7341, %v7340, 0
    %7346 = vmatprep.subr.mxu0 0.0
    %7347 = vmatpush1.msra.mxu0 0.0
    %7348 = vmatprep.subr.mxu0 0.0
    %7349 = vmatpush1.msra.mxu0 0.0
    %7350 = vmatprep.subr.mxu0 0.0
    %7351 = vmatpush1.msra.mxu0 0.0
    %7352 = vmatprep.subr.mxu0 0.0
    %7353 = vmatpush1.msra.mxu0 0.0
    %7354 = vmatprep.subr.mxu0 0.0
    %7355 = vmatpush1.msra.mxu0 0.0
    %7356 = vmatprep.subr.mxu0 0.0
    %7357 = vmatpush1.msra.mxu0 0.0
    %7358 = vmatprep.subr.mxu0 0.0
    %7359 = vmatpush1.msra.mxu0 0.0
    %7360 = vmatprep.subr.mxu0 0.0
    %7361 = vmatpush1.msra.mxu0 0.0
    %7362 = vmatprep.subr.mxu0 0.0
    %7363 = vmatpush1.msra.mxu0 0.0
    %7364 = vmatprep.subr.mxu0 0.0
    %7365 = vmatpush1.msra.mxu0 0.0
    %7366 = vmatprep.subr.mxu0 0.0
    %7367 = vmatpush1.msra.mxu0 0.0
    %7368 = vmatprep.subr.mxu0 0.0
    %7369 = vmatpush1.msra.mxu0 0.0
    %7370 = vmatprep.subr.mxu0 0.0
    %7371 = vmatpush1.msra.mxu0 0.0
    %7372 = vmatprep.subr.mxu0 0.0
    %7373 = vmatpush1.msra.mxu0 0.0
    %7374 = vmatprep.subr.mxu0 0.0
    %7375 = vmatpush1.msra.mxu0 0.0
    %7376 = vmatprep.subr.mxu0 0.0
    %7377 = vmatpush1.msra.mxu0 %v7289
    %7378 = vmatprep.subr.mxu0 0.0
    %7379 = vmatpush2.msra.mxu0 0.0
    %7380 = vmatprep.subr.mxu0 0.0
    %7381 = vmatpush2.msra.mxu0 0.0
    %7382 = vmatprep.subr.mxu0 0.0
    %7383 = vmatpush2.msra.mxu0 0.0
    %7384 = vmatprep.subr.mxu0 0.0
    %7385 = vmatpush2.msra.mxu0 0.0
    %7386 = vmatprep.subr.mxu0 0.0
    %7387 = vmatpush2.msra.mxu0 0.0
    %7388 = vmatprep.subr.mxu0 0.0
    %7389 = vmatpush2.msra.mxu0 0.0
    %7390 = vmatprep.subr.mxu0 0.0
    %7391 = vmatpush2.msra.mxu0 0.0
    %7392 = vmatprep.subr.mxu0 0.0
    %7393 = vmatpush2.msra.mxu0 0.0
    %7394 = vmatprep.subr.mxu0 0.0
    %7395 = vmatpush2.msra.mxu0 0.0
    %7396 = vmatprep.subr.mxu0 0.0
    %7397 = vmatpush2.msra.mxu0 0.0
    %7398 = vmatprep.subr.mxu0 0.0
    %7399 = vmatpush2.msra.mxu0 0.0
    %7400 = vmatprep.subr.mxu0 0.0
    %7401 = vmatpush2.msra.mxu0 0.0
    %7402 = vmatprep.subr.mxu0 0.0
    %7403 = vmatpush2.msra.mxu0 0.0
    %7404 = vmatprep.subr.mxu0 0.0
    %7405 = vmatpush2.msra.mxu0 0.0
    %7406 = vmatprep.subr.mxu0 0.0
    %7407 = vmatpush2.msra.mxu0 0.0
    %7408 = vmatprep.subr.mxu0 0.0
    %7409 = vmatpush2.msra.mxu0 0.0
    %7410 = vmatprep.mubr.f32.mxu0 0.0
    %7411 = vmatmul.mubr.f32.gmra.mxu0 %v7342
    %v7412 = vpop.f32.mrf.mxu0
    %v7413 = vadd.f32 0.0, %v7412
    %v7414 = vpop.f32.mrf.mxu0
    %7415 = vmatprep.mubr.f32.mxu0 0.0
    %7416 = vmatmul.mubr.f32.gmra.mxu0 %v7344
    %v7417 = vpop.f32.mrf.mxu0
    %v7418 = vadd.f32 0.0, %v7417
    %v7419 = vpop.f32.mrf.mxu0
    %7420 = vdwg.mxu0
    %s7421 = scalar_lea.vmem [#allocation2], 16
    %v7422 = vld [vmem:[%s7421] sm:$0xff]
    %s7423 = scalar_lea.vmem [#allocation2], 24
    %v7424 = vld [vmem:[%s7423] sm:$0xff]
    %v7425 = vrot.slane %v7256, 3
    %v7426 = vrot.slane %v7258, 2
    %v7427 = vsel %vm7307, %v7426, %v7425
    %v7428 = vrot.slane %v7260, 1
    %v7429 = vsel %vm7310, %v7428, %v7427
    %v7430 = vsel %vm7313, %v7262, %v7429
    %v7431 = vrot.slane %v7264, 7
    %v7432 = vsel %vm7316, %v7431, %v7430
    %v7433 = vrot.slane %v7266, 6
    %v7434 = vsel %vm7319, %v7433, %v7432
    %v7435 = vrot.slane %v7268, 5
    %v7436 = vsel %vm7322, %v7435, %v7434
    %v7437 = vrot.slane %v7270, 4
    %v7438 = vsel %vm7325, %v7437, %v7436
    %v7439 = vrot.slane %v7272, 3
    %v7440 = vrot.slane %v7274, 2
    %v7441 = vsel %vm7307, %v7440, %v7439
    %v7442 = vrot.slane %v7276, 1
    %v7443 = vsel %vm7310, %v7442, %v7441
    %v7444 = vsel %vm7313, %v7278, %v7443
    %v7445 = vrot.slane %v7280, 7
    %v7446 = vsel %vm7316, %v7445, %v7444
    %v7447 = vrot.slane %v7282, 6
    %v7448 = vsel %vm7319, %v7447, %v7446
    %v7449 = vrot.slane %v7284, 5
    %v7450 = vsel %vm7322, %v7449, %v7448
    %v7451 = vrot.slane %v7286, 4
    %v7452 = vsel %vm7325, %v7451, %v7450
    %v7453 = vsel %vm7341, %v7438, 0
    %v7455 = vsel %vm7341, %v7452, 0
    %7457 = vmatprep.subr.mxu0 0.0
    %7458 = vmatpush1.msra.mxu0 0.0
    %7459 = vmatprep.subr.mxu0 0.0
    %7460 = vmatpush1.msra.mxu0 0.0
    %7461 = vmatprep.subr.mxu0 0.0
    %7462 = vmatpush1.msra.mxu0 0.0
    %7463 = vmatprep.subr.mxu0 0.0
    %7464 = vmatpush1.msra.mxu0 0.0
    %7465 = vmatprep.subr.mxu0 0.0
    %7466 = vmatpush1.msra.mxu0 0.0
    %7467 = vmatprep.subr.mxu0 0.0
    %7468 = vmatpush1.msra.mxu0 0.0
    %7469 = vmatprep.subr.mxu0 0.0
    %7470 = vmatpush1.msra.mxu0 0.0
    %7471 = vmatprep.subr.mxu0 0.0
    %7472 = vmatpush1.msra.mxu0 0.0
    %7473 = vmatprep.subr.mxu0 0.0
    %7474 = vmatpush1.msra.mxu0 0.0
    %7475 = vmatprep.subr.mxu0 0.0
    %7476 = vmatpush1.msra.mxu0 0.0
    %7477 = vmatprep.subr.mxu0 0.0
    %7478 = vmatpush1.msra.mxu0 0.0
    %7479 = vmatprep.subr.mxu0 0.0
    %7480 = vmatpush1.msra.mxu0 0.0
    %7481 = vmatprep.subr.mxu0 0.0
    %7482 = vmatpush1.msra.mxu0 0.0
    %7483 = vmatprep.subr.mxu0 0.0
    %7484 = vmatpush1.msra.mxu0 0.0
    %7485 = vmatprep.subr.mxu0 0.0
    %7486 = vmatpush1.msra.mxu0 0.0
    %7487 = vmatprep.subr.mxu0 0.0
    %7488 = vmatpush1.msra.mxu0 %v7424
    %7489 = vmatprep.subr.mxu0 0.0
    %7490 = vmatpush2.msra.mxu0 0.0
    %7491 = vmatprep.subr.mxu0 0.0
    %7492 = vmatpush2.msra.mxu0 0.0
    %7493 = vmatprep.subr.mxu0 0.0
    %7494 = vmatpush2.msra.mxu0 0.0
    %7495 = vmatprep.subr.mxu0 0.0
    %7496 = vmatpush2.msra.mxu0 0.0
    %7497 = vmatprep.subr.mxu0 0.0
    %7498 = vmatpush2.msra.mxu0 0.0
    %7499 = vmatprep.subr.mxu0 0.0
    %7500 = vmatpush2.msra.mxu0 0.0
    %7501 = vmatprep.subr.mxu0 0.0
    %7502 = vmatpush2.msra.mxu0 0.0
    %7503 = vmatprep.subr.mxu0 0.0
    %7504 = vmatpush2.msra.mxu0 0.0
    %7505 = vmatprep.subr.mxu0 0.0
    %7506 = vmatpush2.msra.mxu0 0.0
    %7507 = vmatprep.subr.mxu0 0.0
    %7508 = vmatpush2.msra.mxu0 0.0
    %7509 = vmatprep.subr.mxu0 0.0
    %7510 = vmatpush2.msra.mxu0 0.0
    %7511 = vmatprep.subr.mxu0 0.0
    %7512 = vmatpush2.msra.mxu0 0.0
    %7513 = vmatprep.subr.mxu0 0.0
    %7514 = vmatpush2.msra.mxu0 0.0
    %7515 = vmatprep.subr.mxu0 0.0
    %7516 = vmatpush2.msra.mxu0 0.0
    %7517 = vmatprep.subr.mxu0 0.0
    %7518 = vmatpush2.msra.mxu0 0.0
    %7519 = vmatprep.subr.mxu0 0.0
    %7520 = vmatpush2.msra.mxu0 0.0
    %7521 = vmatprep.mubr.f32.mxu0 0.0
    %7522 = vmatmul.mubr.f32.gmra.mxu0 %v7453
    %v7523 = vpop.f32.mrf.mxu0
    %v7524 = vadd.f32 0.0, %v7523
    %v7525 = vpop.f32.mrf.mxu0
    %7526 = vmatprep.mubr.f32.mxu0 0.0
    %7527 = vmatmul.mubr.f32.gmra.mxu0 %v7455
    %v7528 = vpop.f32.mrf.mxu0
    %v7529 = vadd.f32 0.0, %v7528
    %v7530 = vpop.f32.mrf.mxu0
    %7531 = vdwg.mxu0
    %s7532 = scalar_lea.vmem [#allocation2], 32
    %v7533 = vld [vmem:[%s7532] sm:$0xff]
    %s7534 = scalar_lea.vmem [#allocation2], 40
    %v7535 = vld [vmem:[%s7534] sm:$0xff]
    %v7536 = vrot.slane %v7256, 5
    %v7537 = vrot.slane %v7258, 4
    %v7538 = vsel %vm7307, %v7537, %v7536
    %v7539 = vrot.slane %v7260, 3
    %v7540 = vsel %vm7310, %v7539, %v7538
    %v7541 = vrot.slane %v7262, 2
    %v7542 = vsel %vm7313, %v7541, %v7540
    %v7543 = vrot.slane %v7264, 1
    %v7544 = vsel %vm7316, %v7543, %v7542
    %v7545 = vsel %vm7319, %v7266, %v7544
    %v7546 = vrot.slane %v7268, 7
    %v7547 = vsel %vm7322, %v7546, %v7545
    %v7548 = vrot.slane %v7270, 6
    %v7549 = vsel %vm7325, %v7548, %v7547
    %v7550 = vrot.slane %v7272, 5
    %v7551 = vrot.slane %v7274, 4
    %v7552 = vsel %vm7307, %v7551, %v7550
    %v7553 = vrot.slane %v7276, 3
    %v7554 = vsel %vm7310, %v7553, %v7552
    %v7555 = vrot.slane %v7278, 2
    %v7556 = vsel %vm7313, %v7555, %v7554
    %v7557 = vrot.slane %v7280, 1
    %v7558 = vsel %vm7316, %v7557, %v7556
    %v7559 = vsel %vm7319, %v7282, %v7558
    %v7560 = vrot.slane %v7284, 7
    %v7561 = vsel %vm7322, %v7560, %v7559
    %v7562 = vrot.slane %v7286, 6
    %v7563 = vsel %vm7325, %v7562, %v7561
    %v7564 = vsel %vm7341, %v7549, 0
    %v7566 = vsel %vm7341, %v7563, 0
    %7568 = vmatprep.subr.mxu0 0.0
    %7569 = vmatpush1.msra.mxu0 0.0
    %7570 = vmatprep.subr.mxu0 0.0
    %7571 = vmatpush1.msra.mxu0 0.0
    %7572 = vmatprep.subr.mxu0 0.0
    %7573 = vmatpush1.msra.mxu0 0.0
    %7574 = vmatprep.subr.mxu0 0.0
    %7575 = vmatpush1.msra.mxu0 0.0
    %7576 = vmatprep.subr.mxu0 0.0
    %7577 = vmatpush1.msra.mxu0 0.0
    %7578 = vmatprep.subr.mxu0 0.0
    %7579 = vmatpush1.msra.mxu0 0.0
    %7580 = vmatprep.subr.mxu0 0.0
    %7581 = vmatpush1.msra.mxu0 0.0
    %7582 = vmatprep.subr.mxu0 0.0
    %7583 = vmatpush1.msra.mxu0 0.0
    %7584 = vmatprep.subr.mxu0 0.0
    %7585 = vmatpush1.msra.mxu0 0.0
    %7586 = vmatprep.subr.mxu0 0.0
    %7587 = vmatpush1.msra.mxu0 0.0
    %7588 = vmatprep.subr.mxu0 0.0
    %7589 = vmatpush1.msra.mxu0 0.0
    %7590 = vmatprep.subr.mxu0 0.0
    %7591 = vmatpush1.msra.mxu0 0.0
    %7592 = vmatprep.subr.mxu0 0.0
    %7593 = vmatpush1.msra.mxu0 0.0
    %7594 = vmatprep.subr.mxu0 0.0
    %7595 = vmatpush1.msra.mxu0 0.0
    %7596 = vmatprep.subr.mxu0 0.0
    %7597 = vmatpush1.msra.mxu0 0.0
    %7598 = vmatprep.subr.mxu0 0.0
    %7599 = vmatpush1.msra.mxu0 %v7535
    %7600 = vmatprep.subr.mxu0 0.0
    %7601 = vmatpush2.msra.mxu0 0.0
    %7602 = vmatprep.subr.mxu0 0.0
    %7603 = vmatpush2.msra.mxu0 0.0
    %7604 = vmatprep.subr.mxu0 0.0
    %7605 = vmatpush2.msra.mxu0 0.0
    %7606 = vmatprep.subr.mxu0 0.0
    %7607 = vmatpush2.msra.mxu0 0.0
    %7608 = vmatprep.subr.mxu0 0.0
    %7609 = vmatpush2.msra.mxu0 0.0
    %7610 = vmatprep.subr.mxu0 0.0
    %7611 = vmatpush2.msra.mxu0 0.0
    %7612 = vmatprep.subr.mxu0 0.0
    %7613 = vmatpush2.msra.mxu0 0.0
    %7614 = vmatprep.subr.mxu0 0.0
    %7615 = vmatpush2.msra.mxu0 0.0
    %7616 = vmatprep.subr.mxu0 0.0
    %7617 = vmatpush2.msra.mxu0 0.0
    %7618 = vmatprep.subr.mxu0 0.0
    %7619 = vmatpush2.msra.mxu0 0.0
    %7620 = vmatprep.subr.mxu0 0.0
    %7621 = vmatpush2.msra.mxu0 0.0
    %7622 = vmatprep.subr.mxu0 0.0
    %7623 = vmatpush2.msra.mxu0 0.0
    %7624 = vmatprep.subr.mxu0 0.0
    %7625 = vmatpush2.msra.mxu0 0.0
    %7626 = vmatprep.subr.mxu0 0.0
    %7627 = vmatpush2.msra.mxu0 0.0
    %7628 = vmatprep.subr.mxu0 0.0
    %7629 = vmatpush2.msra.mxu0 0.0
    %7630 = vmatprep.subr.mxu0 0.0
    %7631 = vmatpush2.msra.mxu0 0.0
    %7632 = vmatprep.mubr.f32.mxu0 0.0
    %7633 = vmatmul.mubr.f32.gmra.mxu0 %v7564
    %v7634 = vpop.f32.mrf.mxu0
    %v7635 = vadd.f32 0.0, %v7634
    %v7636 = vpop.f32.mrf.mxu0
    %7637 = vmatprep.mubr.f32.mxu0 0.0
    %7638 = vmatmul.mubr.f32.gmra.mxu0 %v7566
    %v7639 = vpop.f32.mrf.mxu0
    %v7640 = vadd.f32 0.0, %v7639
    %v7641 = vpop.f32.mrf.mxu0
    %7642 = vdwg.mxu0
    %v7643 = vrot.slane %v7258, 7
    %v7644 = vsel %vm7307, %v7643, %v7256
    %v7645 = vrot.slane %v7260, 6
    %v7646 = vsel %vm7310, %v7645, %v7644
    %v7647 = vrot.slane %v7262, 5
    %v7648 = vsel %vm7313, %v7647, %v7646
    %v7649 = vrot.slane %v7264, 4
    %v7650 = vsel %vm7316, %v7649, %v7648
    %v7651 = vrot.slane %v7266, 3
    %v7652 = vsel %vm7319, %v7651, %v7650
    %v7653 = vrot.slane %v7268, 2
    %v7654 = vsel %vm7322, %v7653, %v7652
    %v7655 = vrot.slane %v7270, 1
    %v7656 = vsel %vm7325, %v7655, %v7654
    %v7657 = vrot.slane %v7274, 7
    %v7658 = vsel %vm7307, %v7657, %v7272
    %v7659 = vrot.slane %v7276, 6
    %v7660 = vsel %vm7310, %v7659, %v7658
    %v7661 = vrot.slane %v7278, 5
    %v7662 = vsel %vm7313, %v7661, %v7660
    %v7663 = vrot.slane %v7280, 4
    %v7664 = vsel %vm7316, %v7663, %v7662
    %v7665 = vrot.slane %v7282, 3
    %v7666 = vsel %vm7319, %v7665, %v7664
    %v7667 = vrot.slane %v7284, 2
    %v7668 = vsel %vm7322, %v7667, %v7666
    %v7669 = vrot.slane %v7286, 1
    %v7670 = vsel %vm7325, %v7669, %v7668
    %v7671 = vsel %vm7341, %v7656, 0
    %v7673 = vsel %vm7341, %v7670, 0
    %7675 = vmatprep.subr.mxu0 0.0
    %7676 = vmatpush1.msra.mxu0 0.0
    %7677 = vmatprep.subr.mxu0 0.0
    %7678 = vmatpush1.msra.mxu0 0.0
    %7679 = vmatprep.subr.mxu0 0.0
    %7680 = vmatpush1.msra.mxu0 0.0
    %7681 = vmatprep.subr.mxu0 0.0
    %7682 = vmatpush1.msra.mxu0 0.0
    %7683 = vmatprep.subr.mxu0 0.0
    %7684 = vmatpush1.msra.mxu0 0.0
    %7685 = vmatprep.subr.mxu0 0.0
    %7686 = vmatpush1.msra.mxu0 0.0
    %7687 = vmatprep.subr.mxu0 0.0
    %7688 = vmatpush1.msra.mxu0 0.0
    %7689 = vmatprep.subr.mxu0 0.0
    %7690 = vmatpush1.msra.mxu0 0.0
    %7691 = vmatprep.subr.mxu0 0.0
    %7692 = vmatpush1.msra.mxu0 0.0
    %7693 = vmatprep.subr.mxu0 0.0
    %7694 = vmatpush1.msra.mxu0 0.0
    %7695 = vmatprep.subr.mxu0 0.0
    %7696 = vmatpush1.msra.mxu0 0.0
    %7697 = vmatprep.subr.mxu0 0.0
    %7698 = vmatpush1.msra.mxu0 0.0
    %7699 = vmatprep.subr.mxu0 0.0
    %7700 = vmatpush1.msra.mxu0 0.0
    %7701 = vmatprep.subr.mxu0 0.0
    %7702 = vmatpush1.msra.mxu0 0.0
    %7703 = vmatprep.subr.mxu0 0.0
    %7704 = vmatpush1.msra.mxu0 0.0
    %7705 = vmatprep.subr.mxu0 0.0
    %7706 = vmatpush1.msra.mxu0 %v7287
    %7707 = vmatprep.subr.mxu0 0.0
    %7708 = vmatpush2.msra.mxu0 0.0
    %7709 = vmatprep.subr.mxu0 0.0
    %7710 = vmatpush2.msra.mxu0 0.0
    %7711 = vmatprep.subr.mxu0 0.0
    %7712 = vmatpush2.msra.mxu0 0.0
    %7713 = vmatprep.subr.mxu0 0.0
    %7714 = vmatpush2.msra.mxu0 0.0
    %7715 = vmatprep.subr.mxu0 0.0
    %7716 = vmatpush2.msra.mxu0 0.0
    %7717 = vmatprep.subr.mxu0 0.0
    %7718 = vmatpush2.msra.mxu0 0.0
    %7719 = vmatprep.subr.mxu0 0.0
    %7720 = vmatpush2.msra.mxu0 0.0
    %7721 = vmatprep.subr.mxu0 0.0
    %7722 = vmatpush2.msra.mxu0 0.0
    %7723 = vmatprep.subr.mxu0 0.0
    %7724 = vmatpush2.msra.mxu0 0.0
    %7725 = vmatprep.subr.mxu0 0.0
    %7726 = vmatpush2.msra.mxu0 0.0
    %7727 = vmatprep.subr.mxu0 0.0
    %7728 = vmatpush2.msra.mxu0 0.0
    %7729 = vmatprep.subr.mxu0 0.0
    %7730 = vmatpush2.msra.mxu0 0.0
    %7731 = vmatprep.subr.mxu0 0.0
    %7732 = vmatpush2.msra.mxu0 0.0
    %7733 = vmatprep.subr.mxu0 0.0
    %7734 = vmatpush2.msra.mxu0 0.0
    %7735 = vmatprep.subr.mxu0 0.0
    %7736 = vmatpush2.msra.mxu0 0.0
    %7737 = vmatprep.subr.mxu0 0.0
    %7738 = vmatpush2.msra.mxu0 0.0
    %7739 = vmatprep.mubr.f32.mxu0 0.0
    %7740 = vmatmul.mubr.f32.gmra.mxu0 %v7671
    %v7741 = vpop.f32.mrf.mxu0
    %v7742 = vadd.f32 %v7413, %v7741
    %v7743 = vpop.f32.mrf.mxu0
    %7744 = vmatprep.mubr.f32.mxu0 0.0
    %7745 = vmatmul.mubr.f32.gmra.mxu0 %v7673
    %v7746 = vpop.f32.mrf.mxu0
    %v7747 = vadd.f32 %v7418, %v7746
    %v7748 = vpop.f32.mrf.mxu0
    %7749 = vdwg.mxu0
    %v7750 = vrot.slane %v7256, 2
    %v7751 = vrot.slane %v7258, 1
    %v7752 = vsel %vm7307, %v7751, %v7750
    %v7753 = vsel %vm7310, %v7260, %v7752
    %v7754 = vrot.slane %v7262, 7
    %v7755 = vsel %vm7313, %v7754, %v7753
    %v7756 = vrot.slane %v7264, 6
    %v7757 = vsel %vm7316, %v7756, %v7755
    %v7758 = vrot.slane %v7266, 5
    %v7759 = vsel %vm7319, %v7758, %v7757
    %v7760 = vrot.slane %v7268, 4
    %v7761 = vsel %vm7322, %v7760, %v7759
    %v7762 = vrot.slane %v7270, 3
    %v7763 = vsel %vm7325, %v7762, %v7761
    %v7764 = vrot.slane %v7272, 2
    %v7765 = vrot.slane %v7274, 1
    %v7766 = vsel %vm7307, %v7765, %v7764
    %v7767 = vsel %vm7310, %v7276, %v7766
    %v7768 = vrot.slane %v7278, 7
    %v7769 = vsel %vm7313, %v7768, %v7767
    %v7770 = vrot.slane %v7280, 6
    %v7771 = vsel %vm7316, %v7770, %v7769
    %v7772 = vrot.slane %v7282, 5
    %v7773 = vsel %vm7319, %v7772, %v7771
    %v7774 = vrot.slane %v7284, 4
    %v7775 = vsel %vm7322, %v7774, %v7773
    %v7776 = vrot.slane %v7286, 3
    %v7777 = vsel %vm7325, %v7776, %v7775
    %v7778 = vsel %vm7341, %v7763, 0
    %v7780 = vsel %vm7341, %v7777, 0
    %7782 = vmatprep.subr.mxu0 0.0
    %7783 = vmatpush1.msra.mxu0 0.0
    %7784 = vmatprep.subr.mxu0 0.0
    %7785 = vmatpush1.msra.mxu0 0.0
    %7786 = vmatprep.subr.mxu0 0.0
    %7787 = vmatpush1.msra.mxu0 0.0
    %7788 = vmatprep.subr.mxu0 0.0
    %7789 = vmatpush1.msra.mxu0 0.0
    %7790 = vmatprep.subr.mxu0 0.0
    %7791 = vmatpush1.msra.mxu0 0.0
    %7792 = vmatprep.subr.mxu0 0.0
    %7793 = vmatpush1.msra.mxu0 0.0
    %7794 = vmatprep.subr.mxu0 0.0
    %7795 = vmatpush1.msra.mxu0 0.0
    %7796 = vmatprep.subr.mxu0 0.0
    %7797 = vmatpush1.msra.mxu0 0.0
    %7798 = vmatprep.subr.mxu0 0.0
    %7799 = vmatpush1.msra.mxu0 0.0
    %7800 = vmatprep.subr.mxu0 0.0
    %7801 = vmatpush1.msra.mxu0 0.0
    %7802 = vmatprep.subr.mxu0 0.0
    %7803 = vmatpush1.msra.mxu0 0.0
    %7804 = vmatprep.subr.mxu0 0.0
    %7805 = vmatpush1.msra.mxu0 0.0
    %7806 = vmatprep.subr.mxu0 0.0
    %7807 = vmatpush1.msra.mxu0 0.0
    %7808 = vmatprep.subr.mxu0 0.0
    %7809 = vmatpush1.msra.mxu0 0.0
    %7810 = vmatprep.subr.mxu0 0.0
    %7811 = vmatpush1.msra.mxu0 0.0
    %7812 = vmatprep.subr.mxu0 0.0
    %7813 = vmatpush1.msra.mxu0 %v7422
    %7814 = vmatprep.subr.mxu0 0.0
    %7815 = vmatpush2.msra.mxu0 0.0
    %7816 = vmatprep.subr.mxu0 0.0
    %7817 = vmatpush2.msra.mxu0 0.0
    %7818 = vmatprep.subr.mxu0 0.0
    %7819 = vmatpush2.msra.mxu0 0.0
    %7820 = vmatprep.subr.mxu0 0.0
    %7821 = vmatpush2.msra.mxu0 0.0
    %7822 = vmatprep.subr.mxu0 0.0
    %7823 = vmatpush2.msra.mxu0 0.0
    %7824 = vmatprep.subr.mxu0 0.0
    %7825 = vmatpush2.msra.mxu0 0.0
    %7826 = vmatprep.subr.mxu0 0.0
    %7827 = vmatpush2.msra.mxu0 0.0
    %7828 = vmatprep.subr.mxu0 0.0
    %7829 = vmatpush2.msra.mxu0 0.0
    %7830 = vmatprep.subr.mxu0 0.0
    %7831 = vmatpush2.msra.mxu0 0.0
    %7832 = vmatprep.subr.mxu0 0.0
    %7833 = vmatpush2.msra.mxu0 0.0
    %7834 = vmatprep.subr.mxu0 0.0
    %7835 = vmatpush2.msra.mxu0 0.0
    %7836 = vmatprep.subr.mxu0 0.0
    %7837 = vmatpush2.msra.mxu0 0.0
    %7838 = vmatprep.subr.mxu0 0.0
    %7839 = vmatpush2.msra.mxu0 0.0
    %7840 = vmatprep.subr.mxu0 0.0
    %7841 = vmatpush2.msra.mxu0 0.0
    %7842 = vmatprep.subr.mxu0 0.0
    %7843 = vmatpush2.msra.mxu0 0.0
    %7844 = vmatprep.subr.mxu0 0.0
    %7845 = vmatpush2.msra.mxu0 0.0
    %7846 = vmatprep.mubr.f32.mxu0 0.0
    %7847 = vmatmul.mubr.f32.gmra.mxu0 %v7778
    %v7848 = vpop.f32.mrf.mxu0
    %v7849 = vadd.f32 %v7524, %v7848
    %v7850 = vpop.f32.mrf.mxu0
    %7851 = vmatprep.mubr.f32.mxu0 0.0
    %7852 = vmatmul.mubr.f32.gmra.mxu0 %v7780
    %v7853 = vpop.f32.mrf.mxu0
    %v7854 = vadd.f32 %v7529, %v7853
    %v7855 = vpop.f32.mrf.mxu0
    %7856 = vdwg.mxu0
    %v7857 = vrot.slane %v7256, 4
    %v7858 = vrot.slane %v7258, 3
    %v7859 = vsel %vm7307, %v7858, %v7857
    %v7860 = vrot.slane %v7260, 2
    %v7861 = vsel %vm7310, %v7860, %v7859
    %v7862 = vrot.slane %v7262, 1
    %v7863 = vsel %vm7313, %v7862, %v7861
    %v7864 = vsel %vm7316, %v7264, %v7863
    %v7865 = vrot.slane %v7266, 7
    %v7866 = vsel %vm7319, %v7865, %v7864
    %v7867 = vrot.slane %v7268, 6
    %v7868 = vsel %vm7322, %v7867, %v7866
    %v7869 = vrot.slane %v7270, 5
    %v7870 = vsel %vm7325, %v7869, %v7868
    %v7871 = vrot.slane %v7272, 4
    %v7872 = vrot.slane %v7274, 3
    %v7873 = vsel %vm7307, %v7872, %v7871
    %v7874 = vrot.slane %v7276, 2
    %v7875 = vsel %vm7310, %v7874, %v7873
    %v7876 = vrot.slane %v7278, 1
    %v7877 = vsel %vm7313, %v7876, %v7875
    %v7878 = vsel %vm7316, %v7280, %v7877
    %v7879 = vrot.slane %v7282, 7
    %v7880 = vsel %vm7319, %v7879, %v7878
    %v7881 = vrot.slane %v7284, 6
    %v7882 = vsel %vm7322, %v7881, %v7880
    %v7883 = vrot.slane %v7286, 5
    %v7884 = vsel %vm7325, %v7883, %v7882
    %v7885 = vsel %vm7341, %v7870, 0
    %v7887 = vsel %vm7341, %v7884, 0
    %7889 = vmatprep.subr.mxu0 0.0
    %7890 = vmatpush1.msra.mxu0 0.0
    %7891 = vmatprep.subr.mxu0 0.0
    %7892 = vmatpush1.msra.mxu0 0.0
    %7893 = vmatprep.subr.mxu0 0.0
    %7894 = vmatpush1.msra.mxu0 0.0
    %7895 = vmatprep.subr.mxu0 0.0
    %7896 = vmatpush1.msra.mxu0 0.0
    %7897 = vmatprep.subr.mxu0 0.0
    %7898 = vmatpush1.msra.mxu0 0.0
    %7899 = vmatprep.subr.mxu0 0.0
    %7900 = vmatpush1.msra.mxu0 0.0
    %7901 = vmatprep.subr.mxu0 0.0
    %7902 = vmatpush1.msra.mxu0 0.0
    %7903 = vmatprep.subr.mxu0 0.0
    %7904 = vmatpush1.msra.mxu0 0.0
    %7905 = vmatprep.subr.mxu0 0.0
    %7906 = vmatpush1.msra.mxu0 0.0
    %7907 = vmatprep.subr.mxu0 0.0
    %7908 = vmatpush1.msra.mxu0 0.0
    %7909 = vmatprep.subr.mxu0 0.0
    %7910 = vmatpush1.msra.mxu0 0.0
    %7911 = vmatprep.subr.mxu0 0.0
    %7912 = vmatpush1.msra.mxu0 0.0
    %7913 = vmatprep.subr.mxu0 0.0
    %7914 = vmatpush1.msra.mxu0 0.0
    %7915 = vmatprep.subr.mxu0 0.0
    %7916 = vmatpush1.msra.mxu0 0.0
    %7917 = vmatprep.subr.mxu0 0.0
    %7918 = vmatpush1.msra.mxu0 0.0
    %7919 = vmatprep.subr.mxu0 0.0
    %7920 = vmatpush1.msra.mxu0 %v7533
    %7921 = vmatprep.subr.mxu0 0.0
    %7922 = vmatpush2.msra.mxu0 0.0
    %7923 = vmatprep.subr.mxu0 0.0
    %7924 = vmatpush2.msra.mxu0 0.0
    %7925 = vmatprep.subr.mxu0 0.0
    %7926 = vmatpush2.msra.mxu0 0.0
    %7927 = vmatprep.subr.mxu0 0.0
    %7928 = vmatpush2.msra.mxu0 0.0
    %7929 = vmatprep.subr.mxu0 0.0
    %7930 = vmatpush2.msra.mxu0 0.0
    %7931 = vmatprep.subr.mxu0 0.0
    %7932 = vmatpush2.msra.mxu0 0.0
    %7933 = vmatprep.subr.mxu0 0.0
    %7934 = vmatpush2.msra.mxu0 0.0
    %7935 = vmatprep.subr.mxu0 0.0
    %7936 = vmatpush2.msra.mxu0 0.0
    %7937 = vmatprep.subr.mxu0 0.0
    %7938 = vmatpush2.msra.mxu0 0.0
    %7939 = vmatprep.subr.mxu0 0.0
    %7940 = vmatpush2.msra.mxu0 0.0
    %7941 = vmatprep.subr.mxu0 0.0
    %7942 = vmatpush2.msra.mxu0 0.0
    %7943 = vmatprep.subr.mxu0 0.0
    %7944 = vmatpush2.msra.mxu0 0.0
    %7945 = vmatprep.subr.mxu0 0.0
    %7946 = vmatpush2.msra.mxu0 0.0
    %7947 = vmatprep.subr.mxu0 0.0
    %7948 = vmatpush2.msra.mxu0 0.0
    %7949 = vmatprep.subr.mxu0 0.0
    %7950 = vmatpush2.msra.mxu0 0.0
    %7951 = vmatprep.subr.mxu0 0.0
    %7952 = vmatpush2.msra.mxu0 0.0
    %7953 = vmatprep.mubr.f32.mxu0 0.0
    %7954 = vmatmul.mubr.f32.gmra.mxu0 %v7885
    %v7955 = vpop.f32.mrf.mxu0
    %v7956 = vadd.f32 %v7635, %v7955
    %v7957 = vpop.f32.mrf.mxu0
    %7958 = vmatprep.mubr.f32.mxu0 0.0
    %7959 = vmatmul.mubr.f32.gmra.mxu0 %v7887
    %v7960 = vpop.f32.mrf.mxu0
    %v7961 = vadd.f32 %v7640, %v7960
    %v7962 = vpop.f32.mrf.mxu0
    %7963 = vdwg.mxu0
    %v7964 = vadd.f32 %v7742, %v7849
    %v7965 = vadd.f32 %v7747, %v7854
    %v7966 = vadd.f32 %v7964, %v7956
    %v7967 = vadd.f32 %v7965, %v7961
    %v7968 = vld [vmem:[%s5] sm:$0x1]
    %v7970 = vlaneseq
    %v7971 = vshrl.u32 %v7970, 7
    %v7972 = vsub.s32 0, %v7971
    %v7973 = vrot.slane %v7968, %v7972
    %v7975 = vadd.f32 %v7966, %v7973
    %v7976 = vadd.f32 %v7967, %v7973
    %7977 = vst [vmem:[#allocation5] sm:$0xff] %v7975
    %7978 = vst [vmem:[#allocation5 + $0x8] sm:$0xff] %v7976
    // Predicated region
    $region30: #{tpu_custom_call.1} parent=1 // pred_check
      _
    $region31: #{tpu_custom_call.1} parent=1 // pred_check_branch
      %7980 = sbr.rel (0) target = $region33
    $region32: #{tpu_custom_call.1} parent=1 // pred_region
      %s7982 = ssub.s32 256, 256
      %7983 = vsyncadd [#allocation4], %s7982
      %s7984 = sshll.u32 [#allocation5], 4
      %s7985 = int_to_ptr.vmem [resolvable:$true] %s7984
      %7990 = dma.vmem_to_hbm [thread:$0]  %s7985, 256, %s6, [#allocation4], 128, 128, 8
    $region33: #{tpu_custom_call.1} parent=1 // pred_fallthru
      _
    // Predicated region
    $region34: #{tpu_custom_call.1} parent=1 // pred_check
      _
    $region35: #{tpu_custom_call.1} parent=1 // pred_check_branch
      %7992 = sbr.rel (0) target = $region37
    $region36: #{tpu_custom_call.1} parent=1 // pred_region
      %7993 = dma.done [#allocation4], 256
    $region37: #{tpu_custom_call.1} parent=1 // pred_fallthru
      _
    %7994 = vsyncpa [#allocation3], 1
    %7995 = vsyncpa [#allocation4], 1

</llo_original>
